<compile_context>
chip_gen: v5e
topology: v5e:2x2
jax: 0.10.0
libtpu: 0.0.40
codegen_flags: <defaults>
</compile_context>

<pallas_src>
import functools

import jax
import jax.numpy as jnp
from jax.experimental import pallas as pl
from jax.experimental.pallas import tpu as pltpu

_LN_EPS = 1e-5   # nn.LayerNorm default
_LANE = 128      # TPU lane width


def _round_up(x, m):
    return -(-x // m) * m


def _tensorcore_count():
    """TensorCores sharing the 'parallel' grid axis (2 on v7x/megacore, else 1)."""
    try:
        dev = jax.devices()[0]
    except Exception:
        return 1
    n = getattr(dev, "num_cores", None)
    try:
        n = int(n)
    except (TypeError, ValueError):
        return 1
    return n if n >= 1 else 1


def _pick_batch_tile(n_rows, num_cores, max_rows_per_step=4096):
    """Rows per grid step: one step per TensorCore unless N is very large."""
    n_blocks = max(num_cores, -(-n_rows // max_rows_per_step))
    n_blocks = _round_up(n_blocks, num_cores)      # even split across TCs (v7x)
    tile = -(-n_rows // n_blocks)
    return _round_up(max(tile, 8), 8)              # sublane multiple


def mlp_pred_kernel(x_ref, w_ref, p_ref, out_ref, *,
                    d_pad, h1, h2, n_classes, lane):
    """Fused Linear->LN->ReLU -> Linear->LN->ReLU -> Linear->softmax.

    x_ref : (TB, d_pad) bf16 input rows (zero column padding if any).
    w_ref : (d_pad + 2*lane, lane) bf16 weight slab, rows
            [0:d_pad]=W1, [d_pad:d_pad+lane]=W2, [d_pad+lane:]=W3,
            each zero-padded to `lane` columns (row offsets are multiples of 16
            so the bf16 sublane tiling stays aligned -> slices are free).
    p_ref : (8, lane) f32 rows = b1, g1, be1, b2, g2, be2, b3, 0 (zero padded).
    Zero weight/bias padding plus gamma=beta=0 on padded lanes keeps the padded
    lanes of every activation exactly 0, so full-width (lane-dense) reductions
    equal reductions over the real H lanes -- no masking needed until softmax.
    """
    def ln_relu(z, inv_h, gamma, beta):
        # var = E[z^2] - mu^2 (one pass; the two reductions can overlap on XLU)
        s1 = jnp.sum(z, axis=-1, keepdims=True)
        s2 = jnp.sum(z * z, axis=-1, keepdims=True)
        mu = s1 * inv_h
        var = s2 * inv_h - mu * mu
        zn = (z - mu) * jax.lax.rsqrt(var + _LN_EPS) * gamma + beta
        # padded lanes: (0 - mu) * rsqrt * gamma(=0) + beta(=0) = 0 ; relu keeps 0
        return jnp.maximum(zn, 0.0)

    w1 = w_ref[0:d_pad, :]
    w2 = w_ref[d_pad:d_pad + lane, :]
    w3 = w_ref[d_pad + lane:d_pad + 2 * lane, :]

    # hidden layers: Linear -> LayerNorm -> ReLU   (dropout=0.0 -> identity)
    # TODO(synk): dropout>0 at train time would need pltpu.prng_* masking here.
    z1 = jnp.dot(x_ref[...], w1, preferred_element_type=jnp.float32) + p_ref[0:1, :]
    a1 = ln_relu(z1, 1.0 / h1, p_ref[1:2, :], p_ref[2:3, :])

    z2 = jnp.dot(a1.astype(jnp.bfloat16), w2,
                 preferred_element_type=jnp.float32) + p_ref[3:4, :]
    a2 = ln_relu(z2, 1.0 / h2, p_ref[4:5, :], p_ref[5:6, :])

    # output layer + softmax restricted to the real classes (static lane slice)
    logits = jnp.dot(a2.astype(jnp.bfloat16), w3,
                     preferred_element_type=jnp.float32) + p_ref[6:7, :]
    logits = logits[:, :n_classes]
    m = jnp.max(logits, axis=-1, keepdims=True)
    e = jnp.exp(logits - m)
    denom = jnp.sum(e, axis=-1, keepdims=True)
    out_ref[...] = (e / denom).astype(out_ref.dtype)   # exact: rows sum to 1


@functools.partial(jax.jit, static_argnums=(2,))
def _mlp_pred_impl(x, params, batch_tile):
    (w1, b1, g1, be1, w2, b2, g2, be2, w3, b3) = params
    N, in_feats = x.shape
    h1, h2, n_classes = w1.shape[1], w2.shape[1], w3.shape[1]
    lane = _LANE
    assert max(h1, h2, n_classes) <= lane, "head sizes > 128 lanes not supported"

    # ---- layout plumbing (wrapper-side, not hot-path compute) ---------------
    d_pad = _round_up(in_feats, 16)                 # bf16 sublane-tile multiple
    n_blocks = -(-N // batch_tile)
    n_pad = n_blocks * batch_tile

    x_p = jnp.pad(x, ((0, n_pad - N), (0, d_pad - in_feats))).astype(jnp.bfloat16)

    # One bf16 weight slab: rows = W1 | W2 | W3, all zero-padded to 128 lanes.
    w1_p = jnp.pad(w1, ((0, d_pad - in_feats), (0, lane - h1)))
    w2_p = jnp.pad(w2, ((0, lane - h1), (0, lane - h2)))
    w3_p = jnp.pad(w3, ((0, lane - h2), (0, lane - n_classes)))
    w_slab = jnp.concatenate([w1_p, w2_p, w3_p], axis=0).astype(jnp.bfloat16)

    # One f32 vector-param slab: b1,g1,be1,b2,g2,be2,b3 (+ zero row) x 128 lanes.
    def row(v, width):
        return jnp.pad(v, ((0, 0), (0, lane - width)))
    p_slab = jnp.concatenate(
        [row(b1, h1), row(g1, h1), row(be1, h1),
         row(b2, h2), row(g2, h2), row(be2, h2),
         row(b3, n_classes), jnp.zeros((1, lane), jnp.float32)],
        axis=0).astype(jnp.float32)                 # (8, 128)

    kernel = functools.partial(mlp_pred_kernel, d_pad=d_pad, h1=h1, h2=h2,
                               n_classes=n_classes, lane=lane)

    const_spec = lambda shape: pl.BlockSpec(shape, lambda i: (0, 0))

    cost = pl.CostEstimate(
        flops=int(2 * N * (in_feats * h1 + h1 * h2 + h2 * n_classes)),
        transcendentals=int(N * (n_classes + 2)),
        bytes_accessed=int(x_p.size * 2 + w_slab.size * 2 + p_slab.size * 4
                           + n_pad * n_classes * 4),
    )

    out = pl.pallas_call(
        kernel,
        out_shape=jax.ShapeDtypeStruct((n_pad, n_classes), jnp.float32),
        grid_spec=pltpu.PrefetchScalarGridSpec(
            num_scalar_prefetch=0,
            grid=(n_blocks,),
            in_specs=[
                pl.BlockSpec((batch_tile, d_pad), lambda i: (i, 0)),  # x rows
                const_spec(w_slab.shape),                             # weights
                const_spec(p_slab.shape),                             # b/gamma/beta
            ],
            out_specs=pl.BlockSpec((batch_tile, n_classes), lambda i: (i, 0)),
        ),
        compiler_params=pltpu.CompilerParams(
            dimension_semantics=("parallel",)),
        cost_estimate=cost,
    )(x_p, w_slab, p_slab)

    return out[:N]


def mlp_pred_forward(x, params, *, batch_tile=None, num_cores=None):
    """x: (N, in_feats) f32. Returns (N, n_classes) softmax probabilities (f32)."""
    if batch_tile is None:
        if num_cores is None:
            num_cores = _tensorcore_count()
        batch_tile = _pick_batch_tile(x.shape[0], num_cores)
    else:
        batch_tile = _round_up(int(batch_tile), 8)
    return _mlp_pred_impl(x, params, batch_tile)


def init_params(key, in_feats, hiddens, n_classes):
    """Deterministic synthetic params. Linear weights stored as (in, out)."""
    dims = [in_feats] + hiddens + [n_classes]
    keys = jax.random.split(key, 2 * (len(dims) - 1))
    params = []
    for i in range(len(dims) - 1):
        fan_in, fan_out = dims[i], dims[i + 1]
        bound = 1.0 / jnp.sqrt(fan_in)
        w = jax.random.uniform(keys[2 * i], (fan_in, fan_out),
                               minval=-bound, maxval=bound, dtype=jnp.float32)
        b = jax.random.uniform(keys[2 * i + 1], (1, fan_out),
                               minval=-bound, maxval=bound, dtype=jnp.float32)
        params.append(w)
        params.append(b)
        if i < len(dims) - 2:
            params.append(jnp.ones((1, fan_out), jnp.float32))   # LN gamma
            params.append(jnp.zeros((1, fan_out), jnp.float32))  # LN beta
    return tuple(params)


def reference_forward(x, params, matmul_dtype=jnp.float32):
    """Pure-JAX reference; matmul_dtype=bf16 mirrors the kernel's MXU inputs."""
    (w1, b1, g1, be1, w2, b2, g2, be2, w3, b3) = params

    def dense(h, w):
        return jnp.dot(h.astype(matmul_dtype), w.astype(matmul_dtype),
                       preferred_element_type=jnp.float32)

    def ln(h, g, b):
        mu = jnp.mean(h, axis=-1, keepdims=True)
        var = jnp.mean((h - mu) ** 2, axis=-1, keepdims=True)
        return (h - mu) / jnp.sqrt(var + _LN_EPS) * g + b

    h = jax.nn.relu(ln(dense(x, w1) + b1, g1, be1))
    h = jax.nn.relu(ln(dense(h, w2) + b2, g2, be2))
    return jax.nn.softmax(dense(h, w3) + b3, axis=1)


if __name__ == "__main__":
    key = jax.random.PRNGKey(0)
    in_feats, hiddens, n_classes = 16, [32, 32], 8
    N = 1000   # not a multiple of 8*128: exercises the zero-padded row tail

    pkey, xkey = jax.random.split(key)
    params = init_params(pkey, in_feats, hiddens, n_classes)
    x = jax.random.normal(xkey, (N, in_feats), dtype=jnp.float32)

    probs = mlp_pred_forward(x, params)      # grid auto-sized per TC count
    probs = jax.block_until_ready(probs)
    assert probs.shape == (N, n_classes)

    # Tight check vs. a reference using the same bf16 matmul inputs.
    ref_bf16 = reference_forward(x, params, matmul_dtype=jnp.bfloat16)
    assert jnp.allclose(probs, ref_bf16, atol=5e-3, rtol=0)

    # Loose check vs. the full-f32 reference (bf16 weight/activation quantization).
    ref_f32 = reference_forward(x, params, matmul_dtype=jnp.float32)
    assert jnp.allclose(probs, ref_f32, atol=5e-2, rtol=0)

    # Exact softmax division -> rows sum to 1 to f32 accuracy.
    assert jnp.allclose(jnp.sum(probs, axis=1), 1.0, atol=1e-5)

    # Also exercise an explicit multi-step tiling (v7x-style even split).
    probs2 = jax.block_until_ready(mlp_pred_forward(x, params, batch_tile=504))
    assert jnp.allclose(probs2, probs, atol=1e-6, rtol=0)

    print("KERNEL_OK")
</pallas_src>

<mosaic_0001>
module attributes {stable_mosaic.version = 11 : i64} {
  func.func @mlp_pred_kernel(%arg0: i32, %arg1: memref<1000x16xbf16, #tpu.memory_space<vmem>>, %arg2: memref<272x128xbf16, #tpu.memory_space<vmem>>, %arg3: memref<8x128xf32, #tpu.memory_space<vmem>>, %arg4: memref<1000x8xf32, #tpu.memory_space<vmem>>) attributes {dimension_semantics = [#tpu.dimension_semantics<parallel>], iteration_bounds = array<i64: 1>, scalar_prefetch = 0 : i64, scratch_operands = 0 : i64, tpu.core_type = #tpu.core_type<tc>, window_params = [{transform_indices = @transform_0, window_bounds = array<i64: 1000, 16>}, {pipeline_mode = #tpu.pipeline_mode<synchronous>, transform_indices = @transform_1, window_bounds = array<i64: 272, 128>}, {pipeline_mode = #tpu.pipeline_mode<synchronous>, transform_indices = @transform_2, window_bounds = array<i64: 8, 128>}, {transform_indices = @transform_3, window_bounds = array<i64: 1000, 8>}]} {
    %c0 = arith.constant 0 : index
    %c0_0 = arith.constant 0 : index
    %0 = vector.load %arg2[%c0, %c0_0] : memref<272x128xbf16, #tpu.memory_space<vmem>>, vector<16x128xbf16>
    %c16 = arith.constant 16 : index
    %c0_1 = arith.constant 0 : index
    %1 = vector.load %arg2[%c16, %c0_1] : memref<272x128xbf16, #tpu.memory_space<vmem>>, vector<128x128xbf16>
    %c144 = arith.constant 144 : index
    %c0_2 = arith.constant 0 : index
    %2 = vector.load %arg2[%c144, %c0_2] : memref<272x128xbf16, #tpu.memory_space<vmem>>, vector<128x128xbf16>
    %c0_3 = arith.constant 0 : index
    %c0_4 = arith.constant 0 : index
    %3 = vector.load %arg1[%c0_3, %c0_4] : memref<1000x16xbf16, #tpu.memory_space<vmem>>, vector<1000x16xbf16>
    %cst = arith.constant dense<0.000000e+00> : vector<1000x128xf32>
    %4 = tpu.matmul %3, %0, %cst {dimension_numbers = #tpu.dot_dimension_numbers<[1], [0], [0], [1], [0, 0, 1, 1], [], []>} : vector<1000x16xbf16>, vector<16x128xbf16>, vector<1000x128xf32> -> vector<1000x128xf32>
    %c0_5 = arith.constant 0 : index
    %c0_6 = arith.constant 0 : index
    %5 = vector.load %arg3[%c0_5, %c0_6] : memref<8x128xf32, #tpu.memory_space<vmem>>, vector<1x128xf32>
    %6 = vector.broadcast %5 : vector<1x128xf32> to vector<1000x128xf32>
    %7 = arith.addf %4, %6 : vector<1000x128xf32>
    %c1 = arith.constant 1 : index
    %c0_7 = arith.constant 0 : index
    %8 = vector.load %arg3[%c1, %c0_7] : memref<8x128xf32, #tpu.memory_space<vmem>>, vector<1x128xf32>
    %c2 = arith.constant 2 : index
    %c0_8 = arith.constant 0 : index
    %9 = vector.load %arg3[%c2, %c0_8] : memref<8x128xf32, #tpu.memory_space<vmem>>, vector<1x128xf32>
    %cst_9 = arith.constant dense<0.000000e+00> : vector<1000xf32>
    %10 = vector.multi_reduction <add>, %7, %cst_9 [1] : vector<1000x128xf32> to vector<1000xf32>
    %11 = vector.shape_cast %10 : vector<1000xf32> to vector<1000x1xf32>
    %12 = arith.mulf %7, %7 : vector<1000x128xf32>
    %cst_10 = arith.constant dense<0.000000e+00> : vector<1000xf32>
    %13 = vector.multi_reduction <add>, %12, %cst_10 [1] : vector<1000x128xf32> to vector<1000xf32>
    %14 = vector.shape_cast %13 : vector<1000xf32> to vector<1000x1xf32>
    %cst_11 = arith.constant 3.125000e-02 : f32
    %15 = vector.broadcast %cst_11 : f32 to vector<1000x1xf32>
    %16 = arith.mulf %11, %15 : vector<1000x1xf32>
    %cst_12 = arith.constant 3.125000e-02 : f32
    %17 = vector.broadcast %cst_12 : f32 to vector<1000x1xf32>
    %18 = arith.mulf %14, %17 : vector<1000x1xf32>
    %19 = arith.mulf %16, %16 : vector<1000x1xf32>
    %20 = arith.subf %18, %19 : vector<1000x1xf32>
    %21 = vector.broadcast %16 : vector<1000x1xf32> to vector<1000x128xf32>
    %22 = arith.subf %7, %21 : vector<1000x128xf32>
    %cst_13 = arith.constant 9.99999974E-6 : f32
    %23 = vector.broadcast %cst_13 : f32 to vector<1000x1xf32>
    %24 = arith.addf %20, %23 : vector<1000x1xf32>
    %25 = math.rsqrt %24 : vector<1000x1xf32>
    %26 = vector.broadcast %25 : vector<1000x1xf32> to vector<1000x128xf32>
    %27 = arith.mulf %22, %26 : vector<1000x128xf32>
    %28 = vector.broadcast %8 : vector<1x128xf32> to vector<1000x128xf32>
    %29 = arith.mulf %27, %28 : vector<1000x128xf32>
    %30 = vector.broadcast %9 : vector<1x128xf32> to vector<1000x128xf32>
    %31 = arith.addf %29, %30 : vector<1000x128xf32>
    %cst_14 = arith.constant 0.000000e+00 : f32
    %32 = vector.broadcast %cst_14 : f32 to vector<1000x128xf32>
    %33 = arith.maximumf %31, %32 : vector<1000x128xf32>
    %34 = arith.truncf %33 : vector<1000x128xf32> to vector<1000x128xbf16>
    %cst_15 = arith.constant dense<0.000000e+00> : vector<1000x128xf32>
    %35 = tpu.matmul %34, %1, %cst_15 {dimension_numbers = #tpu.dot_dimension_numbers<[1], [0], [0], [1], [0, 0, 1, 1], [], []>} : vector<1000x128xbf16>, vector<128x128xbf16>, vector<1000x128xf32> -> vector<1000x128xf32>
    %c3 = arith.constant 3 : index
    %c0_16 = arith.constant 0 : index
    %36 = vector.load %arg3[%c3, %c0_16] : memref<8x128xf32, #tpu.memory_space<vmem>>, vector<1x128xf32>
    %37 = vector.broadcast %36 : vector<1x128xf32> to vector<1000x128xf32>
    %38 = arith.addf %35, %37 : vector<1000x128xf32>
    %c4 = arith.constant 4 : index
    %c0_17 = arith.constant 0 : index
    %39 = vector.load %arg3[%c4, %c0_17] : memref<8x128xf32, #tpu.memory_space<vmem>>, vector<1x128xf32>
    %c5 = arith.constant 5 : index
    %c0_18 = arith.constant 0 : index
    %40 = vector.load %arg3[%c5, %c0_18] : memref<8x128xf32, #tpu.memory_space<vmem>>, vector<1x128xf32>
    %cst_19 = arith.constant dense<0.000000e+00> : vector<1000xf32>
    %41 = vector.multi_reduction <add>, %38, %cst_19 [1] : vector<1000x128xf32> to vector<1000xf32>
    %42 = vector.shape_cast %41 : vector<1000xf32> to vector<1000x1xf32>
    %43 = arith.mulf %38, %38 : vector<1000x128xf32>
    %cst_20 = arith.constant dense<0.000000e+00> : vector<1000xf32>
    %44 = vector.multi_reduction <add>, %43, %cst_20 [1] : vector<1000x128xf32> to vector<1000xf32>
    %45 = vector.shape_cast %44 : vector<1000xf32> to vector<1000x1xf32>
    %cst_21 = arith.constant 3.125000e-02 : f32
    %46 = vector.broadcast %cst_21 : f32 to vector<1000x1xf32>
    %47 = arith.mulf %42, %46 : vector<1000x1xf32>
    %cst_22 = arith.constant 3.125000e-02 : f32
    %48 = vector.broadcast %cst_22 : f32 to vector<1000x1xf32>
    %49 = arith.mulf %45, %48 : vector<1000x1xf32>
    %50 = arith.mulf %47, %47 : vector<1000x1xf32>
    %51 = arith.subf %49, %50 : vector<1000x1xf32>
    %52 = vector.broadcast %47 : vector<1000x1xf32> to vector<1000x128xf32>
    %53 = arith.subf %38, %52 : vector<1000x128xf32>
    %cst_23 = arith.constant 9.99999974E-6 : f32
    %54 = vector.broadcast %cst_23 : f32 to vector<1000x1xf32>
    %55 = arith.addf %51, %54 : vector<1000x1xf32>
    %56 = math.rsqrt %55 : vector<1000x1xf32>
    %57 = vector.broadcast %56 : vector<1000x1xf32> to vector<1000x128xf32>
    %58 = arith.mulf %53, %57 : vector<1000x128xf32>
    %59 = vector.broadcast %39 : vector<1x128xf32> to vector<1000x128xf32>
    %60 = arith.mulf %58, %59 : vector<1000x128xf32>
    %61 = vector.broadcast %40 : vector<1x128xf32> to vector<1000x128xf32>
    %62 = arith.addf %60, %61 : vector<1000x128xf32>
    %cst_24 = arith.constant 0.000000e+00 : f32
    %63 = vector.broadcast %cst_24 : f32 to vector<1000x128xf32>
    %64 = arith.maximumf %62, %63 : vector<1000x128xf32>
    %65 = arith.truncf %64 : vector<1000x128xf32> to vector<1000x128xbf16>
    %cst_25 = arith.constant dense<0.000000e+00> : vector<1000x128xf32>
    %66 = tpu.matmul %65, %2, %cst_25 {dimension_numbers = #tpu.dot_dimension_numbers<[1], [0], [0], [1], [0, 0, 1, 1], [], []>} : vector<1000x128xbf16>, vector<128x128xbf16>, vector<1000x128xf32> -> vector<1000x128xf32>
    %c6 = arith.constant 6 : index
    %c0_26 = arith.constant 0 : index
    %67 = vector.load %arg3[%c6, %c0_26] : memref<8x128xf32, #tpu.memory_space<vmem>>, vector<1x128xf32>
    %68 = vector.broadcast %67 : vector<1x128xf32> to vector<1000x128xf32>
    %69 = arith.addf %66, %68 : vector<1000x128xf32>
    %70 = vector.extract_strided_slice %69 {offsets = [0, 0], sizes = [1000, 8], strides = [1, 1]} : vector<1000x128xf32> to vector<1000x8xf32>
    %cst_27 = arith.constant dense<0xFF800000> : vector<1000xf32>
    %71 = vector.multi_reduction <maximumf>, %70, %cst_27 [1] : vector<1000x8xf32> to vector<1000xf32>
    %72 = vector.shape_cast %71 : vector<1000xf32> to vector<1000x1xf32>
    %73 = vector.broadcast %72 : vector<1000x1xf32> to vector<1000x8xf32>
    %74 = arith.subf %70, %73 : vector<1000x8xf32>
    %75 = math.exp %74 : vector<1000x8xf32>
    %cst_28 = arith.constant dense<0.000000e+00> : vector<1000xf32>
    %76 = vector.multi_reduction <add>, %75, %cst_28 [1] : vector<1000x8xf32> to vector<1000xf32>
    %77 = vector.shape_cast %76 : vector<1000xf32> to vector<1000x1xf32>
    %78 = vector.broadcast %77 : vector<1000x1xf32> to vector<1000x8xf32>
    %79 = arith.divf %75, %78 : vector<1000x8xf32>
    %c0_29 = arith.constant 0 : index
    %c0_30 = arith.constant 0 : index
    %80 = vector.load %arg4[%c0_29, %c0_30] : memref<1000x8xf32, #tpu.memory_space<vmem>>, vector<1000x8xf32>
    tpu.vector_store %arg4[%c0_29, %c0_30], %79 {strides = array<i32>} : memref<1000x8xf32, #tpu.memory_space<vmem>>, vector<1000x8xf32>,
    return
  }
  func.func @transform_0(%arg0: i32) -> (i32, i32) {
    %c0_i32 = arith.constant 0 : i32
    %c0_i32_0 = arith.constant 0 : i32
    return %arg0, %c0_i32 : i32, i32
  }
  func.func @transform_1(%arg0: i32) -> (i32, i32) {
    %c0_i32 = arith.constant 0 : i32
    %c0_i32_0 = arith.constant 0 : i32
    %c0_i32_1 = arith.constant 0 : i32
    return %c0_i32, %c0_i32_0 : i32, i32
  }
  func.func @transform_2(%arg0: i32) -> (i32, i32) {
    %c0_i32 = arith.constant 0 : i32
    %c0_i32_0 = arith.constant 0 : i32
    %c0_i32_1 = arith.constant 0 : i32
    return %c0_i32, %c0_i32_0 : i32, i32
  }
  func.func @transform_3(%arg0: i32) -> (i32, i32) {
    %c0_i32 = arith.constant 0 : i32
    %c0_i32_0 = arith.constant 0 : i32
    return %arg0, %c0_i32 : i32, i32
  }
}

</mosaic_0001>

<llo_original>
// kernel: _mlp_pred_impl.1
$region0: #{_mlp_pred_impl.1}
  #allocation0 [shape = 'u32[]', space=smem, size = 0x4, offset = 0x4, fixed_abs, tag = 'smem constant byte address 0x4 - core index']
  #allocation1 [shape = 'u32[72,128]{1,0:T(1,128)}', space=vmem, size = 0x9000, scoped, tag = 'internal scratch']
  %s0 = inlined_call_operand.vmem [shape: bf16[1000,16], index: 0, kind: input, shape index: {}]
  %s1 = inlined_call_operand.vmem [shape: bf16[272,128], index: 1, kind: input, shape index: {}]
  %s2 = inlined_call_operand.vmem [shape: f32[8,128], index: 2, kind: input, shape index: {}]
  %s3 = inlined_call_operand.vmem [shape: f32[1000,8], index: 3, kind: output, shape index: {}]
  %s4 = sld [smem:[#allocation0]]
  $region22: #{_mlp_pred_impl.1} parent=0
    _
  %s6 = ssub.s32 1, %s4
  %s7 = scalar_select 0, %s6, %s4
  // Predicated region
  $region2: #{_mlp_pred_impl.1} parent=0 // pred_check
    _
  $region3: #{_mlp_pred_impl.1} parent=0 // pred_check_branch
    %9 = sbr.rel (0) target = $region5
  $region4: #{_mlp_pred_impl.1} parent=0 // pred_region
    _
  $region5: #{_mlp_pred_impl.1} parent=0 // pred_fallthru
    _
  // Predicated region
  $region6: #{_mlp_pred_impl.1} parent=0 // pred_check
    _
  $region7: #{_mlp_pred_impl.1} parent=0 // pred_check_branch
    %11 = sbr.rel (0) target = $region9
  $region8: #{_mlp_pred_impl.1} parent=0 // pred_region
    _
  $region9: #{_mlp_pred_impl.1} parent=0 // pred_fallthru
    _
  // Predicated region
  $region10: #{_mlp_pred_impl.1} parent=0 // pred_check
    _
  $region11: #{_mlp_pred_impl.1} parent=0 // pred_check_branch
    %13 = sbr.rel (0) target = $region13
  $region12: #{_mlp_pred_impl.1} parent=0 // pred_region
    _
  $region13: #{_mlp_pred_impl.1} parent=0 // pred_fallthru
    _
  %v15 = vld [vmem:[%s1] sm:$0xf]
  %v16 = vld [vmem:[%s1 + $0x4] sm:$0xf]
  %v17 = vld [vmem:[%s1 + $0x8] sm:$0xf]
  %v18 = vld [vmem:[%s1 + $0xc] sm:$0xf]
  %v19 = vld [vmem:[%s1 + $0x10] sm:$0xf]
  %v20 = vld [vmem:[%s1 + $0x14] sm:$0xf]
  %v21 = vld [vmem:[%s1 + $0x18] sm:$0xf]
  %v22 = vld [vmem:[%s1 + $0x1c] sm:$0xf]
  %v23 = vld [vmem:[%s1 + $0x20] sm:$0xf]
  %v24 = vld [vmem:[%s1 + $0x24] sm:$0xf]
  %v25 = vld [vmem:[%s1 + $0x28] sm:$0xf]
  %v26 = vld [vmem:[%s1 + $0x2c] sm:$0xf]
  %v27 = vld [vmem:[%s1 + $0x30] sm:$0xf]
  %v28 = vld [vmem:[%s1 + $0x34] sm:$0xf]
  %v29 = vld [vmem:[%s1 + $0x38] sm:$0xf]
  %v30 = vld [vmem:[%s1 + $0x3c] sm:$0xf]
  %v31 = vld [vmem:[%s1 + $0x40] sm:$0xf]
  %v32 = vld [vmem:[%s1 + $0x44] sm:$0xf]
  %v33 = vld [vmem:[%s1 + $0x48] sm:$0xf]
  %v34 = vld [vmem:[%s1 + $0x4c] sm:$0xf]
  %v35 = vld [vmem:[%s1 + $0x50] sm:$0xf]
  %v36 = vld [vmem:[%s1 + $0x54] sm:$0xf]
  %v37 = vld [vmem:[%s1 + $0x58] sm:$0xf]
  %v38 = vld [vmem:[%s1 + $0x5c] sm:$0xf]
  %v39 = vld [vmem:[%s1 + $0x60] sm:$0xf]
  %v40 = vld [vmem:[%s1 + $0x64] sm:$0xf]
  %v41 = vld [vmem:[%s1 + $0x68] sm:$0xf]
  %v42 = vld [vmem:[%s1 + $0x6c] sm:$0xf]
  %v43 = vld [vmem:[%s1 + $0x70] sm:$0xf]
  %v44 = vld [vmem:[%s1 + $0x74] sm:$0xf]
  %v45 = vld [vmem:[%s1 + $0x78] sm:$0xf]
  %v46 = vld [vmem:[%s1 + $0x7c] sm:$0xf]
  %v47 = vld [vmem:[%s1 + $0x80] sm:$0xf]
  %v48 = vld [vmem:[%s1 + $0x84] sm:$0xf]
  %v49 = vld [vmem:[%s0] sm:$0xf]
  %v50 = vld [vmem:[%s0 + $0x4] sm:$0xf]
  %v51 = vld [vmem:[%s0 + $0x8] sm:$0xf]
  %v52 = vld [vmem:[%s0 + $0xc] sm:$0xf]
  %v53 = vld [vmem:[%s0 + $0x10] sm:$0xf]
  %v54 = vld [vmem:[%s0 + $0x14] sm:$0xf]
  %v55 = vld [vmem:[%s0 + $0x18] sm:$0xf]
  %v56 = vld [vmem:[%s0 + $0x1c] sm:$0xf]
  %v57 = vld [vmem:[%s0 + $0x20] sm:$0xf]
  %v58 = vld [vmem:[%s0 + $0x24] sm:$0xf]
  %v59 = vld [vmem:[%s0 + $0x28] sm:$0xf]
  %v60 = vld [vmem:[%s0 + $0x2c] sm:$0xf]
  %v61 = vld [vmem:[%s0 + $0x30] sm:$0xf]
  %v62 = vld [vmem:[%s0 + $0x34] sm:$0xf]
  %v63 = vld [vmem:[%s0 + $0x38] sm:$0xf]
  %v64 = vld [vmem:[%s0 + $0x3c] sm:$0xf]
  %v65 = vld [vmem:[%s0 + $0x40] sm:$0xf]
  %v66 = vld [vmem:[%s0 + $0x44] sm:$0xf]
  %v67 = vld [vmem:[%s0 + $0x48] sm:$0xf]
  %v68 = vld [vmem:[%s0 + $0x4c] sm:$0xf]
  %v69 = vld [vmem:[%s0 + $0x50] sm:$0xf]
  %v70 = vld [vmem:[%s0 + $0x54] sm:$0xf]
  %v71 = vld [vmem:[%s0 + $0x58] sm:$0xf]
  %v72 = vld [vmem:[%s0 + $0x5c] sm:$0xf]
  %v73 = vld [vmem:[%s0 + $0x60] sm:$0xf]
  %v74 = vld [vmem:[%s0 + $0x64] sm:$0xf]
  %v75 = vld [vmem:[%s0 + $0x68] sm:$0xf]
  %v76 = vld [vmem:[%s0 + $0x6c] sm:$0xf]
  %v77 = vld [vmem:[%s0 + $0x70] sm:$0xf]
  %v78 = vld [vmem:[%s0 + $0x74] sm:$0xf]
  %v79 = vld [vmem:[%s0 + $0x78] sm:$0xf]
  %v80 = vld [vmem:[%s0 + $0x7c] sm:$0xf]
  %v81 = vld [vmem:[%s0 + $0x80] sm:$0xf]
  %v82 = vld [vmem:[%s0 + $0x84] sm:$0xf]
  %v83 = vld [vmem:[%s0 + $0x88] sm:$0xf]
  %v84 = vld [vmem:[%s0 + $0x8c] sm:$0xf]
  %v85 = vld [vmem:[%s0 + $0x90] sm:$0xf]
  %v86 = vld [vmem:[%s0 + $0x94] sm:$0xf]
  %v87 = vld [vmem:[%s0 + $0x98] sm:$0xf]
  %v88 = vld [vmem:[%s0 + $0x9c] sm:$0xf]
  %v89 = vld [vmem:[%s0 + $0xa0] sm:$0xf]
  %v90 = vld [vmem:[%s0 + $0xa4] sm:$0xf]
  %v91 = vld [vmem:[%s0 + $0xa8] sm:$0xf]
  %v92 = vld [vmem:[%s0 + $0xac] sm:$0xf]
  %v93 = vld [vmem:[%s0 + $0xb0] sm:$0xf]
  %v94 = vld [vmem:[%s0 + $0xb4] sm:$0xf]
  %v95 = vld [vmem:[%s0 + $0xb8] sm:$0xf]
  %v96 = vld [vmem:[%s0 + $0xbc] sm:$0xf]
  %v97 = vld [vmem:[%s0 + $0xc0] sm:$0xf]
  %v98 = vld [vmem:[%s0 + $0xc4] sm:$0xf]
  %v99 = vld [vmem:[%s0 + $0xc8] sm:$0xf]
  %v100 = vld [vmem:[%s0 + $0xcc] sm:$0xf]
  %v101 = vld [vmem:[%s0 + $0xd0] sm:$0xf]
  %v102 = vld [vmem:[%s0 + $0xd4] sm:$0xf]
  %v103 = vld [vmem:[%s0 + $0xd8] sm:$0xf]
  %v104 = vld [vmem:[%s0 + $0xdc] sm:$0xf]
  %v105 = vld [vmem:[%s0 + $0xe0] sm:$0xf]
  %v106 = vld [vmem:[%s0 + $0xe4] sm:$0xf]
  %v107 = vld [vmem:[%s0 + $0xe8] sm:$0xf]
  %v108 = vld [vmem:[%s0 + $0xec] sm:$0xf]
  %v109 = vld [vmem:[%s0 + $0xf0] sm:$0xf]
  %v110 = vld [vmem:[%s0 + $0xf4] sm:$0xf]
  %v111 = vld [vmem:[%s0 + $0xf8] sm:$0xf]
  %v112 = vld [vmem:[%s0 + $0xfc] sm:$0xf]
  %v113 = vld [vmem:[%s0 + $0x100] sm:$0xf]
  %v114 = vld [vmem:[%s0 + $0x104] sm:$0xf]
  %v115 = vld [vmem:[%s0 + $0x108] sm:$0xf]
  %v116 = vld [vmem:[%s0 + $0x10c] sm:$0xf]
  %v117 = vld [vmem:[%s0 + $0x110] sm:$0xf]
  %v118 = vld [vmem:[%s0 + $0x114] sm:$0xf]
  %v119 = vld [vmem:[%s0 + $0x118] sm:$0xf]
  %v120 = vld [vmem:[%s0 + $0x11c] sm:$0xf]
  %v121 = vld [vmem:[%s0 + $0x120] sm:$0xf]
  %v122 = vld [vmem:[%s0 + $0x124] sm:$0xf]
  %v123 = vld [vmem:[%s0 + $0x128] sm:$0xf]
  %v124 = vld [vmem:[%s0 + $0x12c] sm:$0xf]
  %v125 = vld [vmem:[%s0 + $0x130] sm:$0xf]
  %v126 = vld [vmem:[%s0 + $0x134] sm:$0xf]
  %v127 = vld [vmem:[%s0 + $0x138] sm:$0xf]
  %v128 = vld [vmem:[%s0 + $0x13c] sm:$0xf]
  %v129 = vld [vmem:[%s0 + $0x140] sm:$0xf]
  %v130 = vld [vmem:[%s0 + $0x144] sm:$0xf]
  %v131 = vld [vmem:[%s0 + $0x148] sm:$0xf]
  %v132 = vld [vmem:[%s0 + $0x14c] sm:$0xf]
  %v133 = vld [vmem:[%s0 + $0x150] sm:$0xf]
  %v134 = vld [vmem:[%s0 + $0x154] sm:$0xf]
  %v135 = vld [vmem:[%s0 + $0x158] sm:$0xf]
  %v136 = vld [vmem:[%s0 + $0x15c] sm:$0xf]
  %v137 = vld [vmem:[%s0 + $0x160] sm:$0xf]
  %v138 = vld [vmem:[%s0 + $0x164] sm:$0xf]
  %v139 = vld [vmem:[%s0 + $0x168] sm:$0xf]
  %v140 = vld [vmem:[%s0 + $0x16c] sm:$0xf]
  %v141 = vld [vmem:[%s0 + $0x170] sm:$0xf]
  %v142 = vld [vmem:[%s0 + $0x174] sm:$0xf]
  %v143 = vld [vmem:[%s0 + $0x178] sm:$0xf]
  %v144 = vld [vmem:[%s0 + $0x17c] sm:$0xf]
  %v145 = vld [vmem:[%s0 + $0x180] sm:$0xf]
  %v146 = vld [vmem:[%s0 + $0x184] sm:$0xf]
  %v147 = vld [vmem:[%s0 + $0x188] sm:$0xf]
  %v148 = vld [vmem:[%s0 + $0x18c] sm:$0xf]
  %v149 = vld [vmem:[%s0 + $0x190] sm:$0xf]
  %v150 = vld [vmem:[%s0 + $0x194] sm:$0xf]
  %v151 = vld [vmem:[%s0 + $0x198] sm:$0xf]
  %v152 = vld [vmem:[%s0 + $0x19c] sm:$0xf]
  %v153 = vld [vmem:[%s0 + $0x1a0] sm:$0xf]
  %v154 = vld [vmem:[%s0 + $0x1a4] sm:$0xf]
  %v155 = vld [vmem:[%s0 + $0x1a8] sm:$0xf]
  %v156 = vld [vmem:[%s0 + $0x1ac] sm:$0xf]
  %v157 = vld [vmem:[%s0 + $0x1b0] sm:$0xf]
  %v158 = vld [vmem:[%s0 + $0x1b4] sm:$0xf]
  %v159 = vld [vmem:[%s0 + $0x1b8] sm:$0xf]
  %v160 = vld [vmem:[%s0 + $0x1bc] sm:$0xf]
  %v161 = vld [vmem:[%s0 + $0x1c0] sm:$0xf]
  %v162 = vld [vmem:[%s0 + $0x1c4] sm:$0xf]
  %v163 = vld [vmem:[%s0 + $0x1c8] sm:$0xf]
  %v164 = vld [vmem:[%s0 + $0x1cc] sm:$0xf]
  %v165 = vld [vmem:[%s0 + $0x1d0] sm:$0xf]
  %v166 = vld [vmem:[%s0 + $0x1d4] sm:$0xf]
  %v167 = vld [vmem:[%s0 + $0x1d8] sm:$0xf]
  %v168 = vld [vmem:[%s0 + $0x1dc] sm:$0xf]
  %v169 = vld [vmem:[%s0 + $0x1e0] sm:$0xf]
  %v170 = vld [vmem:[%s0 + $0x1e4] sm:$0xf]
  %v171 = vld [vmem:[%s0 + $0x1e8] sm:$0xf]
  %v172 = vld [vmem:[%s0 + $0x1ec] sm:$0xf]
  %v173 = vld [vmem:[%s0 + $0x1f0] sm:$0xf]
  %v174 = vld [vmem:[%s2] sm:$0x1]
  %v175 = vperm.slane %v174, 0
  %v301 = vunpack.c.l.b16 %v49
  %v302 = vunpack.c.l.b16 %v50
  %v303 = vunpack.c.l.b16 %v51
  %v304 = vunpack.c.l.b16 %v52
  %v305 = vunpack.c.l.b16 %v53
  %v306 = vunpack.c.l.b16 %v54
  %v307 = vunpack.c.l.b16 %v55
  %v308 = vunpack.c.l.b16 %v56
  %v309 = vunpack.c.l.b16 %v57
  %v310 = vunpack.c.l.b16 %v58
  %v311 = vunpack.c.l.b16 %v59
  %v312 = vunpack.c.l.b16 %v60
  %v313 = vunpack.c.l.b16 %v61
  %v314 = vunpack.c.l.b16 %v62
  %v315 = vunpack.c.l.b16 %v63
  %v316 = vunpack.c.l.b16 %v64
  %v317 = vunpack.c.l.b16 %v65
  %v318 = vunpack.c.l.b16 %v66
  %v319 = vunpack.c.l.b16 %v67
  %v320 = vunpack.c.l.b16 %v68
  %v321 = vunpack.c.l.b16 %v69
  %v322 = vunpack.c.l.b16 %v70
  %v323 = vunpack.c.l.b16 %v71
  %v324 = vunpack.c.l.b16 %v72
  %v325 = vunpack.c.l.b16 %v73
  %v326 = vunpack.c.l.b16 %v74
  %v327 = vunpack.c.l.b16 %v75
  %v328 = vunpack.c.l.b16 %v76
  %v329 = vunpack.c.l.b16 %v77
  %v330 = vunpack.c.l.b16 %v78
  %v331 = vunpack.c.l.b16 %v79
  %v332 = vunpack.c.l.b16 %v80
  %v333 = vunpack.c.l.b16 %v81
  %v334 = vunpack.c.l.b16 %v82
  %v335 = vunpack.c.l.b16 %v83
  %v336 = vunpack.c.l.b16 %v84
  %v337 = vunpack.c.l.b16 %v85
  %v338 = vunpack.c.l.b16 %v86
  %v339 = vunpack.c.l.b16 %v87
  %v340 = vunpack.c.l.b16 %v88
  %v341 = vunpack.c.l.b16 %v89
  %v342 = vunpack.c.l.b16 %v90
  %v343 = vunpack.c.l.b16 %v91
  %v344 = vunpack.c.l.b16 %v92
  %v345 = vunpack.c.l.b16 %v93
  %v346 = vunpack.c.l.b16 %v94
  %v347 = vunpack.c.l.b16 %v95
  %v348 = vunpack.c.l.b16 %v96
  %v349 = vunpack.c.l.b16 %v97
  %v350 = vunpack.c.l.b16 %v98
  %v351 = vunpack.c.l.b16 %v99
  %v352 = vunpack.c.l.b16 %v100
  %v353 = vunpack.c.l.b16 %v101
  %v354 = vunpack.c.l.b16 %v102
  %v355 = vunpack.c.l.b16 %v103
  %v356 = vunpack.c.l.b16 %v104
  %v357 = vunpack.c.l.b16 %v105
  %v358 = vunpack.c.l.b16 %v106
  %v359 = vunpack.c.l.b16 %v107
  %v360 = vunpack.c.l.b16 %v108
  %v361 = vunpack.c.l.b16 %v109
  %v362 = vunpack.c.l.b16 %v110
  %v363 = vunpack.c.l.b16 %v111
  %v364 = vunpack.c.l.b16 %v112
  %v365 = vunpack.c.l.b16 %v113
  %v366 = vunpack.c.l.b16 %v114
  %v367 = vunpack.c.l.b16 %v115
  %v368 = vunpack.c.l.b16 %v116
  %v369 = vunpack.c.l.b16 %v117
  %v370 = vunpack.c.l.b16 %v118
  %v371 = vunpack.c.l.b16 %v119
  %v372 = vunpack.c.l.b16 %v120
  %v373 = vunpack.c.l.b16 %v121
  %v374 = vunpack.c.l.b16 %v122
  %v375 = vunpack.c.l.b16 %v123
  %v376 = vunpack.c.l.b16 %v124
  %v377 = vunpack.c.l.b16 %v125
  %v378 = vunpack.c.l.b16 %v126
  %v379 = vunpack.c.l.b16 %v127
  %v380 = vunpack.c.l.b16 %v128
  %v381 = vunpack.c.l.b16 %v129
  %v382 = vunpack.c.l.b16 %v130
  %v383 = vunpack.c.l.b16 %v131
  %v384 = vunpack.c.l.b16 %v132
  %v385 = vunpack.c.l.b16 %v133
  %v386 = vunpack.c.l.b16 %v134
  %v387 = vunpack.c.l.b16 %v135
  %v388 = vunpack.c.l.b16 %v136
  %v389 = vunpack.c.l.b16 %v137
  %v390 = vunpack.c.l.b16 %v138
  %v391 = vunpack.c.l.b16 %v139
  %v392 = vunpack.c.l.b16 %v140
  %v393 = vunpack.c.l.b16 %v141
  %v394 = vunpack.c.l.b16 %v142
  %v395 = vunpack.c.l.b16 %v143
  %v396 = vunpack.c.l.b16 %v144
  %v397 = vunpack.c.l.b16 %v145
  %v398 = vunpack.c.l.b16 %v146
  %v399 = vunpack.c.l.b16 %v147
  %v400 = vunpack.c.l.b16 %v148
  %v401 = vunpack.c.l.b16 %v149
  %v402 = vunpack.c.l.b16 %v150
  %v403 = vunpack.c.l.b16 %v151
  %v404 = vunpack.c.l.b16 %v152
  %v405 = vunpack.c.l.b16 %v153
  %v406 = vunpack.c.l.b16 %v154
  %v407 = vunpack.c.l.b16 %v155
  %v408 = vunpack.c.l.b16 %v156
  %v409 = vunpack.c.l.b16 %v157
  %v410 = vunpack.c.l.b16 %v158
  %v411 = vunpack.c.l.b16 %v159
  %v412 = vunpack.c.l.b16 %v160
  %v413 = vunpack.c.l.b16 %v161
  %v414 = vunpack.c.l.b16 %v162
  %v415 = vunpack.c.l.b16 %v163
  %v416 = vunpack.c.l.b16 %v164
  %v417 = vunpack.c.l.b16 %v165
  %v418 = vunpack.c.l.b16 %v166
  %v419 = vunpack.c.l.b16 %v167
  %v420 = vunpack.c.l.b16 %v168
  %v421 = vunpack.c.l.b16 %v169
  %v422 = vunpack.c.l.b16 %v170
  %v423 = vunpack.c.l.b16 %v171
  %v424 = vunpack.c.l.b16 %v172
  %v425 = vunpack.c.l.b16 %v173
  %v426 = vpack.c.b16 %v302, %v301
  %v427 = vpack.c.b16 %v304, %v303
  %v428 = vpack.c.b16 %v306, %v305
  %v429 = vpack.c.b16 %v308, %v307
  %v430 = vpack.c.b16 %v310, %v309
  %v431 = vpack.c.b16 %v312, %v311
  %v432 = vpack.c.b16 %v314, %v313
  %v433 = vpack.c.b16 %v316, %v315
  %v434 = vpack.c.b16 %v318, %v317
  %v435 = vpack.c.b16 %v320, %v319
  %v436 = vpack.c.b16 %v322, %v321
  %v437 = vpack.c.b16 %v324, %v323
  %v438 = vpack.c.b16 %v326, %v325
  %v439 = vpack.c.b16 %v328, %v327
  %v440 = vpack.c.b16 %v330, %v329
  %v441 = vpack.c.b16 %v332, %v331
  %v442 = vpack.c.b16 %v334, %v333
  %v443 = vpack.c.b16 %v336, %v335
  %v444 = vpack.c.b16 %v338, %v337
  %v445 = vpack.c.b16 %v340, %v339
  %v446 = vpack.c.b16 %v342, %v341
  %v447 = vpack.c.b16 %v344, %v343
  %v448 = vpack.c.b16 %v346, %v345
  %v449 = vpack.c.b16 %v348, %v347
  %v450 = vpack.c.b16 %v350, %v349
  %v451 = vpack.c.b16 %v352, %v351
  %v452 = vpack.c.b16 %v354, %v353
  %v453 = vpack.c.b16 %v356, %v355
  %v454 = vpack.c.b16 %v358, %v357
  %v455 = vpack.c.b16 %v360, %v359
  %v456 = vpack.c.b16 %v362, %v361
  %v457 = vpack.c.b16 %v364, %v363
  %v458 = vpack.c.b16 %v366, %v365
  %v459 = vpack.c.b16 %v368, %v367
  %v460 = vpack.c.b16 %v370, %v369
  %v461 = vpack.c.b16 %v372, %v371
  %v462 = vpack.c.b16 %v374, %v373
  %v463 = vpack.c.b16 %v376, %v375
  %v464 = vpack.c.b16 %v378, %v377
  %v465 = vpack.c.b16 %v380, %v379
  %v466 = vpack.c.b16 %v382, %v381
  %v467 = vpack.c.b16 %v384, %v383
  %v468 = vpack.c.b16 %v386, %v385
  %v469 = vpack.c.b16 %v388, %v387
  %v470 = vpack.c.b16 %v390, %v389
  %v471 = vpack.c.b16 %v392, %v391
  %v472 = vpack.c.b16 %v394, %v393
  %v473 = vpack.c.b16 %v396, %v395
  %v474 = vpack.c.b16 %v398, %v397
  %v475 = vpack.c.b16 %v400, %v399
  %v476 = vpack.c.b16 %v402, %v401
  %v477 = vpack.c.b16 %v404, %v403
  %v478 = vpack.c.b16 %v406, %v405
  %v479 = vpack.c.b16 %v408, %v407
  %v480 = vpack.c.b16 %v410, %v409
  %v481 = vpack.c.b16 %v412, %v411
  %v482 = vpack.c.b16 %v414, %v413
  %v483 = vpack.c.b16 %v416, %v415
  %v484 = vpack.c.b16 %v418, %v417
  %v485 = vpack.c.b16 %v420, %v419
  %v486 = vpack.c.b16 %v422, %v421
  %v487 = vpack.c.b16 %v424, %v423
  %v488 = vpack.c.b16 %v425, %v425
  %v491 = vunpack.c.l.b16 %v15
  %v492 = vunpack.c.l.b16 %v16
  %v493 = vpack.c.b16 %v492, %v491
  %vm495 = vcmask 130048
  %v497 = vsel %vm495, %v426, 0
  %v500 = vsel %vm495, %v427, 0
  %v503 = vsel %vm495, %v428, 0
  %v506 = vsel %vm495, %v429, 0
  %v509 = vsel %vm495, %v430, 0
  %v512 = vsel %vm495, %v431, 0
  %v515 = vsel %vm495, %v432, 0
  %v518 = vsel %vm495, %v433, 0
  %v521 = vsel %vm495, %v434, 0
  %v524 = vsel %vm495, %v435, 0
  %v527 = vsel %vm495, %v436, 0
  %v530 = vsel %vm495, %v437, 0
  %v533 = vsel %vm495, %v438, 0
  %v536 = vsel %vm495, %v439, 0
  %v539 = vsel %vm495, %v440, 0
  %v542 = vsel %vm495, %v441, 0
  %v545 = vsel %vm495, %v442, 0
  %v548 = vsel %vm495, %v443, 0
  %v551 = vsel %vm495, %v444, 0
  %v554 = vsel %vm495, %v445, 0
  %v557 = vsel %vm495, %v446, 0
  %v560 = vsel %vm495, %v447, 0
  %v563 = vsel %vm495, %v448, 0
  %v566 = vsel %vm495, %v449, 0
  %v569 = vsel %vm495, %v450, 0
  %v572 = vsel %vm495, %v451, 0
  %v575 = vsel %vm495, %v452, 0
  %v578 = vsel %vm495, %v453, 0
  %v581 = vsel %vm495, %v454, 0
  %v584 = vsel %vm495, %v455, 0
  %v587 = vsel %vm495, %v456, 0
  %v590 = vsel %vm495, %v457, 0
  %v593 = vsel %vm495, %v458, 0
  %v596 = vsel %vm495, %v459, 0
  %v599 = vsel %vm495, %v460, 0
  %v602 = vsel %vm495, %v461, 0
  %v605 = vsel %vm495, %v462, 0
  %v608 = vsel %vm495, %v463, 0
  %v611 = vsel %vm495, %v464, 0
  %v614 = vsel %vm495, %v465, 0
  %v617 = vsel %vm495, %v466, 0
  %v620 = vsel %vm495, %v467, 0
  %v623 = vsel %vm495, %v468, 0
  %v626 = vsel %vm495, %v469, 0
  %v629 = vsel %vm495, %v470, 0
  %v632 = vsel %vm495, %v471, 0
  %v635 = vsel %vm495, %v472, 0
  %v638 = vsel %vm495, %v473, 0
  %v641 = vsel %vm495, %v474, 0
  %v644 = vsel %vm495, %v475, 0
  %v647 = vsel %vm495, %v476, 0
  %v650 = vsel %vm495, %v477, 0
  %v653 = vsel %vm495, %v478, 0
  %v656 = vsel %vm495, %v479, 0
  %v659 = vsel %vm495, %v480, 0
  %v662 = vsel %vm495, %v481, 0
  %v665 = vsel %vm495, %v482, 0
  %v668 = vsel %vm495, %v483, 0
  %v671 = vsel %vm495, %v484, 0
  %v674 = vsel %vm495, %v485, 0
  %v677 = vsel %vm495, %v486, 0
  %v680 = vsel %vm495, %v487, 0
  %v683 = vsel %vm495, %v488, 0
  %685 = vmatpush.bf16.msra.mxu0 0
  %686 = vmatpush.bf16.msra.mxu0 0
  %687 = vmatpush.bf16.msra.mxu0 0
  %688 = vmatpush.bf16.msra.mxu0 0
  %689 = vmatpush.bf16.msra.mxu0 0
  %690 = vmatpush.bf16.msra.mxu0 0
  %691 = vmatpush.bf16.msra.mxu0 0
  %692 = vmatpush.bf16.msra.mxu0 %v493
  %693 = vmatmul.bf16.gmra.mxu0 %v497
  %v694 = vpop.f32.mrf.mxu0
  %v695 = vadd.f32 %v175, %v694
  %v696 = vpop.f32.mrf.mxu0
  %v697 = vadd.f32 %v175, %v696
  %698 = vmatmul.bf16.gmra.mxu0 %v500
  %v699 = vpop.f32.mrf.mxu0
  %v700 = vadd.f32 %v175, %v699
  %v701 = vpop.f32.mrf.mxu0
  %v702 = vadd.f32 %v175, %v701
  %703 = vmatmul.bf16.gmra.mxu0 %v503
  %v704 = vpop.f32.mrf.mxu0
  %v705 = vadd.f32 %v175, %v704
  %v706 = vpop.f32.mrf.mxu0
  %v707 = vadd.f32 %v175, %v706
  %708 = vmatmul.bf16.gmra.mxu0 %v506
  %v709 = vpop.f32.mrf.mxu0
  %v710 = vadd.f32 %v175, %v709
  %v711 = vpop.f32.mrf.mxu0
  %v712 = vadd.f32 %v175, %v711
  %713 = vmatmul.bf16.gmra.mxu0 %v509
  %v714 = vpop.f32.mrf.mxu0
  %v715 = vadd.f32 %v175, %v714
  %v716 = vpop.f32.mrf.mxu0
  %v717 = vadd.f32 %v175, %v716
  %718 = vmatmul.bf16.gmra.mxu0 %v512
  %v719 = vpop.f32.mrf.mxu0
  %v720 = vadd.f32 %v175, %v719
  %v721 = vpop.f32.mrf.mxu0
  %v722 = vadd.f32 %v175, %v721
  %723 = vmatmul.bf16.gmra.mxu0 %v515
  %v724 = vpop.f32.mrf.mxu0
  %v725 = vadd.f32 %v175, %v724
  %v726 = vpop.f32.mrf.mxu0
  %v727 = vadd.f32 %v175, %v726
  %728 = vmatmul.bf16.gmra.mxu0 %v518
  %v729 = vpop.f32.mrf.mxu0
  %v730 = vadd.f32 %v175, %v729
  %v731 = vpop.f32.mrf.mxu0
  %v732 = vadd.f32 %v175, %v731
  %733 = vmatmul.bf16.gmra.mxu0 %v521
  %v734 = vpop.f32.mrf.mxu0
  %v735 = vadd.f32 %v175, %v734
  %v736 = vpop.f32.mrf.mxu0
  %v737 = vadd.f32 %v175, %v736
  %738 = vmatmul.bf16.gmra.mxu0 %v524
  %v739 = vpop.f32.mrf.mxu0
  %v740 = vadd.f32 %v175, %v739
  %v741 = vpop.f32.mrf.mxu0
  %v742 = vadd.f32 %v175, %v741
  %743 = vmatmul.bf16.gmra.mxu0 %v527
  %v744 = vpop.f32.mrf.mxu0
  %v745 = vadd.f32 %v175, %v744
  %v746 = vpop.f32.mrf.mxu0
  %v747 = vadd.f32 %v175, %v746
  %748 = vmatmul.bf16.gmra.mxu0 %v530
  %v749 = vpop.f32.mrf.mxu0
  %v750 = vadd.f32 %v175, %v749
  %v751 = vpop.f32.mrf.mxu0
  %v752 = vadd.f32 %v175, %v751
  %753 = vmatmul.bf16.gmra.mxu0 %v533
  %v754 = vpop.f32.mrf.mxu0
  %v755 = vadd.f32 %v175, %v754
  %v756 = vpop.f32.mrf.mxu0
  %v757 = vadd.f32 %v175, %v756
  %758 = vmatmul.bf16.gmra.mxu0 %v536
  %v759 = vpop.f32.mrf.mxu0
  %v760 = vadd.f32 %v175, %v759
  %v761 = vpop.f32.mrf.mxu0
  %v762 = vadd.f32 %v175, %v761
  %763 = vmatmul.bf16.gmra.mxu0 %v539
  %v764 = vpop.f32.mrf.mxu0
  %v765 = vadd.f32 %v175, %v764
  %v766 = vpop.f32.mrf.mxu0
  %v767 = vadd.f32 %v175, %v766
  %768 = vmatmul.bf16.gmra.mxu0 %v542
  %v769 = vpop.f32.mrf.mxu0
  %v770 = vadd.f32 %v175, %v769
  %v771 = vpop.f32.mrf.mxu0
  %v772 = vadd.f32 %v175, %v771
  %773 = vmatmul.bf16.gmra.mxu0 %v545
  %v774 = vpop.f32.mrf.mxu0
  %v775 = vadd.f32 %v175, %v774
  %v776 = vpop.f32.mrf.mxu0
  %v777 = vadd.f32 %v175, %v776
  %778 = vmatmul.bf16.gmra.mxu0 %v548
  %v779 = vpop.f32.mrf.mxu0
  %v780 = vadd.f32 %v175, %v779
  %v781 = vpop.f32.mrf.mxu0
  %v782 = vadd.f32 %v175, %v781
  %783 = vmatmul.bf16.gmra.mxu0 %v551
  %v784 = vpop.f32.mrf.mxu0
  %v785 = vadd.f32 %v175, %v784
  %v786 = vpop.f32.mrf.mxu0
  %v787 = vadd.f32 %v175, %v786
  %788 = vmatmul.bf16.gmra.mxu0 %v554
  %v789 = vpop.f32.mrf.mxu0
  %v790 = vadd.f32 %v175, %v789
  %v791 = vpop.f32.mrf.mxu0
  %v792 = vadd.f32 %v175, %v791
  %793 = vmatmul.bf16.gmra.mxu0 %v557
  %v794 = vpop.f32.mrf.mxu0
  %v795 = vadd.f32 %v175, %v794
  %v796 = vpop.f32.mrf.mxu0
  %v797 = vadd.f32 %v175, %v796
  %798 = vmatmul.bf16.gmra.mxu0 %v560
  %v799 = vpop.f32.mrf.mxu0
  %v800 = vadd.f32 %v175, %v799
  %v801 = vpop.f32.mrf.mxu0
  %v802 = vadd.f32 %v175, %v801
  %803 = vmatmul.bf16.gmra.mxu0 %v563
  %v804 = vpop.f32.mrf.mxu0
  %v805 = vadd.f32 %v175, %v804
  %v806 = vpop.f32.mrf.mxu0
  %v807 = vadd.f32 %v175, %v806
  %808 = vmatmul.bf16.gmra.mxu0 %v566
  %v809 = vpop.f32.mrf.mxu0
  %v810 = vadd.f32 %v175, %v809
  %v811 = vpop.f32.mrf.mxu0
  %v812 = vadd.f32 %v175, %v811
  %813 = vmatmul.bf16.gmra.mxu0 %v569
  %v814 = vpop.f32.mrf.mxu0
  %v815 = vadd.f32 %v175, %v814
  %v816 = vpop.f32.mrf.mxu0
  %v817 = vadd.f32 %v175, %v816
  %818 = vmatmul.bf16.gmra.mxu0 %v572
  %v819 = vpop.f32.mrf.mxu0
  %v820 = vadd.f32 %v175, %v819
  %v821 = vpop.f32.mrf.mxu0
  %v822 = vadd.f32 %v175, %v821
  %823 = vmatmul.bf16.gmra.mxu0 %v575
  %v824 = vpop.f32.mrf.mxu0
  %v825 = vadd.f32 %v175, %v824
  %v826 = vpop.f32.mrf.mxu0
  %v827 = vadd.f32 %v175, %v826
  %828 = vmatmul.bf16.gmra.mxu0 %v578
  %v829 = vpop.f32.mrf.mxu0
  %v830 = vadd.f32 %v175, %v829
  %v831 = vpop.f32.mrf.mxu0
  %v832 = vadd.f32 %v175, %v831
  %833 = vmatmul.bf16.gmra.mxu0 %v581
  %v834 = vpop.f32.mrf.mxu0
  %v835 = vadd.f32 %v175, %v834
  %v836 = vpop.f32.mrf.mxu0
  %v837 = vadd.f32 %v175, %v836
  %838 = vmatmul.bf16.gmra.mxu0 %v584
  %v839 = vpop.f32.mrf.mxu0
  %v840 = vadd.f32 %v175, %v839
  %v841 = vpop.f32.mrf.mxu0
  %v842 = vadd.f32 %v175, %v841
  %843 = vmatmul.bf16.gmra.mxu0 %v587
  %v844 = vpop.f32.mrf.mxu0
  %v845 = vadd.f32 %v175, %v844
  %v846 = vpop.f32.mrf.mxu0
  %v847 = vadd.f32 %v175, %v846
  %848 = vmatmul.bf16.gmra.mxu0 %v590
  %v849 = vpop.f32.mrf.mxu0
  %v850 = vadd.f32 %v175, %v849
  %v851 = vpop.f32.mrf.mxu0
  %v852 = vadd.f32 %v175, %v851
  %853 = vmatmul.bf16.gmra.mxu0 %v593
  %v854 = vpop.f32.mrf.mxu0
  %v855 = vadd.f32 %v175, %v854
  %v856 = vpop.f32.mrf.mxu0
  %v857 = vadd.f32 %v175, %v856
  %858 = vmatmul.bf16.gmra.mxu0 %v596
  %v859 = vpop.f32.mrf.mxu0
  %v860 = vadd.f32 %v175, %v859
  %v861 = vpop.f32.mrf.mxu0
  %v862 = vadd.f32 %v175, %v861
  %863 = vmatmul.bf16.gmra.mxu0 %v599
  %v864 = vpop.f32.mrf.mxu0
  %v865 = vadd.f32 %v175, %v864
  %v866 = vpop.f32.mrf.mxu0
  %v867 = vadd.f32 %v175, %v866
  %868 = vmatmul.bf16.gmra.mxu0 %v602
  %v869 = vpop.f32.mrf.mxu0
  %v870 = vadd.f32 %v175, %v869
  %v871 = vpop.f32.mrf.mxu0
  %v872 = vadd.f32 %v175, %v871
  %873 = vmatmul.bf16.gmra.mxu0 %v605
  %v874 = vpop.f32.mrf.mxu0
  %v875 = vadd.f32 %v175, %v874
  %v876 = vpop.f32.mrf.mxu0
  %v877 = vadd.f32 %v175, %v876
  %878 = vmatmul.bf16.gmra.mxu0 %v608
  %v879 = vpop.f32.mrf.mxu0
  %v880 = vadd.f32 %v175, %v879
  %v881 = vpop.f32.mrf.mxu0
  %v882 = vadd.f32 %v175, %v881
  %883 = vmatmul.bf16.gmra.mxu0 %v611
  %v884 = vpop.f32.mrf.mxu0
  %v885 = vadd.f32 %v175, %v884
  %v886 = vpop.f32.mrf.mxu0
  %v887 = vadd.f32 %v175, %v886
  %888 = vmatmul.bf16.gmra.mxu0 %v614
  %v889 = vpop.f32.mrf.mxu0
  %v890 = vadd.f32 %v175, %v889
  %v891 = vpop.f32.mrf.mxu0
  %v892 = vadd.f32 %v175, %v891
  %893 = vmatmul.bf16.gmra.mxu0 %v617
  %v894 = vpop.f32.mrf.mxu0
  %v895 = vadd.f32 %v175, %v894
  %v896 = vpop.f32.mrf.mxu0
  %v897 = vadd.f32 %v175, %v896
  %898 = vmatmul.bf16.gmra.mxu0 %v620
  %v899 = vpop.f32.mrf.mxu0
  %v900 = vadd.f32 %v175, %v899
  %v901 = vpop.f32.mrf.mxu0
  %v902 = vadd.f32 %v175, %v901
  %903 = vmatmul.bf16.gmra.mxu0 %v623
  %v904 = vpop.f32.mrf.mxu0
  %v905 = vadd.f32 %v175, %v904
  %v906 = vpop.f32.mrf.mxu0
  %v907 = vadd.f32 %v175, %v906
  %908 = vmatmul.bf16.gmra.mxu0 %v626
  %v909 = vpop.f32.mrf.mxu0
  %v910 = vadd.f32 %v175, %v909
  %v911 = vpop.f32.mrf.mxu0
  %v912 = vadd.f32 %v175, %v911
  %913 = vmatmul.bf16.gmra.mxu0 %v629
  %v914 = vpop.f32.mrf.mxu0
  %v915 = vadd.f32 %v175, %v914
  %v916 = vpop.f32.mrf.mxu0
  %v917 = vadd.f32 %v175, %v916
  %918 = vmatmul.bf16.gmra.mxu0 %v632
  %v919 = vpop.f32.mrf.mxu0
  %v920 = vadd.f32 %v175, %v919
  %v921 = vpop.f32.mrf.mxu0
  %v922 = vadd.f32 %v175, %v921
  %923 = vmatmul.bf16.gmra.mxu0 %v635
  %v924 = vpop.f32.mrf.mxu0
  %v925 = vadd.f32 %v175, %v924
  %v926 = vpop.f32.mrf.mxu0
  %v927 = vadd.f32 %v175, %v926
  %928 = vmatmul.bf16.gmra.mxu0 %v638
  %v929 = vpop.f32.mrf.mxu0
  %v930 = vadd.f32 %v175, %v929
  %v931 = vpop.f32.mrf.mxu0
  %v932 = vadd.f32 %v175, %v931
  %933 = vmatmul.bf16.gmra.mxu0 %v641
  %v934 = vpop.f32.mrf.mxu0
  %v935 = vadd.f32 %v175, %v934
  %v936 = vpop.f32.mrf.mxu0
  %v937 = vadd.f32 %v175, %v936
  %938 = vmatmul.bf16.gmra.mxu0 %v644
  %v939 = vpop.f32.mrf.mxu0
  %v940 = vadd.f32 %v175, %v939
  %v941 = vpop.f32.mrf.mxu0
  %v942 = vadd.f32 %v175, %v941
  %943 = vmatmul.bf16.gmra.mxu0 %v647
  %v944 = vpop.f32.mrf.mxu0
  %v945 = vadd.f32 %v175, %v944
  %v946 = vpop.f32.mrf.mxu0
  %v947 = vadd.f32 %v175, %v946
  %948 = vmatmul.bf16.gmra.mxu0 %v650
  %v949 = vpop.f32.mrf.mxu0
  %v950 = vadd.f32 %v175, %v949
  %v951 = vpop.f32.mrf.mxu0
  %v952 = vadd.f32 %v175, %v951
  %953 = vmatmul.bf16.gmra.mxu0 %v653
  %v954 = vpop.f32.mrf.mxu0
  %v955 = vadd.f32 %v175, %v954
  %v956 = vpop.f32.mrf.mxu0
  %v957 = vadd.f32 %v175, %v956
  %958 = vmatmul.bf16.gmra.mxu0 %v656
  %v959 = vpop.f32.mrf.mxu0
  %v960 = vadd.f32 %v175, %v959
  %v961 = vpop.f32.mrf.mxu0
  %v962 = vadd.f32 %v175, %v961
  %963 = vmatmul.bf16.gmra.mxu0 %v659
  %v964 = vpop.f32.mrf.mxu0
  %v965 = vadd.f32 %v175, %v964
  %v966 = vpop.f32.mrf.mxu0
  %v967 = vadd.f32 %v175, %v966
  %968 = vmatmul.bf16.gmra.mxu0 %v662
  %v969 = vpop.f32.mrf.mxu0
  %v970 = vadd.f32 %v175, %v969
  %v971 = vpop.f32.mrf.mxu0
  %v972 = vadd.f32 %v175, %v971
  %973 = vmatmul.bf16.gmra.mxu0 %v665
  %v974 = vpop.f32.mrf.mxu0
  %v975 = vadd.f32 %v175, %v974
  %v976 = vpop.f32.mrf.mxu0
  %v977 = vadd.f32 %v175, %v976
  %978 = vmatmul.bf16.gmra.mxu0 %v668
  %v979 = vpop.f32.mrf.mxu0
  %v980 = vadd.f32 %v175, %v979
  %v981 = vpop.f32.mrf.mxu0
  %v982 = vadd.f32 %v175, %v981
  %983 = vmatmul.bf16.gmra.mxu0 %v671
  %v984 = vpop.f32.mrf.mxu0
  %v985 = vadd.f32 %v175, %v984
  %v986 = vpop.f32.mrf.mxu0
  %v987 = vadd.f32 %v175, %v986
  %988 = vmatmul.bf16.gmra.mxu0 %v674
  %v989 = vpop.f32.mrf.mxu0
  %v990 = vadd.f32 %v175, %v989
  %v991 = vpop.f32.mrf.mxu0
  %v992 = vadd.f32 %v175, %v991
  %993 = vmatmul.bf16.gmra.mxu0 %v677
  %v994 = vpop.f32.mrf.mxu0
  %v995 = vadd.f32 %v175, %v994
  %v996 = vpop.f32.mrf.mxu0
  %v997 = vadd.f32 %v175, %v996
  %998 = vmatmul.bf16.gmra.mxu0 %v680
  %v999 = vpop.f32.mrf.mxu0
  %v1000 = vadd.f32 %v175, %v999
  %v1001 = vpop.f32.mrf.mxu0
  %v1002 = vadd.f32 %v175, %v1001
  %1003 = vmatmul.bf16.gmra.mxu0 %v683
  %v1004 = vpop.f32.mrf.mxu0
  %v1005 = vadd.f32 %v175, %v1004
  %v1006 = vpop.f32.mrf.mxu0
  %1007 = vdwg.mxu0
  %v1008 = vld [vmem:[%s2 + $0x1] sm:$0x1]
  %v1009 = vld [vmem:[%s2 + $0x2] sm:$0x1]
  %1010 = vadd.xlane.f32.xlu0 %v695
  %v1011 = vpop.xlane.xlu0 %1010
  %1012 = vadd.xlane.f32.xlu0 %v697
  %v1013 = vpop.xlane.xlu0 %1012
  %1014 = vadd.xlane.f32.xlu0 %v700
  %v1015 = vpop.xlane.xlu0 %1014
  %1016 = vadd.xlane.f32.xlu0 %v702
  %v1017 = vpop.xlane.xlu0 %1016
  %1018 = vadd.xlane.f32.xlu0 %v705
  %v1019 = vpop.xlane.xlu0 %1018
  %1020 = vadd.xlane.f32.xlu0 %v707
  %v1021 = vpop.xlane.xlu0 %1020
  %1022 = vadd.xlane.f32.xlu0 %v710
  %v1023 = vpop.xlane.xlu0 %1022
  %1024 = vadd.xlane.f32.xlu0 %v712
  %v1025 = vpop.xlane.xlu0 %1024
  %1026 = vadd.xlane.f32.xlu0 %v715
  %v1027 = vpop.xlane.xlu0 %1026
  %1028 = vadd.xlane.f32.xlu0 %v717
  %v1029 = vpop.xlane.xlu0 %1028
  %1030 = vadd.xlane.f32.xlu0 %v720
  %v1031 = vpop.xlane.xlu0 %1030
  %1032 = vadd.xlane.f32.xlu0 %v722
  %v1033 = vpop.xlane.xlu0 %1032
  %1034 = vadd.xlane.f32.xlu0 %v725
  %v1035 = vpop.xlane.xlu0 %1034
  %1036 = vadd.xlane.f32.xlu0 %v727
  %v1037 = vpop.xlane.xlu0 %1036
  %1038 = vadd.xlane.f32.xlu0 %v730
  %v1039 = vpop.xlane.xlu0 %1038
  %1040 = vadd.xlane.f32.xlu0 %v732
  %v1041 = vpop.xlane.xlu0 %1040
  %1042 = vadd.xlane.f32.xlu0 %v735
  %v1043 = vpop.xlane.xlu0 %1042
  %1044 = vadd.xlane.f32.xlu0 %v737
  %v1045 = vpop.xlane.xlu0 %1044
  %1046 = vadd.xlane.f32.xlu0 %v740
  %v1047 = vpop.xlane.xlu0 %1046
  %1048 = vadd.xlane.f32.xlu0 %v742
  %v1049 = vpop.xlane.xlu0 %1048
  %1050 = vadd.xlane.f32.xlu0 %v745
  %v1051 = vpop.xlane.xlu0 %1050
  %1052 = vadd.xlane.f32.xlu0 %v747
  %v1053 = vpop.xlane.xlu0 %1052
  %1054 = vadd.xlane.f32.xlu0 %v750
  %v1055 = vpop.xlane.xlu0 %1054
  %1056 = vadd.xlane.f32.xlu0 %v752
  %v1057 = vpop.xlane.xlu0 %1056
  %1058 = vadd.xlane.f32.xlu0 %v755
  %v1059 = vpop.xlane.xlu0 %1058
  %1060 = vadd.xlane.f32.xlu0 %v757
  %v1061 = vpop.xlane.xlu0 %1060
  %1062 = vadd.xlane.f32.xlu0 %v760
  %v1063 = vpop.xlane.xlu0 %1062
  %1064 = vadd.xlane.f32.xlu0 %v762
  %v1065 = vpop.xlane.xlu0 %1064
  %1066 = vadd.xlane.f32.xlu0 %v765
  %v1067 = vpop.xlane.xlu0 %1066
  %1068 = vadd.xlane.f32.xlu0 %v767
  %v1069 = vpop.xlane.xlu0 %1068
  %1070 = vadd.xlane.f32.xlu0 %v770
  %v1071 = vpop.xlane.xlu0 %1070
  %1072 = vadd.xlane.f32.xlu0 %v772
  %v1073 = vpop.xlane.xlu0 %1072
  %1074 = vadd.xlane.f32.xlu0 %v775
  %v1075 = vpop.xlane.xlu0 %1074
  %1076 = vadd.xlane.f32.xlu0 %v777
  %v1077 = vpop.xlane.xlu0 %1076
  %1078 = vadd.xlane.f32.xlu0 %v780
  %v1079 = vpop.xlane.xlu0 %1078
  %1080 = vadd.xlane.f32.xlu0 %v782
  %v1081 = vpop.xlane.xlu0 %1080
  %1082 = vadd.xlane.f32.xlu0 %v785
  %v1083 = vpop.xlane.xlu0 %1082
  %1084 = vadd.xlane.f32.xlu0 %v787
  %v1085 = vpop.xlane.xlu0 %1084
  %1086 = vadd.xlane.f32.xlu0 %v790
  %v1087 = vpop.xlane.xlu0 %1086
  %1088 = vadd.xlane.f32.xlu0 %v792
  %v1089 = vpop.xlane.xlu0 %1088
  %1090 = vadd.xlane.f32.xlu0 %v795
  %v1091 = vpop.xlane.xlu0 %1090
  %1092 = vadd.xlane.f32.xlu0 %v797
  %v1093 = vpop.xlane.xlu0 %1092
  %1094 = vadd.xlane.f32.xlu0 %v800
  %v1095 = vpop.xlane.xlu0 %1094
  %1096 = vadd.xlane.f32.xlu0 %v802
  %v1097 = vpop.xlane.xlu0 %1096
  %1098 = vadd.xlane.f32.xlu0 %v805
  %v1099 = vpop.xlane.xlu0 %1098
  %1100 = vadd.xlane.f32.xlu0 %v807
  %v1101 = vpop.xlane.xlu0 %1100
  %1102 = vadd.xlane.f32.xlu0 %v810
  %v1103 = vpop.xlane.xlu0 %1102
  %1104 = vadd.xlane.f32.xlu0 %v812
  %v1105 = vpop.xlane.xlu0 %1104
  %1106 = vadd.xlane.f32.xlu0 %v815
  %v1107 = vpop.xlane.xlu0 %1106
  %1108 = vadd.xlane.f32.xlu0 %v817
  %v1109 = vpop.xlane.xlu0 %1108
  %1110 = vadd.xlane.f32.xlu0 %v820
  %v1111 = vpop.xlane.xlu0 %1110
  %1112 = vadd.xlane.f32.xlu0 %v822
  %v1113 = vpop.xlane.xlu0 %1112
  %1114 = vadd.xlane.f32.xlu0 %v825
  %v1115 = vpop.xlane.xlu0 %1114
  %1116 = vadd.xlane.f32.xlu0 %v827
  %v1117 = vpop.xlane.xlu0 %1116
  %1118 = vadd.xlane.f32.xlu0 %v830
  %v1119 = vpop.xlane.xlu0 %1118
  %1120 = vadd.xlane.f32.xlu0 %v832
  %v1121 = vpop.xlane.xlu0 %1120
  %1122 = vadd.xlane.f32.xlu0 %v835
  %v1123 = vpop.xlane.xlu0 %1122
  %1124 = vadd.xlane.f32.xlu0 %v837
  %v1125 = vpop.xlane.xlu0 %1124
  %1126 = vadd.xlane.f32.xlu0 %v840
  %v1127 = vpop.xlane.xlu0 %1126
  %1128 = vadd.xlane.f32.xlu0 %v842
  %v1129 = vpop.xlane.xlu0 %1128
  %1130 = vadd.xlane.f32.xlu0 %v845
  %v1131 = vpop.xlane.xlu0 %1130
  %1132 = vadd.xlane.f32.xlu0 %v847
  %v1133 = vpop.xlane.xlu0 %1132
  %1134 = vadd.xlane.f32.xlu0 %v850
  %v1135 = vpop.xlane.xlu0 %1134
  %1136 = vadd.xlane.f32.xlu0 %v852
  %v1137 = vpop.xlane.xlu0 %1136
  %1138 = vadd.xlane.f32.xlu0 %v855
  %v1139 = vpop.xlane.xlu0 %1138
  %1140 = vadd.xlane.f32.xlu0 %v857
  %v1141 = vpop.xlane.xlu0 %1140
  %1142 = vadd.xlane.f32.xlu0 %v860
  %v1143 = vpop.xlane.xlu0 %1142
  %1144 = vadd.xlane.f32.xlu0 %v862
  %v1145 = vpop.xlane.xlu0 %1144
  %1146 = vadd.xlane.f32.xlu0 %v865
  %v1147 = vpop.xlane.xlu0 %1146
  %1148 = vadd.xlane.f32.xlu0 %v867
  %v1149 = vpop.xlane.xlu0 %1148
  %1150 = vadd.xlane.f32.xlu0 %v870
  %v1151 = vpop.xlane.xlu0 %1150
  %1152 = vadd.xlane.f32.xlu0 %v872
  %v1153 = vpop.xlane.xlu0 %1152
  %1154 = vadd.xlane.f32.xlu0 %v875
  %v1155 = vpop.xlane.xlu0 %1154
  %1156 = vadd.xlane.f32.xlu0 %v877
  %v1157 = vpop.xlane.xlu0 %1156
  %1158 = vadd.xlane.f32.xlu0 %v880
  %v1159 = vpop.xlane.xlu0 %1158
  %1160 = vadd.xlane.f32.xlu0 %v882
  %v1161 = vpop.xlane.xlu0 %1160
  %1162 = vadd.xlane.f32.xlu0 %v885
  %v1163 = vpop.xlane.xlu0 %1162
  %1164 = vadd.xlane.f32.xlu0 %v887
  %v1165 = vpop.xlane.xlu0 %1164
  %1166 = vadd.xlane.f32.xlu0 %v890
  %v1167 = vpop.xlane.xlu0 %1166
  %1168 = vadd.xlane.f32.xlu0 %v892
  %v1169 = vpop.xlane.xlu0 %1168
  %1170 = vadd.xlane.f32.xlu0 %v895
  %v1171 = vpop.xlane.xlu0 %1170
  %1172 = vadd.xlane.f32.xlu0 %v897
  %v1173 = vpop.xlane.xlu0 %1172
  %1174 = vadd.xlane.f32.xlu0 %v900
  %v1175 = vpop.xlane.xlu0 %1174
  %1176 = vadd.xlane.f32.xlu0 %v902
  %v1177 = vpop.xlane.xlu0 %1176
  %1178 = vadd.xlane.f32.xlu0 %v905
  %v1179 = vpop.xlane.xlu0 %1178
  %1180 = vadd.xlane.f32.xlu0 %v907
  %v1181 = vpop.xlane.xlu0 %1180
  %1182 = vadd.xlane.f32.xlu0 %v910
  %v1183 = vpop.xlane.xlu0 %1182
  %1184 = vadd.xlane.f32.xlu0 %v912
  %v1185 = vpop.xlane.xlu0 %1184
  %1186 = vadd.xlane.f32.xlu0 %v915
  %v1187 = vpop.xlane.xlu0 %1186
  %1188 = vadd.xlane.f32.xlu0 %v917
  %v1189 = vpop.xlane.xlu0 %1188
  %1190 = vadd.xlane.f32.xlu0 %v920
  %v1191 = vpop.xlane.xlu0 %1190
  %1192 = vadd.xlane.f32.xlu0 %v922
  %v1193 = vpop.xlane.xlu0 %1192
  %1194 = vadd.xlane.f32.xlu0 %v925
  %v1195 = vpop.xlane.xlu0 %1194
  %1196 = vadd.xlane.f32.xlu0 %v927
  %v1197 = vpop.xlane.xlu0 %1196
  %1198 = vadd.xlane.f32.xlu0 %v930
  %v1199 = vpop.xlane.xlu0 %1198
  %1200 = vadd.xlane.f32.xlu0 %v932
  %v1201 = vpop.xlane.xlu0 %1200
  %1202 = vadd.xlane.f32.xlu0 %v935
  %v1203 = vpop.xlane.xlu0 %1202
  %1204 = vadd.xlane.f32.xlu0 %v937
  %v1205 = vpop.xlane.xlu0 %1204
  %1206 = vadd.xlane.f32.xlu0 %v940
  %v1207 = vpop.xlane.xlu0 %1206
  %1208 = vadd.xlane.f32.xlu0 %v942
  %v1209 = vpop.xlane.xlu0 %1208
  %1210 = vadd.xlane.f32.xlu0 %v945
  %v1211 = vpop.xlane.xlu0 %1210
  %1212 = vadd.xlane.f32.xlu0 %v947
  %v1213 = vpop.xlane.xlu0 %1212
  %1214 = vadd.xlane.f32.xlu0 %v950
  %v1215 = vpop.xlane.xlu0 %1214
  %1216 = vadd.xlane.f32.xlu0 %v952
  %v1217 = vpop.xlane.xlu0 %1216
  %1218 = vadd.xlane.f32.xlu0 %v955
  %v1219 = vpop.xlane.xlu0 %1218
  %1220 = vadd.xlane.f32.xlu0 %v957
  %v1221 = vpop.xlane.xlu0 %1220
  %1222 = vadd.xlane.f32.xlu0 %v960
  %v1223 = vpop.xlane.xlu0 %1222
  %1224 = vadd.xlane.f32.xlu0 %v962
  %v1225 = vpop.xlane.xlu0 %1224
  %1226 = vadd.xlane.f32.xlu0 %v965
  %v1227 = vpop.xlane.xlu0 %1226
  %1228 = vadd.xlane.f32.xlu0 %v967
  %v1229 = vpop.xlane.xlu0 %1228
  %1230 = vadd.xlane.f32.xlu0 %v970
  %v1231 = vpop.xlane.xlu0 %1230
  %1232 = vadd.xlane.f32.xlu0 %v972
  %v1233 = vpop.xlane.xlu0 %1232
  %1234 = vadd.xlane.f32.xlu0 %v975
  %v1235 = vpop.xlane.xlu0 %1234
  %1236 = vadd.xlane.f32.xlu0 %v977
  %v1237 = vpop.xlane.xlu0 %1236
  %1238 = vadd.xlane.f32.xlu0 %v980
  %v1239 = vpop.xlane.xlu0 %1238
  %1240 = vadd.xlane.f32.xlu0 %v982
  %v1241 = vpop.xlane.xlu0 %1240
  %1242 = vadd.xlane.f32.xlu0 %v985
  %v1243 = vpop.xlane.xlu0 %1242
  %1244 = vadd.xlane.f32.xlu0 %v987
  %v1245 = vpop.xlane.xlu0 %1244
  %1246 = vadd.xlane.f32.xlu0 %v990
  %v1247 = vpop.xlane.xlu0 %1246
  %1248 = vadd.xlane.f32.xlu0 %v992
  %v1249 = vpop.xlane.xlu0 %1248
  %1250 = vadd.xlane.f32.xlu0 %v995
  %v1251 = vpop.xlane.xlu0 %1250
  %1252 = vadd.xlane.f32.xlu0 %v997
  %v1253 = vpop.xlane.xlu0 %1252
  %1254 = vadd.xlane.f32.xlu0 %v1000
  %v1255 = vpop.xlane.xlu0 %1254
  %1256 = vadd.xlane.f32.xlu0 %v1002
  %v1257 = vpop.xlane.xlu0 %1256
  %1258 = vadd.xlane.f32.xlu0 %v1005
  %v1259 = vpop.xlane.xlu0 %1258
  %v1260 = vmul.f32 %v695, %v695
  %v1261 = vmul.f32 %v697, %v697
  %v1262 = vmul.f32 %v700, %v700
  %v1263 = vmul.f32 %v702, %v702
  %v1264 = vmul.f32 %v705, %v705
  %v1265 = vmul.f32 %v707, %v707
  %v1266 = vmul.f32 %v710, %v710
  %v1267 = vmul.f32 %v712, %v712
  %v1268 = vmul.f32 %v715, %v715
  %v1269 = vmul.f32 %v717, %v717
  %v1270 = vmul.f32 %v720, %v720
  %v1271 = vmul.f32 %v722, %v722
  %v1272 = vmul.f32 %v725, %v725
  %v1273 = vmul.f32 %v727, %v727
  %v1274 = vmul.f32 %v730, %v730
  %v1275 = vmul.f32 %v732, %v732
  %v1276 = vmul.f32 %v735, %v735
  %v1277 = vmul.f32 %v737, %v737
  %v1278 = vmul.f32 %v740, %v740
  %v1279 = vmul.f32 %v742, %v742
  %v1280 = vmul.f32 %v745, %v745
  %v1281 = vmul.f32 %v747, %v747
  %v1282 = vmul.f32 %v750, %v750
  %v1283 = vmul.f32 %v752, %v752
  %v1284 = vmul.f32 %v755, %v755
  %v1285 = vmul.f32 %v757, %v757
  %v1286 = vmul.f32 %v760, %v760
  %v1287 = vmul.f32 %v762, %v762
  %v1288 = vmul.f32 %v765, %v765
  %v1289 = vmul.f32 %v767, %v767
  %v1290 = vmul.f32 %v770, %v770
  %v1291 = vmul.f32 %v772, %v772
  %v1292 = vmul.f32 %v775, %v775
  %v1293 = vmul.f32 %v777, %v777
  %v1294 = vmul.f32 %v780, %v780
  %v1295 = vmul.f32 %v782, %v782
  %v1296 = vmul.f32 %v785, %v785
  %v1297 = vmul.f32 %v787, %v787
  %v1298 = vmul.f32 %v790, %v790
  %v1299 = vmul.f32 %v792, %v792
  %v1300 = vmul.f32 %v795, %v795
  %v1301 = vmul.f32 %v797, %v797
  %v1302 = vmul.f32 %v800, %v800
  %v1303 = vmul.f32 %v802, %v802
  %v1304 = vmul.f32 %v805, %v805
  %v1305 = vmul.f32 %v807, %v807
  %v1306 = vmul.f32 %v810, %v810
  %v1307 = vmul.f32 %v812, %v812
  %v1308 = vmul.f32 %v815, %v815
  %v1309 = vmul.f32 %v817, %v817
  %v1310 = vmul.f32 %v820, %v820
  %v1311 = vmul.f32 %v822, %v822
  %v1312 = vmul.f32 %v825, %v825
  %v1313 = vmul.f32 %v827, %v827
  %v1314 = vmul.f32 %v830, %v830
  %v1315 = vmul.f32 %v832, %v832
  %v1316 = vmul.f32 %v835, %v835
  %v1317 = vmul.f32 %v837, %v837
  %v1318 = vmul.f32 %v840, %v840
  %v1319 = vmul.f32 %v842, %v842
  %v1320 = vmul.f32 %v845, %v845
  %v1321 = vmul.f32 %v847, %v847
  %v1322 = vmul.f32 %v850, %v850
  %v1323 = vmul.f32 %v852, %v852
  %v1324 = vmul.f32 %v855, %v855
  %v1325 = vmul.f32 %v857, %v857
  %v1326 = vmul.f32 %v860, %v860
  %v1327 = vmul.f32 %v862, %v862
  %v1328 = vmul.f32 %v865, %v865
  %v1329 = vmul.f32 %v867, %v867
  %v1330 = vmul.f32 %v870, %v870
  %v1331 = vmul.f32 %v872, %v872
  %v1332 = vmul.f32 %v875, %v875
  %v1333 = vmul.f32 %v877, %v877
  %v1334 = vmul.f32 %v880, %v880
  %v1335 = vmul.f32 %v882, %v882
  %v1336 = vmul.f32 %v885, %v885
  %v1337 = vmul.f32 %v887, %v887
  %v1338 = vmul.f32 %v890, %v890
  %v1339 = vmul.f32 %v892, %v892
  %v1340 = vmul.f32 %v895, %v895
  %v1341 = vmul.f32 %v897, %v897
  %v1342 = vmul.f32 %v900, %v900
  %v1343 = vmul.f32 %v902, %v902
  %v1344 = vmul.f32 %v905, %v905
  %v1345 = vmul.f32 %v907, %v907
  %v1346 = vmul.f32 %v910, %v910
  %v1347 = vmul.f32 %v912, %v912
  %v1348 = vmul.f32 %v915, %v915
  %v1349 = vmul.f32 %v917, %v917
  %v1350 = vmul.f32 %v920, %v920
  %v1351 = vmul.f32 %v922, %v922
  %v1352 = vmul.f32 %v925, %v925
  %v1353 = vmul.f32 %v927, %v927
  %v1354 = vmul.f32 %v930, %v930
  %v1355 = vmul.f32 %v932, %v932
  %v1356 = vmul.f32 %v935, %v935
  %v1357 = vmul.f32 %v937, %v937
  %v1358 = vmul.f32 %v940, %v940
  %v1359 = vmul.f32 %v942, %v942
  %v1360 = vmul.f32 %v945, %v945
  %v1361 = vmul.f32 %v947, %v947
  %v1362 = vmul.f32 %v950, %v950
  %v1363 = vmul.f32 %v952, %v952
  %v1364 = vmul.f32 %v955, %v955
  %v1365 = vmul.f32 %v957, %v957
  %v1366 = vmul.f32 %v960, %v960
  %v1367 = vmul.f32 %v962, %v962
  %v1368 = vmul.f32 %v965, %v965
  %v1369 = vmul.f32 %v967, %v967
  %v1370 = vmul.f32 %v970, %v970
  %v1371 = vmul.f32 %v972, %v972
  %v1372 = vmul.f32 %v975, %v975
  %v1373 = vmul.f32 %v977, %v977
  %v1374 = vmul.f32 %v980, %v980
  %v1375 = vmul.f32 %v982, %v982
  %v1376 = vmul.f32 %v985, %v985
  %v1377 = vmul.f32 %v987, %v987
  %v1378 = vmul.f32 %v990, %v990
  %v1379 = vmul.f32 %v992, %v992
  %v1380 = vmul.f32 %v995, %v995
  %v1381 = vmul.f32 %v997, %v997
  %v1382 = vmul.f32 %v1000, %v1000
  %v1383 = vmul.f32 %v1002, %v1002
  %v1384 = vmul.f32 %v1005, %v1005
  %1385 = vadd.xlane.f32.xlu0 %v1260
  %v1386 = vpop.xlane.xlu0 %1385
  %1387 = vadd.xlane.f32.xlu0 %v1261
  %v1388 = vpop.xlane.xlu0 %1387
  %1389 = vadd.xlane.f32.xlu0 %v1262
  %v1390 = vpop.xlane.xlu0 %1389
  %1391 = vadd.xlane.f32.xlu0 %v1263
  %v1392 = vpop.xlane.xlu0 %1391
  %1393 = vadd.xlane.f32.xlu0 %v1264
  %v1394 = vpop.xlane.xlu0 %1393
  %1395 = vadd.xlane.f32.xlu0 %v1265
  %v1396 = vpop.xlane.xlu0 %1395
  %1397 = vadd.xlane.f32.xlu0 %v1266
  %v1398 = vpop.xlane.xlu0 %1397
  %1399 = vadd.xlane.f32.xlu0 %v1267
  %v1400 = vpop.xlane.xlu0 %1399
  %1401 = vadd.xlane.f32.xlu0 %v1268
  %v1402 = vpop.xlane.xlu0 %1401
  %1403 = vadd.xlane.f32.xlu0 %v1269
  %v1404 = vpop.xlane.xlu0 %1403
  %1405 = vadd.xlane.f32.xlu0 %v1270
  %v1406 = vpop.xlane.xlu0 %1405
  %1407 = vadd.xlane.f32.xlu0 %v1271
  %v1408 = vpop.xlane.xlu0 %1407
  %1409 = vadd.xlane.f32.xlu0 %v1272
  %v1410 = vpop.xlane.xlu0 %1409
  %1411 = vadd.xlane.f32.xlu0 %v1273
  %v1412 = vpop.xlane.xlu0 %1411
  %1413 = vadd.xlane.f32.xlu0 %v1274
  %v1414 = vpop.xlane.xlu0 %1413
  %1415 = vadd.xlane.f32.xlu0 %v1275
  %v1416 = vpop.xlane.xlu0 %1415
  %1417 = vadd.xlane.f32.xlu0 %v1276
  %v1418 = vpop.xlane.xlu0 %1417
  %1419 = vadd.xlane.f32.xlu0 %v1277
  %v1420 = vpop.xlane.xlu0 %1419
  %1421 = vadd.xlane.f32.xlu0 %v1278
  %v1422 = vpop.xlane.xlu0 %1421
  %1423 = vadd.xlane.f32.xlu0 %v1279
  %v1424 = vpop.xlane.xlu0 %1423
  %1425 = vadd.xlane.f32.xlu0 %v1280
  %v1426 = vpop.xlane.xlu0 %1425
  %1427 = vadd.xlane.f32.xlu0 %v1281
  %v1428 = vpop.xlane.xlu0 %1427
  %1429 = vadd.xlane.f32.xlu0 %v1282
  %v1430 = vpop.xlane.xlu0 %1429
  %1431 = vadd.xlane.f32.xlu0 %v1283
  %v1432 = vpop.xlane.xlu0 %1431
  %1433 = vadd.xlane.f32.xlu0 %v1284
  %v1434 = vpop.xlane.xlu0 %1433
  %1435 = vadd.xlane.f32.xlu0 %v1285
  %v1436 = vpop.xlane.xlu0 %1435
  %1437 = vadd.xlane.f32.xlu0 %v1286
  %v1438 = vpop.xlane.xlu0 %1437
  %1439 = vadd.xlane.f32.xlu0 %v1287
  %v1440 = vpop.xlane.xlu0 %1439
  %1441 = vadd.xlane.f32.xlu0 %v1288
  %v1442 = vpop.xlane.xlu0 %1441
  %1443 = vadd.xlane.f32.xlu0 %v1289
  %v1444 = vpop.xlane.xlu0 %1443
  %1445 = vadd.xlane.f32.xlu0 %v1290
  %v1446 = vpop.xlane.xlu0 %1445
  %1447 = vadd.xlane.f32.xlu0 %v1291
  %v1448 = vpop.xlane.xlu0 %1447
  %1449 = vadd.xlane.f32.xlu0 %v1292
  %v1450 = vpop.xlane.xlu0 %1449
  %1451 = vadd.xlane.f32.xlu0 %v1293
  %v1452 = vpop.xlane.xlu0 %1451
  %1453 = vadd.xlane.f32.xlu0 %v1294
  %v1454 = vpop.xlane.xlu0 %1453
  %1455 = vadd.xlane.f32.xlu0 %v1295
  %v1456 = vpop.xlane.xlu0 %1455
  %1457 = vadd.xlane.f32.xlu0 %v1296
  %v1458 = vpop.xlane.xlu0 %1457
  %1459 = vadd.xlane.f32.xlu0 %v1297
  %v1460 = vpop.xlane.xlu0 %1459
  %1461 = vadd.xlane.f32.xlu0 %v1298
  %v1462 = vpop.xlane.xlu0 %1461
  %1463 = vadd.xlane.f32.xlu0 %v1299
  %v1464 = vpop.xlane.xlu0 %1463
  %1465 = vadd.xlane.f32.xlu0 %v1300
  %v1466 = vpop.xlane.xlu0 %1465
  %1467 = vadd.xlane.f32.xlu0 %v1301
  %v1468 = vpop.xlane.xlu0 %1467
  %1469 = vadd.xlane.f32.xlu0 %v1302
  %v1470 = vpop.xlane.xlu0 %1469
  %1471 = vadd.xlane.f32.xlu0 %v1303
  %v1472 = vpop.xlane.xlu0 %1471
  %1473 = vadd.xlane.f32.xlu0 %v1304
  %v1474 = vpop.xlane.xlu0 %1473
  %1475 = vadd.xlane.f32.xlu0 %v1305
  %v1476 = vpop.xlane.xlu0 %1475
  %1477 = vadd.xlane.f32.xlu0 %v1306
  %v1478 = vpop.xlane.xlu0 %1477
  %1479 = vadd.xlane.f32.xlu0 %v1307
  %v1480 = vpop.xlane.xlu0 %1479
  %1481 = vadd.xlane.f32.xlu0 %v1308
  %v1482 = vpop.xlane.xlu0 %1481
  %1483 = vadd.xlane.f32.xlu0 %v1309
  %v1484 = vpop.xlane.xlu0 %1483
  %1485 = vadd.xlane.f32.xlu0 %v1310
  %v1486 = vpop.xlane.xlu0 %1485
  %1487 = vadd.xlane.f32.xlu0 %v1311
  %v1488 = vpop.xlane.xlu0 %1487
  %1489 = vadd.xlane.f32.xlu0 %v1312
  %v1490 = vpop.xlane.xlu0 %1489
  %1491 = vadd.xlane.f32.xlu0 %v1313
  %v1492 = vpop.xlane.xlu0 %1491
  %1493 = vadd.xlane.f32.xlu0 %v1314
  %v1494 = vpop.xlane.xlu0 %1493
  %1495 = vadd.xlane.f32.xlu0 %v1315
  %v1496 = vpop.xlane.xlu0 %1495
  %1497 = vadd.xlane.f32.xlu0 %v1316
  %v1498 = vpop.xlane.xlu0 %1497
  %1499 = vadd.xlane.f32.xlu0 %v1317
  %v1500 = vpop.xlane.xlu0 %1499
  %1501 = vadd.xlane.f32.xlu0 %v1318
  %v1502 = vpop.xlane.xlu0 %1501
  %1503 = vadd.xlane.f32.xlu0 %v1319
  %v1504 = vpop.xlane.xlu0 %1503
  %1505 = vadd.xlane.f32.xlu0 %v1320
  %v1506 = vpop.xlane.xlu0 %1505
  %1507 = vadd.xlane.f32.xlu0 %v1321
  %v1508 = vpop.xlane.xlu0 %1507
  %1509 = vadd.xlane.f32.xlu0 %v1322
  %v1510 = vpop.xlane.xlu0 %1509
  %1511 = vadd.xlane.f32.xlu0 %v1323
  %v1512 = vpop.xlane.xlu0 %1511
  %1513 = vadd.xlane.f32.xlu0 %v1324
  %v1514 = vpop.xlane.xlu0 %1513
  %1515 = vadd.xlane.f32.xlu0 %v1325
  %v1516 = vpop.xlane.xlu0 %1515
  %1517 = vadd.xlane.f32.xlu0 %v1326
  %v1518 = vpop.xlane.xlu0 %1517
  %1519 = vadd.xlane.f32.xlu0 %v1327
  %v1520 = vpop.xlane.xlu0 %1519
  %1521 = vadd.xlane.f32.xlu0 %v1328
  %v1522 = vpop.xlane.xlu0 %1521
  %1523 = vadd.xlane.f32.xlu0 %v1329
  %v1524 = vpop.xlane.xlu0 %1523
  %1525 = vadd.xlane.f32.xlu0 %v1330
  %v1526 = vpop.xlane.xlu0 %1525
  %1527 = vadd.xlane.f32.xlu0 %v1331
  %v1528 = vpop.xlane.xlu0 %1527
  %1529 = vadd.xlane.f32.xlu0 %v1332
  %v1530 = vpop.xlane.xlu0 %1529
  %1531 = vadd.xlane.f32.xlu0 %v1333
  %v1532 = vpop.xlane.xlu0 %1531
  %1533 = vadd.xlane.f32.xlu0 %v1334
  %v1534 = vpop.xlane.xlu0 %1533
  %1535 = vadd.xlane.f32.xlu0 %v1335
  %v1536 = vpop.xlane.xlu0 %1535
  %1537 = vadd.xlane.f32.xlu0 %v1336
  %v1538 = vpop.xlane.xlu0 %1537
  %1539 = vadd.xlane.f32.xlu0 %v1337
  %v1540 = vpop.xlane.xlu0 %1539
  %1541 = vadd.xlane.f32.xlu0 %v1338
  %v1542 = vpop.xlane.xlu0 %1541
  %1543 = vadd.xlane.f32.xlu0 %v1339
  %v1544 = vpop.xlane.xlu0 %1543
  %1545 = vadd.xlane.f32.xlu0 %v1340
  %v1546 = vpop.xlane.xlu0 %1545
  %1547 = vadd.xlane.f32.xlu0 %v1341
  %v1548 = vpop.xlane.xlu0 %1547
  %1549 = vadd.xlane.f32.xlu0 %v1342
  %v1550 = vpop.xlane.xlu0 %1549
  %1551 = vadd.xlane.f32.xlu0 %v1343
  %v1552 = vpop.xlane.xlu0 %1551
  %1553 = vadd.xlane.f32.xlu0 %v1344
  %v1554 = vpop.xlane.xlu0 %1553
  %1555 = vadd.xlane.f32.xlu0 %v1345
  %v1556 = vpop.xlane.xlu0 %1555
  %1557 = vadd.xlane.f32.xlu0 %v1346
  %v1558 = vpop.xlane.xlu0 %1557
  %1559 = vadd.xlane.f32.xlu0 %v1347
  %v1560 = vpop.xlane.xlu0 %1559
  %1561 = vadd.xlane.f32.xlu0 %v1348
  %v1562 = vpop.xlane.xlu0 %1561
  %1563 = vadd.xlane.f32.xlu0 %v1349
  %v1564 = vpop.xlane.xlu0 %1563
  %1565 = vadd.xlane.f32.xlu0 %v1350
  %v1566 = vpop.xlane.xlu0 %1565
  %1567 = vadd.xlane.f32.xlu0 %v1351
  %v1568 = vpop.xlane.xlu0 %1567
  %1569 = vadd.xlane.f32.xlu0 %v1352
  %v1570 = vpop.xlane.xlu0 %1569
  %1571 = vadd.xlane.f32.xlu0 %v1353
  %v1572 = vpop.xlane.xlu0 %1571
  %1573 = vadd.xlane.f32.xlu0 %v1354
  %v1574 = vpop.xlane.xlu0 %1573
  %1575 = vadd.xlane.f32.xlu0 %v1355
  %v1576 = vpop.xlane.xlu0 %1575
  %1577 = vadd.xlane.f32.xlu0 %v1356
  %v1578 = vpop.xlane.xlu0 %1577
  %1579 = vadd.xlane.f32.xlu0 %v1357
  %v1580 = vpop.xlane.xlu0 %1579
  %1581 = vadd.xlane.f32.xlu0 %v1358
  %v1582 = vpop.xlane.xlu0 %1581
  %1583 = vadd.xlane.f32.xlu0 %v1359
  %v1584 = vpop.xlane.xlu0 %1583
  %1585 = vadd.xlane.f32.xlu0 %v1360
  %v1586 = vpop.xlane.xlu0 %1585
  %1587 = vadd.xlane.f32.xlu0 %v1361
  %v1588 = vpop.xlane.xlu0 %1587
  %1589 = vadd.xlane.f32.xlu0 %v1362
  %v1590 = vpop.xlane.xlu0 %1589
  %1591 = vadd.xlane.f32.xlu0 %v1363
  %v1592 = vpop.xlane.xlu0 %1591
  %1593 = vadd.xlane.f32.xlu0 %v1364
  %v1594 = vpop.xlane.xlu0 %1593
  %1595 = vadd.xlane.f32.xlu0 %v1365
  %v1596 = vpop.xlane.xlu0 %1595
  %1597 = vadd.xlane.f32.xlu0 %v1366
  %v1598 = vpop.xlane.xlu0 %1597
  %1599 = vadd.xlane.f32.xlu0 %v1367
  %v1600 = vpop.xlane.xlu0 %1599
  %1601 = vadd.xlane.f32.xlu0 %v1368
  %v1602 = vpop.xlane.xlu0 %1601
  %1603 = vadd.xlane.f32.xlu0 %v1369
  %v1604 = vpop.xlane.xlu0 %1603
  %1605 = vadd.xlane.f32.xlu0 %v1370
  %v1606 = vpop.xlane.xlu0 %1605
  %1607 = vadd.xlane.f32.xlu0 %v1371
  %v1608 = vpop.xlane.xlu0 %1607
  %1609 = vadd.xlane.f32.xlu0 %v1372
  %v1610 = vpop.xlane.xlu0 %1609
  %1611 = vadd.xlane.f32.xlu0 %v1373
  %v1612 = vpop.xlane.xlu0 %1611
  %1613 = vadd.xlane.f32.xlu0 %v1374
  %v1614 = vpop.xlane.xlu0 %1613
  %1615 = vadd.xlane.f32.xlu0 %v1375
  %v1616 = vpop.xlane.xlu0 %1615
  %1617 = vadd.xlane.f32.xlu0 %v1376
  %v1618 = vpop.xlane.xlu0 %1617
  %1619 = vadd.xlane.f32.xlu0 %v1377
  %v1620 = vpop.xlane.xlu0 %1619
  %1621 = vadd.xlane.f32.xlu0 %v1378
  %v1622 = vpop.xlane.xlu0 %1621
  %1623 = vadd.xlane.f32.xlu0 %v1379
  %v1624 = vpop.xlane.xlu0 %1623
  %1625 = vadd.xlane.f32.xlu0 %v1380
  %v1626 = vpop.xlane.xlu0 %1625
  %1627 = vadd.xlane.f32.xlu0 %v1381
  %v1628 = vpop.xlane.xlu0 %1627
  %1629 = vadd.xlane.f32.xlu0 %v1382
  %v1630 = vpop.xlane.xlu0 %1629
  %1631 = vadd.xlane.f32.xlu0 %v1383
  %v1632 = vpop.xlane.xlu0 %1631
  %1633 = vadd.xlane.f32.xlu0 %v1384
  %v1634 = vpop.xlane.xlu0 %1633
  %v1635 = vmul.f32 %v1011, 0.03125
  %v1636 = vmul.f32 %v1013, 0.03125
  %v1637 = vmul.f32 %v1015, 0.03125
  %v1638 = vmul.f32 %v1017, 0.03125
  %v1639 = vmul.f32 %v1019, 0.03125
  %v1640 = vmul.f32 %v1021, 0.03125
  %v1641 = vmul.f32 %v1023, 0.03125
  %v1642 = vmul.f32 %v1025, 0.03125
  %v1643 = vmul.f32 %v1027, 0.03125
  %v1644 = vmul.f32 %v1029, 0.03125
  %v1645 = vmul.f32 %v1031, 0.03125
  %v1646 = vmul.f32 %v1033, 0.03125
  %v1647 = vmul.f32 %v1035, 0.03125
  %v1648 = vmul.f32 %v1037, 0.03125
  %v1649 = vmul.f32 %v1039, 0.03125
  %v1650 = vmul.f32 %v1041, 0.03125
  %v1651 = vmul.f32 %v1043, 0.03125
  %v1652 = vmul.f32 %v1045, 0.03125
  %v1653 = vmul.f32 %v1047, 0.03125
  %v1654 = vmul.f32 %v1049, 0.03125
  %v1655 = vmul.f32 %v1051, 0.03125
  %v1656 = vmul.f32 %v1053, 0.03125
  %v1657 = vmul.f32 %v1055, 0.03125
  %v1658 = vmul.f32 %v1057, 0.03125
  %v1659 = vmul.f32 %v1059, 0.03125
  %v1660 = vmul.f32 %v1061, 0.03125
  %v1661 = vmul.f32 %v1063, 0.03125
  %v1662 = vmul.f32 %v1065, 0.03125
  %v1663 = vmul.f32 %v1067, 0.03125
  %v1664 = vmul.f32 %v1069, 0.03125
  %v1665 = vmul.f32 %v1071, 0.03125
  %v1666 = vmul.f32 %v1073, 0.03125
  %v1667 = vmul.f32 %v1075, 0.03125
  %v1668 = vmul.f32 %v1077, 0.03125
  %v1669 = vmul.f32 %v1079, 0.03125
  %v1670 = vmul.f32 %v1081, 0.03125
  %v1671 = vmul.f32 %v1083, 0.03125
  %v1672 = vmul.f32 %v1085, 0.03125
  %v1673 = vmul.f32 %v1087, 0.03125
  %v1674 = vmul.f32 %v1089, 0.03125
  %v1675 = vmul.f32 %v1091, 0.03125
  %v1676 = vmul.f32 %v1093, 0.03125
  %v1677 = vmul.f32 %v1095, 0.03125
  %v1678 = vmul.f32 %v1097, 0.03125
  %v1679 = vmul.f32 %v1099, 0.03125
  %v1680 = vmul.f32 %v1101, 0.03125
  %v1681 = vmul.f32 %v1103, 0.03125
  %v1682 = vmul.f32 %v1105, 0.03125
  %v1683 = vmul.f32 %v1107, 0.03125
  %v1684 = vmul.f32 %v1109, 0.03125
  %v1685 = vmul.f32 %v1111, 0.03125
  %v1686 = vmul.f32 %v1113, 0.03125
  %v1687 = vmul.f32 %v1115, 0.03125
  %v1688 = vmul.f32 %v1117, 0.03125
  %v1689 = vmul.f32 %v1119, 0.03125
  %v1690 = vmul.f32 %v1121, 0.03125
  %v1691 = vmul.f32 %v1123, 0.03125
  %v1692 = vmul.f32 %v1125, 0.03125
  %v1693 = vmul.f32 %v1127, 0.03125
  %v1694 = vmul.f32 %v1129, 0.03125
  %v1695 = vmul.f32 %v1131, 0.03125
  %v1696 = vmul.f32 %v1133, 0.03125
  %v1697 = vmul.f32 %v1135, 0.03125
  %v1698 = vmul.f32 %v1137, 0.03125
  %v1699 = vmul.f32 %v1139, 0.03125
  %v1700 = vmul.f32 %v1141, 0.03125
  %v1701 = vmul.f32 %v1143, 0.03125
  %v1702 = vmul.f32 %v1145, 0.03125
  %v1703 = vmul.f32 %v1147, 0.03125
  %v1704 = vmul.f32 %v1149, 0.03125
  %v1705 = vmul.f32 %v1151, 0.03125
  %v1706 = vmul.f32 %v1153, 0.03125
  %v1707 = vmul.f32 %v1155, 0.03125
  %v1708 = vmul.f32 %v1157, 0.03125
  %v1709 = vmul.f32 %v1159, 0.03125
  %v1710 = vmul.f32 %v1161, 0.03125
  %v1711 = vmul.f32 %v1163, 0.03125
  %v1712 = vmul.f32 %v1165, 0.03125
  %v1713 = vmul.f32 %v1167, 0.03125
  %v1714 = vmul.f32 %v1169, 0.03125
  %v1715 = vmul.f32 %v1171, 0.03125
  %v1716 = vmul.f32 %v1173, 0.03125
  %v1717 = vmul.f32 %v1175, 0.03125
  %v1718 = vmul.f32 %v1177, 0.03125
  %v1719 = vmul.f32 %v1179, 0.03125
  %v1720 = vmul.f32 %v1181, 0.03125
  %v1721 = vmul.f32 %v1183, 0.03125
  %v1722 = vmul.f32 %v1185, 0.03125
  %v1723 = vmul.f32 %v1187, 0.03125
  %v1724 = vmul.f32 %v1189, 0.03125
  %v1725 = vmul.f32 %v1191, 0.03125
  %v1726 = vmul.f32 %v1193, 0.03125
  %v1727 = vmul.f32 %v1195, 0.03125
  %v1728 = vmul.f32 %v1197, 0.03125
  %v1729 = vmul.f32 %v1199, 0.03125
  %v1730 = vmul.f32 %v1201, 0.03125
  %v1731 = vmul.f32 %v1203, 0.03125
  %v1732 = vmul.f32 %v1205, 0.03125
  %v1733 = vmul.f32 %v1207, 0.03125
  %v1734 = vmul.f32 %v1209, 0.03125
  %v1735 = vmul.f32 %v1211, 0.03125
  %v1736 = vmul.f32 %v1213, 0.03125
  %v1737 = vmul.f32 %v1215, 0.03125
  %v1738 = vmul.f32 %v1217, 0.03125
  %v1739 = vmul.f32 %v1219, 0.03125
  %v1740 = vmul.f32 %v1221, 0.03125
  %v1741 = vmul.f32 %v1223, 0.03125
  %v1742 = vmul.f32 %v1225, 0.03125
  %v1743 = vmul.f32 %v1227, 0.03125
  %v1744 = vmul.f32 %v1229, 0.03125
  %v1745 = vmul.f32 %v1231, 0.03125
  %v1746 = vmul.f32 %v1233, 0.03125
  %v1747 = vmul.f32 %v1235, 0.03125
  %v1748 = vmul.f32 %v1237, 0.03125
  %v1749 = vmul.f32 %v1239, 0.03125
  %v1750 = vmul.f32 %v1241, 0.03125
  %v1751 = vmul.f32 %v1243, 0.03125
  %v1752 = vmul.f32 %v1245, 0.03125
  %v1753 = vmul.f32 %v1247, 0.03125
  %v1754 = vmul.f32 %v1249, 0.03125
  %v1755 = vmul.f32 %v1251, 0.03125
  %v1756 = vmul.f32 %v1253, 0.03125
  %v1757 = vmul.f32 %v1255, 0.03125
  %v1758 = vmul.f32 %v1257, 0.03125
  %v1759 = vmul.f32 %v1259, 0.03125
  %v1760 = vmul.f32 %v1386, 0.03125
  %v1761 = vmul.f32 %v1388, 0.03125
  %v1762 = vmul.f32 %v1390, 0.03125
  %v1763 = vmul.f32 %v1392, 0.03125
  %v1764 = vmul.f32 %v1394, 0.03125
  %v1765 = vmul.f32 %v1396, 0.03125
  %v1766 = vmul.f32 %v1398, 0.03125
  %v1767 = vmul.f32 %v1400, 0.03125
  %v1768 = vmul.f32 %v1402, 0.03125
  %v1769 = vmul.f32 %v1404, 0.03125
  %v1770 = vmul.f32 %v1406, 0.03125
  %v1771 = vmul.f32 %v1408, 0.03125
  %v1772 = vmul.f32 %v1410, 0.03125
  %v1773 = vmul.f32 %v1412, 0.03125
  %v1774 = vmul.f32 %v1414, 0.03125
  %v1775 = vmul.f32 %v1416, 0.03125
  %v1776 = vmul.f32 %v1418, 0.03125
  %v1777 = vmul.f32 %v1420, 0.03125
  %v1778 = vmul.f32 %v1422, 0.03125
  %v1779 = vmul.f32 %v1424, 0.03125
  %v1780 = vmul.f32 %v1426, 0.03125
  %v1781 = vmul.f32 %v1428, 0.03125
  %v1782 = vmul.f32 %v1430, 0.03125
  %v1783 = vmul.f32 %v1432, 0.03125
  %v1784 = vmul.f32 %v1434, 0.03125
  %v1785 = vmul.f32 %v1436, 0.03125
  %v1786 = vmul.f32 %v1438, 0.03125
  %v1787 = vmul.f32 %v1440, 0.03125
  %v1788 = vmul.f32 %v1442, 0.03125
  %v1789 = vmul.f32 %v1444, 0.03125
  %v1790 = vmul.f32 %v1446, 0.03125
  %v1791 = vmul.f32 %v1448, 0.03125
  %v1792 = vmul.f32 %v1450, 0.03125
  %v1793 = vmul.f32 %v1452, 0.03125
  %v1794 = vmul.f32 %v1454, 0.03125
  %v1795 = vmul.f32 %v1456, 0.03125
  %v1796 = vmul.f32 %v1458, 0.03125
  %v1797 = vmul.f32 %v1460, 0.03125
  %v1798 = vmul.f32 %v1462, 0.03125
  %v1799 = vmul.f32 %v1464, 0.03125
  %v1800 = vmul.f32 %v1466, 0.03125
  %v1801 = vmul.f32 %v1468, 0.03125
  %v1802 = vmul.f32 %v1470, 0.03125
  %v1803 = vmul.f32 %v1472, 0.03125
  %v1804 = vmul.f32 %v1474, 0.03125
  %v1805 = vmul.f32 %v1476, 0.03125
  %v1806 = vmul.f32 %v1478, 0.03125
  %v1807 = vmul.f32 %v1480, 0.03125
  %v1808 = vmul.f32 %v1482, 0.03125
  %v1809 = vmul.f32 %v1484, 0.03125
  %v1810 = vmul.f32 %v1486, 0.03125
  %v1811 = vmul.f32 %v1488, 0.03125
  %v1812 = vmul.f32 %v1490, 0.03125
  %v1813 = vmul.f32 %v1492, 0.03125
  %v1814 = vmul.f32 %v1494, 0.03125
  %v1815 = vmul.f32 %v1496, 0.03125
  %v1816 = vmul.f32 %v1498, 0.03125
  %v1817 = vmul.f32 %v1500, 0.03125
  %v1818 = vmul.f32 %v1502, 0.03125
  %v1819 = vmul.f32 %v1504, 0.03125
  %v1820 = vmul.f32 %v1506, 0.03125
  %v1821 = vmul.f32 %v1508, 0.03125
  %v1822 = vmul.f32 %v1510, 0.03125
  %v1823 = vmul.f32 %v1512, 0.03125
  %v1824 = vmul.f32 %v1514, 0.03125
  %v1825 = vmul.f32 %v1516, 0.03125
  %v1826 = vmul.f32 %v1518, 0.03125
  %v1827 = vmul.f32 %v1520, 0.03125
  %v1828 = vmul.f32 %v1522, 0.03125
  %v1829 = vmul.f32 %v1524, 0.03125
  %v1830 = vmul.f32 %v1526, 0.03125
  %v1831 = vmul.f32 %v1528, 0.03125
  %v1832 = vmul.f32 %v1530, 0.03125
  %v1833 = vmul.f32 %v1532, 0.03125
  %v1834 = vmul.f32 %v1534, 0.03125
  %v1835 = vmul.f32 %v1536, 0.03125
  %v1836 = vmul.f32 %v1538, 0.03125
  %v1837 = vmul.f32 %v1540, 0.03125
  %v1838 = vmul.f32 %v1542, 0.03125
  %v1839 = vmul.f32 %v1544, 0.03125
  %v1840 = vmul.f32 %v1546, 0.03125
  %v1841 = vmul.f32 %v1548, 0.03125
  %v1842 = vmul.f32 %v1550, 0.03125
  %v1843 = vmul.f32 %v1552, 0.03125
  %v1844 = vmul.f32 %v1554, 0.03125
  %v1845 = vmul.f32 %v1556, 0.03125
  %v1846 = vmul.f32 %v1558, 0.03125
  %v1847 = vmul.f32 %v1560, 0.03125
  %v1848 = vmul.f32 %v1562, 0.03125
  %v1849 = vmul.f32 %v1564, 0.03125
  %v1850 = vmul.f32 %v1566, 0.03125
  %v1851 = vmul.f32 %v1568, 0.03125
  %v1852 = vmul.f32 %v1570, 0.03125
  %v1853 = vmul.f32 %v1572, 0.03125
  %v1854 = vmul.f32 %v1574, 0.03125
  %v1855 = vmul.f32 %v1576, 0.03125
  %v1856 = vmul.f32 %v1578, 0.03125
  %v1857 = vmul.f32 %v1580, 0.03125
  %v1858 = vmul.f32 %v1582, 0.03125
  %v1859 = vmul.f32 %v1584, 0.03125
  %v1860 = vmul.f32 %v1586, 0.03125
  %v1861 = vmul.f32 %v1588, 0.03125
  %v1862 = vmul.f32 %v1590, 0.03125
  %v1863 = vmul.f32 %v1592, 0.03125
  %v1864 = vmul.f32 %v1594, 0.03125
  %v1865 = vmul.f32 %v1596, 0.03125
  %v1866 = vmul.f32 %v1598, 0.03125
  %v1867 = vmul.f32 %v1600, 0.03125
  %v1868 = vmul.f32 %v1602, 0.03125
  %v1869 = vmul.f32 %v1604, 0.03125
  %v1870 = vmul.f32 %v1606, 0.03125
  %v1871 = vmul.f32 %v1608, 0.03125
  %v1872 = vmul.f32 %v1610, 0.03125
  %v1873 = vmul.f32 %v1612, 0.03125
  %v1874 = vmul.f32 %v1614, 0.03125
  %v1875 = vmul.f32 %v1616, 0.03125
  %v1876 = vmul.f32 %v1618, 0.03125
  %v1877 = vmul.f32 %v1620, 0.03125
  %v1878 = vmul.f32 %v1622, 0.03125
  %v1879 = vmul.f32 %v1624, 0.03125
  %v1880 = vmul.f32 %v1626, 0.03125
  %v1881 = vmul.f32 %v1628, 0.03125
  %v1882 = vmul.f32 %v1630, 0.03125
  %v1883 = vmul.f32 %v1632, 0.03125
  %v1884 = vmul.f32 %v1634, 0.03125
  %v1885 = vmul.f32 %v1635, %v1635
  %v1886 = vmul.f32 %v1636, %v1636
  %v1887 = vmul.f32 %v1637, %v1637
  %v1888 = vmul.f32 %v1638, %v1638
  %v1889 = vmul.f32 %v1639, %v1639
  %v1890 = vmul.f32 %v1640, %v1640
  %v1891 = vmul.f32 %v1641, %v1641
  %v1892 = vmul.f32 %v1642, %v1642
  %v1893 = vmul.f32 %v1643, %v1643
  %v1894 = vmul.f32 %v1644, %v1644
  %v1895 = vmul.f32 %v1645, %v1645
  %v1896 = vmul.f32 %v1646, %v1646
  %v1897 = vmul.f32 %v1647, %v1647
  %v1898 = vmul.f32 %v1648, %v1648
  %v1899 = vmul.f32 %v1649, %v1649
  %v1900 = vmul.f32 %v1650, %v1650
  %v1901 = vmul.f32 %v1651, %v1651
  %v1902 = vmul.f32 %v1652, %v1652
  %v1903 = vmul.f32 %v1653, %v1653
  %v1904 = vmul.f32 %v1654, %v1654
  %v1905 = vmul.f32 %v1655, %v1655
  %v1906 = vmul.f32 %v1656, %v1656
  %v1907 = vmul.f32 %v1657, %v1657
  %v1908 = vmul.f32 %v1658, %v1658
  %v1909 = vmul.f32 %v1659, %v1659
  %v1910 = vmul.f32 %v1660, %v1660
  %v1911 = vmul.f32 %v1661, %v1661
  %v1912 = vmul.f32 %v1662, %v1662
  %v1913 = vmul.f32 %v1663, %v1663
  %v1914 = vmul.f32 %v1664, %v1664
  %v1915 = vmul.f32 %v1665, %v1665
  %v1916 = vmul.f32 %v1666, %v1666
  %v1917 = vmul.f32 %v1667, %v1667
  %v1918 = vmul.f32 %v1668, %v1668
  %v1919 = vmul.f32 %v1669, %v1669
  %v1920 = vmul.f32 %v1670, %v1670
  %v1921 = vmul.f32 %v1671, %v1671
  %v1922 = vmul.f32 %v1672, %v1672
  %v1923 = vmul.f32 %v1673, %v1673
  %v1924 = vmul.f32 %v1674, %v1674
  %v1925 = vmul.f32 %v1675, %v1675
  %v1926 = vmul.f32 %v1676, %v1676
  %v1927 = vmul.f32 %v1677, %v1677
  %v1928 = vmul.f32 %v1678, %v1678
  %v1929 = vmul.f32 %v1679, %v1679
  %v1930 = vmul.f32 %v1680, %v1680
  %v1931 = vmul.f32 %v1681, %v1681
  %v1932 = vmul.f32 %v1682, %v1682
  %v1933 = vmul.f32 %v1683, %v1683
  %v1934 = vmul.f32 %v1684, %v1684
  %v1935 = vmul.f32 %v1685, %v1685
  %v1936 = vmul.f32 %v1686, %v1686
  %v1937 = vmul.f32 %v1687, %v1687
  %v1938 = vmul.f32 %v1688, %v1688
  %v1939 = vmul.f32 %v1689, %v1689
  %v1940 = vmul.f32 %v1690, %v1690
  %v1941 = vmul.f32 %v1691, %v1691
  %v1942 = vmul.f32 %v1692, %v1692
  %v1943 = vmul.f32 %v1693, %v1693
  %v1944 = vmul.f32 %v1694, %v1694
  %v1945 = vmul.f32 %v1695, %v1695
  %v1946 = vmul.f32 %v1696, %v1696
  %v1947 = vmul.f32 %v1697, %v1697
  %v1948 = vmul.f32 %v1698, %v1698
  %v1949 = vmul.f32 %v1699, %v1699
  %v1950 = vmul.f32 %v1700, %v1700
  %v1951 = vmul.f32 %v1701, %v1701
  %v1952 = vmul.f32 %v1702, %v1702
  %v1953 = vmul.f32 %v1703, %v1703
  %v1954 = vmul.f32 %v1704, %v1704
  %v1955 = vmul.f32 %v1705, %v1705
  %v1956 = vmul.f32 %v1706, %v1706
  %v1957 = vmul.f32 %v1707, %v1707
  %v1958 = vmul.f32 %v1708, %v1708
  %v1959 = vmul.f32 %v1709, %v1709
  %v1960 = vmul.f32 %v1710, %v1710
  %v1961 = vmul.f32 %v1711, %v1711
  %v1962 = vmul.f32 %v1712, %v1712
  %v1963 = vmul.f32 %v1713, %v1713
  %v1964 = vmul.f32 %v1714, %v1714
  %v1965 = vmul.f32 %v1715, %v1715
  %v1966 = vmul.f32 %v1716, %v1716
  %v1967 = vmul.f32 %v1717, %v1717
  %v1968 = vmul.f32 %v1718, %v1718
  %v1969 = vmul.f32 %v1719, %v1719
  %v1970 = vmul.f32 %v1720, %v1720
  %v1971 = vmul.f32 %v1721, %v1721
  %v1972 = vmul.f32 %v1722, %v1722
  %v1973 = vmul.f32 %v1723, %v1723
  %v1974 = vmul.f32 %v1724, %v1724
  %v1975 = vmul.f32 %v1725, %v1725
  %v1976 = vmul.f32 %v1726, %v1726
  %v1977 = vmul.f32 %v1727, %v1727
  %v1978 = vmul.f32 %v1728, %v1728
  %v1979 = vmul.f32 %v1729, %v1729
  %v1980 = vmul.f32 %v1730, %v1730
  %v1981 = vmul.f32 %v1731, %v1731
  %v1982 = vmul.f32 %v1732, %v1732
  %v1983 = vmul.f32 %v1733, %v1733
  %v1984 = vmul.f32 %v1734, %v1734
  %v1985 = vmul.f32 %v1735, %v1735
  %v1986 = vmul.f32 %v1736, %v1736
  %v1987 = vmul.f32 %v1737, %v1737
  %v1988 = vmul.f32 %v1738, %v1738
  %v1989 = vmul.f32 %v1739, %v1739
  %v1990 = vmul.f32 %v1740, %v1740
  %v1991 = vmul.f32 %v1741, %v1741
  %v1992 = vmul.f32 %v1742, %v1742
  %v1993 = vmul.f32 %v1743, %v1743
  %v1994 = vmul.f32 %v1744, %v1744
  %v1995 = vmul.f32 %v1745, %v1745
  %v1996 = vmul.f32 %v1746, %v1746
  %v1997 = vmul.f32 %v1747, %v1747
  %v1998 = vmul.f32 %v1748, %v1748
  %v1999 = vmul.f32 %v1749, %v1749
  %v2000 = vmul.f32 %v1750, %v1750
  %v2001 = vmul.f32 %v1751, %v1751
  %v2002 = vmul.f32 %v1752, %v1752
  %v2003 = vmul.f32 %v1753, %v1753
  %v2004 = vmul.f32 %v1754, %v1754
  %v2005 = vmul.f32 %v1755, %v1755
  %v2006 = vmul.f32 %v1756, %v1756
  %v2007 = vmul.f32 %v1757, %v1757
  %v2008 = vmul.f32 %v1758, %v1758
  %v2009 = vmul.f32 %v1759, %v1759
  %v2010 = vsub.f32 %v1760, %v1885
  %v2011 = vsub.f32 %v1761, %v1886
  %v2012 = vsub.f32 %v1762, %v1887
  %v2013 = vsub.f32 %v1763, %v1888
  %v2014 = vsub.f32 %v1764, %v1889
  %v2015 = vsub.f32 %v1765, %v1890
  %v2016 = vsub.f32 %v1766, %v1891
  %v2017 = vsub.f32 %v1767, %v1892
  %v2018 = vsub.f32 %v1768, %v1893
  %v2019 = vsub.f32 %v1769, %v1894
  %v2020 = vsub.f32 %v1770, %v1895
  %v2021 = vsub.f32 %v1771, %v1896
  %v2022 = vsub.f32 %v1772, %v1897
  %v2023 = vsub.f32 %v1773, %v1898
  %v2024 = vsub.f32 %v1774, %v1899
  %v2025 = vsub.f32 %v1775, %v1900
  %v2026 = vsub.f32 %v1776, %v1901
  %v2027 = vsub.f32 %v1777, %v1902
  %v2028 = vsub.f32 %v1778, %v1903
  %v2029 = vsub.f32 %v1779, %v1904
  %v2030 = vsub.f32 %v1780, %v1905
  %v2031 = vsub.f32 %v1781, %v1906
  %v2032 = vsub.f32 %v1782, %v1907
  %v2033 = vsub.f32 %v1783, %v1908
  %v2034 = vsub.f32 %v1784, %v1909
  %v2035 = vsub.f32 %v1785, %v1910
  %v2036 = vsub.f32 %v1786, %v1911
  %v2037 = vsub.f32 %v1787, %v1912
  %v2038 = vsub.f32 %v1788, %v1913
  %v2039 = vsub.f32 %v1789, %v1914
  %v2040 = vsub.f32 %v1790, %v1915
  %v2041 = vsub.f32 %v1791, %v1916
  %v2042 = vsub.f32 %v1792, %v1917
  %v2043 = vsub.f32 %v1793, %v1918
  %v2044 = vsub.f32 %v1794, %v1919
  %v2045 = vsub.f32 %v1795, %v1920
  %v2046 = vsub.f32 %v1796, %v1921
  %v2047 = vsub.f32 %v1797, %v1922
  %v2048 = vsub.f32 %v1798, %v1923
  %v2049 = vsub.f32 %v1799, %v1924
  %v2050 = vsub.f32 %v1800, %v1925
  %v2051 = vsub.f32 %v1801, %v1926
  %v2052 = vsub.f32 %v1802, %v1927
  %v2053 = vsub.f32 %v1803, %v1928
  %v2054 = vsub.f32 %v1804, %v1929
  %v2055 = vsub.f32 %v1805, %v1930
  %v2056 = vsub.f32 %v1806, %v1931
  %v2057 = vsub.f32 %v1807, %v1932
  %v2058 = vsub.f32 %v1808, %v1933
  %v2059 = vsub.f32 %v1809, %v1934
  %v2060 = vsub.f32 %v1810, %v1935
  %v2061 = vsub.f32 %v1811, %v1936
  %v2062 = vsub.f32 %v1812, %v1937
  %v2063 = vsub.f32 %v1813, %v1938
  %v2064 = vsub.f32 %v1814, %v1939
  %v2065 = vsub.f32 %v1815, %v1940
  %v2066 = vsub.f32 %v1816, %v1941
  %v2067 = vsub.f32 %v1817, %v1942
  %v2068 = vsub.f32 %v1818, %v1943
  %v2069 = vsub.f32 %v1819, %v1944
  %v2070 = vsub.f32 %v1820, %v1945
  %v2071 = vsub.f32 %v1821, %v1946
  %v2072 = vsub.f32 %v1822, %v1947
  %v2073 = vsub.f32 %v1823, %v1948
  %v2074 = vsub.f32 %v1824, %v1949
  %v2075 = vsub.f32 %v1825, %v1950
  %v2076 = vsub.f32 %v1826, %v1951
  %v2077 = vsub.f32 %v1827, %v1952
  %v2078 = vsub.f32 %v1828, %v1953
  %v2079 = vsub.f32 %v1829, %v1954
  %v2080 = vsub.f32 %v1830, %v1955
  %v2081 = vsub.f32 %v1831, %v1956
  %v2082 = vsub.f32 %v1832, %v1957
  %v2083 = vsub.f32 %v1833, %v1958
  %v2084 = vsub.f32 %v1834, %v1959
  %v2085 = vsub.f32 %v1835, %v1960
  %v2086 = vsub.f32 %v1836, %v1961
  %v2087 = vsub.f32 %v1837, %v1962
  %v2088 = vsub.f32 %v1838, %v1963
  %v2089 = vsub.f32 %v1839, %v1964
  %v2090 = vsub.f32 %v1840, %v1965
  %v2091 = vsub.f32 %v1841, %v1966
  %v2092 = vsub.f32 %v1842, %v1967
  %v2093 = vsub.f32 %v1843, %v1968
  %v2094 = vsub.f32 %v1844, %v1969
  %v2095 = vsub.f32 %v1845, %v1970
  %v2096 = vsub.f32 %v1846, %v1971
  %v2097 = vsub.f32 %v1847, %v1972
  %v2098 = vsub.f32 %v1848, %v1973
  %v2099 = vsub.f32 %v1849, %v1974
  %v2100 = vsub.f32 %v1850, %v1975
  %v2101 = vsub.f32 %v1851, %v1976
  %v2102 = vsub.f32 %v1852, %v1977
  %v2103 = vsub.f32 %v1853, %v1978
  %v2104 = vsub.f32 %v1854, %v1979
  %v2105 = vsub.f32 %v1855, %v1980
  %v2106 = vsub.f32 %v1856, %v1981
  %v2107 = vsub.f32 %v1857, %v1982
  %v2108 = vsub.f32 %v1858, %v1983
  %v2109 = vsub.f32 %v1859, %v1984
  %v2110 = vsub.f32 %v1860, %v1985
  %v2111 = vsub.f32 %v1861, %v1986
  %v2112 = vsub.f32 %v1862, %v1987
  %v2113 = vsub.f32 %v1863, %v1988
  %v2114 = vsub.f32 %v1864, %v1989
  %v2115 = vsub.f32 %v1865, %v1990
  %v2116 = vsub.f32 %v1866, %v1991
  %v2117 = vsub.f32 %v1867, %v1992
  %v2118 = vsub.f32 %v1868, %v1993
  %v2119 = vsub.f32 %v1869, %v1994
  %v2120 = vsub.f32 %v1870, %v1995
  %v2121 = vsub.f32 %v1871, %v1996
  %v2122 = vsub.f32 %v1872, %v1997
  %v2123 = vsub.f32 %v1873, %v1998
  %v2124 = vsub.f32 %v1874, %v1999
  %v2125 = vsub.f32 %v1875, %v2000
  %v2126 = vsub.f32 %v1876, %v2001
  %v2127 = vsub.f32 %v1877, %v2002
  %v2128 = vsub.f32 %v1878, %v2003
  %v2129 = vsub.f32 %v1879, %v2004
  %v2130 = vsub.f32 %v1880, %v2005
  %v2131 = vsub.f32 %v1881, %v2006
  %v2132 = vsub.f32 %v1882, %v2007
  %v2133 = vsub.f32 %v1883, %v2008
  %v2134 = vsub.f32 %v1884, %v2009
  %v2135 = vsub.f32 %v695, %v1635
  %v2136 = vsub.f32 %v697, %v1636
  %v2137 = vsub.f32 %v700, %v1637
  %v2138 = vsub.f32 %v702, %v1638
  %v2139 = vsub.f32 %v705, %v1639
  %v2140 = vsub.f32 %v707, %v1640
  %v2141 = vsub.f32 %v710, %v1641
  %v2142 = vsub.f32 %v712, %v1642
  %v2143 = vsub.f32 %v715, %v1643
  %v2144 = vsub.f32 %v717, %v1644
  %v2145 = vsub.f32 %v720, %v1645
  %v2146 = vsub.f32 %v722, %v1646
  %v2147 = vsub.f32 %v725, %v1647
  %v2148 = vsub.f32 %v727, %v1648
  %v2149 = vsub.f32 %v730, %v1649
  %v2150 = vsub.f32 %v732, %v1650
  %v2151 = vsub.f32 %v735, %v1651
  %v2152 = vsub.f32 %v737, %v1652
  %v2153 = vsub.f32 %v740, %v1653
  %v2154 = vsub.f32 %v742, %v1654
  %v2155 = vsub.f32 %v745, %v1655
  %v2156 = vsub.f32 %v747, %v1656
  %v2157 = vsub.f32 %v750, %v1657
  %v2158 = vsub.f32 %v752, %v1658
  %v2159 = vsub.f32 %v755, %v1659
  %v2160 = vsub.f32 %v757, %v1660
  %v2161 = vsub.f32 %v760, %v1661
  %v2162 = vsub.f32 %v762, %v1662
  %v2163 = vsub.f32 %v765, %v1663
  %v2164 = vsub.f32 %v767, %v1664
  %v2165 = vsub.f32 %v770, %v1665
  %v2166 = vsub.f32 %v772, %v1666
  %v2167 = vsub.f32 %v775, %v1667
  %v2168 = vsub.f32 %v777, %v1668
  %v2169 = vsub.f32 %v780, %v1669
  %v2170 = vsub.f32 %v782, %v1670
  %v2171 = vsub.f32 %v785, %v1671
  %v2172 = vsub.f32 %v787, %v1672
  %v2173 = vsub.f32 %v790, %v1673
  %v2174 = vsub.f32 %v792, %v1674
  %v2175 = vsub.f32 %v795, %v1675
  %v2176 = vsub.f32 %v797, %v1676
  %v2177 = vsub.f32 %v800, %v1677
  %v2178 = vsub.f32 %v802, %v1678
  %v2179 = vsub.f32 %v805, %v1679
  %v2180 = vsub.f32 %v807, %v1680
  %v2181 = vsub.f32 %v810, %v1681
  %v2182 = vsub.f32 %v812, %v1682
  %v2183 = vsub.f32 %v815, %v1683
  %v2184 = vsub.f32 %v817, %v1684
  %v2185 = vsub.f32 %v820, %v1685
  %v2186 = vsub.f32 %v822, %v1686
  %v2187 = vsub.f32 %v825, %v1687
  %v2188 = vsub.f32 %v827, %v1688
  %v2189 = vsub.f32 %v830, %v1689
  %v2190 = vsub.f32 %v832, %v1690
  %v2191 = vsub.f32 %v835, %v1691
  %v2192 = vsub.f32 %v837, %v1692
  %v2193 = vsub.f32 %v840, %v1693
  %v2194 = vsub.f32 %v842, %v1694
  %v2195 = vsub.f32 %v845, %v1695
  %v2196 = vsub.f32 %v847, %v1696
  %v2197 = vsub.f32 %v850, %v1697
  %v2198 = vsub.f32 %v852, %v1698
  %v2199 = vsub.f32 %v855, %v1699
  %v2200 = vsub.f32 %v857, %v1700
  %v2201 = vsub.f32 %v860, %v1701
  %v2202 = vsub.f32 %v862, %v1702
  %v2203 = vsub.f32 %v865, %v1703
  %v2204 = vsub.f32 %v867, %v1704
  %v2205 = vsub.f32 %v870, %v1705
  %v2206 = vsub.f32 %v872, %v1706
  %v2207 = vsub.f32 %v875, %v1707
  %v2208 = vsub.f32 %v877, %v1708
  %v2209 = vsub.f32 %v880, %v1709
  %v2210 = vsub.f32 %v882, %v1710
  %v2211 = vsub.f32 %v885, %v1711
  %v2212 = vsub.f32 %v887, %v1712
  %v2213 = vsub.f32 %v890, %v1713
  %v2214 = vsub.f32 %v892, %v1714
  %v2215 = vsub.f32 %v895, %v1715
  %v2216 = vsub.f32 %v897, %v1716
  %v2217 = vsub.f32 %v900, %v1717
  %v2218 = vsub.f32 %v902, %v1718
  %v2219 = vsub.f32 %v905, %v1719
  %v2220 = vsub.f32 %v907, %v1720
  %v2221 = vsub.f32 %v910, %v1721
  %v2222 = vsub.f32 %v912, %v1722
  %v2223 = vsub.f32 %v915, %v1723
  %v2224 = vsub.f32 %v917, %v1724
  %v2225 = vsub.f32 %v920, %v1725
  %v2226 = vsub.f32 %v922, %v1726
  %v2227 = vsub.f32 %v925, %v1727
  %v2228 = vsub.f32 %v927, %v1728
  %v2229 = vsub.f32 %v930, %v1729
  %v2230 = vsub.f32 %v932, %v1730
  %v2231 = vsub.f32 %v935, %v1731
  %v2232 = vsub.f32 %v937, %v1732
  %v2233 = vsub.f32 %v940, %v1733
  %v2234 = vsub.f32 %v942, %v1734
  %v2235 = vsub.f32 %v945, %v1735
  %v2236 = vsub.f32 %v947, %v1736
  %v2237 = vsub.f32 %v950, %v1737
  %v2238 = vsub.f32 %v952, %v1738
  %v2239 = vsub.f32 %v955, %v1739
  %v2240 = vsub.f32 %v957, %v1740
  %v2241 = vsub.f32 %v960, %v1741
  %v2242 = vsub.f32 %v962, %v1742
  %v2243 = vsub.f32 %v965, %v1743
  %v2244 = vsub.f32 %v967, %v1744
  %v2245 = vsub.f32 %v970, %v1745
  %v2246 = vsub.f32 %v972, %v1746
  %v2247 = vsub.f32 %v975, %v1747
  %v2248 = vsub.f32 %v977, %v1748
  %v2249 = vsub.f32 %v980, %v1749
  %v2250 = vsub.f32 %v982, %v1750
  %v2251 = vsub.f32 %v985, %v1751
  %v2252 = vsub.f32 %v987, %v1752
  %v2253 = vsub.f32 %v990, %v1753
  %v2254 = vsub.f32 %v992, %v1754
  %v2255 = vsub.f32 %v995, %v1755
  %v2256 = vsub.f32 %v997, %v1756
  %v2257 = vsub.f32 %v1000, %v1757
  %v2258 = vsub.f32 %v1002, %v1758
  %v2259 = vsub.f32 %v1005, %v1759
  %v2260 = vadd.f32 %v2010, 1e-05
  %v2261 = vadd.f32 %v2011, 1e-05
  %v2262 = vadd.f32 %v2012, 1e-05
  %v2263 = vadd.f32 %v2013, 1e-05
  %v2264 = vadd.f32 %v2014, 1e-05
  %v2265 = vadd.f32 %v2015, 1e-05
  %v2266 = vadd.f32 %v2016, 1e-05
  %v2267 = vadd.f32 %v2017, 1e-05
  %v2268 = vadd.f32 %v2018, 1e-05
  %v2269 = vadd.f32 %v2019, 1e-05
  %v2270 = vadd.f32 %v2020, 1e-05
  %v2271 = vadd.f32 %v2021, 1e-05
  %v2272 = vadd.f32 %v2022, 1e-05
  %v2273 = vadd.f32 %v2023, 1e-05
  %v2274 = vadd.f32 %v2024, 1e-05
  %v2275 = vadd.f32 %v2025, 1e-05
  %v2276 = vadd.f32 %v2026, 1e-05
  %v2277 = vadd.f32 %v2027, 1e-05
  %v2278 = vadd.f32 %v2028, 1e-05
  %v2279 = vadd.f32 %v2029, 1e-05
  %v2280 = vadd.f32 %v2030, 1e-05
  %v2281 = vadd.f32 %v2031, 1e-05
  %v2282 = vadd.f32 %v2032, 1e-05
  %v2283 = vadd.f32 %v2033, 1e-05
  %v2284 = vadd.f32 %v2034, 1e-05
  %v2285 = vadd.f32 %v2035, 1e-05
  %v2286 = vadd.f32 %v2036, 1e-05
  %v2287 = vadd.f32 %v2037, 1e-05
  %v2288 = vadd.f32 %v2038, 1e-05
  %v2289 = vadd.f32 %v2039, 1e-05
  %v2290 = vadd.f32 %v2040, 1e-05
  %v2291 = vadd.f32 %v2041, 1e-05
  %v2292 = vadd.f32 %v2042, 1e-05
  %v2293 = vadd.f32 %v2043, 1e-05
  %v2294 = vadd.f32 %v2044, 1e-05
  %v2295 = vadd.f32 %v2045, 1e-05
  %v2296 = vadd.f32 %v2046, 1e-05
  %v2297 = vadd.f32 %v2047, 1e-05
  %v2298 = vadd.f32 %v2048, 1e-05
  %v2299 = vadd.f32 %v2049, 1e-05
  %v2300 = vadd.f32 %v2050, 1e-05
  %v2301 = vadd.f32 %v2051, 1e-05
  %v2302 = vadd.f32 %v2052, 1e-05
  %v2303 = vadd.f32 %v2053, 1e-05
  %v2304 = vadd.f32 %v2054, 1e-05
  %v2305 = vadd.f32 %v2055, 1e-05
  %v2306 = vadd.f32 %v2056, 1e-05
  %v2307 = vadd.f32 %v2057, 1e-05
  %v2308 = vadd.f32 %v2058, 1e-05
  %v2309 = vadd.f32 %v2059, 1e-05
  %v2310 = vadd.f32 %v2060, 1e-05
  %v2311 = vadd.f32 %v2061, 1e-05
  %v2312 = vadd.f32 %v2062, 1e-05
  %v2313 = vadd.f32 %v2063, 1e-05
  %v2314 = vadd.f32 %v2064, 1e-05
  %v2315 = vadd.f32 %v2065, 1e-05
  %v2316 = vadd.f32 %v2066, 1e-05
  %v2317 = vadd.f32 %v2067, 1e-05
  %v2318 = vadd.f32 %v2068, 1e-05
  %v2319 = vadd.f32 %v2069, 1e-05
  %v2320 = vadd.f32 %v2070, 1e-05
  %v2321 = vadd.f32 %v2071, 1e-05
  %v2322 = vadd.f32 %v2072, 1e-05
  %v2323 = vadd.f32 %v2073, 1e-05
  %v2324 = vadd.f32 %v2074, 1e-05
  %v2325 = vadd.f32 %v2075, 1e-05
  %v2326 = vadd.f32 %v2076, 1e-05
  %v2327 = vadd.f32 %v2077, 1e-05
  %v2328 = vadd.f32 %v2078, 1e-05
  %v2329 = vadd.f32 %v2079, 1e-05
  %v2330 = vadd.f32 %v2080, 1e-05
  %v2331 = vadd.f32 %v2081, 1e-05
  %v2332 = vadd.f32 %v2082, 1e-05
  %v2333 = vadd.f32 %v2083, 1e-05
  %v2334 = vadd.f32 %v2084, 1e-05
  %v2335 = vadd.f32 %v2085, 1e-05
  %v2336 = vadd.f32 %v2086, 1e-05
  %v2337 = vadd.f32 %v2087, 1e-05
  %v2338 = vadd.f32 %v2088, 1e-05
  %v2339 = vadd.f32 %v2089, 1e-05
  %v2340 = vadd.f32 %v2090, 1e-05
  %v2341 = vadd.f32 %v2091, 1e-05
  %v2342 = vadd.f32 %v2092, 1e-05
  %v2343 = vadd.f32 %v2093, 1e-05
  %v2344 = vadd.f32 %v2094, 1e-05
  %v2345 = vadd.f32 %v2095, 1e-05
  %v2346 = vadd.f32 %v2096, 1e-05
  %v2347 = vadd.f32 %v2097, 1e-05
  %v2348 = vadd.f32 %v2098, 1e-05
  %v2349 = vadd.f32 %v2099, 1e-05
  %v2350 = vadd.f32 %v2100, 1e-05
  %v2351 = vadd.f32 %v2101, 1e-05
  %v2352 = vadd.f32 %v2102, 1e-05
  %v2353 = vadd.f32 %v2103, 1e-05
  %v2354 = vadd.f32 %v2104, 1e-05
  %v2355 = vadd.f32 %v2105, 1e-05
  %v2356 = vadd.f32 %v2106, 1e-05
  %v2357 = vadd.f32 %v2107, 1e-05
  %v2358 = vadd.f32 %v2108, 1e-05
  %v2359 = vadd.f32 %v2109, 1e-05
  %v2360 = vadd.f32 %v2110, 1e-05
  %v2361 = vadd.f32 %v2111, 1e-05
  %v2362 = vadd.f32 %v2112, 1e-05
  %v2363 = vadd.f32 %v2113, 1e-05
  %v2364 = vadd.f32 %v2114, 1e-05
  %v2365 = vadd.f32 %v2115, 1e-05
  %v2366 = vadd.f32 %v2116, 1e-05
  %v2367 = vadd.f32 %v2117, 1e-05
  %v2368 = vadd.f32 %v2118, 1e-05
  %v2369 = vadd.f32 %v2119, 1e-05
  %v2370 = vadd.f32 %v2120, 1e-05
  %v2371 = vadd.f32 %v2121, 1e-05
  %v2372 = vadd.f32 %v2122, 1e-05
  %v2373 = vadd.f32 %v2123, 1e-05
  %v2374 = vadd.f32 %v2124, 1e-05
  %v2375 = vadd.f32 %v2125, 1e-05
  %v2376 = vadd.f32 %v2126, 1e-05
  %v2377 = vadd.f32 %v2127, 1e-05
  %v2378 = vadd.f32 %v2128, 1e-05
  %v2379 = vadd.f32 %v2129, 1e-05
  %v2380 = vadd.f32 %v2130, 1e-05
  %v2381 = vadd.f32 %v2131, 1e-05
  %v2382 = vadd.f32 %v2132, 1e-05
  %v2383 = vadd.f32 %v2133, 1e-05
  %v2384 = vadd.f32 %v2134, 1e-05
  %v2385 = vrsqrt.pop %v2260
  %v2386 = vmul.f32 %v2385, %v2260
  %v2387 = vmul.f32 %v2386, %v2385
  %v2388 = vmul.f32 0.5, %v2387
  %v2389 = vsub.f32 1.5, %v2388
  %v2390 = vmul.f32 %v2385, %v2389
  %vm2391 = vweird.f32 %v2260
  %vm2392 = vweird.f32 %v2385
  %vm2393 = vmor %vm2391, %vm2392
  %v2394 = vsel %vm2393, %v2385, %v2390
  %v2395 = vrsqrt.pop %v2261
  %v2396 = vmul.f32 %v2395, %v2261
  %v2397 = vmul.f32 %v2396, %v2395
  %v2398 = vmul.f32 0.5, %v2397
  %v2399 = vsub.f32 1.5, %v2398
  %v2400 = vmul.f32 %v2395, %v2399
  %vm2401 = vweird.f32 %v2261
  %vm2402 = vweird.f32 %v2395
  %vm2403 = vmor %vm2401, %vm2402
  %v2404 = vsel %vm2403, %v2395, %v2400
  %v2405 = vrsqrt.pop %v2262
  %v2406 = vmul.f32 %v2405, %v2262
  %v2407 = vmul.f32 %v2406, %v2405
  %v2408 = vmul.f32 0.5, %v2407
  %v2409 = vsub.f32 1.5, %v2408
  %v2410 = vmul.f32 %v2405, %v2409
  %vm2411 = vweird.f32 %v2262
  %vm2412 = vweird.f32 %v2405
  %vm2413 = vmor %vm2411, %vm2412
  %v2414 = vsel %vm2413, %v2405, %v2410
  %v2415 = vrsqrt.pop %v2263
  %v2416 = vmul.f32 %v2415, %v2263
  %v2417 = vmul.f32 %v2416, %v2415
  %v2418 = vmul.f32 0.5, %v2417
  %v2419 = vsub.f32 1.5, %v2418
  %v2420 = vmul.f32 %v2415, %v2419
  %vm2421 = vweird.f32 %v2263
  %vm2422 = vweird.f32 %v2415
  %vm2423 = vmor %vm2421, %vm2422
  %v2424 = vsel %vm2423, %v2415, %v2420
  %v2425 = vrsqrt.pop %v2264
  %v2426 = vmul.f32 %v2425, %v2264
  %v2427 = vmul.f32 %v2426, %v2425
  %v2428 = vmul.f32 0.5, %v2427
  %v2429 = vsub.f32 1.5, %v2428
  %v2430 = vmul.f32 %v2425, %v2429
  %vm2431 = vweird.f32 %v2264
  %vm2432 = vweird.f32 %v2425
  %vm2433 = vmor %vm2431, %vm2432
  %v2434 = vsel %vm2433, %v2425, %v2430
  %v2435 = vrsqrt.pop %v2265
  %v2436 = vmul.f32 %v2435, %v2265
  %v2437 = vmul.f32 %v2436, %v2435
  %v2438 = vmul.f32 0.5, %v2437
  %v2439 = vsub.f32 1.5, %v2438
  %v2440 = vmul.f32 %v2435, %v2439
  %vm2441 = vweird.f32 %v2265
  %vm2442 = vweird.f32 %v2435
  %vm2443 = vmor %vm2441, %vm2442
  %v2444 = vsel %vm2443, %v2435, %v2440
  %v2445 = vrsqrt.pop %v2266
  %v2446 = vmul.f32 %v2445, %v2266
  %v2447 = vmul.f32 %v2446, %v2445
  %v2448 = vmul.f32 0.5, %v2447
  %v2449 = vsub.f32 1.5, %v2448
  %v2450 = vmul.f32 %v2445, %v2449
  %vm2451 = vweird.f32 %v2266
  %vm2452 = vweird.f32 %v2445
  %vm2453 = vmor %vm2451, %vm2452
  %v2454 = vsel %vm2453, %v2445, %v2450
  %v2455 = vrsqrt.pop %v2267
  %v2456 = vmul.f32 %v2455, %v2267
  %v2457 = vmul.f32 %v2456, %v2455
  %v2458 = vmul.f32 0.5, %v2457
  %v2459 = vsub.f32 1.5, %v2458
  %v2460 = vmul.f32 %v2455, %v2459
  %vm2461 = vweird.f32 %v2267
  %vm2462 = vweird.f32 %v2455
  %vm2463 = vmor %vm2461, %vm2462
  %v2464 = vsel %vm2463, %v2455, %v2460
  %v2465 = vrsqrt.pop %v2268
  %v2466 = vmul.f32 %v2465, %v2268
  %v2467 = vmul.f32 %v2466, %v2465
  %v2468 = vmul.f32 0.5, %v2467
  %v2469 = vsub.f32 1.5, %v2468
  %v2470 = vmul.f32 %v2465, %v2469
  %vm2471 = vweird.f32 %v2268
  %vm2472 = vweird.f32 %v2465
  %vm2473 = vmor %vm2471, %vm2472
  %v2474 = vsel %vm2473, %v2465, %v2470
  %v2475 = vrsqrt.pop %v2269
  %v2476 = vmul.f32 %v2475, %v2269
  %v2477 = vmul.f32 %v2476, %v2475
  %v2478 = vmul.f32 0.5, %v2477
  %v2479 = vsub.f32 1.5, %v2478
  %v2480 = vmul.f32 %v2475, %v2479
  %vm2481 = vweird.f32 %v2269
  %vm2482 = vweird.f32 %v2475
  %vm2483 = vmor %vm2481, %vm2482
  %v2484 = vsel %vm2483, %v2475, %v2480
  %v2485 = vrsqrt.pop %v2270
  %v2486 = vmul.f32 %v2485, %v2270
  %v2487 = vmul.f32 %v2486, %v2485
  %v2488 = vmul.f32 0.5, %v2487
  %v2489 = vsub.f32 1.5, %v2488
  %v2490 = vmul.f32 %v2485, %v2489
  %vm2491 = vweird.f32 %v2270
  %vm2492 = vweird.f32 %v2485
  %vm2493 = vmor %vm2491, %vm2492
  %v2494 = vsel %vm2493, %v2485, %v2490
  %v2495 = vrsqrt.pop %v2271
  %v2496 = vmul.f32 %v2495, %v2271
  %v2497 = vmul.f32 %v2496, %v2495
  %v2498 = vmul.f32 0.5, %v2497
  %v2499 = vsub.f32 1.5, %v2498
  %v2500 = vmul.f32 %v2495, %v2499
  %vm2501 = vweird.f32 %v2271
  %vm2502 = vweird.f32 %v2495
  %vm2503 = vmor %vm2501, %vm2502
  %v2504 = vsel %vm2503, %v2495, %v2500
  %v2505 = vrsqrt.pop %v2272
  %v2506 = vmul.f32 %v2505, %v2272
  %v2507 = vmul.f32 %v2506, %v2505
  %v2508 = vmul.f32 0.5, %v2507
  %v2509 = vsub.f32 1.5, %v2508
  %v2510 = vmul.f32 %v2505, %v2509
  %vm2511 = vweird.f32 %v2272
  %vm2512 = vweird.f32 %v2505
  %vm2513 = vmor %vm2511, %vm2512
  %v2514 = vsel %vm2513, %v2505, %v2510
  %v2515 = vrsqrt.pop %v2273
  %v2516 = vmul.f32 %v2515, %v2273
  %v2517 = vmul.f32 %v2516, %v2515
  %v2518 = vmul.f32 0.5, %v2517
  %v2519 = vsub.f32 1.5, %v2518
  %v2520 = vmul.f32 %v2515, %v2519
  %vm2521 = vweird.f32 %v2273
  %vm2522 = vweird.f32 %v2515
  %vm2523 = vmor %vm2521, %vm2522
  %v2524 = vsel %vm2523, %v2515, %v2520
  %v2525 = vrsqrt.pop %v2274
  %v2526 = vmul.f32 %v2525, %v2274
  %v2527 = vmul.f32 %v2526, %v2525
  %v2528 = vmul.f32 0.5, %v2527
  %v2529 = vsub.f32 1.5, %v2528
  %v2530 = vmul.f32 %v2525, %v2529
  %vm2531 = vweird.f32 %v2274
  %vm2532 = vweird.f32 %v2525
  %vm2533 = vmor %vm2531, %vm2532
  %v2534 = vsel %vm2533, %v2525, %v2530
  %v2535 = vrsqrt.pop %v2275
  %v2536 = vmul.f32 %v2535, %v2275
  %v2537 = vmul.f32 %v2536, %v2535
  %v2538 = vmul.f32 0.5, %v2537
  %v2539 = vsub.f32 1.5, %v2538
  %v2540 = vmul.f32 %v2535, %v2539
  %vm2541 = vweird.f32 %v2275
  %vm2542 = vweird.f32 %v2535
  %vm2543 = vmor %vm2541, %vm2542
  %v2544 = vsel %vm2543, %v2535, %v2540
  %v2545 = vrsqrt.pop %v2276
  %v2546 = vmul.f32 %v2545, %v2276
  %v2547 = vmul.f32 %v2546, %v2545
  %v2548 = vmul.f32 0.5, %v2547
  %v2549 = vsub.f32 1.5, %v2548
  %v2550 = vmul.f32 %v2545, %v2549
  %vm2551 = vweird.f32 %v2276
  %vm2552 = vweird.f32 %v2545
  %vm2553 = vmor %vm2551, %vm2552
  %v2554 = vsel %vm2553, %v2545, %v2550
  %v2555 = vrsqrt.pop %v2277
  %v2556 = vmul.f32 %v2555, %v2277
  %v2557 = vmul.f32 %v2556, %v2555
  %v2558 = vmul.f32 0.5, %v2557
  %v2559 = vsub.f32 1.5, %v2558
  %v2560 = vmul.f32 %v2555, %v2559
  %vm2561 = vweird.f32 %v2277
  %vm2562 = vweird.f32 %v2555
  %vm2563 = vmor %vm2561, %vm2562
  %v2564 = vsel %vm2563, %v2555, %v2560
  %v2565 = vrsqrt.pop %v2278
  %v2566 = vmul.f32 %v2565, %v2278
  %v2567 = vmul.f32 %v2566, %v2565
  %v2568 = vmul.f32 0.5, %v2567
  %v2569 = vsub.f32 1.5, %v2568
  %v2570 = vmul.f32 %v2565, %v2569
  %vm2571 = vweird.f32 %v2278
  %vm2572 = vweird.f32 %v2565
  %vm2573 = vmor %vm2571, %vm2572
  %v2574 = vsel %vm2573, %v2565, %v2570
  %v2575 = vrsqrt.pop %v2279
  %v2576 = vmul.f32 %v2575, %v2279
  %v2577 = vmul.f32 %v2576, %v2575
  %v2578 = vmul.f32 0.5, %v2577
  %v2579 = vsub.f32 1.5, %v2578
  %v2580 = vmul.f32 %v2575, %v2579
  %vm2581 = vweird.f32 %v2279
  %vm2582 = vweird.f32 %v2575
  %vm2583 = vmor %vm2581, %vm2582
  %v2584 = vsel %vm2583, %v2575, %v2580
  %v2585 = vrsqrt.pop %v2280
  %v2586 = vmul.f32 %v2585, %v2280
  %v2587 = vmul.f32 %v2586, %v2585
  %v2588 = vmul.f32 0.5, %v2587
  %v2589 = vsub.f32 1.5, %v2588
  %v2590 = vmul.f32 %v2585, %v2589
  %vm2591 = vweird.f32 %v2280
  %vm2592 = vweird.f32 %v2585
  %vm2593 = vmor %vm2591, %vm2592
  %v2594 = vsel %vm2593, %v2585, %v2590
  %v2595 = vrsqrt.pop %v2281
  %v2596 = vmul.f32 %v2595, %v2281
  %v2597 = vmul.f32 %v2596, %v2595
  %v2598 = vmul.f32 0.5, %v2597
  %v2599 = vsub.f32 1.5, %v2598
  %v2600 = vmul.f32 %v2595, %v2599
  %vm2601 = vweird.f32 %v2281
  %vm2602 = vweird.f32 %v2595
  %vm2603 = vmor %vm2601, %vm2602
  %v2604 = vsel %vm2603, %v2595, %v2600
  %v2605 = vrsqrt.pop %v2282
  %v2606 = vmul.f32 %v2605, %v2282
  %v2607 = vmul.f32 %v2606, %v2605
  %v2608 = vmul.f32 0.5, %v2607
  %v2609 = vsub.f32 1.5, %v2608
  %v2610 = vmul.f32 %v2605, %v2609
  %vm2611 = vweird.f32 %v2282
  %vm2612 = vweird.f32 %v2605
  %vm2613 = vmor %vm2611, %vm2612
  %v2614 = vsel %vm2613, %v2605, %v2610
  %v2615 = vrsqrt.pop %v2283
  %v2616 = vmul.f32 %v2615, %v2283
  %v2617 = vmul.f32 %v2616, %v2615
  %v2618 = vmul.f32 0.5, %v2617
  %v2619 = vsub.f32 1.5, %v2618
  %v2620 = vmul.f32 %v2615, %v2619
  %vm2621 = vweird.f32 %v2283
  %vm2622 = vweird.f32 %v2615
  %vm2623 = vmor %vm2621, %vm2622
  %v2624 = vsel %vm2623, %v2615, %v2620
  %v2625 = vrsqrt.pop %v2284
  %v2626 = vmul.f32 %v2625, %v2284
  %v2627 = vmul.f32 %v2626, %v2625
  %v2628 = vmul.f32 0.5, %v2627
  %v2629 = vsub.f32 1.5, %v2628
  %v2630 = vmul.f32 %v2625, %v2629
  %vm2631 = vweird.f32 %v2284
  %vm2632 = vweird.f32 %v2625
  %vm2633 = vmor %vm2631, %vm2632
  %v2634 = vsel %vm2633, %v2625, %v2630
  %v2635 = vrsqrt.pop %v2285
  %v2636 = vmul.f32 %v2635, %v2285
  %v2637 = vmul.f32 %v2636, %v2635
  %v2638 = vmul.f32 0.5, %v2637
  %v2639 = vsub.f32 1.5, %v2638
  %v2640 = vmul.f32 %v2635, %v2639
  %vm2641 = vweird.f32 %v2285
  %vm2642 = vweird.f32 %v2635
  %vm2643 = vmor %vm2641, %vm2642
  %v2644 = vsel %vm2643, %v2635, %v2640
  %v2645 = vrsqrt.pop %v2286
  %v2646 = vmul.f32 %v2645, %v2286
  %v2647 = vmul.f32 %v2646, %v2645
  %v2648 = vmul.f32 0.5, %v2647
  %v2649 = vsub.f32 1.5, %v2648
  %v2650 = vmul.f32 %v2645, %v2649
  %vm2651 = vweird.f32 %v2286
  %vm2652 = vweird.f32 %v2645
  %vm2653 = vmor %vm2651, %vm2652
  %v2654 = vsel %vm2653, %v2645, %v2650
  %v2655 = vrsqrt.pop %v2287
  %v2656 = vmul.f32 %v2655, %v2287
  %v2657 = vmul.f32 %v2656, %v2655
  %v2658 = vmul.f32 0.5, %v2657
  %v2659 = vsub.f32 1.5, %v2658
  %v2660 = vmul.f32 %v2655, %v2659
  %vm2661 = vweird.f32 %v2287
  %vm2662 = vweird.f32 %v2655
  %vm2663 = vmor %vm2661, %vm2662
  %v2664 = vsel %vm2663, %v2655, %v2660
  %v2665 = vrsqrt.pop %v2288
  %v2666 = vmul.f32 %v2665, %v2288
  %v2667 = vmul.f32 %v2666, %v2665
  %v2668 = vmul.f32 0.5, %v2667
  %v2669 = vsub.f32 1.5, %v2668
  %v2670 = vmul.f32 %v2665, %v2669
  %vm2671 = vweird.f32 %v2288
  %vm2672 = vweird.f32 %v2665
  %vm2673 = vmor %vm2671, %vm2672
  %v2674 = vsel %vm2673, %v2665, %v2670
  %v2675 = vrsqrt.pop %v2289
  %v2676 = vmul.f32 %v2675, %v2289
  %v2677 = vmul.f32 %v2676, %v2675
  %v2678 = vmul.f32 0.5, %v2677
  %v2679 = vsub.f32 1.5, %v2678
  %v2680 = vmul.f32 %v2675, %v2679
  %vm2681 = vweird.f32 %v2289
  %vm2682 = vweird.f32 %v2675
  %vm2683 = vmor %vm2681, %vm2682
  %v2684 = vsel %vm2683, %v2675, %v2680
  %v2685 = vrsqrt.pop %v2290
  %v2686 = vmul.f32 %v2685, %v2290
  %v2687 = vmul.f32 %v2686, %v2685
  %v2688 = vmul.f32 0.5, %v2687
  %v2689 = vsub.f32 1.5, %v2688
  %v2690 = vmul.f32 %v2685, %v2689
  %vm2691 = vweird.f32 %v2290
  %vm2692 = vweird.f32 %v2685
  %vm2693 = vmor %vm2691, %vm2692
  %v2694 = vsel %vm2693, %v2685, %v2690
  %v2695 = vrsqrt.pop %v2291
  %v2696 = vmul.f32 %v2695, %v2291
  %v2697 = vmul.f32 %v2696, %v2695
  %v2698 = vmul.f32 0.5, %v2697
  %v2699 = vsub.f32 1.5, %v2698
  %v2700 = vmul.f32 %v2695, %v2699
  %vm2701 = vweird.f32 %v2291
  %vm2702 = vweird.f32 %v2695
  %vm2703 = vmor %vm2701, %vm2702
  %v2704 = vsel %vm2703, %v2695, %v2700
  %v2705 = vrsqrt.pop %v2292
  %v2706 = vmul.f32 %v2705, %v2292
  %v2707 = vmul.f32 %v2706, %v2705
  %v2708 = vmul.f32 0.5, %v2707
  %v2709 = vsub.f32 1.5, %v2708
  %v2710 = vmul.f32 %v2705, %v2709
  %vm2711 = vweird.f32 %v2292
  %vm2712 = vweird.f32 %v2705
  %vm2713 = vmor %vm2711, %vm2712
  %v2714 = vsel %vm2713, %v2705, %v2710
  %v2715 = vrsqrt.pop %v2293
  %v2716 = vmul.f32 %v2715, %v2293
  %v2717 = vmul.f32 %v2716, %v2715
  %v2718 = vmul.f32 0.5, %v2717
  %v2719 = vsub.f32 1.5, %v2718
  %v2720 = vmul.f32 %v2715, %v2719
  %vm2721 = vweird.f32 %v2293
  %vm2722 = vweird.f32 %v2715
  %vm2723 = vmor %vm2721, %vm2722
  %v2724 = vsel %vm2723, %v2715, %v2720
  %v2725 = vrsqrt.pop %v2294
  %v2726 = vmul.f32 %v2725, %v2294
  %v2727 = vmul.f32 %v2726, %v2725
  %v2728 = vmul.f32 0.5, %v2727
  %v2729 = vsub.f32 1.5, %v2728
  %v2730 = vmul.f32 %v2725, %v2729
  %vm2731 = vweird.f32 %v2294
  %vm2732 = vweird.f32 %v2725
  %vm2733 = vmor %vm2731, %vm2732
  %v2734 = vsel %vm2733, %v2725, %v2730
  %v2735 = vrsqrt.pop %v2295
  %v2736 = vmul.f32 %v2735, %v2295
  %v2737 = vmul.f32 %v2736, %v2735
  %v2738 = vmul.f32 0.5, %v2737
  %v2739 = vsub.f32 1.5, %v2738
  %v2740 = vmul.f32 %v2735, %v2739
  %vm2741 = vweird.f32 %v2295
  %vm2742 = vweird.f32 %v2735
  %vm2743 = vmor %vm2741, %vm2742
  %v2744 = vsel %vm2743, %v2735, %v2740
  %v2745 = vrsqrt.pop %v2296
  %v2746 = vmul.f32 %v2745, %v2296
  %v2747 = vmul.f32 %v2746, %v2745
  %v2748 = vmul.f32 0.5, %v2747
  %v2749 = vsub.f32 1.5, %v2748
  %v2750 = vmul.f32 %v2745, %v2749
  %vm2751 = vweird.f32 %v2296
  %vm2752 = vweird.f32 %v2745
  %vm2753 = vmor %vm2751, %vm2752
  %v2754 = vsel %vm2753, %v2745, %v2750
  %v2755 = vrsqrt.pop %v2297
  %v2756 = vmul.f32 %v2755, %v2297
  %v2757 = vmul.f32 %v2756, %v2755
  %v2758 = vmul.f32 0.5, %v2757
  %v2759 = vsub.f32 1.5, %v2758
  %v2760 = vmul.f32 %v2755, %v2759
  %vm2761 = vweird.f32 %v2297
  %vm2762 = vweird.f32 %v2755
  %vm2763 = vmor %vm2761, %vm2762
  %v2764 = vsel %vm2763, %v2755, %v2760
  %v2765 = vrsqrt.pop %v2298
  %v2766 = vmul.f32 %v2765, %v2298
  %v2767 = vmul.f32 %v2766, %v2765
  %v2768 = vmul.f32 0.5, %v2767
  %v2769 = vsub.f32 1.5, %v2768
  %v2770 = vmul.f32 %v2765, %v2769
  %vm2771 = vweird.f32 %v2298
  %vm2772 = vweird.f32 %v2765
  %vm2773 = vmor %vm2771, %vm2772
  %v2774 = vsel %vm2773, %v2765, %v2770
  %v2775 = vrsqrt.pop %v2299
  %v2776 = vmul.f32 %v2775, %v2299
  %v2777 = vmul.f32 %v2776, %v2775
  %v2778 = vmul.f32 0.5, %v2777
  %v2779 = vsub.f32 1.5, %v2778
  %v2780 = vmul.f32 %v2775, %v2779
  %vm2781 = vweird.f32 %v2299
  %vm2782 = vweird.f32 %v2775
  %vm2783 = vmor %vm2781, %vm2782
  %v2784 = vsel %vm2783, %v2775, %v2780
  %v2785 = vrsqrt.pop %v2300
  %v2786 = vmul.f32 %v2785, %v2300
  %v2787 = vmul.f32 %v2786, %v2785
  %v2788 = vmul.f32 0.5, %v2787
  %v2789 = vsub.f32 1.5, %v2788
  %v2790 = vmul.f32 %v2785, %v2789
  %vm2791 = vweird.f32 %v2300
  %vm2792 = vweird.f32 %v2785
  %vm2793 = vmor %vm2791, %vm2792
  %v2794 = vsel %vm2793, %v2785, %v2790
  %v2795 = vrsqrt.pop %v2301
  %v2796 = vmul.f32 %v2795, %v2301
  %v2797 = vmul.f32 %v2796, %v2795
  %v2798 = vmul.f32 0.5, %v2797
  %v2799 = vsub.f32 1.5, %v2798
  %v2800 = vmul.f32 %v2795, %v2799
  %vm2801 = vweird.f32 %v2301
  %vm2802 = vweird.f32 %v2795
  %vm2803 = vmor %vm2801, %vm2802
  %v2804 = vsel %vm2803, %v2795, %v2800
  %v2805 = vrsqrt.pop %v2302
  %v2806 = vmul.f32 %v2805, %v2302
  %v2807 = vmul.f32 %v2806, %v2805
  %v2808 = vmul.f32 0.5, %v2807
  %v2809 = vsub.f32 1.5, %v2808
  %v2810 = vmul.f32 %v2805, %v2809
  %vm2811 = vweird.f32 %v2302
  %vm2812 = vweird.f32 %v2805
  %vm2813 = vmor %vm2811, %vm2812
  %v2814 = vsel %vm2813, %v2805, %v2810
  %v2815 = vrsqrt.pop %v2303
  %v2816 = vmul.f32 %v2815, %v2303
  %v2817 = vmul.f32 %v2816, %v2815
  %v2818 = vmul.f32 0.5, %v2817
  %v2819 = vsub.f32 1.5, %v2818
  %v2820 = vmul.f32 %v2815, %v2819
  %vm2821 = vweird.f32 %v2303
  %vm2822 = vweird.f32 %v2815
  %vm2823 = vmor %vm2821, %vm2822
  %v2824 = vsel %vm2823, %v2815, %v2820
  %v2825 = vrsqrt.pop %v2304
  %v2826 = vmul.f32 %v2825, %v2304
  %v2827 = vmul.f32 %v2826, %v2825
  %v2828 = vmul.f32 0.5, %v2827
  %v2829 = vsub.f32 1.5, %v2828
  %v2830 = vmul.f32 %v2825, %v2829
  %vm2831 = vweird.f32 %v2304
  %vm2832 = vweird.f32 %v2825
  %vm2833 = vmor %vm2831, %vm2832
  %v2834 = vsel %vm2833, %v2825, %v2830
  %v2835 = vrsqrt.pop %v2305
  %v2836 = vmul.f32 %v2835, %v2305
  %v2837 = vmul.f32 %v2836, %v2835
  %v2838 = vmul.f32 0.5, %v2837
  %v2839 = vsub.f32 1.5, %v2838
  %v2840 = vmul.f32 %v2835, %v2839
  %vm2841 = vweird.f32 %v2305
  %vm2842 = vweird.f32 %v2835
  %vm2843 = vmor %vm2841, %vm2842
  %v2844 = vsel %vm2843, %v2835, %v2840
  %v2845 = vrsqrt.pop %v2306
  %v2846 = vmul.f32 %v2845, %v2306
  %v2847 = vmul.f32 %v2846, %v2845
  %v2848 = vmul.f32 0.5, %v2847
  %v2849 = vsub.f32 1.5, %v2848
  %v2850 = vmul.f32 %v2845, %v2849
  %vm2851 = vweird.f32 %v2306
  %vm2852 = vweird.f32 %v2845
  %vm2853 = vmor %vm2851, %vm2852
  %v2854 = vsel %vm2853, %v2845, %v2850
  %v2855 = vrsqrt.pop %v2307
  %v2856 = vmul.f32 %v2855, %v2307
  %v2857 = vmul.f32 %v2856, %v2855
  %v2858 = vmul.f32 0.5, %v2857
  %v2859 = vsub.f32 1.5, %v2858
  %v2860 = vmul.f32 %v2855, %v2859
  %vm2861 = vweird.f32 %v2307
  %vm2862 = vweird.f32 %v2855
  %vm2863 = vmor %vm2861, %vm2862
  %v2864 = vsel %vm2863, %v2855, %v2860
  %v2865 = vrsqrt.pop %v2308
  %v2866 = vmul.f32 %v2865, %v2308
  %v2867 = vmul.f32 %v2866, %v2865
  %v2868 = vmul.f32 0.5, %v2867
  %v2869 = vsub.f32 1.5, %v2868
  %v2870 = vmul.f32 %v2865, %v2869
  %vm2871 = vweird.f32 %v2308
  %vm2872 = vweird.f32 %v2865
  %vm2873 = vmor %vm2871, %vm2872
  %v2874 = vsel %vm2873, %v2865, %v2870
  %v2875 = vrsqrt.pop %v2309
  %v2876 = vmul.f32 %v2875, %v2309
  %v2877 = vmul.f32 %v2876, %v2875
  %v2878 = vmul.f32 0.5, %v2877
  %v2879 = vsub.f32 1.5, %v2878
  %v2880 = vmul.f32 %v2875, %v2879
  %vm2881 = vweird.f32 %v2309
  %vm2882 = vweird.f32 %v2875
  %vm2883 = vmor %vm2881, %vm2882
  %v2884 = vsel %vm2883, %v2875, %v2880
  %v2885 = vrsqrt.pop %v2310
  %v2886 = vmul.f32 %v2885, %v2310
  %v2887 = vmul.f32 %v2886, %v2885
  %v2888 = vmul.f32 0.5, %v2887
  %v2889 = vsub.f32 1.5, %v2888
  %v2890 = vmul.f32 %v2885, %v2889
  %vm2891 = vweird.f32 %v2310
  %vm2892 = vweird.f32 %v2885
  %vm2893 = vmor %vm2891, %vm2892
  %v2894 = vsel %vm2893, %v2885, %v2890
  %v2895 = vrsqrt.pop %v2311
  %v2896 = vmul.f32 %v2895, %v2311
  %v2897 = vmul.f32 %v2896, %v2895
  %v2898 = vmul.f32 0.5, %v2897
  %v2899 = vsub.f32 1.5, %v2898
  %v2900 = vmul.f32 %v2895, %v2899
  %vm2901 = vweird.f32 %v2311
  %vm2902 = vweird.f32 %v2895
  %vm2903 = vmor %vm2901, %vm2902
  %v2904 = vsel %vm2903, %v2895, %v2900
  %v2905 = vrsqrt.pop %v2312
  %v2906 = vmul.f32 %v2905, %v2312
  %v2907 = vmul.f32 %v2906, %v2905
  %v2908 = vmul.f32 0.5, %v2907
  %v2909 = vsub.f32 1.5, %v2908
  %v2910 = vmul.f32 %v2905, %v2909
  %vm2911 = vweird.f32 %v2312
  %vm2912 = vweird.f32 %v2905
  %vm2913 = vmor %vm2911, %vm2912
  %v2914 = vsel %vm2913, %v2905, %v2910
  %v2915 = vrsqrt.pop %v2313
  %v2916 = vmul.f32 %v2915, %v2313
  %v2917 = vmul.f32 %v2916, %v2915
  %v2918 = vmul.f32 0.5, %v2917
  %v2919 = vsub.f32 1.5, %v2918
  %v2920 = vmul.f32 %v2915, %v2919
  %vm2921 = vweird.f32 %v2313
  %vm2922 = vweird.f32 %v2915
  %vm2923 = vmor %vm2921, %vm2922
  %v2924 = vsel %vm2923, %v2915, %v2920
  %v2925 = vrsqrt.pop %v2314
  %v2926 = vmul.f32 %v2925, %v2314
  %v2927 = vmul.f32 %v2926, %v2925
  %v2928 = vmul.f32 0.5, %v2927
  %v2929 = vsub.f32 1.5, %v2928
  %v2930 = vmul.f32 %v2925, %v2929
  %vm2931 = vweird.f32 %v2314
  %vm2932 = vweird.f32 %v2925
  %vm2933 = vmor %vm2931, %vm2932
  %v2934 = vsel %vm2933, %v2925, %v2930
  %v2935 = vrsqrt.pop %v2315
  %v2936 = vmul.f32 %v2935, %v2315
  %v2937 = vmul.f32 %v2936, %v2935
  %v2938 = vmul.f32 0.5, %v2937
  %v2939 = vsub.f32 1.5, %v2938
  %v2940 = vmul.f32 %v2935, %v2939
  %vm2941 = vweird.f32 %v2315
  %vm2942 = vweird.f32 %v2935
  %vm2943 = vmor %vm2941, %vm2942
  %v2944 = vsel %vm2943, %v2935, %v2940
  %v2945 = vrsqrt.pop %v2316
  %v2946 = vmul.f32 %v2945, %v2316
  %v2947 = vmul.f32 %v2946, %v2945
  %v2948 = vmul.f32 0.5, %v2947
  %v2949 = vsub.f32 1.5, %v2948
  %v2950 = vmul.f32 %v2945, %v2949
  %vm2951 = vweird.f32 %v2316
  %vm2952 = vweird.f32 %v2945
  %vm2953 = vmor %vm2951, %vm2952
  %v2954 = vsel %vm2953, %v2945, %v2950
  %v2955 = vrsqrt.pop %v2317
  %v2956 = vmul.f32 %v2955, %v2317
  %v2957 = vmul.f32 %v2956, %v2955
  %v2958 = vmul.f32 0.5, %v2957
  %v2959 = vsub.f32 1.5, %v2958
  %v2960 = vmul.f32 %v2955, %v2959
  %vm2961 = vweird.f32 %v2317
  %vm2962 = vweird.f32 %v2955
  %vm2963 = vmor %vm2961, %vm2962
  %v2964 = vsel %vm2963, %v2955, %v2960
  %v2965 = vrsqrt.pop %v2318
  %v2966 = vmul.f32 %v2965, %v2318
  %v2967 = vmul.f32 %v2966, %v2965
  %v2968 = vmul.f32 0.5, %v2967
  %v2969 = vsub.f32 1.5, %v2968
  %v2970 = vmul.f32 %v2965, %v2969
  %vm2971 = vweird.f32 %v2318
  %vm2972 = vweird.f32 %v2965
  %vm2973 = vmor %vm2971, %vm2972
  %v2974 = vsel %vm2973, %v2965, %v2970
  %v2975 = vrsqrt.pop %v2319
  %v2976 = vmul.f32 %v2975, %v2319
  %v2977 = vmul.f32 %v2976, %v2975
  %v2978 = vmul.f32 0.5, %v2977
  %v2979 = vsub.f32 1.5, %v2978
  %v2980 = vmul.f32 %v2975, %v2979
  %vm2981 = vweird.f32 %v2319
  %vm2982 = vweird.f32 %v2975
  %vm2983 = vmor %vm2981, %vm2982
  %v2984 = vsel %vm2983, %v2975, %v2980
  %v2985 = vrsqrt.pop %v2320
  %v2986 = vmul.f32 %v2985, %v2320
  %v2987 = vmul.f32 %v2986, %v2985
  %v2988 = vmul.f32 0.5, %v2987
  %v2989 = vsub.f32 1.5, %v2988
  %v2990 = vmul.f32 %v2985, %v2989
  %vm2991 = vweird.f32 %v2320
  %vm2992 = vweird.f32 %v2985
  %vm2993 = vmor %vm2991, %vm2992
  %v2994 = vsel %vm2993, %v2985, %v2990
  %v2995 = vrsqrt.pop %v2321
  %v2996 = vmul.f32 %v2995, %v2321
  %v2997 = vmul.f32 %v2996, %v2995
  %v2998 = vmul.f32 0.5, %v2997
  %v2999 = vsub.f32 1.5, %v2998
  %v3000 = vmul.f32 %v2995, %v2999
  %vm3001 = vweird.f32 %v2321
  %vm3002 = vweird.f32 %v2995
  %vm3003 = vmor %vm3001, %vm3002
  %v3004 = vsel %vm3003, %v2995, %v3000
  %v3005 = vrsqrt.pop %v2322
  %v3006 = vmul.f32 %v3005, %v2322
  %v3007 = vmul.f32 %v3006, %v3005
  %v3008 = vmul.f32 0.5, %v3007
  %v3009 = vsub.f32 1.5, %v3008
  %v3010 = vmul.f32 %v3005, %v3009
  %vm3011 = vweird.f32 %v2322
  %vm3012 = vweird.f32 %v3005
  %vm3013 = vmor %vm3011, %vm3012
  %v3014 = vsel %vm3013, %v3005, %v3010
  %v3015 = vrsqrt.pop %v2323
  %v3016 = vmul.f32 %v3015, %v2323
  %v3017 = vmul.f32 %v3016, %v3015
  %v3018 = vmul.f32 0.5, %v3017
  %v3019 = vsub.f32 1.5, %v3018
  %v3020 = vmul.f32 %v3015, %v3019
  %vm3021 = vweird.f32 %v2323
  %vm3022 = vweird.f32 %v3015
  %vm3023 = vmor %vm3021, %vm3022
  %v3024 = vsel %vm3023, %v3015, %v3020
  %v3025 = vrsqrt.pop %v2324
  %v3026 = vmul.f32 %v3025, %v2324
  %v3027 = vmul.f32 %v3026, %v3025
  %v3028 = vmul.f32 0.5, %v3027
  %v3029 = vsub.f32 1.5, %v3028
  %v3030 = vmul.f32 %v3025, %v3029
  %vm3031 = vweird.f32 %v2324
  %vm3032 = vweird.f32 %v3025
  %vm3033 = vmor %vm3031, %vm3032
  %v3034 = vsel %vm3033, %v3025, %v3030
  %v3035 = vrsqrt.pop %v2325
  %v3036 = vmul.f32 %v3035, %v2325
  %v3037 = vmul.f32 %v3036, %v3035
  %v3038 = vmul.f32 0.5, %v3037
  %v3039 = vsub.f32 1.5, %v3038
  %v3040 = vmul.f32 %v3035, %v3039
  %vm3041 = vweird.f32 %v2325
  %vm3042 = vweird.f32 %v3035
  %vm3043 = vmor %vm3041, %vm3042
  %v3044 = vsel %vm3043, %v3035, %v3040
  %v3045 = vrsqrt.pop %v2326
  %v3046 = vmul.f32 %v3045, %v2326
  %v3047 = vmul.f32 %v3046, %v3045
  %v3048 = vmul.f32 0.5, %v3047
  %v3049 = vsub.f32 1.5, %v3048
  %v3050 = vmul.f32 %v3045, %v3049
  %vm3051 = vweird.f32 %v2326
  %vm3052 = vweird.f32 %v3045
  %vm3053 = vmor %vm3051, %vm3052
  %v3054 = vsel %vm3053, %v3045, %v3050
  %v3055 = vrsqrt.pop %v2327
  %v3056 = vmul.f32 %v3055, %v2327
  %v3057 = vmul.f32 %v3056, %v3055
  %v3058 = vmul.f32 0.5, %v3057
  %v3059 = vsub.f32 1.5, %v3058
  %v3060 = vmul.f32 %v3055, %v3059
  %vm3061 = vweird.f32 %v2327
  %vm3062 = vweird.f32 %v3055
  %vm3063 = vmor %vm3061, %vm3062
  %v3064 = vsel %vm3063, %v3055, %v3060
  %v3065 = vrsqrt.pop %v2328
  %v3066 = vmul.f32 %v3065, %v2328
  %v3067 = vmul.f32 %v3066, %v3065
  %v3068 = vmul.f32 0.5, %v3067
  %v3069 = vsub.f32 1.5, %v3068
  %v3070 = vmul.f32 %v3065, %v3069
  %vm3071 = vweird.f32 %v2328
  %vm3072 = vweird.f32 %v3065
  %vm3073 = vmor %vm3071, %vm3072
  %v3074 = vsel %vm3073, %v3065, %v3070
  %v3075 = vrsqrt.pop %v2329
  %v3076 = vmul.f32 %v3075, %v2329
  %v3077 = vmul.f32 %v3076, %v3075
  %v3078 = vmul.f32 0.5, %v3077
  %v3079 = vsub.f32 1.5, %v3078
  %v3080 = vmul.f32 %v3075, %v3079
  %vm3081 = vweird.f32 %v2329
  %vm3082 = vweird.f32 %v3075
  %vm3083 = vmor %vm3081, %vm3082
  %v3084 = vsel %vm3083, %v3075, %v3080
  %v3085 = vrsqrt.pop %v2330
  %v3086 = vmul.f32 %v3085, %v2330
  %v3087 = vmul.f32 %v3086, %v3085
  %v3088 = vmul.f32 0.5, %v3087
  %v3089 = vsub.f32 1.5, %v3088
  %v3090 = vmul.f32 %v3085, %v3089
  %vm3091 = vweird.f32 %v2330
  %vm3092 = vweird.f32 %v3085
  %vm3093 = vmor %vm3091, %vm3092
  %v3094 = vsel %vm3093, %v3085, %v3090
  %v3095 = vrsqrt.pop %v2331
  %v3096 = vmul.f32 %v3095, %v2331
  %v3097 = vmul.f32 %v3096, %v3095
  %v3098 = vmul.f32 0.5, %v3097
  %v3099 = vsub.f32 1.5, %v3098
  %v3100 = vmul.f32 %v3095, %v3099
  %vm3101 = vweird.f32 %v2331
  %vm3102 = vweird.f32 %v3095
  %vm3103 = vmor %vm3101, %vm3102
  %v3104 = vsel %vm3103, %v3095, %v3100
  %v3105 = vrsqrt.pop %v2332
  %v3106 = vmul.f32 %v3105, %v2332
  %v3107 = vmul.f32 %v3106, %v3105
  %v3108 = vmul.f32 0.5, %v3107
  %v3109 = vsub.f32 1.5, %v3108
  %v3110 = vmul.f32 %v3105, %v3109
  %vm3111 = vweird.f32 %v2332
  %vm3112 = vweird.f32 %v3105
  %vm3113 = vmor %vm3111, %vm3112
  %v3114 = vsel %vm3113, %v3105, %v3110
  %v3115 = vrsqrt.pop %v2333
  %v3116 = vmul.f32 %v3115, %v2333
  %v3117 = vmul.f32 %v3116, %v3115
  %v3118 = vmul.f32 0.5, %v3117
  %v3119 = vsub.f32 1.5, %v3118
  %v3120 = vmul.f32 %v3115, %v3119
  %vm3121 = vweird.f32 %v2333
  %vm3122 = vweird.f32 %v3115
  %vm3123 = vmor %vm3121, %vm3122
  %v3124 = vsel %vm3123, %v3115, %v3120
  %v3125 = vrsqrt.pop %v2334
  %v3126 = vmul.f32 %v3125, %v2334
  %v3127 = vmul.f32 %v3126, %v3125
  %v3128 = vmul.f32 0.5, %v3127
  %v3129 = vsub.f32 1.5, %v3128
  %v3130 = vmul.f32 %v3125, %v3129
  %vm3131 = vweird.f32 %v2334
  %vm3132 = vweird.f32 %v3125
  %vm3133 = vmor %vm3131, %vm3132
  %v3134 = vsel %vm3133, %v3125, %v3130
  %v3135 = vrsqrt.pop %v2335
  %v3136 = vmul.f32 %v3135, %v2335
  %v3137 = vmul.f32 %v3136, %v3135
  %v3138 = vmul.f32 0.5, %v3137
  %v3139 = vsub.f32 1.5, %v3138
  %v3140 = vmul.f32 %v3135, %v3139
  %vm3141 = vweird.f32 %v2335
  %vm3142 = vweird.f32 %v3135
  %vm3143 = vmor %vm3141, %vm3142
  %v3144 = vsel %vm3143, %v3135, %v3140
  %v3145 = vrsqrt.pop %v2336
  %v3146 = vmul.f32 %v3145, %v2336
  %v3147 = vmul.f32 %v3146, %v3145
  %v3148 = vmul.f32 0.5, %v3147
  %v3149 = vsub.f32 1.5, %v3148
  %v3150 = vmul.f32 %v3145, %v3149
  %vm3151 = vweird.f32 %v2336
  %vm3152 = vweird.f32 %v3145
  %vm3153 = vmor %vm3151, %vm3152
  %v3154 = vsel %vm3153, %v3145, %v3150
  %v3155 = vrsqrt.pop %v2337
  %v3156 = vmul.f32 %v3155, %v2337
  %v3157 = vmul.f32 %v3156, %v3155
  %v3158 = vmul.f32 0.5, %v3157
  %v3159 = vsub.f32 1.5, %v3158
  %v3160 = vmul.f32 %v3155, %v3159
  %vm3161 = vweird.f32 %v2337
  %vm3162 = vweird.f32 %v3155
  %vm3163 = vmor %vm3161, %vm3162
  %v3164 = vsel %vm3163, %v3155, %v3160
  %v3165 = vrsqrt.pop %v2338
  %v3166 = vmul.f32 %v3165, %v2338
  %v3167 = vmul.f32 %v3166, %v3165
  %v3168 = vmul.f32 0.5, %v3167
  %v3169 = vsub.f32 1.5, %v3168
  %v3170 = vmul.f32 %v3165, %v3169
  %vm3171 = vweird.f32 %v2338
  %vm3172 = vweird.f32 %v3165
  %vm3173 = vmor %vm3171, %vm3172
  %v3174 = vsel %vm3173, %v3165, %v3170
  %v3175 = vrsqrt.pop %v2339
  %v3176 = vmul.f32 %v3175, %v2339
  %v3177 = vmul.f32 %v3176, %v3175
  %v3178 = vmul.f32 0.5, %v3177
  %v3179 = vsub.f32 1.5, %v3178
  %v3180 = vmul.f32 %v3175, %v3179
  %vm3181 = vweird.f32 %v2339
  %vm3182 = vweird.f32 %v3175
  %vm3183 = vmor %vm3181, %vm3182
  %v3184 = vsel %vm3183, %v3175, %v3180
  %v3185 = vrsqrt.pop %v2340
  %v3186 = vmul.f32 %v3185, %v2340
  %v3187 = vmul.f32 %v3186, %v3185
  %v3188 = vmul.f32 0.5, %v3187
  %v3189 = vsub.f32 1.5, %v3188
  %v3190 = vmul.f32 %v3185, %v3189
  %vm3191 = vweird.f32 %v2340
  %vm3192 = vweird.f32 %v3185
  %vm3193 = vmor %vm3191, %vm3192
  %v3194 = vsel %vm3193, %v3185, %v3190
  %v3195 = vrsqrt.pop %v2341
  %v3196 = vmul.f32 %v3195, %v2341
  %v3197 = vmul.f32 %v3196, %v3195
  %v3198 = vmul.f32 0.5, %v3197
  %v3199 = vsub.f32 1.5, %v3198
  %v3200 = vmul.f32 %v3195, %v3199
  %vm3201 = vweird.f32 %v2341
  %vm3202 = vweird.f32 %v3195
  %vm3203 = vmor %vm3201, %vm3202
  %v3204 = vsel %vm3203, %v3195, %v3200
  %v3205 = vrsqrt.pop %v2342
  %v3206 = vmul.f32 %v3205, %v2342
  %v3207 = vmul.f32 %v3206, %v3205
  %v3208 = vmul.f32 0.5, %v3207
  %v3209 = vsub.f32 1.5, %v3208
  %v3210 = vmul.f32 %v3205, %v3209
  %vm3211 = vweird.f32 %v2342
  %vm3212 = vweird.f32 %v3205
  %vm3213 = vmor %vm3211, %vm3212
  %v3214 = vsel %vm3213, %v3205, %v3210
  %v3215 = vrsqrt.pop %v2343
  %v3216 = vmul.f32 %v3215, %v2343
  %v3217 = vmul.f32 %v3216, %v3215
  %v3218 = vmul.f32 0.5, %v3217
  %v3219 = vsub.f32 1.5, %v3218
  %v3220 = vmul.f32 %v3215, %v3219
  %vm3221 = vweird.f32 %v2343
  %vm3222 = vweird.f32 %v3215
  %vm3223 = vmor %vm3221, %vm3222
  %v3224 = vsel %vm3223, %v3215, %v3220
  %v3225 = vrsqrt.pop %v2344
  %v3226 = vmul.f32 %v3225, %v2344
  %v3227 = vmul.f32 %v3226, %v3225
  %v3228 = vmul.f32 0.5, %v3227
  %v3229 = vsub.f32 1.5, %v3228
  %v3230 = vmul.f32 %v3225, %v3229
  %vm3231 = vweird.f32 %v2344
  %vm3232 = vweird.f32 %v3225
  %vm3233 = vmor %vm3231, %vm3232
  %v3234 = vsel %vm3233, %v3225, %v3230
  %v3235 = vrsqrt.pop %v2345
  %v3236 = vmul.f32 %v3235, %v2345
  %v3237 = vmul.f32 %v3236, %v3235
  %v3238 = vmul.f32 0.5, %v3237
  %v3239 = vsub.f32 1.5, %v3238
  %v3240 = vmul.f32 %v3235, %v3239
  %vm3241 = vweird.f32 %v2345
  %vm3242 = vweird.f32 %v3235
  %vm3243 = vmor %vm3241, %vm3242
  %v3244 = vsel %vm3243, %v3235, %v3240
  %v3245 = vrsqrt.pop %v2346
  %v3246 = vmul.f32 %v3245, %v2346
  %v3247 = vmul.f32 %v3246, %v3245
  %v3248 = vmul.f32 0.5, %v3247
  %v3249 = vsub.f32 1.5, %v3248
  %v3250 = vmul.f32 %v3245, %v3249
  %vm3251 = vweird.f32 %v2346
  %vm3252 = vweird.f32 %v3245
  %vm3253 = vmor %vm3251, %vm3252
  %v3254 = vsel %vm3253, %v3245, %v3250
  %v3255 = vrsqrt.pop %v2347
  %v3256 = vmul.f32 %v3255, %v2347
  %v3257 = vmul.f32 %v3256, %v3255
  %v3258 = vmul.f32 0.5, %v3257
  %v3259 = vsub.f32 1.5, %v3258
  %v3260 = vmul.f32 %v3255, %v3259
  %vm3261 = vweird.f32 %v2347
  %vm3262 = vweird.f32 %v3255
  %vm3263 = vmor %vm3261, %vm3262
  %v3264 = vsel %vm3263, %v3255, %v3260
  %v3265 = vrsqrt.pop %v2348
  %v3266 = vmul.f32 %v3265, %v2348
  %v3267 = vmul.f32 %v3266, %v3265
  %v3268 = vmul.f32 0.5, %v3267
  %v3269 = vsub.f32 1.5, %v3268
  %v3270 = vmul.f32 %v3265, %v3269
  %vm3271 = vweird.f32 %v2348
  %vm3272 = vweird.f32 %v3265
  %vm3273 = vmor %vm3271, %vm3272
  %v3274 = vsel %vm3273, %v3265, %v3270
  %v3275 = vrsqrt.pop %v2349
  %v3276 = vmul.f32 %v3275, %v2349
  %v3277 = vmul.f32 %v3276, %v3275
  %v3278 = vmul.f32 0.5, %v3277
  %v3279 = vsub.f32 1.5, %v3278
  %v3280 = vmul.f32 %v3275, %v3279
  %vm3281 = vweird.f32 %v2349
  %vm3282 = vweird.f32 %v3275
  %vm3283 = vmor %vm3281, %vm3282
  %v3284 = vsel %vm3283, %v3275, %v3280
  %v3285 = vrsqrt.pop %v2350
  %v3286 = vmul.f32 %v3285, %v2350
  %v3287 = vmul.f32 %v3286, %v3285
  %v3288 = vmul.f32 0.5, %v3287
  %v3289 = vsub.f32 1.5, %v3288
  %v3290 = vmul.f32 %v3285, %v3289
  %vm3291 = vweird.f32 %v2350
  %vm3292 = vweird.f32 %v3285
  %vm3293 = vmor %vm3291, %vm3292
  %v3294 = vsel %vm3293, %v3285, %v3290
  %v3295 = vrsqrt.pop %v2351
  %v3296 = vmul.f32 %v3295, %v2351
  %v3297 = vmul.f32 %v3296, %v3295
  %v3298 = vmul.f32 0.5, %v3297
  %v3299 = vsub.f32 1.5, %v3298
  %v3300 = vmul.f32 %v3295, %v3299
  %vm3301 = vweird.f32 %v2351
  %vm3302 = vweird.f32 %v3295
  %vm3303 = vmor %vm3301, %vm3302
  %v3304 = vsel %vm3303, %v3295, %v3300
  %v3305 = vrsqrt.pop %v2352
  %v3306 = vmul.f32 %v3305, %v2352
  %v3307 = vmul.f32 %v3306, %v3305
  %v3308 = vmul.f32 0.5, %v3307
  %v3309 = vsub.f32 1.5, %v3308
  %v3310 = vmul.f32 %v3305, %v3309
  %vm3311 = vweird.f32 %v2352
  %vm3312 = vweird.f32 %v3305
  %vm3313 = vmor %vm3311, %vm3312
  %v3314 = vsel %vm3313, %v3305, %v3310
  %v3315 = vrsqrt.pop %v2353
  %v3316 = vmul.f32 %v3315, %v2353
  %v3317 = vmul.f32 %v3316, %v3315
  %v3318 = vmul.f32 0.5, %v3317
  %v3319 = vsub.f32 1.5, %v3318
  %v3320 = vmul.f32 %v3315, %v3319
  %vm3321 = vweird.f32 %v2353
  %vm3322 = vweird.f32 %v3315
  %vm3323 = vmor %vm3321, %vm3322
  %v3324 = vsel %vm3323, %v3315, %v3320
  %v3325 = vrsqrt.pop %v2354
  %v3326 = vmul.f32 %v3325, %v2354
  %v3327 = vmul.f32 %v3326, %v3325
  %v3328 = vmul.f32 0.5, %v3327
  %v3329 = vsub.f32 1.5, %v3328
  %v3330 = vmul.f32 %v3325, %v3329
  %vm3331 = vweird.f32 %v2354
  %vm3332 = vweird.f32 %v3325
  %vm3333 = vmor %vm3331, %vm3332
  %v3334 = vsel %vm3333, %v3325, %v3330
  %v3335 = vrsqrt.pop %v2355
  %v3336 = vmul.f32 %v3335, %v2355
  %v3337 = vmul.f32 %v3336, %v3335
  %v3338 = vmul.f32 0.5, %v3337
  %v3339 = vsub.f32 1.5, %v3338
  %v3340 = vmul.f32 %v3335, %v3339
  %vm3341 = vweird.f32 %v2355
  %vm3342 = vweird.f32 %v3335
  %vm3343 = vmor %vm3341, %vm3342
  %v3344 = vsel %vm3343, %v3335, %v3340
  %v3345 = vrsqrt.pop %v2356
  %v3346 = vmul.f32 %v3345, %v2356
  %v3347 = vmul.f32 %v3346, %v3345
  %v3348 = vmul.f32 0.5, %v3347
  %v3349 = vsub.f32 1.5, %v3348
  %v3350 = vmul.f32 %v3345, %v3349
  %vm3351 = vweird.f32 %v2356
  %vm3352 = vweird.f32 %v3345
  %vm3353 = vmor %vm3351, %vm3352
  %v3354 = vsel %vm3353, %v3345, %v3350
  %v3355 = vrsqrt.pop %v2357
  %v3356 = vmul.f32 %v3355, %v2357
  %v3357 = vmul.f32 %v3356, %v3355
  %v3358 = vmul.f32 0.5, %v3357
  %v3359 = vsub.f32 1.5, %v3358
  %v3360 = vmul.f32 %v3355, %v3359
  %vm3361 = vweird.f32 %v2357
  %vm3362 = vweird.f32 %v3355
  %vm3363 = vmor %vm3361, %vm3362
  %v3364 = vsel %vm3363, %v3355, %v3360
  %v3365 = vrsqrt.pop %v2358
  %v3366 = vmul.f32 %v3365, %v2358
  %v3367 = vmul.f32 %v3366, %v3365
  %v3368 = vmul.f32 0.5, %v3367
  %v3369 = vsub.f32 1.5, %v3368
  %v3370 = vmul.f32 %v3365, %v3369
  %vm3371 = vweird.f32 %v2358
  %vm3372 = vweird.f32 %v3365
  %vm3373 = vmor %vm3371, %vm3372
  %v3374 = vsel %vm3373, %v3365, %v3370
  %v3375 = vrsqrt.pop %v2359
  %v3376 = vmul.f32 %v3375, %v2359
  %v3377 = vmul.f32 %v3376, %v3375
  %v3378 = vmul.f32 0.5, %v3377
  %v3379 = vsub.f32 1.5, %v3378
  %v3380 = vmul.f32 %v3375, %v3379
  %vm3381 = vweird.f32 %v2359
  %vm3382 = vweird.f32 %v3375
  %vm3383 = vmor %vm3381, %vm3382
  %v3384 = vsel %vm3383, %v3375, %v3380
  %v3385 = vrsqrt.pop %v2360
  %v3386 = vmul.f32 %v3385, %v2360
  %v3387 = vmul.f32 %v3386, %v3385
  %v3388 = vmul.f32 0.5, %v3387
  %v3389 = vsub.f32 1.5, %v3388
  %v3390 = vmul.f32 %v3385, %v3389
  %vm3391 = vweird.f32 %v2360
  %vm3392 = vweird.f32 %v3385
  %vm3393 = vmor %vm3391, %vm3392
  %v3394 = vsel %vm3393, %v3385, %v3390
  %v3395 = vrsqrt.pop %v2361
  %v3396 = vmul.f32 %v3395, %v2361
  %v3397 = vmul.f32 %v3396, %v3395
  %v3398 = vmul.f32 0.5, %v3397
  %v3399 = vsub.f32 1.5, %v3398
  %v3400 = vmul.f32 %v3395, %v3399
  %vm3401 = vweird.f32 %v2361
  %vm3402 = vweird.f32 %v3395
  %vm3403 = vmor %vm3401, %vm3402
  %v3404 = vsel %vm3403, %v3395, %v3400
  %v3405 = vrsqrt.pop %v2362
  %v3406 = vmul.f32 %v3405, %v2362
  %v3407 = vmul.f32 %v3406, %v3405
  %v3408 = vmul.f32 0.5, %v3407
  %v3409 = vsub.f32 1.5, %v3408
  %v3410 = vmul.f32 %v3405, %v3409
  %vm3411 = vweird.f32 %v2362
  %vm3412 = vweird.f32 %v3405
  %vm3413 = vmor %vm3411, %vm3412
  %v3414 = vsel %vm3413, %v3405, %v3410
  %v3415 = vrsqrt.pop %v2363
  %v3416 = vmul.f32 %v3415, %v2363
  %v3417 = vmul.f32 %v3416, %v3415
  %v3418 = vmul.f32 0.5, %v3417
  %v3419 = vsub.f32 1.5, %v3418
  %v3420 = vmul.f32 %v3415, %v3419
  %vm3421 = vweird.f32 %v2363
  %vm3422 = vweird.f32 %v3415
  %vm3423 = vmor %vm3421, %vm3422
  %v3424 = vsel %vm3423, %v3415, %v3420
  %v3425 = vrsqrt.pop %v2364
  %v3426 = vmul.f32 %v3425, %v2364
  %v3427 = vmul.f32 %v3426, %v3425
  %v3428 = vmul.f32 0.5, %v3427
  %v3429 = vsub.f32 1.5, %v3428
  %v3430 = vmul.f32 %v3425, %v3429
  %vm3431 = vweird.f32 %v2364
  %vm3432 = vweird.f32 %v3425
  %vm3433 = vmor %vm3431, %vm3432
  %v3434 = vsel %vm3433, %v3425, %v3430
  %v3435 = vrsqrt.pop %v2365
  %v3436 = vmul.f32 %v3435, %v2365
  %v3437 = vmul.f32 %v3436, %v3435
  %v3438 = vmul.f32 0.5, %v3437
  %v3439 = vsub.f32 1.5, %v3438
  %v3440 = vmul.f32 %v3435, %v3439
  %vm3441 = vweird.f32 %v2365
  %vm3442 = vweird.f32 %v3435
  %vm3443 = vmor %vm3441, %vm3442
  %v3444 = vsel %vm3443, %v3435, %v3440
  %v3445 = vrsqrt.pop %v2366
  %v3446 = vmul.f32 %v3445, %v2366
  %v3447 = vmul.f32 %v3446, %v3445
  %v3448 = vmul.f32 0.5, %v3447
  %v3449 = vsub.f32 1.5, %v3448
  %v3450 = vmul.f32 %v3445, %v3449
  %vm3451 = vweird.f32 %v2366
  %vm3452 = vweird.f32 %v3445
  %vm3453 = vmor %vm3451, %vm3452
  %v3454 = vsel %vm3453, %v3445, %v3450
  %v3455 = vrsqrt.pop %v2367
  %v3456 = vmul.f32 %v3455, %v2367
  %v3457 = vmul.f32 %v3456, %v3455
  %v3458 = vmul.f32 0.5, %v3457
  %v3459 = vsub.f32 1.5, %v3458
  %v3460 = vmul.f32 %v3455, %v3459
  %vm3461 = vweird.f32 %v2367
  %vm3462 = vweird.f32 %v3455
  %vm3463 = vmor %vm3461, %vm3462
  %v3464 = vsel %vm3463, %v3455, %v3460
  %v3465 = vrsqrt.pop %v2368
  %v3466 = vmul.f32 %v3465, %v2368
  %v3467 = vmul.f32 %v3466, %v3465
  %v3468 = vmul.f32 0.5, %v3467
  %v3469 = vsub.f32 1.5, %v3468
  %v3470 = vmul.f32 %v3465, %v3469
  %vm3471 = vweird.f32 %v2368
  %vm3472 = vweird.f32 %v3465
  %vm3473 = vmor %vm3471, %vm3472
  %v3474 = vsel %vm3473, %v3465, %v3470
  %v3475 = vrsqrt.pop %v2369
  %v3476 = vmul.f32 %v3475, %v2369
  %v3477 = vmul.f32 %v3476, %v3475
  %v3478 = vmul.f32 0.5, %v3477
  %v3479 = vsub.f32 1.5, %v3478
  %v3480 = vmul.f32 %v3475, %v3479
  %vm3481 = vweird.f32 %v2369
  %vm3482 = vweird.f32 %v3475
  %vm3483 = vmor %vm3481, %vm3482
  %v3484 = vsel %vm3483, %v3475, %v3480
  %v3485 = vrsqrt.pop %v2370
  %v3486 = vmul.f32 %v3485, %v2370
  %v3487 = vmul.f32 %v3486, %v3485
  %v3488 = vmul.f32 0.5, %v3487
  %v3489 = vsub.f32 1.5, %v3488
  %v3490 = vmul.f32 %v3485, %v3489
  %vm3491 = vweird.f32 %v2370
  %vm3492 = vweird.f32 %v3485
  %vm3493 = vmor %vm3491, %vm3492
  %v3494 = vsel %vm3493, %v3485, %v3490
  %v3495 = vrsqrt.pop %v2371
  %v3496 = vmul.f32 %v3495, %v2371
  %v3497 = vmul.f32 %v3496, %v3495
  %v3498 = vmul.f32 0.5, %v3497
  %v3499 = vsub.f32 1.5, %v3498
  %v3500 = vmul.f32 %v3495, %v3499
  %vm3501 = vweird.f32 %v2371
  %vm3502 = vweird.f32 %v3495
  %vm3503 = vmor %vm3501, %vm3502
  %v3504 = vsel %vm3503, %v3495, %v3500
  %v3505 = vrsqrt.pop %v2372
  %v3506 = vmul.f32 %v3505, %v2372
  %v3507 = vmul.f32 %v3506, %v3505
  %v3508 = vmul.f32 0.5, %v3507
  %v3509 = vsub.f32 1.5, %v3508
  %v3510 = vmul.f32 %v3505, %v3509
  %vm3511 = vweird.f32 %v2372
  %vm3512 = vweird.f32 %v3505
  %vm3513 = vmor %vm3511, %vm3512
  %v3514 = vsel %vm3513, %v3505, %v3510
  %v3515 = vrsqrt.pop %v2373
  %v3516 = vmul.f32 %v3515, %v2373
  %v3517 = vmul.f32 %v3516, %v3515
  %v3518 = vmul.f32 0.5, %v3517
  %v3519 = vsub.f32 1.5, %v3518
  %v3520 = vmul.f32 %v3515, %v3519
  %vm3521 = vweird.f32 %v2373
  %vm3522 = vweird.f32 %v3515
  %vm3523 = vmor %vm3521, %vm3522
  %v3524 = vsel %vm3523, %v3515, %v3520
  %v3525 = vrsqrt.pop %v2374
  %v3526 = vmul.f32 %v3525, %v2374
  %v3527 = vmul.f32 %v3526, %v3525
  %v3528 = vmul.f32 0.5, %v3527
  %v3529 = vsub.f32 1.5, %v3528
  %v3530 = vmul.f32 %v3525, %v3529
  %vm3531 = vweird.f32 %v2374
  %vm3532 = vweird.f32 %v3525
  %vm3533 = vmor %vm3531, %vm3532
  %v3534 = vsel %vm3533, %v3525, %v3530
  %v3535 = vrsqrt.pop %v2375
  %v3536 = vmul.f32 %v3535, %v2375
  %v3537 = vmul.f32 %v3536, %v3535
  %v3538 = vmul.f32 0.5, %v3537
  %v3539 = vsub.f32 1.5, %v3538
  %v3540 = vmul.f32 %v3535, %v3539
  %vm3541 = vweird.f32 %v2375
  %vm3542 = vweird.f32 %v3535
  %vm3543 = vmor %vm3541, %vm3542
  %v3544 = vsel %vm3543, %v3535, %v3540
  %v3545 = vrsqrt.pop %v2376
  %v3546 = vmul.f32 %v3545, %v2376
  %v3547 = vmul.f32 %v3546, %v3545
  %v3548 = vmul.f32 0.5, %v3547
  %v3549 = vsub.f32 1.5, %v3548
  %v3550 = vmul.f32 %v3545, %v3549
  %vm3551 = vweird.f32 %v2376
  %vm3552 = vweird.f32 %v3545
  %vm3553 = vmor %vm3551, %vm3552
  %v3554 = vsel %vm3553, %v3545, %v3550
  %v3555 = vrsqrt.pop %v2377
  %v3556 = vmul.f32 %v3555, %v2377
  %v3557 = vmul.f32 %v3556, %v3555
  %v3558 = vmul.f32 0.5, %v3557
  %v3559 = vsub.f32 1.5, %v3558
  %v3560 = vmul.f32 %v3555, %v3559
  %vm3561 = vweird.f32 %v2377
  %vm3562 = vweird.f32 %v3555
  %vm3563 = vmor %vm3561, %vm3562
  %v3564 = vsel %vm3563, %v3555, %v3560
  %v3565 = vrsqrt.pop %v2378
  %v3566 = vmul.f32 %v3565, %v2378
  %v3567 = vmul.f32 %v3566, %v3565
  %v3568 = vmul.f32 0.5, %v3567
  %v3569 = vsub.f32 1.5, %v3568
  %v3570 = vmul.f32 %v3565, %v3569
  %vm3571 = vweird.f32 %v2378
  %vm3572 = vweird.f32 %v3565
  %vm3573 = vmor %vm3571, %vm3572
  %v3574 = vsel %vm3573, %v3565, %v3570
  %v3575 = vrsqrt.pop %v2379
  %v3576 = vmul.f32 %v3575, %v2379
  %v3577 = vmul.f32 %v3576, %v3575
  %v3578 = vmul.f32 0.5, %v3577
  %v3579 = vsub.f32 1.5, %v3578
  %v3580 = vmul.f32 %v3575, %v3579
  %vm3581 = vweird.f32 %v2379
  %vm3582 = vweird.f32 %v3575
  %vm3583 = vmor %vm3581, %vm3582
  %v3584 = vsel %vm3583, %v3575, %v3580
  %v3585 = vrsqrt.pop %v2380
  %v3586 = vmul.f32 %v3585, %v2380
  %v3587 = vmul.f32 %v3586, %v3585
  %v3588 = vmul.f32 0.5, %v3587
  %v3589 = vsub.f32 1.5, %v3588
  %v3590 = vmul.f32 %v3585, %v3589
  %vm3591 = vweird.f32 %v2380
  %vm3592 = vweird.f32 %v3585
  %vm3593 = vmor %vm3591, %vm3592
  %v3594 = vsel %vm3593, %v3585, %v3590
  %v3595 = vrsqrt.pop %v2381
  %v3596 = vmul.f32 %v3595, %v2381
  %v3597 = vmul.f32 %v3596, %v3595
  %v3598 = vmul.f32 0.5, %v3597
  %v3599 = vsub.f32 1.5, %v3598
  %v3600 = vmul.f32 %v3595, %v3599
  %vm3601 = vweird.f32 %v2381
  %vm3602 = vweird.f32 %v3595
  %vm3603 = vmor %vm3601, %vm3602
  %v3604 = vsel %vm3603, %v3595, %v3600
  %v3605 = vrsqrt.pop %v2382
  %v3606 = vmul.f32 %v3605, %v2382
  %v3607 = vmul.f32 %v3606, %v3605
  %v3608 = vmul.f32 0.5, %v3607
  %v3609 = vsub.f32 1.5, %v3608
  %v3610 = vmul.f32 %v3605, %v3609
  %vm3611 = vweird.f32 %v2382
  %vm3612 = vweird.f32 %v3605
  %vm3613 = vmor %vm3611, %vm3612
  %v3614 = vsel %vm3613, %v3605, %v3610
  %v3615 = vrsqrt.pop %v2383
  %v3616 = vmul.f32 %v3615, %v2383
  %v3617 = vmul.f32 %v3616, %v3615
  %v3618 = vmul.f32 0.5, %v3617
  %v3619 = vsub.f32 1.5, %v3618
  %v3620 = vmul.f32 %v3615, %v3619
  %vm3621 = vweird.f32 %v2383
  %vm3622 = vweird.f32 %v3615
  %vm3623 = vmor %vm3621, %vm3622
  %v3624 = vsel %vm3623, %v3615, %v3620
  %v3625 = vrsqrt.pop %v2384
  %v3626 = vmul.f32 %v3625, %v2384
  %v3627 = vmul.f32 %v3626, %v3625
  %v3628 = vmul.f32 0.5, %v3627
  %v3629 = vsub.f32 1.5, %v3628
  %v3630 = vmul.f32 %v3625, %v3629
  %vm3631 = vweird.f32 %v2384
  %vm3632 = vweird.f32 %v3625
  %vm3633 = vmor %vm3631, %vm3632
  %v3634 = vsel %vm3633, %v3625, %v3630
  %v3635 = vmul.f32 %v2135, %v2394
  %v3636 = vmul.f32 %v2136, %v2404
  %v3637 = vmul.f32 %v2137, %v2414
  %v3638 = vmul.f32 %v2138, %v2424
  %v3639 = vmul.f32 %v2139, %v2434
  %v3640 = vmul.f32 %v2140, %v2444
  %v3641 = vmul.f32 %v2141, %v2454
  %v3642 = vmul.f32 %v2142, %v2464
  %v3643 = vmul.f32 %v2143, %v2474
  %v3644 = vmul.f32 %v2144, %v2484
  %v3645 = vmul.f32 %v2145, %v2494
  %v3646 = vmul.f32 %v2146, %v2504
  %v3647 = vmul.f32 %v2147, %v2514
  %v3648 = vmul.f32 %v2148, %v2524
  %v3649 = vmul.f32 %v2149, %v2534
  %v3650 = vmul.f32 %v2150, %v2544
  %v3651 = vmul.f32 %v2151, %v2554
  %v3652 = vmul.f32 %v2152, %v2564
  %v3653 = vmul.f32 %v2153, %v2574
  %v3654 = vmul.f32 %v2154, %v2584
  %v3655 = vmul.f32 %v2155, %v2594
  %v3656 = vmul.f32 %v2156, %v2604
  %v3657 = vmul.f32 %v2157, %v2614
  %v3658 = vmul.f32 %v2158, %v2624
  %v3659 = vmul.f32 %v2159, %v2634
  %v3660 = vmul.f32 %v2160, %v2644
  %v3661 = vmul.f32 %v2161, %v2654
  %v3662 = vmul.f32 %v2162, %v2664
  %v3663 = vmul.f32 %v2163, %v2674
  %v3664 = vmul.f32 %v2164, %v2684
  %v3665 = vmul.f32 %v2165, %v2694
  %v3666 = vmul.f32 %v2166, %v2704
  %v3667 = vmul.f32 %v2167, %v2714
  %v3668 = vmul.f32 %v2168, %v2724
  %v3669 = vmul.f32 %v2169, %v2734
  %v3670 = vmul.f32 %v2170, %v2744
  %v3671 = vmul.f32 %v2171, %v2754
  %v3672 = vmul.f32 %v2172, %v2764
  %v3673 = vmul.f32 %v2173, %v2774
  %v3674 = vmul.f32 %v2174, %v2784
  %v3675 = vmul.f32 %v2175, %v2794
  %v3676 = vmul.f32 %v2176, %v2804
  %v3677 = vmul.f32 %v2177, %v2814
  %v3678 = vmul.f32 %v2178, %v2824
  %v3679 = vmul.f32 %v2179, %v2834
  %v3680 = vmul.f32 %v2180, %v2844
  %v3681 = vmul.f32 %v2181, %v2854
  %v3682 = vmul.f32 %v2182, %v2864
  %v3683 = vmul.f32 %v2183, %v2874
  %v3684 = vmul.f32 %v2184, %v2884
  %v3685 = vmul.f32 %v2185, %v2894
  %v3686 = vmul.f32 %v2186, %v2904
  %v3687 = vmul.f32 %v2187, %v2914
  %v3688 = vmul.f32 %v2188, %v2924
  %v3689 = vmul.f32 %v2189, %v2934
  %v3690 = vmul.f32 %v2190, %v2944
  %v3691 = vmul.f32 %v2191, %v2954
  %v3692 = vmul.f32 %v2192, %v2964
  %v3693 = vmul.f32 %v2193, %v2974
  %v3694 = vmul.f32 %v2194, %v2984
  %v3695 = vmul.f32 %v2195, %v2994
  %v3696 = vmul.f32 %v2196, %v3004
  %v3697 = vmul.f32 %v2197, %v3014
  %v3698 = vmul.f32 %v2198, %v3024
  %v3699 = vmul.f32 %v2199, %v3034
  %v3700 = vmul.f32 %v2200, %v3044
  %v3701 = vmul.f32 %v2201, %v3054
  %v3702 = vmul.f32 %v2202, %v3064
  %v3703 = vmul.f32 %v2203, %v3074
  %v3704 = vmul.f32 %v2204, %v3084
  %v3705 = vmul.f32 %v2205, %v3094
  %v3706 = vmul.f32 %v2206, %v3104
  %v3707 = vmul.f32 %v2207, %v3114
  %v3708 = vmul.f32 %v2208, %v3124
  %v3709 = vmul.f32 %v2209, %v3134
  %v3710 = vmul.f32 %v2210, %v3144
  %v3711 = vmul.f32 %v2211, %v3154
  %v3712 = vmul.f32 %v2212, %v3164
  %v3713 = vmul.f32 %v2213, %v3174
  %v3714 = vmul.f32 %v2214, %v3184
  %v3715 = vmul.f32 %v2215, %v3194
  %v3716 = vmul.f32 %v2216, %v3204
  %v3717 = vmul.f32 %v2217, %v3214
  %v3718 = vmul.f32 %v2218, %v3224
  %v3719 = vmul.f32 %v2219, %v3234
  %v3720 = vmul.f32 %v2220, %v3244
  %v3721 = vmul.f32 %v2221, %v3254
  %v3722 = vmul.f32 %v2222, %v3264
  %v3723 = vmul.f32 %v2223, %v3274
  %v3724 = vmul.f32 %v2224, %v3284
  %v3725 = vmul.f32 %v2225, %v3294
  %v3726 = vmul.f32 %v2226, %v3304
  %v3727 = vmul.f32 %v2227, %v3314
  %v3728 = vmul.f32 %v2228, %v3324
  %v3729 = vmul.f32 %v2229, %v3334
  %v3730 = vmul.f32 %v2230, %v3344
  %v3731 = vmul.f32 %v2231, %v3354
  %v3732 = vmul.f32 %v2232, %v3364
  %v3733 = vmul.f32 %v2233, %v3374
  %v3734 = vmul.f32 %v2234, %v3384
  %v3735 = vmul.f32 %v2235, %v3394
  %v3736 = vmul.f32 %v2236, %v3404
  %v3737 = vmul.f32 %v2237, %v3414
  %v3738 = vmul.f32 %v2238, %v3424
  %v3739 = vmul.f32 %v2239, %v3434
  %v3740 = vmul.f32 %v2240, %v3444
  %v3741 = vmul.f32 %v2241, %v3454
  %v3742 = vmul.f32 %v2242, %v3464
  %v3743 = vmul.f32 %v2243, %v3474
  %v3744 = vmul.f32 %v2244, %v3484
  %v3745 = vmul.f32 %v2245, %v3494
  %v3746 = vmul.f32 %v2246, %v3504
  %v3747 = vmul.f32 %v2247, %v3514
  %v3748 = vmul.f32 %v2248, %v3524
  %v3749 = vmul.f32 %v2249, %v3534
  %v3750 = vmul.f32 %v2250, %v3544
  %v3751 = vmul.f32 %v2251, %v3554
  %v3752 = vmul.f32 %v2252, %v3564
  %v3753 = vmul.f32 %v2253, %v3574
  %v3754 = vmul.f32 %v2254, %v3584
  %v3755 = vmul.f32 %v2255, %v3594
  %v3756 = vmul.f32 %v2256, %v3604
  %v3757 = vmul.f32 %v2257, %v3614
  %v3758 = vmul.f32 %v2258, %v3624
  %v3759 = vmul.f32 %v2259, %v3634
  %v3760 = vperm.slane %v1008, 0
  %v3761 = vmul.f32 %v3635, %v3760
  %v3762 = vmul.f32 %v3636, %v3760
  %v3763 = vmul.f32 %v3637, %v3760
  %v3764 = vmul.f32 %v3638, %v3760
  %v3765 = vmul.f32 %v3639, %v3760
  %v3766 = vmul.f32 %v3640, %v3760
  %v3767 = vmul.f32 %v3641, %v3760
  %v3768 = vmul.f32 %v3642, %v3760
  %v3769 = vmul.f32 %v3643, %v3760
  %v3770 = vmul.f32 %v3644, %v3760
  %v3771 = vmul.f32 %v3645, %v3760
  %v3772 = vmul.f32 %v3646, %v3760
  %v3773 = vmul.f32 %v3647, %v3760
  %v3774 = vmul.f32 %v3648, %v3760
  %v3775 = vmul.f32 %v3649, %v3760
  %v3776 = vmul.f32 %v3650, %v3760
  %v3777 = vmul.f32 %v3651, %v3760
  %v3778 = vmul.f32 %v3652, %v3760
  %v3779 = vmul.f32 %v3653, %v3760
  %v3780 = vmul.f32 %v3654, %v3760
  %v3781 = vmul.f32 %v3655, %v3760
  %v3782 = vmul.f32 %v3656, %v3760
  %v3783 = vmul.f32 %v3657, %v3760
  %v3784 = vmul.f32 %v3658, %v3760
  %v3785 = vmul.f32 %v3659, %v3760
  %v3786 = vmul.f32 %v3660, %v3760
  %v3787 = vmul.f32 %v3661, %v3760
  %v3788 = vmul.f32 %v3662, %v3760
  %v3789 = vmul.f32 %v3663, %v3760
  %v3790 = vmul.f32 %v3664, %v3760
  %v3791 = vmul.f32 %v3665, %v3760
  %v3792 = vmul.f32 %v3666, %v3760
  %v3793 = vmul.f32 %v3667, %v3760
  %v3794 = vmul.f32 %v3668, %v3760
  %v3795 = vmul.f32 %v3669, %v3760
  %v3796 = vmul.f32 %v3670, %v3760
  %v3797 = vmul.f32 %v3671, %v3760
  %v3798 = vmul.f32 %v3672, %v3760
  %v3799 = vmul.f32 %v3673, %v3760
  %v3800 = vmul.f32 %v3674, %v3760
  %v3801 = vmul.f32 %v3675, %v3760
  %v3802 = vmul.f32 %v3676, %v3760
  %v3803 = vmul.f32 %v3677, %v3760
  %v3804 = vmul.f32 %v3678, %v3760
  %v3805 = vmul.f32 %v3679, %v3760
  %v3806 = vmul.f32 %v3680, %v3760
  %v3807 = vmul.f32 %v3681, %v3760
  %v3808 = vmul.f32 %v3682, %v3760
  %v3809 = vmul.f32 %v3683, %v3760
  %v3810 = vmul.f32 %v3684, %v3760
  %v3811 = vmul.f32 %v3685, %v3760
  %v3812 = vmul.f32 %v3686, %v3760
  %v3813 = vmul.f32 %v3687, %v3760
  %v3814 = vmul.f32 %v3688, %v3760
  %v3815 = vmul.f32 %v3689, %v3760
  %v3816 = vmul.f32 %v3690, %v3760
  %v3817 = vmul.f32 %v3691, %v3760
  %v3818 = vmul.f32 %v3692, %v3760
  %v3819 = vmul.f32 %v3693, %v3760
  %v3820 = vmul.f32 %v3694, %v3760
  %v3821 = vmul.f32 %v3695, %v3760
  %v3822 = vmul.f32 %v3696, %v3760
  %v3823 = vmul.f32 %v3697, %v3760
  %v3824 = vmul.f32 %v3698, %v3760
  %v3825 = vmul.f32 %v3699, %v3760
  %v3826 = vmul.f32 %v3700, %v3760
  %v3827 = vmul.f32 %v3701, %v3760
  %v3828 = vmul.f32 %v3702, %v3760
  %v3829 = vmul.f32 %v3703, %v3760
  %v3830 = vmul.f32 %v3704, %v3760
  %v3831 = vmul.f32 %v3705, %v3760
  %v3832 = vmul.f32 %v3706, %v3760
  %v3833 = vmul.f32 %v3707, %v3760
  %v3834 = vmul.f32 %v3708, %v3760
  %v3835 = vmul.f32 %v3709, %v3760
  %v3836 = vmul.f32 %v3710, %v3760
  %v3837 = vmul.f32 %v3711, %v3760
  %v3838 = vmul.f32 %v3712, %v3760
  %v3839 = vmul.f32 %v3713, %v3760
  %v3840 = vmul.f32 %v3714, %v3760
  %v3841 = vmul.f32 %v3715, %v3760
  %v3842 = vmul.f32 %v3716, %v3760
  %v3843 = vmul.f32 %v3717, %v3760
  %v3844 = vmul.f32 %v3718, %v3760
  %v3845 = vmul.f32 %v3719, %v3760
  %v3846 = vmul.f32 %v3720, %v3760
  %v3847 = vmul.f32 %v3721, %v3760
  %v3848 = vmul.f32 %v3722, %v3760
  %v3849 = vmul.f32 %v3723, %v3760
  %v3850 = vmul.f32 %v3724, %v3760
  %v3851 = vmul.f32 %v3725, %v3760
  %v3852 = vmul.f32 %v3726, %v3760
  %v3853 = vmul.f32 %v3727, %v3760
  %v3854 = vmul.f32 %v3728, %v3760
  %v3855 = vmul.f32 %v3729, %v3760
  %v3856 = vmul.f32 %v3730, %v3760
  %v3857 = vmul.f32 %v3731, %v3760
  %v3858 = vmul.f32 %v3732, %v3760
  %v3859 = vmul.f32 %v3733, %v3760
  %v3860 = vmul.f32 %v3734, %v3760
  %v3861 = vmul.f32 %v3735, %v3760
  %v3862 = vmul.f32 %v3736, %v3760
  %v3863 = vmul.f32 %v3737, %v3760
  %v3864 = vmul.f32 %v3738, %v3760
  %v3865 = vmul.f32 %v3739, %v3760
  %v3866 = vmul.f32 %v3740, %v3760
  %v3867 = vmul.f32 %v3741, %v3760
  %v3868 = vmul.f32 %v3742, %v3760
  %v3869 = vmul.f32 %v3743, %v3760
  %v3870 = vmul.f32 %v3744, %v3760
  %v3871 = vmul.f32 %v3745, %v3760
  %v3872 = vmul.f32 %v3746, %v3760
  %v3873 = vmul.f32 %v3747, %v3760
  %v3874 = vmul.f32 %v3748, %v3760
  %v3875 = vmul.f32 %v3749, %v3760
  %v3876 = vmul.f32 %v3750, %v3760
  %v3877 = vmul.f32 %v3751, %v3760
  %v3878 = vmul.f32 %v3752, %v3760
  %v3879 = vmul.f32 %v3753, %v3760
  %v3880 = vmul.f32 %v3754, %v3760
  %v3881 = vmul.f32 %v3755, %v3760
  %v3882 = vmul.f32 %v3756, %v3760
  %v3883 = vmul.f32 %v3757, %v3760
  %v3884 = vmul.f32 %v3758, %v3760
  %v3885 = vmul.f32 %v3759, %v3760
  %v3886 = vperm.slane %v1009, 0
  %v3887 = vadd.f32 %v3761, %v3886
  %v3888 = vadd.f32 %v3762, %v3886
  %v3889 = vadd.f32 %v3763, %v3886
  %v3890 = vadd.f32 %v3764, %v3886
  %v3891 = vadd.f32 %v3765, %v3886
  %v3892 = vadd.f32 %v3766, %v3886
  %v3893 = vadd.f32 %v3767, %v3886
  %v3894 = vadd.f32 %v3768, %v3886
  %v3895 = vadd.f32 %v3769, %v3886
  %v3896 = vadd.f32 %v3770, %v3886
  %v3897 = vadd.f32 %v3771, %v3886
  %v3898 = vadd.f32 %v3772, %v3886
  %v3899 = vadd.f32 %v3773, %v3886
  %v3900 = vadd.f32 %v3774, %v3886
  %v3901 = vadd.f32 %v3775, %v3886
  %v3902 = vadd.f32 %v3776, %v3886
  %v3903 = vadd.f32 %v3777, %v3886
  %v3904 = vadd.f32 %v3778, %v3886
  %v3905 = vadd.f32 %v3779, %v3886
  %v3906 = vadd.f32 %v3780, %v3886
  %v3907 = vadd.f32 %v3781, %v3886
  %v3908 = vadd.f32 %v3782, %v3886
  %v3909 = vadd.f32 %v3783, %v3886
  %v3910 = vadd.f32 %v3784, %v3886
  %v3911 = vadd.f32 %v3785, %v3886
  %v3912 = vadd.f32 %v3786, %v3886
  %v3913 = vadd.f32 %v3787, %v3886
  %v3914 = vadd.f32 %v3788, %v3886
  %v3915 = vadd.f32 %v3789, %v3886
  %v3916 = vadd.f32 %v3790, %v3886
  %v3917 = vadd.f32 %v3791, %v3886
  %v3918 = vadd.f32 %v3792, %v3886
  %v3919 = vadd.f32 %v3793, %v3886
  %v3920 = vadd.f32 %v3794, %v3886
  %v3921 = vadd.f32 %v3795, %v3886
  %v3922 = vadd.f32 %v3796, %v3886
  %v3923 = vadd.f32 %v3797, %v3886
  %v3924 = vadd.f32 %v3798, %v3886
  %v3925 = vadd.f32 %v3799, %v3886
  %v3926 = vadd.f32 %v3800, %v3886
  %v3927 = vadd.f32 %v3801, %v3886
  %v3928 = vadd.f32 %v3802, %v3886
  %v3929 = vadd.f32 %v3803, %v3886
  %v3930 = vadd.f32 %v3804, %v3886
  %v3931 = vadd.f32 %v3805, %v3886
  %v3932 = vadd.f32 %v3806, %v3886
  %v3933 = vadd.f32 %v3807, %v3886
  %v3934 = vadd.f32 %v3808, %v3886
  %v3935 = vadd.f32 %v3809, %v3886
  %v3936 = vadd.f32 %v3810, %v3886
  %v3937 = vadd.f32 %v3811, %v3886
  %v3938 = vadd.f32 %v3812, %v3886
  %v3939 = vadd.f32 %v3813, %v3886
  %v3940 = vadd.f32 %v3814, %v3886
  %v3941 = vadd.f32 %v3815, %v3886
  %v3942 = vadd.f32 %v3816, %v3886
  %v3943 = vadd.f32 %v3817, %v3886
  %v3944 = vadd.f32 %v3818, %v3886
  %v3945 = vadd.f32 %v3819, %v3886
  %v3946 = vadd.f32 %v3820, %v3886
  %v3947 = vadd.f32 %v3821, %v3886
  %v3948 = vadd.f32 %v3822, %v3886
  %v3949 = vadd.f32 %v3823, %v3886
  %v3950 = vadd.f32 %v3824, %v3886
  %v3951 = vadd.f32 %v3825, %v3886
  %v3952 = vadd.f32 %v3826, %v3886
  %v3953 = vadd.f32 %v3827, %v3886
  %v3954 = vadd.f32 %v3828, %v3886
  %v3955 = vadd.f32 %v3829, %v3886
  %v3956 = vadd.f32 %v3830, %v3886
  %v3957 = vadd.f32 %v3831, %v3886
  %v3958 = vadd.f32 %v3832, %v3886
  %v3959 = vadd.f32 %v3833, %v3886
  %v3960 = vadd.f32 %v3834, %v3886
  %v3961 = vadd.f32 %v3835, %v3886
  %v3962 = vadd.f32 %v3836, %v3886
  %v3963 = vadd.f32 %v3837, %v3886
  %v3964 = vadd.f32 %v3838, %v3886
  %v3965 = vadd.f32 %v3839, %v3886
  %v3966 = vadd.f32 %v3840, %v3886
  %v3967 = vadd.f32 %v3841, %v3886
  %v3968 = vadd.f32 %v3842, %v3886
  %v3969 = vadd.f32 %v3843, %v3886
  %v3970 = vadd.f32 %v3844, %v3886
  %v3971 = vadd.f32 %v3845, %v3886
  %v3972 = vadd.f32 %v3846, %v3886
  %v3973 = vadd.f32 %v3847, %v3886
  %v3974 = vadd.f32 %v3848, %v3886
  %v3975 = vadd.f32 %v3849, %v3886
  %v3976 = vadd.f32 %v3850, %v3886
  %v3977 = vadd.f32 %v3851, %v3886
  %v3978 = vadd.f32 %v3852, %v3886
  %v3979 = vadd.f32 %v3853, %v3886
  %v3980 = vadd.f32 %v3854, %v3886
  %v3981 = vadd.f32 %v3855, %v3886
  %v3982 = vadd.f32 %v3856, %v3886
  %v3983 = vadd.f32 %v3857, %v3886
  %v3984 = vadd.f32 %v3858, %v3886
  %v3985 = vadd.f32 %v3859, %v3886
  %v3986 = vadd.f32 %v3860, %v3886
  %v3987 = vadd.f32 %v3861, %v3886
  %v3988 = vadd.f32 %v3862, %v3886
  %v3989 = vadd.f32 %v3863, %v3886
  %v3990 = vadd.f32 %v3864, %v3886
  %v3991 = vadd.f32 %v3865, %v3886
  %v3992 = vadd.f32 %v3866, %v3886
  %v3993 = vadd.f32 %v3867, %v3886
  %v3994 = vadd.f32 %v3868, %v3886
  %v3995 = vadd.f32 %v3869, %v3886
  %v3996 = vadd.f32 %v3870, %v3886
  %v3997 = vadd.f32 %v3871, %v3886
  %v3998 = vadd.f32 %v3872, %v3886
  %v3999 = vadd.f32 %v3873, %v3886
  %v4000 = vadd.f32 %v3874, %v3886
  %v4001 = vadd.f32 %v3875, %v3886
  %v4002 = vadd.f32 %v3876, %v3886
  %v4003 = vadd.f32 %v3877, %v3886
  %v4004 = vadd.f32 %v3878, %v3886
  %v4005 = vadd.f32 %v3879, %v3886
  %v4006 = vadd.f32 %v3880, %v3886
  %v4007 = vadd.f32 %v3881, %v3886
  %v4008 = vadd.f32 %v3882, %v3886
  %v4009 = vadd.f32 %v3883, %v3886
  %v4010 = vadd.f32 %v3884, %v3886
  %v4011 = vadd.f32 %v3885, %v3886
  %v4012 = vmax.f32 %v3887, 0.0
  %v4013 = vmax.f32 %v3888, 0.0
  %v4014 = vmax.f32 %v3889, 0.0
  %v4015 = vmax.f32 %v3890, 0.0
  %v4016 = vmax.f32 %v3891, 0.0
  %v4017 = vmax.f32 %v3892, 0.0
  %v4018 = vmax.f32 %v3893, 0.0
  %v4019 = vmax.f32 %v3894, 0.0
  %v4020 = vmax.f32 %v3895, 0.0
  %v4021 = vmax.f32 %v3896, 0.0
  %v4022 = vmax.f32 %v3897, 0.0
  %v4023 = vmax.f32 %v3898, 0.0
  %v4024 = vmax.f32 %v3899, 0.0
  %v4025 = vmax.f32 %v3900, 0.0
  %v4026 = vmax.f32 %v3901, 0.0
  %v4027 = vmax.f32 %v3902, 0.0
  %v4028 = vmax.f32 %v3903, 0.0
  %v4029 = vmax.f32 %v3904, 0.0
  %v4030 = vmax.f32 %v3905, 0.0
  %v4031 = vmax.f32 %v3906, 0.0
  %v4032 = vmax.f32 %v3907, 0.0
  %v4033 = vmax.f32 %v3908, 0.0
  %v4034 = vmax.f32 %v3909, 0.0
  %v4035 = vmax.f32 %v3910, 0.0
  %v4036 = vmax.f32 %v3911, 0.0
  %v4037 = vmax.f32 %v3912, 0.0
  %v4038 = vmax.f32 %v3913, 0.0
  %v4039 = vmax.f32 %v3914, 0.0
  %v4040 = vmax.f32 %v3915, 0.0
  %v4041 = vmax.f32 %v3916, 0.0
  %v4042 = vmax.f32 %v3917, 0.0
  %v4043 = vmax.f32 %v3918, 0.0
  %v4044 = vmax.f32 %v3919, 0.0
  %v4045 = vmax.f32 %v3920, 0.0
  %v4046 = vmax.f32 %v3921, 0.0
  %v4047 = vmax.f32 %v3922, 0.0
  %v4048 = vmax.f32 %v3923, 0.0
  %v4049 = vmax.f32 %v3924, 0.0
  %v4050 = vmax.f32 %v3925, 0.0
  %v4051 = vmax.f32 %v3926, 0.0
  %v4052 = vmax.f32 %v3927, 0.0
  %v4053 = vmax.f32 %v3928, 0.0
  %v4054 = vmax.f32 %v3929, 0.0
  %v4055 = vmax.f32 %v3930, 0.0
  %v4056 = vmax.f32 %v3931, 0.0
  %v4057 = vmax.f32 %v3932, 0.0
  %v4058 = vmax.f32 %v3933, 0.0
  %v4059 = vmax.f32 %v3934, 0.0
  %v4060 = vmax.f32 %v3935, 0.0
  %v4061 = vmax.f32 %v3936, 0.0
  %v4062 = vmax.f32 %v3937, 0.0
  %v4063 = vmax.f32 %v3938, 0.0
  %v4064 = vmax.f32 %v3939, 0.0
  %v4065 = vmax.f32 %v3940, 0.0
  %v4066 = vmax.f32 %v3941, 0.0
  %v4067 = vmax.f32 %v3942, 0.0
  %v4068 = vmax.f32 %v3943, 0.0
  %v4069 = vmax.f32 %v3944, 0.0
  %v4070 = vmax.f32 %v3945, 0.0
  %v4071 = vmax.f32 %v3946, 0.0
  %v4072 = vmax.f32 %v3947, 0.0
  %v4073 = vmax.f32 %v3948, 0.0
  %v4074 = vmax.f32 %v3949, 0.0
  %v4075 = vmax.f32 %v3950, 0.0
  %v4076 = vmax.f32 %v3951, 0.0
  %v4077 = vmax.f32 %v3952, 0.0
  %v4078 = vmax.f32 %v3953, 0.0
  %v4079 = vmax.f32 %v3954, 0.0
  %v4080 = vmax.f32 %v3955, 0.0
  %v4081 = vmax.f32 %v3956, 0.0
  %v4082 = vmax.f32 %v3957, 0.0
  %v4083 = vmax.f32 %v3958, 0.0
  %v4084 = vmax.f32 %v3959, 0.0
  %v4085 = vmax.f32 %v3960, 0.0
  %v4086 = vmax.f32 %v3961, 0.0
  %v4087 = vmax.f32 %v3962, 0.0
  %v4088 = vmax.f32 %v3963, 0.0
  %v4089 = vmax.f32 %v3964, 0.0
  %v4090 = vmax.f32 %v3965, 0.0
  %v4091 = vmax.f32 %v3966, 0.0
  %v4092 = vmax.f32 %v3967, 0.0
  %v4093 = vmax.f32 %v3968, 0.0
  %v4094 = vmax.f32 %v3969, 0.0
  %v4095 = vmax.f32 %v3970, 0.0
  %v4096 = vmax.f32 %v3971, 0.0
  %v4097 = vmax.f32 %v3972, 0.0
  %v4098 = vmax.f32 %v3973, 0.0
  %v4099 = vmax.f32 %v3974, 0.0
  %v4100 = vmax.f32 %v3975, 0.0
  %v4101 = vmax.f32 %v3976, 0.0
  %v4102 = vmax.f32 %v3977, 0.0
  %v4103 = vmax.f32 %v3978, 0.0
  %v4104 = vmax.f32 %v3979, 0.0
  %v4105 = vmax.f32 %v3980, 0.0
  %v4106 = vmax.f32 %v3981, 0.0
  %v4107 = vmax.f32 %v3982, 0.0
  %v4108 = vmax.f32 %v3983, 0.0
  %v4109 = vmax.f32 %v3984, 0.0
  %v4110 = vmax.f32 %v3985, 0.0
  %v4111 = vmax.f32 %v3986, 0.0
  %v4112 = vmax.f32 %v3987, 0.0
  %v4113 = vmax.f32 %v3988, 0.0
  %v4114 = vmax.f32 %v3989, 0.0
  %v4115 = vmax.f32 %v3990, 0.0
  %v4116 = vmax.f32 %v3991, 0.0
  %v4117 = vmax.f32 %v3992, 0.0
  %v4118 = vmax.f32 %v3993, 0.0
  %v4119 = vmax.f32 %v3994, 0.0
  %v4120 = vmax.f32 %v3995, 0.0
  %v4121 = vmax.f32 %v3996, 0.0
  %v4122 = vmax.f32 %v3997, 0.0
  %v4123 = vmax.f32 %v3998, 0.0
  %v4124 = vmax.f32 %v3999, 0.0
  %v4125 = vmax.f32 %v4000, 0.0
  %v4126 = vmax.f32 %v4001, 0.0
  %v4127 = vmax.f32 %v4002, 0.0
  %v4128 = vmax.f32 %v4003, 0.0
  %v4129 = vmax.f32 %v4004, 0.0
  %v4130 = vmax.f32 %v4005, 0.0
  %v4131 = vmax.f32 %v4006, 0.0
  %v4132 = vmax.f32 %v4007, 0.0
  %v4133 = vmax.f32 %v4008, 0.0
  %v4134 = vmax.f32 %v4009, 0.0
  %v4135 = vmax.f32 %v4010, 0.0
  %v4136 = vmax.f32 %v4011, 0.0
  %v4137 = vpack.c.bf16 %v4013, %v4012
  %v4138 = vpack.c.bf16 %v4015, %v4014
  %v4139 = vpack.c.bf16 %v4017, %v4016
  %v4140 = vpack.c.bf16 %v4019, %v4018
  %v4141 = vpack.c.bf16 %v4021, %v4020
  %v4142 = vpack.c.bf16 %v4023, %v4022
  %v4143 = vpack.c.bf16 %v4025, %v4024
  %v4144 = vpack.c.bf16 %v4027, %v4026
  %v4145 = vpack.c.bf16 %v4029, %v4028
  %v4146 = vpack.c.bf16 %v4031, %v4030
  %v4147 = vpack.c.bf16 %v4033, %v4032
  %v4148 = vpack.c.bf16 %v4035, %v4034
  %v4149 = vpack.c.bf16 %v4037, %v4036
  %v4150 = vpack.c.bf16 %v4039, %v4038
  %v4151 = vpack.c.bf16 %v4041, %v4040
  %v4152 = vpack.c.bf16 %v4043, %v4042
  %v4153 = vpack.c.bf16 %v4045, %v4044
  %v4154 = vpack.c.bf16 %v4047, %v4046
  %v4155 = vpack.c.bf16 %v4049, %v4048
  %v4156 = vpack.c.bf16 %v4051, %v4050
  %v4157 = vpack.c.bf16 %v4053, %v4052
  %v4158 = vpack.c.bf16 %v4055, %v4054
  %v4159 = vpack.c.bf16 %v4057, %v4056
  %v4160 = vpack.c.bf16 %v4059, %v4058
  %v4161 = vpack.c.bf16 %v4061, %v4060
  %v4162 = vpack.c.bf16 %v4063, %v4062
  %v4163 = vpack.c.bf16 %v4065, %v4064
  %v4164 = vpack.c.bf16 %v4067, %v4066
  %v4165 = vpack.c.bf16 %v4069, %v4068
  %v4166 = vpack.c.bf16 %v4071, %v4070
  %v4167 = vpack.c.bf16 %v4073, %v4072
  %v4168 = vpack.c.bf16 %v4075, %v4074
  %v4169 = vpack.c.bf16 %v4077, %v4076
  %v4170 = vpack.c.bf16 %v4079, %v4078
  %v4171 = vpack.c.bf16 %v4081, %v4080
  %v4172 = vpack.c.bf16 %v4083, %v4082
  %v4173 = vpack.c.bf16 %v4085, %v4084
  %v4174 = vpack.c.bf16 %v4087, %v4086
  %v4175 = vpack.c.bf16 %v4089, %v4088
  %v4176 = vpack.c.bf16 %v4091, %v4090
  %v4177 = vpack.c.bf16 %v4093, %v4092
  %v4178 = vpack.c.bf16 %v4095, %v4094
  %v4179 = vpack.c.bf16 %v4097, %v4096
  %v4180 = vpack.c.bf16 %v4099, %v4098
  %v4181 = vpack.c.bf16 %v4101, %v4100
  %v4182 = vpack.c.bf16 %v4103, %v4102
  %v4183 = vpack.c.bf16 %v4105, %v4104
  %v4184 = vpack.c.bf16 %v4107, %v4106
  %v4185 = vpack.c.bf16 %v4109, %v4108
  %v4186 = vpack.c.bf16 %v4111, %v4110
  %v4187 = vpack.c.bf16 %v4113, %v4112
  %v4188 = vpack.c.bf16 %v4115, %v4114
  %v4189 = vpack.c.bf16 %v4117, %v4116
  %v4190 = vpack.c.bf16 %v4119, %v4118
  %v4191 = vpack.c.bf16 %v4121, %v4120
  %v4192 = vpack.c.bf16 %v4123, %v4122
  %v4193 = vpack.c.bf16 %v4125, %v4124
  %v4194 = vpack.c.bf16 %v4127, %v4126
  %v4195 = vpack.c.bf16 %v4129, %v4128
  %v4196 = vpack.c.bf16 %v4131, %v4130
  %v4197 = vpack.c.bf16 %v4133, %v4132
  %v4198 = vpack.c.bf16 %v4135, %v4134
  %v4199 = vpack.c.bf16 %v4136, %v4136
  %v4200 = vld [vmem:[%s2 + $0x3] sm:$0x1]
  %v4201 = vperm.slane %v4200, 0
  %v4218 = vunpack.c.l.b16 %v17
  %v4219 = vunpack.c.l.b16 %v18
  %v4220 = vunpack.c.l.b16 %v19
  %v4221 = vunpack.c.l.b16 %v20
  %v4222 = vunpack.c.l.b16 %v21
  %v4223 = vunpack.c.l.b16 %v22
  %v4224 = vunpack.c.l.b16 %v23
  %v4225 = vunpack.c.l.b16 %v24
  %v4226 = vunpack.c.l.b16 %v25
  %v4227 = vunpack.c.l.b16 %v26
  %v4228 = vunpack.c.l.b16 %v27
  %v4229 = vunpack.c.l.b16 %v28
  %v4230 = vunpack.c.l.b16 %v29
  %v4231 = vunpack.c.l.b16 %v30
  %v4232 = vunpack.c.l.b16 %v31
  %v4233 = vunpack.c.l.b16 %v32
  %v4234 = vpack.c.b16 %v4219, %v4218
  %v4235 = vpack.c.b16 %v4221, %v4220
  %v4236 = vpack.c.b16 %v4223, %v4222
  %v4237 = vpack.c.b16 %v4225, %v4224
  %v4238 = vpack.c.b16 %v4227, %v4226
  %v4239 = vpack.c.b16 %v4229, %v4228
  %v4240 = vpack.c.b16 %v4231, %v4230
  %v4241 = vpack.c.b16 %v4233, %v4232
  %4250 = vmatpush.bf16.msra.mxu0 %v4241
  %4251 = vmatpush.bf16.msra.mxu0 %v4240
  %4252 = vmatpush.bf16.msra.mxu0 %v4239
  %4253 = vmatpush.bf16.msra.mxu0 %v4238
  %4254 = vmatpush.bf16.msra.mxu0 %v4237
  %4255 = vmatpush.bf16.msra.mxu0 %v4236
  %4256 = vmatpush.bf16.msra.mxu0 %v4235
  %4257 = vmatpush.bf16.msra.mxu0 %v4234
  %4258 = vmatmul.bf16.gmra.mxu0 %v4137
  %v4259 = vpop.f32.mrf.mxu0
  %v4260 = vadd.f32 %v4201, %v4259
  %v4261 = vpop.f32.mrf.mxu0
  %v4262 = vadd.f32 %v4201, %v4261
  %4263 = vmatmul.bf16.gmra.mxu0 %v4138
  %v4264 = vpop.f32.mrf.mxu0
  %v4265 = vadd.f32 %v4201, %v4264
  %v4266 = vpop.f32.mrf.mxu0
  %v4267 = vadd.f32 %v4201, %v4266
  %4268 = vmatmul.bf16.gmra.mxu0 %v4139
  %v4269 = vpop.f32.mrf.mxu0
  %v4270 = vadd.f32 %v4201, %v4269
  %v4271 = vpop.f32.mrf.mxu0
  %v4272 = vadd.f32 %v4201, %v4271
  %4273 = vmatmul.bf16.gmra.mxu0 %v4140
  %v4274 = vpop.f32.mrf.mxu0
  %v4275 = vadd.f32 %v4201, %v4274
  %v4276 = vpop.f32.mrf.mxu0
  %v4277 = vadd.f32 %v4201, %v4276
  %4278 = vmatmul.bf16.gmra.mxu0 %v4141
  %v4279 = vpop.f32.mrf.mxu0
  %v4280 = vadd.f32 %v4201, %v4279
  %v4281 = vpop.f32.mrf.mxu0
  %v4282 = vadd.f32 %v4201, %v4281
  %4283 = vmatmul.bf16.gmra.mxu0 %v4142
  %v4284 = vpop.f32.mrf.mxu0
  %v4285 = vadd.f32 %v4201, %v4284
  %v4286 = vpop.f32.mrf.mxu0
  %v4287 = vadd.f32 %v4201, %v4286
  %4288 = vmatmul.bf16.gmra.mxu0 %v4143
  %v4289 = vpop.f32.mrf.mxu0
  %v4290 = vadd.f32 %v4201, %v4289
  %v4291 = vpop.f32.mrf.mxu0
  %v4292 = vadd.f32 %v4201, %v4291
  %4293 = vmatmul.bf16.gmra.mxu0 %v4144
  %v4294 = vpop.f32.mrf.mxu0
  %v4295 = vadd.f32 %v4201, %v4294
  %v4296 = vpop.f32.mrf.mxu0
  %v4297 = vadd.f32 %v4201, %v4296
  %4298 = vmatmul.bf16.gmra.mxu0 %v4145
  %v4299 = vpop.f32.mrf.mxu0
  %v4300 = vadd.f32 %v4201, %v4299
  %v4301 = vpop.f32.mrf.mxu0
  %v4302 = vadd.f32 %v4201, %v4301
  %4303 = vmatmul.bf16.gmra.mxu0 %v4146
  %v4304 = vpop.f32.mrf.mxu0
  %v4305 = vadd.f32 %v4201, %v4304
  %v4306 = vpop.f32.mrf.mxu0
  %v4307 = vadd.f32 %v4201, %v4306
  %4308 = vmatmul.bf16.gmra.mxu0 %v4147
  %v4309 = vpop.f32.mrf.mxu0
  %v4310 = vadd.f32 %v4201, %v4309
  %v4311 = vpop.f32.mrf.mxu0
  %v4312 = vadd.f32 %v4201, %v4311
  %4313 = vmatmul.bf16.gmra.mxu0 %v4148
  %v4314 = vpop.f32.mrf.mxu0
  %v4315 = vadd.f32 %v4201, %v4314
  %v4316 = vpop.f32.mrf.mxu0
  %v4317 = vadd.f32 %v4201, %v4316
  %4318 = vmatmul.bf16.gmra.mxu0 %v4149
  %v4319 = vpop.f32.mrf.mxu0
  %v4320 = vadd.f32 %v4201, %v4319
  %v4321 = vpop.f32.mrf.mxu0
  %v4322 = vadd.f32 %v4201, %v4321
  %4323 = vmatmul.bf16.gmra.mxu0 %v4150
  %v4324 = vpop.f32.mrf.mxu0
  %v4325 = vadd.f32 %v4201, %v4324
  %v4326 = vpop.f32.mrf.mxu0
  %v4327 = vadd.f32 %v4201, %v4326
  %4328 = vmatmul.bf16.gmra.mxu0 %v4151
  %v4329 = vpop.f32.mrf.mxu0
  %v4330 = vadd.f32 %v4201, %v4329
  %v4331 = vpop.f32.mrf.mxu0
  %v4332 = vadd.f32 %v4201, %v4331
  %4333 = vmatmul.bf16.gmra.mxu0 %v4152
  %v4334 = vpop.f32.mrf.mxu0
  %v4335 = vadd.f32 %v4201, %v4334
  %v4336 = vpop.f32.mrf.mxu0
  %v4337 = vadd.f32 %v4201, %v4336
  %4338 = vmatmul.bf16.gmra.mxu0 %v4153
  %v4339 = vpop.f32.mrf.mxu0
  %v4340 = vadd.f32 %v4201, %v4339
  %v4341 = vpop.f32.mrf.mxu0
  %v4342 = vadd.f32 %v4201, %v4341
  %4343 = vmatmul.bf16.gmra.mxu0 %v4154
  %v4344 = vpop.f32.mrf.mxu0
  %v4345 = vadd.f32 %v4201, %v4344
  %v4346 = vpop.f32.mrf.mxu0
  %v4347 = vadd.f32 %v4201, %v4346
  %4348 = vmatmul.bf16.gmra.mxu0 %v4155
  %v4349 = vpop.f32.mrf.mxu0
  %v4350 = vadd.f32 %v4201, %v4349
  %v4351 = vpop.f32.mrf.mxu0
  %v4352 = vadd.f32 %v4201, %v4351
  %4353 = vmatmul.bf16.gmra.mxu0 %v4156
  %v4354 = vpop.f32.mrf.mxu0
  %v4355 = vadd.f32 %v4201, %v4354
  %v4356 = vpop.f32.mrf.mxu0
  %v4357 = vadd.f32 %v4201, %v4356
  %4358 = vmatmul.bf16.gmra.mxu0 %v4157
  %v4359 = vpop.f32.mrf.mxu0
  %v4360 = vadd.f32 %v4201, %v4359
  %v4361 = vpop.f32.mrf.mxu0
  %v4362 = vadd.f32 %v4201, %v4361
  %4363 = vmatmul.bf16.gmra.mxu0 %v4158
  %v4364 = vpop.f32.mrf.mxu0
  %v4365 = vadd.f32 %v4201, %v4364
  %v4366 = vpop.f32.mrf.mxu0
  %v4367 = vadd.f32 %v4201, %v4366
  %4368 = vmatmul.bf16.gmra.mxu0 %v4159
  %v4369 = vpop.f32.mrf.mxu0
  %v4370 = vadd.f32 %v4201, %v4369
  %v4371 = vpop.f32.mrf.mxu0
  %v4372 = vadd.f32 %v4201, %v4371
  %4373 = vmatmul.bf16.gmra.mxu0 %v4160
  %v4374 = vpop.f32.mrf.mxu0
  %v4375 = vadd.f32 %v4201, %v4374
  %v4376 = vpop.f32.mrf.mxu0
  %v4377 = vadd.f32 %v4201, %v4376
  %4378 = vmatmul.bf16.gmra.mxu0 %v4161
  %v4379 = vpop.f32.mrf.mxu0
  %v4380 = vadd.f32 %v4201, %v4379
  %v4381 = vpop.f32.mrf.mxu0
  %v4382 = vadd.f32 %v4201, %v4381
  %4383 = vmatmul.bf16.gmra.mxu0 %v4162
  %v4384 = vpop.f32.mrf.mxu0
  %v4385 = vadd.f32 %v4201, %v4384
  %v4386 = vpop.f32.mrf.mxu0
  %v4387 = vadd.f32 %v4201, %v4386
  %4388 = vmatmul.bf16.gmra.mxu0 %v4163
  %v4389 = vpop.f32.mrf.mxu0
  %v4390 = vadd.f32 %v4201, %v4389
  %v4391 = vpop.f32.mrf.mxu0
  %v4392 = vadd.f32 %v4201, %v4391
  %4393 = vmatmul.bf16.gmra.mxu0 %v4164
  %v4394 = vpop.f32.mrf.mxu0
  %v4395 = vadd.f32 %v4201, %v4394
  %v4396 = vpop.f32.mrf.mxu0
  %v4397 = vadd.f32 %v4201, %v4396
  %4398 = vmatmul.bf16.gmra.mxu0 %v4165
  %v4399 = vpop.f32.mrf.mxu0
  %v4400 = vadd.f32 %v4201, %v4399
  %v4401 = vpop.f32.mrf.mxu0
  %v4402 = vadd.f32 %v4201, %v4401
  %4403 = vmatmul.bf16.gmra.mxu0 %v4166
  %v4404 = vpop.f32.mrf.mxu0
  %v4405 = vadd.f32 %v4201, %v4404
  %v4406 = vpop.f32.mrf.mxu0
  %v4407 = vadd.f32 %v4201, %v4406
  %4408 = vmatmul.bf16.gmra.mxu0 %v4167
  %v4409 = vpop.f32.mrf.mxu0
  %v4410 = vadd.f32 %v4201, %v4409
  %v4411 = vpop.f32.mrf.mxu0
  %v4412 = vadd.f32 %v4201, %v4411
  %4413 = vmatmul.bf16.gmra.mxu0 %v4168
  %v4414 = vpop.f32.mrf.mxu0
  %v4415 = vadd.f32 %v4201, %v4414
  %v4416 = vpop.f32.mrf.mxu0
  %v4417 = vadd.f32 %v4201, %v4416
  %4418 = vmatmul.bf16.gmra.mxu0 %v4169
  %v4419 = vpop.f32.mrf.mxu0
  %v4420 = vadd.f32 %v4201, %v4419
  %v4421 = vpop.f32.mrf.mxu0
  %v4422 = vadd.f32 %v4201, %v4421
  %4423 = vmatmul.bf16.gmra.mxu0 %v4170
  %v4424 = vpop.f32.mrf.mxu0
  %v4425 = vadd.f32 %v4201, %v4424
  %v4426 = vpop.f32.mrf.mxu0
  %v4427 = vadd.f32 %v4201, %v4426
  %4428 = vmatmul.bf16.gmra.mxu0 %v4171
  %v4429 = vpop.f32.mrf.mxu0
  %v4430 = vadd.f32 %v4201, %v4429
  %v4431 = vpop.f32.mrf.mxu0
  %v4432 = vadd.f32 %v4201, %v4431
  %4433 = vmatmul.bf16.gmra.mxu0 %v4172
  %v4434 = vpop.f32.mrf.mxu0
  %v4435 = vadd.f32 %v4201, %v4434
  %v4436 = vpop.f32.mrf.mxu0
  %v4437 = vadd.f32 %v4201, %v4436
  %4438 = vmatmul.bf16.gmra.mxu0 %v4173
  %v4439 = vpop.f32.mrf.mxu0
  %v4440 = vadd.f32 %v4201, %v4439
  %v4441 = vpop.f32.mrf.mxu0
  %v4442 = vadd.f32 %v4201, %v4441
  %4443 = vmatmul.bf16.gmra.mxu0 %v4174
  %v4444 = vpop.f32.mrf.mxu0
  %v4445 = vadd.f32 %v4201, %v4444
  %v4446 = vpop.f32.mrf.mxu0
  %v4447 = vadd.f32 %v4201, %v4446
  %4448 = vmatmul.bf16.gmra.mxu0 %v4175
  %v4449 = vpop.f32.mrf.mxu0
  %v4450 = vadd.f32 %v4201, %v4449
  %v4451 = vpop.f32.mrf.mxu0
  %v4452 = vadd.f32 %v4201, %v4451
  %4453 = vmatmul.bf16.gmra.mxu0 %v4176
  %v4454 = vpop.f32.mrf.mxu0
  %v4455 = vadd.f32 %v4201, %v4454
  %v4456 = vpop.f32.mrf.mxu0
  %v4457 = vadd.f32 %v4201, %v4456
  %4458 = vmatmul.bf16.gmra.mxu0 %v4177
  %v4459 = vpop.f32.mrf.mxu0
  %v4460 = vadd.f32 %v4201, %v4459
  %v4461 = vpop.f32.mrf.mxu0
  %v4462 = vadd.f32 %v4201, %v4461
  %4463 = vmatmul.bf16.gmra.mxu0 %v4178
  %v4464 = vpop.f32.mrf.mxu0
  %v4465 = vadd.f32 %v4201, %v4464
  %v4466 = vpop.f32.mrf.mxu0
  %v4467 = vadd.f32 %v4201, %v4466
  %4468 = vmatmul.bf16.gmra.mxu0 %v4179
  %v4469 = vpop.f32.mrf.mxu0
  %v4470 = vadd.f32 %v4201, %v4469
  %v4471 = vpop.f32.mrf.mxu0
  %v4472 = vadd.f32 %v4201, %v4471
  %4473 = vmatmul.bf16.gmra.mxu0 %v4180
  %v4474 = vpop.f32.mrf.mxu0
  %v4475 = vadd.f32 %v4201, %v4474
  %v4476 = vpop.f32.mrf.mxu0
  %v4477 = vadd.f32 %v4201, %v4476
  %4478 = vmatmul.bf16.gmra.mxu0 %v4181
  %v4479 = vpop.f32.mrf.mxu0
  %v4480 = vadd.f32 %v4201, %v4479
  %v4481 = vpop.f32.mrf.mxu0
  %v4482 = vadd.f32 %v4201, %v4481
  %4483 = vmatmul.bf16.gmra.mxu0 %v4182
  %v4484 = vpop.f32.mrf.mxu0
  %v4485 = vadd.f32 %v4201, %v4484
  %v4486 = vpop.f32.mrf.mxu0
  %v4487 = vadd.f32 %v4201, %v4486
  %4488 = vmatmul.bf16.gmra.mxu0 %v4183
  %v4489 = vpop.f32.mrf.mxu0
  %v4490 = vadd.f32 %v4201, %v4489
  %v4491 = vpop.f32.mrf.mxu0
  %v4492 = vadd.f32 %v4201, %v4491
  %4493 = vmatmul.bf16.gmra.mxu0 %v4184
  %v4494 = vpop.f32.mrf.mxu0
  %v4495 = vadd.f32 %v4201, %v4494
  %v4496 = vpop.f32.mrf.mxu0
  %v4497 = vadd.f32 %v4201, %v4496
  %4498 = vmatmul.bf16.gmra.mxu0 %v4185
  %v4499 = vpop.f32.mrf.mxu0
  %v4500 = vadd.f32 %v4201, %v4499
  %v4501 = vpop.f32.mrf.mxu0
  %v4502 = vadd.f32 %v4201, %v4501
  %4503 = vmatmul.bf16.gmra.mxu0 %v4186
  %v4504 = vpop.f32.mrf.mxu0
  %v4505 = vadd.f32 %v4201, %v4504
  %v4506 = vpop.f32.mrf.mxu0
  %v4507 = vadd.f32 %v4201, %v4506
  %4508 = vmatmul.bf16.gmra.mxu0 %v4187
  %v4509 = vpop.f32.mrf.mxu0
  %v4510 = vadd.f32 %v4201, %v4509
  %v4511 = vpop.f32.mrf.mxu0
  %v4512 = vadd.f32 %v4201, %v4511
  %4513 = vmatmul.bf16.gmra.mxu0 %v4188
  %v4514 = vpop.f32.mrf.mxu0
  %v4515 = vadd.f32 %v4201, %v4514
  %v4516 = vpop.f32.mrf.mxu0
  %v4517 = vadd.f32 %v4201, %v4516
  %4518 = vmatmul.bf16.gmra.mxu0 %v4189
  %v4519 = vpop.f32.mrf.mxu0
  %v4520 = vadd.f32 %v4201, %v4519
  %v4521 = vpop.f32.mrf.mxu0
  %v4522 = vadd.f32 %v4201, %v4521
  %4523 = vmatmul.bf16.gmra.mxu0 %v4190
  %v4524 = vpop.f32.mrf.mxu0
  %v4525 = vadd.f32 %v4201, %v4524
  %v4526 = vpop.f32.mrf.mxu0
  %v4527 = vadd.f32 %v4201, %v4526
  %4528 = vmatmul.bf16.gmra.mxu0 %v4191
  %v4529 = vpop.f32.mrf.mxu0
  %v4530 = vadd.f32 %v4201, %v4529
  %v4531 = vpop.f32.mrf.mxu0
  %v4532 = vadd.f32 %v4201, %v4531
  %4533 = vmatmul.bf16.gmra.mxu0 %v4192
  %v4534 = vpop.f32.mrf.mxu0
  %v4535 = vadd.f32 %v4201, %v4534
  %v4536 = vpop.f32.mrf.mxu0
  %v4537 = vadd.f32 %v4201, %v4536
  %4538 = vmatmul.bf16.gmra.mxu0 %v4193
  %v4539 = vpop.f32.mrf.mxu0
  %v4540 = vadd.f32 %v4201, %v4539
  %v4541 = vpop.f32.mrf.mxu0
  %v4542 = vadd.f32 %v4201, %v4541
  %4543 = vmatmul.bf16.gmra.mxu0 %v4194
  %v4544 = vpop.f32.mrf.mxu0
  %v4545 = vadd.f32 %v4201, %v4544
  %v4546 = vpop.f32.mrf.mxu0
  %v4547 = vadd.f32 %v4201, %v4546
  %4548 = vmatmul.bf16.gmra.mxu0 %v4195
  %v4549 = vpop.f32.mrf.mxu0
  %v4550 = vadd.f32 %v4201, %v4549
  %v4551 = vpop.f32.mrf.mxu0
  %v4552 = vadd.f32 %v4201, %v4551
  %4553 = vmatmul.bf16.gmra.mxu0 %v4196
  %v4554 = vpop.f32.mrf.mxu0
  %v4555 = vadd.f32 %v4201, %v4554
  %v4556 = vpop.f32.mrf.mxu0
  %v4557 = vadd.f32 %v4201, %v4556
  %4558 = vmatmul.bf16.gmra.mxu0 %v4197
  %v4559 = vpop.f32.mrf.mxu0
  %v4560 = vadd.f32 %v4201, %v4559
  %v4561 = vpop.f32.mrf.mxu0
  %v4562 = vadd.f32 %v4201, %v4561
  %4563 = vmatmul.bf16.gmra.mxu0 %v4198
  %v4564 = vpop.f32.mrf.mxu0
  %v4565 = vadd.f32 %v4201, %v4564
  %v4566 = vpop.f32.mrf.mxu0
  %v4567 = vadd.f32 %v4201, %v4566
  %4568 = vmatmul.bf16.gmra.mxu0 %v4199
  %v4569 = vpop.f32.mrf.mxu0
  %v4570 = vadd.f32 %v4201, %v4569
  %v4571 = vpop.f32.mrf.mxu0
  %4572 = vdwg.mxu0
  %v4573 = vld [vmem:[%s2 + $0x4] sm:$0x1]
  %v4574 = vld [vmem:[%s2 + $0x5] sm:$0x1]
  %4575 = vadd.xlane.f32.xlu0 %v4260
  %v4576 = vpop.xlane.xlu0 %4575
  %4577 = vadd.xlane.f32.xlu0 %v4262
  %v4578 = vpop.xlane.xlu0 %4577
  %4579 = vadd.xlane.f32.xlu0 %v4265
  %v4580 = vpop.xlane.xlu0 %4579
  %4581 = vadd.xlane.f32.xlu0 %v4267
  %v4582 = vpop.xlane.xlu0 %4581
  %4583 = vadd.xlane.f32.xlu0 %v4270
  %v4584 = vpop.xlane.xlu0 %4583
  %4585 = vadd.xlane.f32.xlu0 %v4272
  %v4586 = vpop.xlane.xlu0 %4585
  %4587 = vadd.xlane.f32.xlu0 %v4275
  %v4588 = vpop.xlane.xlu0 %4587
  %4589 = vadd.xlane.f32.xlu0 %v4277
  %v4590 = vpop.xlane.xlu0 %4589
  %4591 = vadd.xlane.f32.xlu0 %v4280
  %v4592 = vpop.xlane.xlu0 %4591
  %4593 = vadd.xlane.f32.xlu0 %v4282
  %v4594 = vpop.xlane.xlu0 %4593
  %4595 = vadd.xlane.f32.xlu0 %v4285
  %v4596 = vpop.xlane.xlu0 %4595
  %4597 = vadd.xlane.f32.xlu0 %v4287
  %v4598 = vpop.xlane.xlu0 %4597
  %4599 = vadd.xlane.f32.xlu0 %v4290
  %v4600 = vpop.xlane.xlu0 %4599
  %4601 = vadd.xlane.f32.xlu0 %v4292
  %v4602 = vpop.xlane.xlu0 %4601
  %4603 = vadd.xlane.f32.xlu0 %v4295
  %v4604 = vpop.xlane.xlu0 %4603
  %4605 = vadd.xlane.f32.xlu0 %v4297
  %v4606 = vpop.xlane.xlu0 %4605
  %4607 = vadd.xlane.f32.xlu0 %v4300
  %v4608 = vpop.xlane.xlu0 %4607
  %4609 = vadd.xlane.f32.xlu0 %v4302
  %v4610 = vpop.xlane.xlu0 %4609
  %4611 = vadd.xlane.f32.xlu0 %v4305
  %v4612 = vpop.xlane.xlu0 %4611
  %4613 = vadd.xlane.f32.xlu0 %v4307
  %v4614 = vpop.xlane.xlu0 %4613
  %4615 = vadd.xlane.f32.xlu0 %v4310
  %v4616 = vpop.xlane.xlu0 %4615
  %4617 = vadd.xlane.f32.xlu0 %v4312
  %v4618 = vpop.xlane.xlu0 %4617
  %4619 = vadd.xlane.f32.xlu0 %v4315
  %v4620 = vpop.xlane.xlu0 %4619
  %4621 = vadd.xlane.f32.xlu0 %v4317
  %v4622 = vpop.xlane.xlu0 %4621
  %4623 = vadd.xlane.f32.xlu0 %v4320
  %v4624 = vpop.xlane.xlu0 %4623
  %4625 = vadd.xlane.f32.xlu0 %v4322
  %v4626 = vpop.xlane.xlu0 %4625
  %4627 = vadd.xlane.f32.xlu0 %v4325
  %v4628 = vpop.xlane.xlu0 %4627
  %4629 = vadd.xlane.f32.xlu0 %v4327
  %v4630 = vpop.xlane.xlu0 %4629
  %4631 = vadd.xlane.f32.xlu0 %v4330
  %v4632 = vpop.xlane.xlu0 %4631
  %4633 = vadd.xlane.f32.xlu0 %v4332
  %v4634 = vpop.xlane.xlu0 %4633
  %4635 = vadd.xlane.f32.xlu0 %v4335
  %v4636 = vpop.xlane.xlu0 %4635
  %4637 = vadd.xlane.f32.xlu0 %v4337
  %v4638 = vpop.xlane.xlu0 %4637
  %4639 = vadd.xlane.f32.xlu0 %v4340
  %v4640 = vpop.xlane.xlu0 %4639
  %4641 = vadd.xlane.f32.xlu0 %v4342
  %v4642 = vpop.xlane.xlu0 %4641
  %4643 = vadd.xlane.f32.xlu0 %v4345
  %v4644 = vpop.xlane.xlu0 %4643
  %4645 = vadd.xlane.f32.xlu0 %v4347
  %v4646 = vpop.xlane.xlu0 %4645
  %4647 = vadd.xlane.f32.xlu0 %v4350
  %v4648 = vpop.xlane.xlu0 %4647
  %4649 = vadd.xlane.f32.xlu0 %v4352
  %v4650 = vpop.xlane.xlu0 %4649
  %4651 = vadd.xlane.f32.xlu0 %v4355
  %v4652 = vpop.xlane.xlu0 %4651
  %4653 = vadd.xlane.f32.xlu0 %v4357
  %v4654 = vpop.xlane.xlu0 %4653
  %4655 = vadd.xlane.f32.xlu0 %v4360
  %v4656 = vpop.xlane.xlu0 %4655
  %4657 = vadd.xlane.f32.xlu0 %v4362
  %v4658 = vpop.xlane.xlu0 %4657
  %4659 = vadd.xlane.f32.xlu0 %v4365
  %v4660 = vpop.xlane.xlu0 %4659
  %4661 = vadd.xlane.f32.xlu0 %v4367
  %v4662 = vpop.xlane.xlu0 %4661
  %4663 = vadd.xlane.f32.xlu0 %v4370
  %v4664 = vpop.xlane.xlu0 %4663
  %4665 = vadd.xlane.f32.xlu0 %v4372
  %v4666 = vpop.xlane.xlu0 %4665
  %4667 = vadd.xlane.f32.xlu0 %v4375
  %v4668 = vpop.xlane.xlu0 %4667
  %4669 = vadd.xlane.f32.xlu0 %v4377
  %v4670 = vpop.xlane.xlu0 %4669
  %4671 = vadd.xlane.f32.xlu0 %v4380
  %v4672 = vpop.xlane.xlu0 %4671
  %4673 = vadd.xlane.f32.xlu0 %v4382
  %v4674 = vpop.xlane.xlu0 %4673
  %4675 = vadd.xlane.f32.xlu0 %v4385
  %v4676 = vpop.xlane.xlu0 %4675
  %4677 = vadd.xlane.f32.xlu0 %v4387
  %v4678 = vpop.xlane.xlu0 %4677
  %4679 = vadd.xlane.f32.xlu0 %v4390
  %v4680 = vpop.xlane.xlu0 %4679
  %4681 = vadd.xlane.f32.xlu0 %v4392
  %v4682 = vpop.xlane.xlu0 %4681
  %4683 = vadd.xlane.f32.xlu0 %v4395
  %v4684 = vpop.xlane.xlu0 %4683
  %4685 = vadd.xlane.f32.xlu0 %v4397
  %v4686 = vpop.xlane.xlu0 %4685
  %4687 = vadd.xlane.f32.xlu0 %v4400
  %v4688 = vpop.xlane.xlu0 %4687
  %4689 = vadd.xlane.f32.xlu0 %v4402
  %v4690 = vpop.xlane.xlu0 %4689
  %4691 = vadd.xlane.f32.xlu0 %v4405
  %v4692 = vpop.xlane.xlu0 %4691
  %4693 = vadd.xlane.f32.xlu0 %v4407
  %v4694 = vpop.xlane.xlu0 %4693
  %4695 = vadd.xlane.f32.xlu0 %v4410
  %v4696 = vpop.xlane.xlu0 %4695
  %4697 = vadd.xlane.f32.xlu0 %v4412
  %v4698 = vpop.xlane.xlu0 %4697
  %4699 = vadd.xlane.f32.xlu0 %v4415
  %v4700 = vpop.xlane.xlu0 %4699
  %4701 = vadd.xlane.f32.xlu0 %v4417
  %v4702 = vpop.xlane.xlu0 %4701
  %4703 = vadd.xlane.f32.xlu0 %v4420
  %v4704 = vpop.xlane.xlu0 %4703
  %4705 = vadd.xlane.f32.xlu0 %v4422
  %v4706 = vpop.xlane.xlu0 %4705
  %4707 = vadd.xlane.f32.xlu0 %v4425
  %v4708 = vpop.xlane.xlu0 %4707
  %4709 = vadd.xlane.f32.xlu0 %v4427
  %v4710 = vpop.xlane.xlu0 %4709
  %4711 = vadd.xlane.f32.xlu0 %v4430
  %v4712 = vpop.xlane.xlu0 %4711
  %4713 = vadd.xlane.f32.xlu0 %v4432
  %v4714 = vpop.xlane.xlu0 %4713
  %4715 = vadd.xlane.f32.xlu0 %v4435
  %v4716 = vpop.xlane.xlu0 %4715
  %4717 = vadd.xlane.f32.xlu0 %v4437
  %v4718 = vpop.xlane.xlu0 %4717
  %4719 = vadd.xlane.f32.xlu0 %v4440
  %v4720 = vpop.xlane.xlu0 %4719
  %4721 = vadd.xlane.f32.xlu0 %v4442
  %v4722 = vpop.xlane.xlu0 %4721
  %4723 = vadd.xlane.f32.xlu0 %v4445
  %v4724 = vpop.xlane.xlu0 %4723
  %4725 = vadd.xlane.f32.xlu0 %v4447
  %v4726 = vpop.xlane.xlu0 %4725
  %4727 = vadd.xlane.f32.xlu0 %v4450
  %v4728 = vpop.xlane.xlu0 %4727
  %4729 = vadd.xlane.f32.xlu0 %v4452
  %v4730 = vpop.xlane.xlu0 %4729
  %4731 = vadd.xlane.f32.xlu0 %v4455
  %v4732 = vpop.xlane.xlu0 %4731
  %4733 = vadd.xlane.f32.xlu0 %v4457
  %v4734 = vpop.xlane.xlu0 %4733
  %4735 = vadd.xlane.f32.xlu0 %v4460
  %v4736 = vpop.xlane.xlu0 %4735
  %4737 = vadd.xlane.f32.xlu0 %v4462
  %v4738 = vpop.xlane.xlu0 %4737
  %4739 = vadd.xlane.f32.xlu0 %v4465
  %v4740 = vpop.xlane.xlu0 %4739
  %4741 = vadd.xlane.f32.xlu0 %v4467
  %v4742 = vpop.xlane.xlu0 %4741
  %4743 = vadd.xlane.f32.xlu0 %v4470
  %v4744 = vpop.xlane.xlu0 %4743
  %4745 = vadd.xlane.f32.xlu0 %v4472
  %v4746 = vpop.xlane.xlu0 %4745
  %4747 = vadd.xlane.f32.xlu0 %v4475
  %v4748 = vpop.xlane.xlu0 %4747
  %4749 = vadd.xlane.f32.xlu0 %v4477
  %v4750 = vpop.xlane.xlu0 %4749
  %4751 = vadd.xlane.f32.xlu0 %v4480
  %v4752 = vpop.xlane.xlu0 %4751
  %4753 = vadd.xlane.f32.xlu0 %v4482
  %v4754 = vpop.xlane.xlu0 %4753
  %4755 = vadd.xlane.f32.xlu0 %v4485
  %v4756 = vpop.xlane.xlu0 %4755
  %4757 = vadd.xlane.f32.xlu0 %v4487
  %v4758 = vpop.xlane.xlu0 %4757
  %4759 = vadd.xlane.f32.xlu0 %v4490
  %v4760 = vpop.xlane.xlu0 %4759
  %4761 = vadd.xlane.f32.xlu0 %v4492
  %v4762 = vpop.xlane.xlu0 %4761
  %4763 = vadd.xlane.f32.xlu0 %v4495
  %v4764 = vpop.xlane.xlu0 %4763
  %4765 = vadd.xlane.f32.xlu0 %v4497
  %v4766 = vpop.xlane.xlu0 %4765
  %4767 = vadd.xlane.f32.xlu0 %v4500
  %v4768 = vpop.xlane.xlu0 %4767
  %4769 = vadd.xlane.f32.xlu0 %v4502
  %v4770 = vpop.xlane.xlu0 %4769
  %4771 = vadd.xlane.f32.xlu0 %v4505
  %v4772 = vpop.xlane.xlu0 %4771
  %4773 = vadd.xlane.f32.xlu0 %v4507
  %v4774 = vpop.xlane.xlu0 %4773
  %4775 = vadd.xlane.f32.xlu0 %v4510
  %v4776 = vpop.xlane.xlu0 %4775
  %4777 = vadd.xlane.f32.xlu0 %v4512
  %v4778 = vpop.xlane.xlu0 %4777
  %4779 = vadd.xlane.f32.xlu0 %v4515
  %v4780 = vpop.xlane.xlu0 %4779
  %4781 = vadd.xlane.f32.xlu0 %v4517
  %v4782 = vpop.xlane.xlu0 %4781
  %4783 = vadd.xlane.f32.xlu0 %v4520
  %v4784 = vpop.xlane.xlu0 %4783
  %4785 = vadd.xlane.f32.xlu0 %v4522
  %v4786 = vpop.xlane.xlu0 %4785
  %4787 = vadd.xlane.f32.xlu0 %v4525
  %v4788 = vpop.xlane.xlu0 %4787
  %4789 = vadd.xlane.f32.xlu0 %v4527
  %v4790 = vpop.xlane.xlu0 %4789
  %4791 = vadd.xlane.f32.xlu0 %v4530
  %v4792 = vpop.xlane.xlu0 %4791
  %4793 = vadd.xlane.f32.xlu0 %v4532
  %v4794 = vpop.xlane.xlu0 %4793
  %4795 = vadd.xlane.f32.xlu0 %v4535
  %v4796 = vpop.xlane.xlu0 %4795
  %4797 = vadd.xlane.f32.xlu0 %v4537
  %v4798 = vpop.xlane.xlu0 %4797
  %4799 = vadd.xlane.f32.xlu0 %v4540
  %v4800 = vpop.xlane.xlu0 %4799
  %4801 = vadd.xlane.f32.xlu0 %v4542
  %v4802 = vpop.xlane.xlu0 %4801
  %4803 = vadd.xlane.f32.xlu0 %v4545
  %v4804 = vpop.xlane.xlu0 %4803
  %4805 = vadd.xlane.f32.xlu0 %v4547
  %v4806 = vpop.xlane.xlu0 %4805
  %4807 = vadd.xlane.f32.xlu0 %v4550
  %v4808 = vpop.xlane.xlu0 %4807
  %4809 = vadd.xlane.f32.xlu0 %v4552
  %v4810 = vpop.xlane.xlu0 %4809
  %4811 = vadd.xlane.f32.xlu0 %v4555
  %v4812 = vpop.xlane.xlu0 %4811
  %4813 = vadd.xlane.f32.xlu0 %v4557
  %v4814 = vpop.xlane.xlu0 %4813
  %4815 = vadd.xlane.f32.xlu0 %v4560
  %v4816 = vpop.xlane.xlu0 %4815
  %4817 = vadd.xlane.f32.xlu0 %v4562
  %v4818 = vpop.xlane.xlu0 %4817
  %4819 = vadd.xlane.f32.xlu0 %v4565
  %v4820 = vpop.xlane.xlu0 %4819
  %4821 = vadd.xlane.f32.xlu0 %v4567
  %v4822 = vpop.xlane.xlu0 %4821
  %4823 = vadd.xlane.f32.xlu0 %v4570
  %v4824 = vpop.xlane.xlu0 %4823
  %v4825 = vmul.f32 %v4260, %v4260
  %v4826 = vmul.f32 %v4262, %v4262
  %v4827 = vmul.f32 %v4265, %v4265
  %v4828 = vmul.f32 %v4267, %v4267
  %v4829 = vmul.f32 %v4270, %v4270
  %v4830 = vmul.f32 %v4272, %v4272
  %v4831 = vmul.f32 %v4275, %v4275
  %v4832 = vmul.f32 %v4277, %v4277
  %v4833 = vmul.f32 %v4280, %v4280
  %v4834 = vmul.f32 %v4282, %v4282
  %v4835 = vmul.f32 %v4285, %v4285
  %v4836 = vmul.f32 %v4287, %v4287
  %v4837 = vmul.f32 %v4290, %v4290
  %v4838 = vmul.f32 %v4292, %v4292
  %v4839 = vmul.f32 %v4295, %v4295
  %v4840 = vmul.f32 %v4297, %v4297
  %v4841 = vmul.f32 %v4300, %v4300
  %v4842 = vmul.f32 %v4302, %v4302
  %v4843 = vmul.f32 %v4305, %v4305
  %v4844 = vmul.f32 %v4307, %v4307
  %v4845 = vmul.f32 %v4310, %v4310
  %v4846 = vmul.f32 %v4312, %v4312
  %v4847 = vmul.f32 %v4315, %v4315
  %v4848 = vmul.f32 %v4317, %v4317
  %v4849 = vmul.f32 %v4320, %v4320
  %v4850 = vmul.f32 %v4322, %v4322
  %v4851 = vmul.f32 %v4325, %v4325
  %v4852 = vmul.f32 %v4327, %v4327
  %v4853 = vmul.f32 %v4330, %v4330
  %v4854 = vmul.f32 %v4332, %v4332
  %v4855 = vmul.f32 %v4335, %v4335
  %v4856 = vmul.f32 %v4337, %v4337
  %v4857 = vmul.f32 %v4340, %v4340
  %v4858 = vmul.f32 %v4342, %v4342
  %v4859 = vmul.f32 %v4345, %v4345
  %v4860 = vmul.f32 %v4347, %v4347
  %v4861 = vmul.f32 %v4350, %v4350
  %v4862 = vmul.f32 %v4352, %v4352
  %v4863 = vmul.f32 %v4355, %v4355
  %v4864 = vmul.f32 %v4357, %v4357
  %v4865 = vmul.f32 %v4360, %v4360
  %v4866 = vmul.f32 %v4362, %v4362
  %v4867 = vmul.f32 %v4365, %v4365
  %v4868 = vmul.f32 %v4367, %v4367
  %v4869 = vmul.f32 %v4370, %v4370
  %v4870 = vmul.f32 %v4372, %v4372
  %v4871 = vmul.f32 %v4375, %v4375
  %v4872 = vmul.f32 %v4377, %v4377
  %v4873 = vmul.f32 %v4380, %v4380
  %v4874 = vmul.f32 %v4382, %v4382
  %v4875 = vmul.f32 %v4385, %v4385
  %v4876 = vmul.f32 %v4387, %v4387
  %v4877 = vmul.f32 %v4390, %v4390
  %v4878 = vmul.f32 %v4392, %v4392
  %v4879 = vmul.f32 %v4395, %v4395
  %v4880 = vmul.f32 %v4397, %v4397
  %v4881 = vmul.f32 %v4400, %v4400
  %v4882 = vmul.f32 %v4402, %v4402
  %v4883 = vmul.f32 %v4405, %v4405
  %v4884 = vmul.f32 %v4407, %v4407
  %v4885 = vmul.f32 %v4410, %v4410
  %v4886 = vmul.f32 %v4412, %v4412
  %v4887 = vmul.f32 %v4415, %v4415
  %v4888 = vmul.f32 %v4417, %v4417
  %v4889 = vmul.f32 %v4420, %v4420
  %v4890 = vmul.f32 %v4422, %v4422
  %v4891 = vmul.f32 %v4425, %v4425
  %v4892 = vmul.f32 %v4427, %v4427
  %v4893 = vmul.f32 %v4430, %v4430
  %v4894 = vmul.f32 %v4432, %v4432
  %v4895 = vmul.f32 %v4435, %v4435
  %v4896 = vmul.f32 %v4437, %v4437
  %v4897 = vmul.f32 %v4440, %v4440
  %v4898 = vmul.f32 %v4442, %v4442
  %v4899 = vmul.f32 %v4445, %v4445
  %v4900 = vmul.f32 %v4447, %v4447
  %v4901 = vmul.f32 %v4450, %v4450
  %v4902 = vmul.f32 %v4452, %v4452
  %v4903 = vmul.f32 %v4455, %v4455
  %v4904 = vmul.f32 %v4457, %v4457
  %v4905 = vmul.f32 %v4460, %v4460
  %v4906 = vmul.f32 %v4462, %v4462
  %v4907 = vmul.f32 %v4465, %v4465
  %v4908 = vmul.f32 %v4467, %v4467
  %v4909 = vmul.f32 %v4470, %v4470
  %v4910 = vmul.f32 %v4472, %v4472
  %v4911 = vmul.f32 %v4475, %v4475
  %v4912 = vmul.f32 %v4477, %v4477
  %v4913 = vmul.f32 %v4480, %v4480
  %v4914 = vmul.f32 %v4482, %v4482
  %v4915 = vmul.f32 %v4485, %v4485
  %v4916 = vmul.f32 %v4487, %v4487
  %v4917 = vmul.f32 %v4490, %v4490
  %v4918 = vmul.f32 %v4492, %v4492
  %v4919 = vmul.f32 %v4495, %v4495
  %v4920 = vmul.f32 %v4497, %v4497
  %v4921 = vmul.f32 %v4500, %v4500
  %v4922 = vmul.f32 %v4502, %v4502
  %v4923 = vmul.f32 %v4505, %v4505
  %v4924 = vmul.f32 %v4507, %v4507
  %v4925 = vmul.f32 %v4510, %v4510
  %v4926 = vmul.f32 %v4512, %v4512
  %v4927 = vmul.f32 %v4515, %v4515
  %v4928 = vmul.f32 %v4517, %v4517
  %v4929 = vmul.f32 %v4520, %v4520
  %v4930 = vmul.f32 %v4522, %v4522
  %v4931 = vmul.f32 %v4525, %v4525
  %v4932 = vmul.f32 %v4527, %v4527
  %v4933 = vmul.f32 %v4530, %v4530
  %v4934 = vmul.f32 %v4532, %v4532
  %v4935 = vmul.f32 %v4535, %v4535
  %v4936 = vmul.f32 %v4537, %v4537
  %v4937 = vmul.f32 %v4540, %v4540
  %v4938 = vmul.f32 %v4542, %v4542
  %v4939 = vmul.f32 %v4545, %v4545
  %v4940 = vmul.f32 %v4547, %v4547
  %v4941 = vmul.f32 %v4550, %v4550
  %v4942 = vmul.f32 %v4552, %v4552
  %v4943 = vmul.f32 %v4555, %v4555
  %v4944 = vmul.f32 %v4557, %v4557
  %v4945 = vmul.f32 %v4560, %v4560
  %v4946 = vmul.f32 %v4562, %v4562
  %v4947 = vmul.f32 %v4565, %v4565
  %v4948 = vmul.f32 %v4567, %v4567
  %v4949 = vmul.f32 %v4570, %v4570
  %4950 = vadd.xlane.f32.xlu0 %v4825
  %v4951 = vpop.xlane.xlu0 %4950
  %4952 = vadd.xlane.f32.xlu0 %v4826
  %v4953 = vpop.xlane.xlu0 %4952
  %4954 = vadd.xlane.f32.xlu0 %v4827
  %v4955 = vpop.xlane.xlu0 %4954
  %4956 = vadd.xlane.f32.xlu0 %v4828
  %v4957 = vpop.xlane.xlu0 %4956
  %4958 = vadd.xlane.f32.xlu0 %v4829
  %v4959 = vpop.xlane.xlu0 %4958
  %4960 = vadd.xlane.f32.xlu0 %v4830
  %v4961 = vpop.xlane.xlu0 %4960
  %4962 = vadd.xlane.f32.xlu0 %v4831
  %v4963 = vpop.xlane.xlu0 %4962
  %4964 = vadd.xlane.f32.xlu0 %v4832
  %v4965 = vpop.xlane.xlu0 %4964
  %4966 = vadd.xlane.f32.xlu0 %v4833
  %v4967 = vpop.xlane.xlu0 %4966
  %4968 = vadd.xlane.f32.xlu0 %v4834
  %v4969 = vpop.xlane.xlu0 %4968
  %4970 = vadd.xlane.f32.xlu0 %v4835
  %v4971 = vpop.xlane.xlu0 %4970
  %4972 = vadd.xlane.f32.xlu0 %v4836
  %v4973 = vpop.xlane.xlu0 %4972
  %4974 = vadd.xlane.f32.xlu0 %v4837
  %v4975 = vpop.xlane.xlu0 %4974
  %4976 = vadd.xlane.f32.xlu0 %v4838
  %v4977 = vpop.xlane.xlu0 %4976
  %4978 = vadd.xlane.f32.xlu0 %v4839
  %v4979 = vpop.xlane.xlu0 %4978
  %4980 = vadd.xlane.f32.xlu0 %v4840
  %v4981 = vpop.xlane.xlu0 %4980
  %4982 = vadd.xlane.f32.xlu0 %v4841
  %v4983 = vpop.xlane.xlu0 %4982
  %4984 = vadd.xlane.f32.xlu0 %v4842
  %v4985 = vpop.xlane.xlu0 %4984
  %4986 = vadd.xlane.f32.xlu0 %v4843
  %v4987 = vpop.xlane.xlu0 %4986
  %4988 = vadd.xlane.f32.xlu0 %v4844
  %v4989 = vpop.xlane.xlu0 %4988
  %4990 = vadd.xlane.f32.xlu0 %v4845
  %v4991 = vpop.xlane.xlu0 %4990
  %4992 = vadd.xlane.f32.xlu0 %v4846
  %v4993 = vpop.xlane.xlu0 %4992
  %4994 = vadd.xlane.f32.xlu0 %v4847
  %v4995 = vpop.xlane.xlu0 %4994
  %4996 = vadd.xlane.f32.xlu0 %v4848
  %v4997 = vpop.xlane.xlu0 %4996
  %4998 = vadd.xlane.f32.xlu0 %v4849
  %v4999 = vpop.xlane.xlu0 %4998
  %5000 = vadd.xlane.f32.xlu0 %v4850
  %v5001 = vpop.xlane.xlu0 %5000
  %5002 = vadd.xlane.f32.xlu0 %v4851
  %v5003 = vpop.xlane.xlu0 %5002
  %5004 = vadd.xlane.f32.xlu0 %v4852
  %v5005 = vpop.xlane.xlu0 %5004
  %5006 = vadd.xlane.f32.xlu0 %v4853
  %v5007 = vpop.xlane.xlu0 %5006
  %5008 = vadd.xlane.f32.xlu0 %v4854
  %v5009 = vpop.xlane.xlu0 %5008
  %5010 = vadd.xlane.f32.xlu0 %v4855
  %v5011 = vpop.xlane.xlu0 %5010
  %5012 = vadd.xlane.f32.xlu0 %v4856
  %v5013 = vpop.xlane.xlu0 %5012
  %5014 = vadd.xlane.f32.xlu0 %v4857
  %v5015 = vpop.xlane.xlu0 %5014
  %5016 = vadd.xlane.f32.xlu0 %v4858
  %v5017 = vpop.xlane.xlu0 %5016
  %5018 = vadd.xlane.f32.xlu0 %v4859
  %v5019 = vpop.xlane.xlu0 %5018
  %5020 = vadd.xlane.f32.xlu0 %v4860
  %v5021 = vpop.xlane.xlu0 %5020
  %5022 = vadd.xlane.f32.xlu0 %v4861
  %v5023 = vpop.xlane.xlu0 %5022
  %5024 = vadd.xlane.f32.xlu0 %v4862
  %v5025 = vpop.xlane.xlu0 %5024
  %5026 = vadd.xlane.f32.xlu0 %v4863
  %v5027 = vpop.xlane.xlu0 %5026
  %5028 = vadd.xlane.f32.xlu0 %v4864
  %v5029 = vpop.xlane.xlu0 %5028
  %5030 = vadd.xlane.f32.xlu0 %v4865
  %v5031 = vpop.xlane.xlu0 %5030
  %5032 = vadd.xlane.f32.xlu0 %v4866
  %v5033 = vpop.xlane.xlu0 %5032
  %5034 = vadd.xlane.f32.xlu0 %v4867
  %v5035 = vpop.xlane.xlu0 %5034
  %5036 = vadd.xlane.f32.xlu0 %v4868
  %v5037 = vpop.xlane.xlu0 %5036
  %5038 = vadd.xlane.f32.xlu0 %v4869
  %v5039 = vpop.xlane.xlu0 %5038
  %5040 = vadd.xlane.f32.xlu0 %v4870
  %v5041 = vpop.xlane.xlu0 %5040
  %5042 = vadd.xlane.f32.xlu0 %v4871
  %v5043 = vpop.xlane.xlu0 %5042
  %5044 = vadd.xlane.f32.xlu0 %v4872
  %v5045 = vpop.xlane.xlu0 %5044
  %5046 = vadd.xlane.f32.xlu0 %v4873
  %v5047 = vpop.xlane.xlu0 %5046
  %5048 = vadd.xlane.f32.xlu0 %v4874
  %v5049 = vpop.xlane.xlu0 %5048
  %5050 = vadd.xlane.f32.xlu0 %v4875
  %v5051 = vpop.xlane.xlu0 %5050
  %5052 = vadd.xlane.f32.xlu0 %v4876
  %v5053 = vpop.xlane.xlu0 %5052
  %5054 = vadd.xlane.f32.xlu0 %v4877
  %v5055 = vpop.xlane.xlu0 %5054
  %5056 = vadd.xlane.f32.xlu0 %v4878
  %v5057 = vpop.xlane.xlu0 %5056
  %5058 = vadd.xlane.f32.xlu0 %v4879
  %v5059 = vpop.xlane.xlu0 %5058
  %5060 = vadd.xlane.f32.xlu0 %v4880
  %v5061 = vpop.xlane.xlu0 %5060
  %5062 = vadd.xlane.f32.xlu0 %v4881
  %v5063 = vpop.xlane.xlu0 %5062
  %5064 = vadd.xlane.f32.xlu0 %v4882
  %v5065 = vpop.xlane.xlu0 %5064
  %5066 = vadd.xlane.f32.xlu0 %v4883
  %v5067 = vpop.xlane.xlu0 %5066
  %5068 = vadd.xlane.f32.xlu0 %v4884
  %v5069 = vpop.xlane.xlu0 %5068
  %5070 = vadd.xlane.f32.xlu0 %v4885
  %v5071 = vpop.xlane.xlu0 %5070
  %5072 = vadd.xlane.f32.xlu0 %v4886
  %v5073 = vpop.xlane.xlu0 %5072
  %5074 = vadd.xlane.f32.xlu0 %v4887
  %v5075 = vpop.xlane.xlu0 %5074
  %5076 = vadd.xlane.f32.xlu0 %v4888
  %v5077 = vpop.xlane.xlu0 %5076
  %5078 = vadd.xlane.f32.xlu0 %v4889
  %v5079 = vpop.xlane.xlu0 %5078
  %5080 = vadd.xlane.f32.xlu0 %v4890
  %v5081 = vpop.xlane.xlu0 %5080
  %5082 = vadd.xlane.f32.xlu0 %v4891
  %v5083 = vpop.xlane.xlu0 %5082
  %5084 = vadd.xlane.f32.xlu0 %v4892
  %v5085 = vpop.xlane.xlu0 %5084
  %5086 = vadd.xlane.f32.xlu0 %v4893
  %v5087 = vpop.xlane.xlu0 %5086
  %5088 = vadd.xlane.f32.xlu0 %v4894
  %v5089 = vpop.xlane.xlu0 %5088
  %5090 = vadd.xlane.f32.xlu0 %v4895
  %v5091 = vpop.xlane.xlu0 %5090
  %5092 = vadd.xlane.f32.xlu0 %v4896
  %v5093 = vpop.xlane.xlu0 %5092
  %5094 = vadd.xlane.f32.xlu0 %v4897
  %v5095 = vpop.xlane.xlu0 %5094
  %5096 = vadd.xlane.f32.xlu0 %v4898
  %v5097 = vpop.xlane.xlu0 %5096
  %5098 = vadd.xlane.f32.xlu0 %v4899
  %v5099 = vpop.xlane.xlu0 %5098
  %5100 = vadd.xlane.f32.xlu0 %v4900
  %v5101 = vpop.xlane.xlu0 %5100
  %5102 = vadd.xlane.f32.xlu0 %v4901
  %v5103 = vpop.xlane.xlu0 %5102
  %5104 = vadd.xlane.f32.xlu0 %v4902
  %v5105 = vpop.xlane.xlu0 %5104
  %5106 = vadd.xlane.f32.xlu0 %v4903
  %v5107 = vpop.xlane.xlu0 %5106
  %5108 = vadd.xlane.f32.xlu0 %v4904
  %v5109 = vpop.xlane.xlu0 %5108
  %5110 = vadd.xlane.f32.xlu0 %v4905
  %v5111 = vpop.xlane.xlu0 %5110
  %5112 = vadd.xlane.f32.xlu0 %v4906
  %v5113 = vpop.xlane.xlu0 %5112
  %5114 = vadd.xlane.f32.xlu0 %v4907
  %v5115 = vpop.xlane.xlu0 %5114
  %5116 = vadd.xlane.f32.xlu0 %v4908
  %v5117 = vpop.xlane.xlu0 %5116
  %5118 = vadd.xlane.f32.xlu0 %v4909
  %v5119 = vpop.xlane.xlu0 %5118
  %5120 = vadd.xlane.f32.xlu0 %v4910
  %v5121 = vpop.xlane.xlu0 %5120
  %5122 = vadd.xlane.f32.xlu0 %v4911
  %v5123 = vpop.xlane.xlu0 %5122
  %5124 = vadd.xlane.f32.xlu0 %v4912
  %v5125 = vpop.xlane.xlu0 %5124
  %5126 = vadd.xlane.f32.xlu0 %v4913
  %v5127 = vpop.xlane.xlu0 %5126
  %5128 = vadd.xlane.f32.xlu0 %v4914
  %v5129 = vpop.xlane.xlu0 %5128
  %5130 = vadd.xlane.f32.xlu0 %v4915
  %v5131 = vpop.xlane.xlu0 %5130
  %5132 = vadd.xlane.f32.xlu0 %v4916
  %v5133 = vpop.xlane.xlu0 %5132
  %5134 = vadd.xlane.f32.xlu0 %v4917
  %v5135 = vpop.xlane.xlu0 %5134
  %5136 = vadd.xlane.f32.xlu0 %v4918
  %v5137 = vpop.xlane.xlu0 %5136
  %5138 = vadd.xlane.f32.xlu0 %v4919
  %v5139 = vpop.xlane.xlu0 %5138
  %5140 = vadd.xlane.f32.xlu0 %v4920
  %v5141 = vpop.xlane.xlu0 %5140
  %5142 = vadd.xlane.f32.xlu0 %v4921
  %v5143 = vpop.xlane.xlu0 %5142
  %5144 = vadd.xlane.f32.xlu0 %v4922
  %v5145 = vpop.xlane.xlu0 %5144
  %5146 = vadd.xlane.f32.xlu0 %v4923
  %v5147 = vpop.xlane.xlu0 %5146
  %5148 = vadd.xlane.f32.xlu0 %v4924
  %v5149 = vpop.xlane.xlu0 %5148
  %5150 = vadd.xlane.f32.xlu0 %v4925
  %v5151 = vpop.xlane.xlu0 %5150
  %5152 = vadd.xlane.f32.xlu0 %v4926
  %v5153 = vpop.xlane.xlu0 %5152
  %5154 = vadd.xlane.f32.xlu0 %v4927
  %v5155 = vpop.xlane.xlu0 %5154
  %5156 = vadd.xlane.f32.xlu0 %v4928
  %v5157 = vpop.xlane.xlu0 %5156
  %5158 = vadd.xlane.f32.xlu0 %v4929
  %v5159 = vpop.xlane.xlu0 %5158
  %5160 = vadd.xlane.f32.xlu0 %v4930
  %v5161 = vpop.xlane.xlu0 %5160
  %5162 = vadd.xlane.f32.xlu0 %v4931
  %v5163 = vpop.xlane.xlu0 %5162
  %5164 = vadd.xlane.f32.xlu0 %v4932
  %v5165 = vpop.xlane.xlu0 %5164
  %5166 = vadd.xlane.f32.xlu0 %v4933
  %v5167 = vpop.xlane.xlu0 %5166
  %5168 = vadd.xlane.f32.xlu0 %v4934
  %v5169 = vpop.xlane.xlu0 %5168
  %5170 = vadd.xlane.f32.xlu0 %v4935
  %v5171 = vpop.xlane.xlu0 %5170
  %5172 = vadd.xlane.f32.xlu0 %v4936
  %v5173 = vpop.xlane.xlu0 %5172
  %5174 = vadd.xlane.f32.xlu0 %v4937
  %v5175 = vpop.xlane.xlu0 %5174
  %5176 = vadd.xlane.f32.xlu0 %v4938
  %v5177 = vpop.xlane.xlu0 %5176
  %5178 = vadd.xlane.f32.xlu0 %v4939
  %v5179 = vpop.xlane.xlu0 %5178
  %5180 = vadd.xlane.f32.xlu0 %v4940
  %v5181 = vpop.xlane.xlu0 %5180
  %5182 = vadd.xlane.f32.xlu0 %v4941
  %v5183 = vpop.xlane.xlu0 %5182
  %5184 = vadd.xlane.f32.xlu0 %v4942
  %v5185 = vpop.xlane.xlu0 %5184
  %5186 = vadd.xlane.f32.xlu0 %v4943
  %v5187 = vpop.xlane.xlu0 %5186
  %5188 = vadd.xlane.f32.xlu0 %v4944
  %v5189 = vpop.xlane.xlu0 %5188
  %5190 = vadd.xlane.f32.xlu0 %v4945
  %v5191 = vpop.xlane.xlu0 %5190
  %5192 = vadd.xlane.f32.xlu0 %v4946
  %v5193 = vpop.xlane.xlu0 %5192
  %5194 = vadd.xlane.f32.xlu0 %v4947
  %v5195 = vpop.xlane.xlu0 %5194
  %5196 = vadd.xlane.f32.xlu0 %v4948
  %v5197 = vpop.xlane.xlu0 %5196
  %5198 = vadd.xlane.f32.xlu0 %v4949
  %v5199 = vpop.xlane.xlu0 %5198
  %v5200 = vmul.f32 %v4576, 0.03125
  %v5201 = vmul.f32 %v4578, 0.03125
  %v5202 = vmul.f32 %v4580, 0.03125
  %v5203 = vmul.f32 %v4582, 0.03125
  %v5204 = vmul.f32 %v4584, 0.03125
  %v5205 = vmul.f32 %v4586, 0.03125
  %v5206 = vmul.f32 %v4588, 0.03125
  %v5207 = vmul.f32 %v4590, 0.03125
  %v5208 = vmul.f32 %v4592, 0.03125
  %v5209 = vmul.f32 %v4594, 0.03125
  %v5210 = vmul.f32 %v4596, 0.03125
  %v5211 = vmul.f32 %v4598, 0.03125
  %v5212 = vmul.f32 %v4600, 0.03125
  %v5213 = vmul.f32 %v4602, 0.03125
  %v5214 = vmul.f32 %v4604, 0.03125
  %v5215 = vmul.f32 %v4606, 0.03125
  %v5216 = vmul.f32 %v4608, 0.03125
  %v5217 = vmul.f32 %v4610, 0.03125
  %v5218 = vmul.f32 %v4612, 0.03125
  %v5219 = vmul.f32 %v4614, 0.03125
  %v5220 = vmul.f32 %v4616, 0.03125
  %v5221 = vmul.f32 %v4618, 0.03125
  %v5222 = vmul.f32 %v4620, 0.03125
  %v5223 = vmul.f32 %v4622, 0.03125
  %v5224 = vmul.f32 %v4624, 0.03125
  %v5225 = vmul.f32 %v4626, 0.03125
  %v5226 = vmul.f32 %v4628, 0.03125
  %v5227 = vmul.f32 %v4630, 0.03125
  %v5228 = vmul.f32 %v4632, 0.03125
  %v5229 = vmul.f32 %v4634, 0.03125
  %v5230 = vmul.f32 %v4636, 0.03125
  %v5231 = vmul.f32 %v4638, 0.03125
  %v5232 = vmul.f32 %v4640, 0.03125
  %v5233 = vmul.f32 %v4642, 0.03125
  %v5234 = vmul.f32 %v4644, 0.03125
  %v5235 = vmul.f32 %v4646, 0.03125
  %v5236 = vmul.f32 %v4648, 0.03125
  %v5237 = vmul.f32 %v4650, 0.03125
  %v5238 = vmul.f32 %v4652, 0.03125
  %v5239 = vmul.f32 %v4654, 0.03125
  %v5240 = vmul.f32 %v4656, 0.03125
  %v5241 = vmul.f32 %v4658, 0.03125
  %v5242 = vmul.f32 %v4660, 0.03125
  %v5243 = vmul.f32 %v4662, 0.03125
  %v5244 = vmul.f32 %v4664, 0.03125
  %v5245 = vmul.f32 %v4666, 0.03125
  %v5246 = vmul.f32 %v4668, 0.03125
  %v5247 = vmul.f32 %v4670, 0.03125
  %v5248 = vmul.f32 %v4672, 0.03125
  %v5249 = vmul.f32 %v4674, 0.03125
  %v5250 = vmul.f32 %v4676, 0.03125
  %v5251 = vmul.f32 %v4678, 0.03125
  %v5252 = vmul.f32 %v4680, 0.03125
  %v5253 = vmul.f32 %v4682, 0.03125
  %v5254 = vmul.f32 %v4684, 0.03125
  %v5255 = vmul.f32 %v4686, 0.03125
  %v5256 = vmul.f32 %v4688, 0.03125
  %v5257 = vmul.f32 %v4690, 0.03125
  %v5258 = vmul.f32 %v4692, 0.03125
  %v5259 = vmul.f32 %v4694, 0.03125
  %v5260 = vmul.f32 %v4696, 0.03125
  %v5261 = vmul.f32 %v4698, 0.03125
  %v5262 = vmul.f32 %v4700, 0.03125
  %v5263 = vmul.f32 %v4702, 0.03125
  %v5264 = vmul.f32 %v4704, 0.03125
  %v5265 = vmul.f32 %v4706, 0.03125
  %v5266 = vmul.f32 %v4708, 0.03125
  %v5267 = vmul.f32 %v4710, 0.03125
  %v5268 = vmul.f32 %v4712, 0.03125
  %v5269 = vmul.f32 %v4714, 0.03125
  %v5270 = vmul.f32 %v4716, 0.03125
  %v5271 = vmul.f32 %v4718, 0.03125
  %v5272 = vmul.f32 %v4720, 0.03125
  %v5273 = vmul.f32 %v4722, 0.03125
  %v5274 = vmul.f32 %v4724, 0.03125
  %v5275 = vmul.f32 %v4726, 0.03125
  %v5276 = vmul.f32 %v4728, 0.03125
  %v5277 = vmul.f32 %v4730, 0.03125
  %v5278 = vmul.f32 %v4732, 0.03125
  %v5279 = vmul.f32 %v4734, 0.03125
  %v5280 = vmul.f32 %v4736, 0.03125
  %v5281 = vmul.f32 %v4738, 0.03125
  %v5282 = vmul.f32 %v4740, 0.03125
  %v5283 = vmul.f32 %v4742, 0.03125
  %v5284 = vmul.f32 %v4744, 0.03125
  %v5285 = vmul.f32 %v4746, 0.03125
  %v5286 = vmul.f32 %v4748, 0.03125
  %v5287 = vmul.f32 %v4750, 0.03125
  %v5288 = vmul.f32 %v4752, 0.03125
  %v5289 = vmul.f32 %v4754, 0.03125
  %v5290 = vmul.f32 %v4756, 0.03125
  %v5291 = vmul.f32 %v4758, 0.03125
  %v5292 = vmul.f32 %v4760, 0.03125
  %v5293 = vmul.f32 %v4762, 0.03125
  %v5294 = vmul.f32 %v4764, 0.03125
  %v5295 = vmul.f32 %v4766, 0.03125
  %v5296 = vmul.f32 %v4768, 0.03125
  %v5297 = vmul.f32 %v4770, 0.03125
  %v5298 = vmul.f32 %v4772, 0.03125
  %v5299 = vmul.f32 %v4774, 0.03125
  %v5300 = vmul.f32 %v4776, 0.03125
  %v5301 = vmul.f32 %v4778, 0.03125
  %v5302 = vmul.f32 %v4780, 0.03125
  %v5303 = vmul.f32 %v4782, 0.03125
  %v5304 = vmul.f32 %v4784, 0.03125
  %v5305 = vmul.f32 %v4786, 0.03125
  %v5306 = vmul.f32 %v4788, 0.03125
  %v5307 = vmul.f32 %v4790, 0.03125
  %v5308 = vmul.f32 %v4792, 0.03125
  %v5309 = vmul.f32 %v4794, 0.03125
  %v5310 = vmul.f32 %v4796, 0.03125
  %v5311 = vmul.f32 %v4798, 0.03125
  %v5312 = vmul.f32 %v4800, 0.03125
  %v5313 = vmul.f32 %v4802, 0.03125
  %v5314 = vmul.f32 %v4804, 0.03125
  %v5315 = vmul.f32 %v4806, 0.03125
  %v5316 = vmul.f32 %v4808, 0.03125
  %v5317 = vmul.f32 %v4810, 0.03125
  %v5318 = vmul.f32 %v4812, 0.03125
  %v5319 = vmul.f32 %v4814, 0.03125
  %v5320 = vmul.f32 %v4816, 0.03125
  %v5321 = vmul.f32 %v4818, 0.03125
  %v5322 = vmul.f32 %v4820, 0.03125
  %v5323 = vmul.f32 %v4822, 0.03125
  %v5324 = vmul.f32 %v4824, 0.03125
  %v5325 = vmul.f32 %v4951, 0.03125
  %v5326 = vmul.f32 %v4953, 0.03125
  %v5327 = vmul.f32 %v4955, 0.03125
  %v5328 = vmul.f32 %v4957, 0.03125
  %v5329 = vmul.f32 %v4959, 0.03125
  %v5330 = vmul.f32 %v4961, 0.03125
  %v5331 = vmul.f32 %v4963, 0.03125
  %v5332 = vmul.f32 %v4965, 0.03125
  %v5333 = vmul.f32 %v4967, 0.03125
  %v5334 = vmul.f32 %v4969, 0.03125
  %v5335 = vmul.f32 %v4971, 0.03125
  %v5336 = vmul.f32 %v4973, 0.03125
  %v5337 = vmul.f32 %v4975, 0.03125
  %v5338 = vmul.f32 %v4977, 0.03125
  %v5339 = vmul.f32 %v4979, 0.03125
  %v5340 = vmul.f32 %v4981, 0.03125
  %v5341 = vmul.f32 %v4983, 0.03125
  %v5342 = vmul.f32 %v4985, 0.03125
  %v5343 = vmul.f32 %v4987, 0.03125
  %v5344 = vmul.f32 %v4989, 0.03125
  %v5345 = vmul.f32 %v4991, 0.03125
  %v5346 = vmul.f32 %v4993, 0.03125
  %v5347 = vmul.f32 %v4995, 0.03125
  %v5348 = vmul.f32 %v4997, 0.03125
  %v5349 = vmul.f32 %v4999, 0.03125
  %v5350 = vmul.f32 %v5001, 0.03125
  %v5351 = vmul.f32 %v5003, 0.03125
  %v5352 = vmul.f32 %v5005, 0.03125
  %v5353 = vmul.f32 %v5007, 0.03125
  %v5354 = vmul.f32 %v5009, 0.03125
  %v5355 = vmul.f32 %v5011, 0.03125
  %v5356 = vmul.f32 %v5013, 0.03125
  %v5357 = vmul.f32 %v5015, 0.03125
  %v5358 = vmul.f32 %v5017, 0.03125
  %v5359 = vmul.f32 %v5019, 0.03125
  %v5360 = vmul.f32 %v5021, 0.03125
  %v5361 = vmul.f32 %v5023, 0.03125
  %v5362 = vmul.f32 %v5025, 0.03125
  %v5363 = vmul.f32 %v5027, 0.03125
  %v5364 = vmul.f32 %v5029, 0.03125
  %v5365 = vmul.f32 %v5031, 0.03125
  %v5366 = vmul.f32 %v5033, 0.03125
  %v5367 = vmul.f32 %v5035, 0.03125
  %v5368 = vmul.f32 %v5037, 0.03125
  %v5369 = vmul.f32 %v5039, 0.03125
  %v5370 = vmul.f32 %v5041, 0.03125
  %v5371 = vmul.f32 %v5043, 0.03125
  %v5372 = vmul.f32 %v5045, 0.03125
  %v5373 = vmul.f32 %v5047, 0.03125
  %v5374 = vmul.f32 %v5049, 0.03125
  %v5375 = vmul.f32 %v5051, 0.03125
  %v5376 = vmul.f32 %v5053, 0.03125
  %v5377 = vmul.f32 %v5055, 0.03125
  %v5378 = vmul.f32 %v5057, 0.03125
  %v5379 = vmul.f32 %v5059, 0.03125
  %v5380 = vmul.f32 %v5061, 0.03125
  %v5381 = vmul.f32 %v5063, 0.03125
  %v5382 = vmul.f32 %v5065, 0.03125
  %v5383 = vmul.f32 %v5067, 0.03125
  %v5384 = vmul.f32 %v5069, 0.03125
  %v5385 = vmul.f32 %v5071, 0.03125
  %v5386 = vmul.f32 %v5073, 0.03125
  %v5387 = vmul.f32 %v5075, 0.03125
  %v5388 = vmul.f32 %v5077, 0.03125
  %v5389 = vmul.f32 %v5079, 0.03125
  %v5390 = vmul.f32 %v5081, 0.03125
  %v5391 = vmul.f32 %v5083, 0.03125
  %v5392 = vmul.f32 %v5085, 0.03125
  %v5393 = vmul.f32 %v5087, 0.03125
  %v5394 = vmul.f32 %v5089, 0.03125
  %v5395 = vmul.f32 %v5091, 0.03125
  %v5396 = vmul.f32 %v5093, 0.03125
  %v5397 = vmul.f32 %v5095, 0.03125
  %v5398 = vmul.f32 %v5097, 0.03125
  %v5399 = vmul.f32 %v5099, 0.03125
  %v5400 = vmul.f32 %v5101, 0.03125
  %v5401 = vmul.f32 %v5103, 0.03125
  %v5402 = vmul.f32 %v5105, 0.03125
  %v5403 = vmul.f32 %v5107, 0.03125
  %v5404 = vmul.f32 %v5109, 0.03125
  %v5405 = vmul.f32 %v5111, 0.03125
  %v5406 = vmul.f32 %v5113, 0.03125
  %v5407 = vmul.f32 %v5115, 0.03125
  %v5408 = vmul.f32 %v5117, 0.03125
  %v5409 = vmul.f32 %v5119, 0.03125
  %v5410 = vmul.f32 %v5121, 0.03125
  %v5411 = vmul.f32 %v5123, 0.03125
  %v5412 = vmul.f32 %v5125, 0.03125
  %v5413 = vmul.f32 %v5127, 0.03125
  %v5414 = vmul.f32 %v5129, 0.03125
  %v5415 = vmul.f32 %v5131, 0.03125
  %v5416 = vmul.f32 %v5133, 0.03125
  %v5417 = vmul.f32 %v5135, 0.03125
  %v5418 = vmul.f32 %v5137, 0.03125
  %v5419 = vmul.f32 %v5139, 0.03125
  %v5420 = vmul.f32 %v5141, 0.03125
  %v5421 = vmul.f32 %v5143, 0.03125
  %v5422 = vmul.f32 %v5145, 0.03125
  %v5423 = vmul.f32 %v5147, 0.03125
  %v5424 = vmul.f32 %v5149, 0.03125
  %v5425 = vmul.f32 %v5151, 0.03125
  %v5426 = vmul.f32 %v5153, 0.03125
  %v5427 = vmul.f32 %v5155, 0.03125
  %v5428 = vmul.f32 %v5157, 0.03125
  %v5429 = vmul.f32 %v5159, 0.03125
  %v5430 = vmul.f32 %v5161, 0.03125
  %v5431 = vmul.f32 %v5163, 0.03125
  %v5432 = vmul.f32 %v5165, 0.03125
  %v5433 = vmul.f32 %v5167, 0.03125
  %v5434 = vmul.f32 %v5169, 0.03125
  %v5435 = vmul.f32 %v5171, 0.03125
  %v5436 = vmul.f32 %v5173, 0.03125
  %v5437 = vmul.f32 %v5175, 0.03125
  %v5438 = vmul.f32 %v5177, 0.03125
  %v5439 = vmul.f32 %v5179, 0.03125
  %v5440 = vmul.f32 %v5181, 0.03125
  %v5441 = vmul.f32 %v5183, 0.03125
  %v5442 = vmul.f32 %v5185, 0.03125
  %v5443 = vmul.f32 %v5187, 0.03125
  %v5444 = vmul.f32 %v5189, 0.03125
  %v5445 = vmul.f32 %v5191, 0.03125
  %v5446 = vmul.f32 %v5193, 0.03125
  %v5447 = vmul.f32 %v5195, 0.03125
  %v5448 = vmul.f32 %v5197, 0.03125
  %v5449 = vmul.f32 %v5199, 0.03125
  %v5450 = vmul.f32 %v5200, %v5200
  %v5451 = vmul.f32 %v5201, %v5201
  %v5452 = vmul.f32 %v5202, %v5202
  %v5453 = vmul.f32 %v5203, %v5203
  %v5454 = vmul.f32 %v5204, %v5204
  %v5455 = vmul.f32 %v5205, %v5205
  %v5456 = vmul.f32 %v5206, %v5206
  %v5457 = vmul.f32 %v5207, %v5207
  %v5458 = vmul.f32 %v5208, %v5208
  %v5459 = vmul.f32 %v5209, %v5209
  %v5460 = vmul.f32 %v5210, %v5210
  %v5461 = vmul.f32 %v5211, %v5211
  %v5462 = vmul.f32 %v5212, %v5212
  %v5463 = vmul.f32 %v5213, %v5213
  %v5464 = vmul.f32 %v5214, %v5214
  %v5465 = vmul.f32 %v5215, %v5215
  %v5466 = vmul.f32 %v5216, %v5216
  %v5467 = vmul.f32 %v5217, %v5217
  %v5468 = vmul.f32 %v5218, %v5218
  %v5469 = vmul.f32 %v5219, %v5219
  %v5470 = vmul.f32 %v5220, %v5220
  %v5471 = vmul.f32 %v5221, %v5221
  %v5472 = vmul.f32 %v5222, %v5222
  %v5473 = vmul.f32 %v5223, %v5223
  %v5474 = vmul.f32 %v5224, %v5224
  %v5475 = vmul.f32 %v5225, %v5225
  %v5476 = vmul.f32 %v5226, %v5226
  %v5477 = vmul.f32 %v5227, %v5227
  %v5478 = vmul.f32 %v5228, %v5228
  %v5479 = vmul.f32 %v5229, %v5229
  %v5480 = vmul.f32 %v5230, %v5230
  %v5481 = vmul.f32 %v5231, %v5231
  %v5482 = vmul.f32 %v5232, %v5232
  %v5483 = vmul.f32 %v5233, %v5233
  %v5484 = vmul.f32 %v5234, %v5234
  %v5485 = vmul.f32 %v5235, %v5235
  %v5486 = vmul.f32 %v5236, %v5236
  %v5487 = vmul.f32 %v5237, %v5237
  %v5488 = vmul.f32 %v5238, %v5238
  %v5489 = vmul.f32 %v5239, %v5239
  %v5490 = vmul.f32 %v5240, %v5240
  %v5491 = vmul.f32 %v5241, %v5241
  %v5492 = vmul.f32 %v5242, %v5242
  %v5493 = vmul.f32 %v5243, %v5243
  %v5494 = vmul.f32 %v5244, %v5244
  %v5495 = vmul.f32 %v5245, %v5245
  %v5496 = vmul.f32 %v5246, %v5246
  %v5497 = vmul.f32 %v5247, %v5247
  %v5498 = vmul.f32 %v5248, %v5248
  %v5499 = vmul.f32 %v5249, %v5249
  %v5500 = vmul.f32 %v5250, %v5250
  %v5501 = vmul.f32 %v5251, %v5251
  %v5502 = vmul.f32 %v5252, %v5252
  %v5503 = vmul.f32 %v5253, %v5253
  %v5504 = vmul.f32 %v5254, %v5254
  %v5505 = vmul.f32 %v5255, %v5255
  %v5506 = vmul.f32 %v5256, %v5256
  %v5507 = vmul.f32 %v5257, %v5257
  %v5508 = vmul.f32 %v5258, %v5258
  %v5509 = vmul.f32 %v5259, %v5259
  %v5510 = vmul.f32 %v5260, %v5260
  %v5511 = vmul.f32 %v5261, %v5261
  %v5512 = vmul.f32 %v5262, %v5262
  %v5513 = vmul.f32 %v5263, %v5263
  %v5514 = vmul.f32 %v5264, %v5264
  %v5515 = vmul.f32 %v5265, %v5265
  %v5516 = vmul.f32 %v5266, %v5266
  %v5517 = vmul.f32 %v5267, %v5267
  %v5518 = vmul.f32 %v5268, %v5268
  %v5519 = vmul.f32 %v5269, %v5269
  %v5520 = vmul.f32 %v5270, %v5270
  %v5521 = vmul.f32 %v5271, %v5271
  %v5522 = vmul.f32 %v5272, %v5272
  %v5523 = vmul.f32 %v5273, %v5273
  %v5524 = vmul.f32 %v5274, %v5274
  %v5525 = vmul.f32 %v5275, %v5275
  %v5526 = vmul.f32 %v5276, %v5276
  %v5527 = vmul.f32 %v5277, %v5277
  %v5528 = vmul.f32 %v5278, %v5278
  %v5529 = vmul.f32 %v5279, %v5279
  %v5530 = vmul.f32 %v5280, %v5280
  %v5531 = vmul.f32 %v5281, %v5281
  %v5532 = vmul.f32 %v5282, %v5282
  %v5533 = vmul.f32 %v5283, %v5283
  %v5534 = vmul.f32 %v5284, %v5284
  %v5535 = vmul.f32 %v5285, %v5285
  %v5536 = vmul.f32 %v5286, %v5286
  %v5537 = vmul.f32 %v5287, %v5287
  %v5538 = vmul.f32 %v5288, %v5288
  %v5539 = vmul.f32 %v5289, %v5289
  %v5540 = vmul.f32 %v5290, %v5290
  %v5541 = vmul.f32 %v5291, %v5291
  %v5542 = vmul.f32 %v5292, %v5292
  %v5543 = vmul.f32 %v5293, %v5293
  %v5544 = vmul.f32 %v5294, %v5294
  %v5545 = vmul.f32 %v5295, %v5295
  %v5546 = vmul.f32 %v5296, %v5296
  %v5547 = vmul.f32 %v5297, %v5297
  %v5548 = vmul.f32 %v5298, %v5298
  %v5549 = vmul.f32 %v5299, %v5299
  %v5550 = vmul.f32 %v5300, %v5300
  %v5551 = vmul.f32 %v5301, %v5301
  %v5552 = vmul.f32 %v5302, %v5302
  %v5553 = vmul.f32 %v5303, %v5303
  %v5554 = vmul.f32 %v5304, %v5304
  %v5555 = vmul.f32 %v5305, %v5305
  %v5556 = vmul.f32 %v5306, %v5306
  %v5557 = vmul.f32 %v5307, %v5307
  %v5558 = vmul.f32 %v5308, %v5308
  %v5559 = vmul.f32 %v5309, %v5309
  %v5560 = vmul.f32 %v5310, %v5310
  %v5561 = vmul.f32 %v5311, %v5311
  %v5562 = vmul.f32 %v5312, %v5312
  %v5563 = vmul.f32 %v5313, %v5313
  %v5564 = vmul.f32 %v5314, %v5314
  %v5565 = vmul.f32 %v5315, %v5315
  %v5566 = vmul.f32 %v5316, %v5316
  %v5567 = vmul.f32 %v5317, %v5317
  %v5568 = vmul.f32 %v5318, %v5318
  %v5569 = vmul.f32 %v5319, %v5319
  %v5570 = vmul.f32 %v5320, %v5320
  %v5571 = vmul.f32 %v5321, %v5321
  %v5572 = vmul.f32 %v5322, %v5322
  %v5573 = vmul.f32 %v5323, %v5323
  %v5574 = vmul.f32 %v5324, %v5324
  %v5575 = vsub.f32 %v5325, %v5450
  %v5576 = vsub.f32 %v5326, %v5451
  %v5577 = vsub.f32 %v5327, %v5452
  %v5578 = vsub.f32 %v5328, %v5453
  %v5579 = vsub.f32 %v5329, %v5454
  %v5580 = vsub.f32 %v5330, %v5455
  %v5581 = vsub.f32 %v5331, %v5456
  %v5582 = vsub.f32 %v5332, %v5457
  %v5583 = vsub.f32 %v5333, %v5458
  %v5584 = vsub.f32 %v5334, %v5459
  %v5585 = vsub.f32 %v5335, %v5460
  %v5586 = vsub.f32 %v5336, %v5461
  %v5587 = vsub.f32 %v5337, %v5462
  %v5588 = vsub.f32 %v5338, %v5463
  %v5589 = vsub.f32 %v5339, %v5464
  %v5590 = vsub.f32 %v5340, %v5465
  %v5591 = vsub.f32 %v5341, %v5466
  %v5592 = vsub.f32 %v5342, %v5467
  %v5593 = vsub.f32 %v5343, %v5468
  %v5594 = vsub.f32 %v5344, %v5469
  %v5595 = vsub.f32 %v5345, %v5470
  %v5596 = vsub.f32 %v5346, %v5471
  %v5597 = vsub.f32 %v5347, %v5472
  %v5598 = vsub.f32 %v5348, %v5473
  %v5599 = vsub.f32 %v5349, %v5474
  %v5600 = vsub.f32 %v5350, %v5475
  %v5601 = vsub.f32 %v5351, %v5476
  %v5602 = vsub.f32 %v5352, %v5477
  %v5603 = vsub.f32 %v5353, %v5478
  %v5604 = vsub.f32 %v5354, %v5479
  %v5605 = vsub.f32 %v5355, %v5480
  %v5606 = vsub.f32 %v5356, %v5481
  %v5607 = vsub.f32 %v5357, %v5482
  %v5608 = vsub.f32 %v5358, %v5483
  %v5609 = vsub.f32 %v5359, %v5484
  %v5610 = vsub.f32 %v5360, %v5485
  %v5611 = vsub.f32 %v5361, %v5486
  %v5612 = vsub.f32 %v5362, %v5487
  %v5613 = vsub.f32 %v5363, %v5488
  %v5614 = vsub.f32 %v5364, %v5489
  %v5615 = vsub.f32 %v5365, %v5490
  %v5616 = vsub.f32 %v5366, %v5491
  %v5617 = vsub.f32 %v5367, %v5492
  %v5618 = vsub.f32 %v5368, %v5493
  %v5619 = vsub.f32 %v5369, %v5494
  %v5620 = vsub.f32 %v5370, %v5495
  %v5621 = vsub.f32 %v5371, %v5496
  %v5622 = vsub.f32 %v5372, %v5497
  %v5623 = vsub.f32 %v5373, %v5498
  %v5624 = vsub.f32 %v5374, %v5499
  %v5625 = vsub.f32 %v5375, %v5500
  %v5626 = vsub.f32 %v5376, %v5501
  %v5627 = vsub.f32 %v5377, %v5502
  %v5628 = vsub.f32 %v5378, %v5503
  %v5629 = vsub.f32 %v5379, %v5504
  %v5630 = vsub.f32 %v5380, %v5505
  %v5631 = vsub.f32 %v5381, %v5506
  %v5632 = vsub.f32 %v5382, %v5507
  %v5633 = vsub.f32 %v5383, %v5508
  %v5634 = vsub.f32 %v5384, %v5509
  %v5635 = vsub.f32 %v5385, %v5510
  %v5636 = vsub.f32 %v5386, %v5511
  %v5637 = vsub.f32 %v5387, %v5512
  %v5638 = vsub.f32 %v5388, %v5513
  %v5639 = vsub.f32 %v5389, %v5514
  %v5640 = vsub.f32 %v5390, %v5515
  %v5641 = vsub.f32 %v5391, %v5516
  %v5642 = vsub.f32 %v5392, %v5517
  %v5643 = vsub.f32 %v5393, %v5518
  %v5644 = vsub.f32 %v5394, %v5519
  %v5645 = vsub.f32 %v5395, %v5520
  %v5646 = vsub.f32 %v5396, %v5521
  %v5647 = vsub.f32 %v5397, %v5522
  %v5648 = vsub.f32 %v5398, %v5523
  %v5649 = vsub.f32 %v5399, %v5524
  %v5650 = vsub.f32 %v5400, %v5525
  %v5651 = vsub.f32 %v5401, %v5526
  %v5652 = vsub.f32 %v5402, %v5527
  %v5653 = vsub.f32 %v5403, %v5528
  %v5654 = vsub.f32 %v5404, %v5529
  %v5655 = vsub.f32 %v5405, %v5530
  %v5656 = vsub.f32 %v5406, %v5531
  %v5657 = vsub.f32 %v5407, %v5532
  %v5658 = vsub.f32 %v5408, %v5533
  %v5659 = vsub.f32 %v5409, %v5534
  %v5660 = vsub.f32 %v5410, %v5535
  %v5661 = vsub.f32 %v5411, %v5536
  %v5662 = vsub.f32 %v5412, %v5537
  %v5663 = vsub.f32 %v5413, %v5538
  %v5664 = vsub.f32 %v5414, %v5539
  %v5665 = vsub.f32 %v5415, %v5540
  %v5666 = vsub.f32 %v5416, %v5541
  %v5667 = vsub.f32 %v5417, %v5542
  %v5668 = vsub.f32 %v5418, %v5543
  %v5669 = vsub.f32 %v5419, %v5544
  %v5670 = vsub.f32 %v5420, %v5545
  %v5671 = vsub.f32 %v5421, %v5546
  %v5672 = vsub.f32 %v5422, %v5547
  %v5673 = vsub.f32 %v5423, %v5548
  %v5674 = vsub.f32 %v5424, %v5549
  %v5675 = vsub.f32 %v5425, %v5550
  %v5676 = vsub.f32 %v5426, %v5551
  %v5677 = vsub.f32 %v5427, %v5552
  %v5678 = vsub.f32 %v5428, %v5553
  %v5679 = vsub.f32 %v5429, %v5554
  %v5680 = vsub.f32 %v5430, %v5555
  %v5681 = vsub.f32 %v5431, %v5556
  %v5682 = vsub.f32 %v5432, %v5557
  %v5683 = vsub.f32 %v5433, %v5558
  %v5684 = vsub.f32 %v5434, %v5559
  %v5685 = vsub.f32 %v5435, %v5560
  %v5686 = vsub.f32 %v5436, %v5561
  %v5687 = vsub.f32 %v5437, %v5562
  %v5688 = vsub.f32 %v5438, %v5563
  %v5689 = vsub.f32 %v5439, %v5564
  %v5690 = vsub.f32 %v5440, %v5565
  %v5691 = vsub.f32 %v5441, %v5566
  %v5692 = vsub.f32 %v5442, %v5567
  %v5693 = vsub.f32 %v5443, %v5568
  %v5694 = vsub.f32 %v5444, %v5569
  %v5695 = vsub.f32 %v5445, %v5570
  %v5696 = vsub.f32 %v5446, %v5571
  %v5697 = vsub.f32 %v5447, %v5572
  %v5698 = vsub.f32 %v5448, %v5573
  %v5699 = vsub.f32 %v5449, %v5574
  %v5700 = vsub.f32 %v4260, %v5200
  %v5701 = vsub.f32 %v4262, %v5201
  %v5702 = vsub.f32 %v4265, %v5202
  %v5703 = vsub.f32 %v4267, %v5203
  %v5704 = vsub.f32 %v4270, %v5204
  %v5705 = vsub.f32 %v4272, %v5205
  %v5706 = vsub.f32 %v4275, %v5206
  %v5707 = vsub.f32 %v4277, %v5207
  %v5708 = vsub.f32 %v4280, %v5208
  %v5709 = vsub.f32 %v4282, %v5209
  %v5710 = vsub.f32 %v4285, %v5210
  %v5711 = vsub.f32 %v4287, %v5211
  %v5712 = vsub.f32 %v4290, %v5212
  %v5713 = vsub.f32 %v4292, %v5213
  %v5714 = vsub.f32 %v4295, %v5214
  %v5715 = vsub.f32 %v4297, %v5215
  %v5716 = vsub.f32 %v4300, %v5216
  %v5717 = vsub.f32 %v4302, %v5217
  %v5718 = vsub.f32 %v4305, %v5218
  %v5719 = vsub.f32 %v4307, %v5219
  %v5720 = vsub.f32 %v4310, %v5220
  %v5721 = vsub.f32 %v4312, %v5221
  %v5722 = vsub.f32 %v4315, %v5222
  %v5723 = vsub.f32 %v4317, %v5223
  %v5724 = vsub.f32 %v4320, %v5224
  %v5725 = vsub.f32 %v4322, %v5225
  %v5726 = vsub.f32 %v4325, %v5226
  %v5727 = vsub.f32 %v4327, %v5227
  %v5728 = vsub.f32 %v4330, %v5228
  %v5729 = vsub.f32 %v4332, %v5229
  %v5730 = vsub.f32 %v4335, %v5230
  %v5731 = vsub.f32 %v4337, %v5231
  %v5732 = vsub.f32 %v4340, %v5232
  %v5733 = vsub.f32 %v4342, %v5233
  %v5734 = vsub.f32 %v4345, %v5234
  %v5735 = vsub.f32 %v4347, %v5235
  %v5736 = vsub.f32 %v4350, %v5236
  %v5737 = vsub.f32 %v4352, %v5237
  %v5738 = vsub.f32 %v4355, %v5238
  %v5739 = vsub.f32 %v4357, %v5239
  %v5740 = vsub.f32 %v4360, %v5240
  %v5741 = vsub.f32 %v4362, %v5241
  %v5742 = vsub.f32 %v4365, %v5242
  %v5743 = vsub.f32 %v4367, %v5243
  %v5744 = vsub.f32 %v4370, %v5244
  %v5745 = vsub.f32 %v4372, %v5245
  %v5746 = vsub.f32 %v4375, %v5246
  %v5747 = vsub.f32 %v4377, %v5247
  %v5748 = vsub.f32 %v4380, %v5248
  %v5749 = vsub.f32 %v4382, %v5249
  %v5750 = vsub.f32 %v4385, %v5250
  %v5751 = vsub.f32 %v4387, %v5251
  %v5752 = vsub.f32 %v4390, %v5252
  %v5753 = vsub.f32 %v4392, %v5253
  %v5754 = vsub.f32 %v4395, %v5254
  %v5755 = vsub.f32 %v4397, %v5255
  %v5756 = vsub.f32 %v4400, %v5256
  %v5757 = vsub.f32 %v4402, %v5257
  %v5758 = vsub.f32 %v4405, %v5258
  %v5759 = vsub.f32 %v4407, %v5259
  %v5760 = vsub.f32 %v4410, %v5260
  %v5761 = vsub.f32 %v4412, %v5261
  %v5762 = vsub.f32 %v4415, %v5262
  %v5763 = vsub.f32 %v4417, %v5263
  %v5764 = vsub.f32 %v4420, %v5264
  %v5765 = vsub.f32 %v4422, %v5265
  %v5766 = vsub.f32 %v4425, %v5266
  %v5767 = vsub.f32 %v4427, %v5267
  %v5768 = vsub.f32 %v4430, %v5268
  %v5769 = vsub.f32 %v4432, %v5269
  %v5770 = vsub.f32 %v4435, %v5270
  %v5771 = vsub.f32 %v4437, %v5271
  %v5772 = vsub.f32 %v4440, %v5272
  %v5773 = vsub.f32 %v4442, %v5273
  %v5774 = vsub.f32 %v4445, %v5274
  %v5775 = vsub.f32 %v4447, %v5275
  %v5776 = vsub.f32 %v4450, %v5276
  %v5777 = vsub.f32 %v4452, %v5277
  %v5778 = vsub.f32 %v4455, %v5278
  %v5779 = vsub.f32 %v4457, %v5279
  %v5780 = vsub.f32 %v4460, %v5280
  %v5781 = vsub.f32 %v4462, %v5281
  %v5782 = vsub.f32 %v4465, %v5282
  %v5783 = vsub.f32 %v4467, %v5283
  %v5784 = vsub.f32 %v4470, %v5284
  %v5785 = vsub.f32 %v4472, %v5285
  %v5786 = vsub.f32 %v4475, %v5286
  %v5787 = vsub.f32 %v4477, %v5287
  %v5788 = vsub.f32 %v4480, %v5288
  %v5789 = vsub.f32 %v4482, %v5289
  %v5790 = vsub.f32 %v4485, %v5290
  %v5791 = vsub.f32 %v4487, %v5291
  %v5792 = vsub.f32 %v4490, %v5292
  %v5793 = vsub.f32 %v4492, %v5293
  %v5794 = vsub.f32 %v4495, %v5294
  %v5795 = vsub.f32 %v4497, %v5295
  %v5796 = vsub.f32 %v4500, %v5296
  %v5797 = vsub.f32 %v4502, %v5297
  %v5798 = vsub.f32 %v4505, %v5298
  %v5799 = vsub.f32 %v4507, %v5299
  %v5800 = vsub.f32 %v4510, %v5300
  %v5801 = vsub.f32 %v4512, %v5301
  %v5802 = vsub.f32 %v4515, %v5302
  %v5803 = vsub.f32 %v4517, %v5303
  %v5804 = vsub.f32 %v4520, %v5304
  %v5805 = vsub.f32 %v4522, %v5305
  %v5806 = vsub.f32 %v4525, %v5306
  %v5807 = vsub.f32 %v4527, %v5307
  %v5808 = vsub.f32 %v4530, %v5308
  %v5809 = vsub.f32 %v4532, %v5309
  %v5810 = vsub.f32 %v4535, %v5310
  %v5811 = vsub.f32 %v4537, %v5311
  %v5812 = vsub.f32 %v4540, %v5312
  %v5813 = vsub.f32 %v4542, %v5313
  %v5814 = vsub.f32 %v4545, %v5314
  %v5815 = vsub.f32 %v4547, %v5315
  %v5816 = vsub.f32 %v4550, %v5316
  %v5817 = vsub.f32 %v4552, %v5317
  %v5818 = vsub.f32 %v4555, %v5318
  %v5819 = vsub.f32 %v4557, %v5319
  %v5820 = vsub.f32 %v4560, %v5320
  %v5821 = vsub.f32 %v4562, %v5321
  %v5822 = vsub.f32 %v4565, %v5322
  %v5823 = vsub.f32 %v4567, %v5323
  %v5824 = vsub.f32 %v4570, %v5324
  %v5825 = vadd.f32 %v5575, 1e-05
  %v5826 = vadd.f32 %v5576, 1e-05
  %v5827 = vadd.f32 %v5577, 1e-05
  %v5828 = vadd.f32 %v5578, 1e-05
  %v5829 = vadd.f32 %v5579, 1e-05
  %v5830 = vadd.f32 %v5580, 1e-05
  %v5831 = vadd.f32 %v5581, 1e-05
  %v5832 = vadd.f32 %v5582, 1e-05
  %v5833 = vadd.f32 %v5583, 1e-05
  %v5834 = vadd.f32 %v5584, 1e-05
  %v5835 = vadd.f32 %v5585, 1e-05
  %v5836 = vadd.f32 %v5586, 1e-05
  %v5837 = vadd.f32 %v5587, 1e-05
  %v5838 = vadd.f32 %v5588, 1e-05
  %v5839 = vadd.f32 %v5589, 1e-05
  %v5840 = vadd.f32 %v5590, 1e-05
  %v5841 = vadd.f32 %v5591, 1e-05
  %v5842 = vadd.f32 %v5592, 1e-05
  %v5843 = vadd.f32 %v5593, 1e-05
  %v5844 = vadd.f32 %v5594, 1e-05
  %v5845 = vadd.f32 %v5595, 1e-05
  %v5846 = vadd.f32 %v5596, 1e-05
  %v5847 = vadd.f32 %v5597, 1e-05
  %v5848 = vadd.f32 %v5598, 1e-05
  %v5849 = vadd.f32 %v5599, 1e-05
  %v5850 = vadd.f32 %v5600, 1e-05
  %v5851 = vadd.f32 %v5601, 1e-05
  %v5852 = vadd.f32 %v5602, 1e-05
  %v5853 = vadd.f32 %v5603, 1e-05
  %v5854 = vadd.f32 %v5604, 1e-05
  %v5855 = vadd.f32 %v5605, 1e-05
  %v5856 = vadd.f32 %v5606, 1e-05
  %v5857 = vadd.f32 %v5607, 1e-05
  %v5858 = vadd.f32 %v5608, 1e-05
  %v5859 = vadd.f32 %v5609, 1e-05
  %v5860 = vadd.f32 %v5610, 1e-05
  %v5861 = vadd.f32 %v5611, 1e-05
  %v5862 = vadd.f32 %v5612, 1e-05
  %v5863 = vadd.f32 %v5613, 1e-05
  %v5864 = vadd.f32 %v5614, 1e-05
  %v5865 = vadd.f32 %v5615, 1e-05
  %v5866 = vadd.f32 %v5616, 1e-05
  %v5867 = vadd.f32 %v5617, 1e-05
  %v5868 = vadd.f32 %v5618, 1e-05
  %v5869 = vadd.f32 %v5619, 1e-05
  %v5870 = vadd.f32 %v5620, 1e-05
  %v5871 = vadd.f32 %v5621, 1e-05
  %v5872 = vadd.f32 %v5622, 1e-05
  %v5873 = vadd.f32 %v5623, 1e-05
  %v5874 = vadd.f32 %v5624, 1e-05
  %v5875 = vadd.f32 %v5625, 1e-05
  %v5876 = vadd.f32 %v5626, 1e-05
  %v5877 = vadd.f32 %v5627, 1e-05
  %v5878 = vadd.f32 %v5628, 1e-05
  %v5879 = vadd.f32 %v5629, 1e-05
  %v5880 = vadd.f32 %v5630, 1e-05
  %v5881 = vadd.f32 %v5631, 1e-05
  %v5882 = vadd.f32 %v5632, 1e-05
  %v5883 = vadd.f32 %v5633, 1e-05
  %v5884 = vadd.f32 %v5634, 1e-05
  %v5885 = vadd.f32 %v5635, 1e-05
  %v5886 = vadd.f32 %v5636, 1e-05
  %v5887 = vadd.f32 %v5637, 1e-05
  %v5888 = vadd.f32 %v5638, 1e-05
  %v5889 = vadd.f32 %v5639, 1e-05
  %v5890 = vadd.f32 %v5640, 1e-05
  %v5891 = vadd.f32 %v5641, 1e-05
  %v5892 = vadd.f32 %v5642, 1e-05
  %v5893 = vadd.f32 %v5643, 1e-05
  %v5894 = vadd.f32 %v5644, 1e-05
  %v5895 = vadd.f32 %v5645, 1e-05
  %v5896 = vadd.f32 %v5646, 1e-05
  %v5897 = vadd.f32 %v5647, 1e-05
  %v5898 = vadd.f32 %v5648, 1e-05
  %v5899 = vadd.f32 %v5649, 1e-05
  %v5900 = vadd.f32 %v5650, 1e-05
  %v5901 = vadd.f32 %v5651, 1e-05
  %v5902 = vadd.f32 %v5652, 1e-05
  %v5903 = vadd.f32 %v5653, 1e-05
  %v5904 = vadd.f32 %v5654, 1e-05
  %v5905 = vadd.f32 %v5655, 1e-05
  %v5906 = vadd.f32 %v5656, 1e-05
  %v5907 = vadd.f32 %v5657, 1e-05
  %v5908 = vadd.f32 %v5658, 1e-05
  %v5909 = vadd.f32 %v5659, 1e-05
  %v5910 = vadd.f32 %v5660, 1e-05
  %v5911 = vadd.f32 %v5661, 1e-05
  %v5912 = vadd.f32 %v5662, 1e-05
  %v5913 = vadd.f32 %v5663, 1e-05
  %v5914 = vadd.f32 %v5664, 1e-05
  %v5915 = vadd.f32 %v5665, 1e-05
  %v5916 = vadd.f32 %v5666, 1e-05
  %v5917 = vadd.f32 %v5667, 1e-05
  %v5918 = vadd.f32 %v5668, 1e-05
  %v5919 = vadd.f32 %v5669, 1e-05
  %v5920 = vadd.f32 %v5670, 1e-05
  %v5921 = vadd.f32 %v5671, 1e-05
  %v5922 = vadd.f32 %v5672, 1e-05
  %v5923 = vadd.f32 %v5673, 1e-05
  %v5924 = vadd.f32 %v5674, 1e-05
  %v5925 = vadd.f32 %v5675, 1e-05
  %v5926 = vadd.f32 %v5676, 1e-05
  %v5927 = vadd.f32 %v5677, 1e-05
  %v5928 = vadd.f32 %v5678, 1e-05
  %v5929 = vadd.f32 %v5679, 1e-05
  %v5930 = vadd.f32 %v5680, 1e-05
  %v5931 = vadd.f32 %v5681, 1e-05
  %v5932 = vadd.f32 %v5682, 1e-05
  %v5933 = vadd.f32 %v5683, 1e-05
  %v5934 = vadd.f32 %v5684, 1e-05
  %v5935 = vadd.f32 %v5685, 1e-05
  %v5936 = vadd.f32 %v5686, 1e-05
  %v5937 = vadd.f32 %v5687, 1e-05
  %v5938 = vadd.f32 %v5688, 1e-05
  %v5939 = vadd.f32 %v5689, 1e-05
  %v5940 = vadd.f32 %v5690, 1e-05
  %v5941 = vadd.f32 %v5691, 1e-05
  %v5942 = vadd.f32 %v5692, 1e-05
  %v5943 = vadd.f32 %v5693, 1e-05
  %v5944 = vadd.f32 %v5694, 1e-05
  %v5945 = vadd.f32 %v5695, 1e-05
  %v5946 = vadd.f32 %v5696, 1e-05
  %v5947 = vadd.f32 %v5697, 1e-05
  %v5948 = vadd.f32 %v5698, 1e-05
  %v5949 = vadd.f32 %v5699, 1e-05
  %v5950 = vrsqrt.pop %v5825
  %v5951 = vmul.f32 %v5950, %v5825
  %v5952 = vmul.f32 %v5951, %v5950
  %v5953 = vmul.f32 0.5, %v5952
  %v5954 = vsub.f32 1.5, %v5953
  %v5955 = vmul.f32 %v5950, %v5954
  %vm5956 = vweird.f32 %v5825
  %vm5957 = vweird.f32 %v5950
  %vm5958 = vmor %vm5956, %vm5957
  %v5959 = vsel %vm5958, %v5950, %v5955
  %v5960 = vrsqrt.pop %v5826
  %v5961 = vmul.f32 %v5960, %v5826
  %v5962 = vmul.f32 %v5961, %v5960
  %v5963 = vmul.f32 0.5, %v5962
  %v5964 = vsub.f32 1.5, %v5963
  %v5965 = vmul.f32 %v5960, %v5964
  %vm5966 = vweird.f32 %v5826
  %vm5967 = vweird.f32 %v5960
  %vm5968 = vmor %vm5966, %vm5967
  %v5969 = vsel %vm5968, %v5960, %v5965
  %v5970 = vrsqrt.pop %v5827
  %v5971 = vmul.f32 %v5970, %v5827
  %v5972 = vmul.f32 %v5971, %v5970
  %v5973 = vmul.f32 0.5, %v5972
  %v5974 = vsub.f32 1.5, %v5973
  %v5975 = vmul.f32 %v5970, %v5974
  %vm5976 = vweird.f32 %v5827
  %vm5977 = vweird.f32 %v5970
  %vm5978 = vmor %vm5976, %vm5977
  %v5979 = vsel %vm5978, %v5970, %v5975
  %v5980 = vrsqrt.pop %v5828
  %v5981 = vmul.f32 %v5980, %v5828
  %v5982 = vmul.f32 %v5981, %v5980
  %v5983 = vmul.f32 0.5, %v5982
  %v5984 = vsub.f32 1.5, %v5983
  %v5985 = vmul.f32 %v5980, %v5984
  %vm5986 = vweird.f32 %v5828
  %vm5987 = vweird.f32 %v5980
  %vm5988 = vmor %vm5986, %vm5987
  %v5989 = vsel %vm5988, %v5980, %v5985
  %v5990 = vrsqrt.pop %v5829
  %v5991 = vmul.f32 %v5990, %v5829
  %v5992 = vmul.f32 %v5991, %v5990
  %v5993 = vmul.f32 0.5, %v5992
  %v5994 = vsub.f32 1.5, %v5993
  %v5995 = vmul.f32 %v5990, %v5994
  %vm5996 = vweird.f32 %v5829
  %vm5997 = vweird.f32 %v5990
  %vm5998 = vmor %vm5996, %vm5997
  %v5999 = vsel %vm5998, %v5990, %v5995
  %v6000 = vrsqrt.pop %v5830
  %v6001 = vmul.f32 %v6000, %v5830
  %v6002 = vmul.f32 %v6001, %v6000
  %v6003 = vmul.f32 0.5, %v6002
  %v6004 = vsub.f32 1.5, %v6003
  %v6005 = vmul.f32 %v6000, %v6004
  %vm6006 = vweird.f32 %v5830
  %vm6007 = vweird.f32 %v6000
  %vm6008 = vmor %vm6006, %vm6007
  %v6009 = vsel %vm6008, %v6000, %v6005
  %v6010 = vrsqrt.pop %v5831
  %v6011 = vmul.f32 %v6010, %v5831
  %v6012 = vmul.f32 %v6011, %v6010
  %v6013 = vmul.f32 0.5, %v6012
  %v6014 = vsub.f32 1.5, %v6013
  %v6015 = vmul.f32 %v6010, %v6014
  %vm6016 = vweird.f32 %v5831
  %vm6017 = vweird.f32 %v6010
  %vm6018 = vmor %vm6016, %vm6017
  %v6019 = vsel %vm6018, %v6010, %v6015
  %v6020 = vrsqrt.pop %v5832
  %v6021 = vmul.f32 %v6020, %v5832
  %v6022 = vmul.f32 %v6021, %v6020
  %v6023 = vmul.f32 0.5, %v6022
  %v6024 = vsub.f32 1.5, %v6023
  %v6025 = vmul.f32 %v6020, %v6024
  %vm6026 = vweird.f32 %v5832
  %vm6027 = vweird.f32 %v6020
  %vm6028 = vmor %vm6026, %vm6027
  %v6029 = vsel %vm6028, %v6020, %v6025
  %v6030 = vrsqrt.pop %v5833
  %v6031 = vmul.f32 %v6030, %v5833
  %v6032 = vmul.f32 %v6031, %v6030
  %v6033 = vmul.f32 0.5, %v6032
  %v6034 = vsub.f32 1.5, %v6033
  %v6035 = vmul.f32 %v6030, %v6034
  %vm6036 = vweird.f32 %v5833
  %vm6037 = vweird.f32 %v6030
  %vm6038 = vmor %vm6036, %vm6037
  %v6039 = vsel %vm6038, %v6030, %v6035
  %v6040 = vrsqrt.pop %v5834
  %v6041 = vmul.f32 %v6040, %v5834
  %v6042 = vmul.f32 %v6041, %v6040
  %v6043 = vmul.f32 0.5, %v6042
  %v6044 = vsub.f32 1.5, %v6043
  %v6045 = vmul.f32 %v6040, %v6044
  %vm6046 = vweird.f32 %v5834
  %vm6047 = vweird.f32 %v6040
  %vm6048 = vmor %vm6046, %vm6047
  %v6049 = vsel %vm6048, %v6040, %v6045
  %v6050 = vrsqrt.pop %v5835
  %v6051 = vmul.f32 %v6050, %v5835
  %v6052 = vmul.f32 %v6051, %v6050
  %v6053 = vmul.f32 0.5, %v6052
  %v6054 = vsub.f32 1.5, %v6053
  %v6055 = vmul.f32 %v6050, %v6054
  %vm6056 = vweird.f32 %v5835
  %vm6057 = vweird.f32 %v6050
  %vm6058 = vmor %vm6056, %vm6057
  %v6059 = vsel %vm6058, %v6050, %v6055
  %v6060 = vrsqrt.pop %v5836
  %v6061 = vmul.f32 %v6060, %v5836
  %v6062 = vmul.f32 %v6061, %v6060
  %v6063 = vmul.f32 0.5, %v6062
  %v6064 = vsub.f32 1.5, %v6063
  %v6065 = vmul.f32 %v6060, %v6064
  %vm6066 = vweird.f32 %v5836
  %vm6067 = vweird.f32 %v6060
  %vm6068 = vmor %vm6066, %vm6067
  %v6069 = vsel %vm6068, %v6060, %v6065
  %v6070 = vrsqrt.pop %v5837
  %v6071 = vmul.f32 %v6070, %v5837
  %v6072 = vmul.f32 %v6071, %v6070
  %v6073 = vmul.f32 0.5, %v6072
  %v6074 = vsub.f32 1.5, %v6073
  %v6075 = vmul.f32 %v6070, %v6074
  %vm6076 = vweird.f32 %v5837
  %vm6077 = vweird.f32 %v6070
  %vm6078 = vmor %vm6076, %vm6077
  %v6079 = vsel %vm6078, %v6070, %v6075
  %v6080 = vrsqrt.pop %v5838
  %v6081 = vmul.f32 %v6080, %v5838
  %v6082 = vmul.f32 %v6081, %v6080
  %v6083 = vmul.f32 0.5, %v6082
  %v6084 = vsub.f32 1.5, %v6083
  %v6085 = vmul.f32 %v6080, %v6084
  %vm6086 = vweird.f32 %v5838
  %vm6087 = vweird.f32 %v6080
  %vm6088 = vmor %vm6086, %vm6087
  %v6089 = vsel %vm6088, %v6080, %v6085
  %v6090 = vrsqrt.pop %v5839
  %v6091 = vmul.f32 %v6090, %v5839
  %v6092 = vmul.f32 %v6091, %v6090
  %v6093 = vmul.f32 0.5, %v6092
  %v6094 = vsub.f32 1.5, %v6093
  %v6095 = vmul.f32 %v6090, %v6094
  %vm6096 = vweird.f32 %v5839
  %vm6097 = vweird.f32 %v6090
  %vm6098 = vmor %vm6096, %vm6097
  %v6099 = vsel %vm6098, %v6090, %v6095
  %v6100 = vrsqrt.pop %v5840
  %v6101 = vmul.f32 %v6100, %v5840
  %v6102 = vmul.f32 %v6101, %v6100
  %v6103 = vmul.f32 0.5, %v6102
  %v6104 = vsub.f32 1.5, %v6103
  %v6105 = vmul.f32 %v6100, %v6104
  %vm6106 = vweird.f32 %v5840
  %vm6107 = vweird.f32 %v6100
  %vm6108 = vmor %vm6106, %vm6107
  %v6109 = vsel %vm6108, %v6100, %v6105
  %v6110 = vrsqrt.pop %v5841
  %v6111 = vmul.f32 %v6110, %v5841
  %v6112 = vmul.f32 %v6111, %v6110
  %v6113 = vmul.f32 0.5, %v6112
  %v6114 = vsub.f32 1.5, %v6113
  %v6115 = vmul.f32 %v6110, %v6114
  %vm6116 = vweird.f32 %v5841
  %vm6117 = vweird.f32 %v6110
  %vm6118 = vmor %vm6116, %vm6117
  %v6119 = vsel %vm6118, %v6110, %v6115
  %v6120 = vrsqrt.pop %v5842
  %v6121 = vmul.f32 %v6120, %v5842
  %v6122 = vmul.f32 %v6121, %v6120
  %v6123 = vmul.f32 0.5, %v6122
  %v6124 = vsub.f32 1.5, %v6123
  %v6125 = vmul.f32 %v6120, %v6124
  %vm6126 = vweird.f32 %v5842
  %vm6127 = vweird.f32 %v6120
  %vm6128 = vmor %vm6126, %vm6127
  %v6129 = vsel %vm6128, %v6120, %v6125
  %v6130 = vrsqrt.pop %v5843
  %v6131 = vmul.f32 %v6130, %v5843
  %v6132 = vmul.f32 %v6131, %v6130
  %v6133 = vmul.f32 0.5, %v6132
  %v6134 = vsub.f32 1.5, %v6133
  %v6135 = vmul.f32 %v6130, %v6134
  %vm6136 = vweird.f32 %v5843
  %vm6137 = vweird.f32 %v6130
  %vm6138 = vmor %vm6136, %vm6137
  %v6139 = vsel %vm6138, %v6130, %v6135
  %v6140 = vrsqrt.pop %v5844
  %v6141 = vmul.f32 %v6140, %v5844
  %v6142 = vmul.f32 %v6141, %v6140
  %v6143 = vmul.f32 0.5, %v6142
  %v6144 = vsub.f32 1.5, %v6143
  %v6145 = vmul.f32 %v6140, %v6144
  %vm6146 = vweird.f32 %v5844
  %vm6147 = vweird.f32 %v6140
  %vm6148 = vmor %vm6146, %vm6147
  %v6149 = vsel %vm6148, %v6140, %v6145
  %v6150 = vrsqrt.pop %v5845
  %v6151 = vmul.f32 %v6150, %v5845
  %v6152 = vmul.f32 %v6151, %v6150
  %v6153 = vmul.f32 0.5, %v6152
  %v6154 = vsub.f32 1.5, %v6153
  %v6155 = vmul.f32 %v6150, %v6154
  %vm6156 = vweird.f32 %v5845
  %vm6157 = vweird.f32 %v6150
  %vm6158 = vmor %vm6156, %vm6157
  %v6159 = vsel %vm6158, %v6150, %v6155
  %v6160 = vrsqrt.pop %v5846
  %v6161 = vmul.f32 %v6160, %v5846
  %v6162 = vmul.f32 %v6161, %v6160
  %v6163 = vmul.f32 0.5, %v6162
  %v6164 = vsub.f32 1.5, %v6163
  %v6165 = vmul.f32 %v6160, %v6164
  %vm6166 = vweird.f32 %v5846
  %vm6167 = vweird.f32 %v6160
  %vm6168 = vmor %vm6166, %vm6167
  %v6169 = vsel %vm6168, %v6160, %v6165
  %v6170 = vrsqrt.pop %v5847
  %v6171 = vmul.f32 %v6170, %v5847
  %v6172 = vmul.f32 %v6171, %v6170
  %v6173 = vmul.f32 0.5, %v6172
  %v6174 = vsub.f32 1.5, %v6173
  %v6175 = vmul.f32 %v6170, %v6174
  %vm6176 = vweird.f32 %v5847
  %vm6177 = vweird.f32 %v6170
  %vm6178 = vmor %vm6176, %vm6177
  %v6179 = vsel %vm6178, %v6170, %v6175
  %v6180 = vrsqrt.pop %v5848
  %v6181 = vmul.f32 %v6180, %v5848
  %v6182 = vmul.f32 %v6181, %v6180
  %v6183 = vmul.f32 0.5, %v6182
  %v6184 = vsub.f32 1.5, %v6183
  %v6185 = vmul.f32 %v6180, %v6184
  %vm6186 = vweird.f32 %v5848
  %vm6187 = vweird.f32 %v6180
  %vm6188 = vmor %vm6186, %vm6187
  %v6189 = vsel %vm6188, %v6180, %v6185
  %v6190 = vrsqrt.pop %v5849
  %v6191 = vmul.f32 %v6190, %v5849
  %v6192 = vmul.f32 %v6191, %v6190
  %v6193 = vmul.f32 0.5, %v6192
  %v6194 = vsub.f32 1.5, %v6193
  %v6195 = vmul.f32 %v6190, %v6194
  %vm6196 = vweird.f32 %v5849
  %vm6197 = vweird.f32 %v6190
  %vm6198 = vmor %vm6196, %vm6197
  %v6199 = vsel %vm6198, %v6190, %v6195
  %v6200 = vrsqrt.pop %v5850
  %v6201 = vmul.f32 %v6200, %v5850
  %v6202 = vmul.f32 %v6201, %v6200
  %v6203 = vmul.f32 0.5, %v6202
  %v6204 = vsub.f32 1.5, %v6203
  %v6205 = vmul.f32 %v6200, %v6204
  %vm6206 = vweird.f32 %v5850
  %vm6207 = vweird.f32 %v6200
  %vm6208 = vmor %vm6206, %vm6207
  %v6209 = vsel %vm6208, %v6200, %v6205
  %v6210 = vrsqrt.pop %v5851
  %v6211 = vmul.f32 %v6210, %v5851
  %v6212 = vmul.f32 %v6211, %v6210
  %v6213 = vmul.f32 0.5, %v6212
  %v6214 = vsub.f32 1.5, %v6213
  %v6215 = vmul.f32 %v6210, %v6214
  %vm6216 = vweird.f32 %v5851
  %vm6217 = vweird.f32 %v6210
  %vm6218 = vmor %vm6216, %vm6217
  %v6219 = vsel %vm6218, %v6210, %v6215
  %v6220 = vrsqrt.pop %v5852
  %v6221 = vmul.f32 %v6220, %v5852
  %v6222 = vmul.f32 %v6221, %v6220
  %v6223 = vmul.f32 0.5, %v6222
  %v6224 = vsub.f32 1.5, %v6223
  %v6225 = vmul.f32 %v6220, %v6224
  %vm6226 = vweird.f32 %v5852
  %vm6227 = vweird.f32 %v6220
  %vm6228 = vmor %vm6226, %vm6227
  %v6229 = vsel %vm6228, %v6220, %v6225
  %v6230 = vrsqrt.pop %v5853
  %v6231 = vmul.f32 %v6230, %v5853
  %v6232 = vmul.f32 %v6231, %v6230
  %v6233 = vmul.f32 0.5, %v6232
  %v6234 = vsub.f32 1.5, %v6233
  %v6235 = vmul.f32 %v6230, %v6234
  %vm6236 = vweird.f32 %v5853
  %vm6237 = vweird.f32 %v6230
  %vm6238 = vmor %vm6236, %vm6237
  %v6239 = vsel %vm6238, %v6230, %v6235
  %v6240 = vrsqrt.pop %v5854
  %v6241 = vmul.f32 %v6240, %v5854
  %v6242 = vmul.f32 %v6241, %v6240
  %v6243 = vmul.f32 0.5, %v6242
  %v6244 = vsub.f32 1.5, %v6243
  %v6245 = vmul.f32 %v6240, %v6244
  %vm6246 = vweird.f32 %v5854
  %vm6247 = vweird.f32 %v6240
  %vm6248 = vmor %vm6246, %vm6247
  %v6249 = vsel %vm6248, %v6240, %v6245
  %v6250 = vrsqrt.pop %v5855
  %v6251 = vmul.f32 %v6250, %v5855
  %v6252 = vmul.f32 %v6251, %v6250
  %v6253 = vmul.f32 0.5, %v6252
  %v6254 = vsub.f32 1.5, %v6253
  %v6255 = vmul.f32 %v6250, %v6254
  %vm6256 = vweird.f32 %v5855
  %vm6257 = vweird.f32 %v6250
  %vm6258 = vmor %vm6256, %vm6257
  %v6259 = vsel %vm6258, %v6250, %v6255
  %v6260 = vrsqrt.pop %v5856
  %v6261 = vmul.f32 %v6260, %v5856
  %v6262 = vmul.f32 %v6261, %v6260
  %v6263 = vmul.f32 0.5, %v6262
  %v6264 = vsub.f32 1.5, %v6263
  %v6265 = vmul.f32 %v6260, %v6264
  %vm6266 = vweird.f32 %v5856
  %vm6267 = vweird.f32 %v6260
  %vm6268 = vmor %vm6266, %vm6267
  %v6269 = vsel %vm6268, %v6260, %v6265
  %v6270 = vrsqrt.pop %v5857
  %v6271 = vmul.f32 %v6270, %v5857
  %v6272 = vmul.f32 %v6271, %v6270
  %v6273 = vmul.f32 0.5, %v6272
  %v6274 = vsub.f32 1.5, %v6273
  %v6275 = vmul.f32 %v6270, %v6274
  %vm6276 = vweird.f32 %v5857
  %vm6277 = vweird.f32 %v6270
  %vm6278 = vmor %vm6276, %vm6277
  %v6279 = vsel %vm6278, %v6270, %v6275
  %v6280 = vrsqrt.pop %v5858
  %v6281 = vmul.f32 %v6280, %v5858
  %v6282 = vmul.f32 %v6281, %v6280
  %v6283 = vmul.f32 0.5, %v6282
  %v6284 = vsub.f32 1.5, %v6283
  %v6285 = vmul.f32 %v6280, %v6284
  %vm6286 = vweird.f32 %v5858
  %vm6287 = vweird.f32 %v6280
  %vm6288 = vmor %vm6286, %vm6287
  %v6289 = vsel %vm6288, %v6280, %v6285
  %v6290 = vrsqrt.pop %v5859
  %v6291 = vmul.f32 %v6290, %v5859
  %v6292 = vmul.f32 %v6291, %v6290
  %v6293 = vmul.f32 0.5, %v6292
  %v6294 = vsub.f32 1.5, %v6293
  %v6295 = vmul.f32 %v6290, %v6294
  %vm6296 = vweird.f32 %v5859
  %vm6297 = vweird.f32 %v6290
  %vm6298 = vmor %vm6296, %vm6297
  %v6299 = vsel %vm6298, %v6290, %v6295
  %v6300 = vrsqrt.pop %v5860
  %v6301 = vmul.f32 %v6300, %v5860
  %v6302 = vmul.f32 %v6301, %v6300
  %v6303 = vmul.f32 0.5, %v6302
  %v6304 = vsub.f32 1.5, %v6303
  %v6305 = vmul.f32 %v6300, %v6304
  %vm6306 = vweird.f32 %v5860
  %vm6307 = vweird.f32 %v6300
  %vm6308 = vmor %vm6306, %vm6307
  %v6309 = vsel %vm6308, %v6300, %v6305
  %v6310 = vrsqrt.pop %v5861
  %v6311 = vmul.f32 %v6310, %v5861
  %v6312 = vmul.f32 %v6311, %v6310
  %v6313 = vmul.f32 0.5, %v6312
  %v6314 = vsub.f32 1.5, %v6313
  %v6315 = vmul.f32 %v6310, %v6314
  %vm6316 = vweird.f32 %v5861
  %vm6317 = vweird.f32 %v6310
  %vm6318 = vmor %vm6316, %vm6317
  %v6319 = vsel %vm6318, %v6310, %v6315
  %v6320 = vrsqrt.pop %v5862
  %v6321 = vmul.f32 %v6320, %v5862
  %v6322 = vmul.f32 %v6321, %v6320
  %v6323 = vmul.f32 0.5, %v6322
  %v6324 = vsub.f32 1.5, %v6323
  %v6325 = vmul.f32 %v6320, %v6324
  %vm6326 = vweird.f32 %v5862
  %vm6327 = vweird.f32 %v6320
  %vm6328 = vmor %vm6326, %vm6327
  %v6329 = vsel %vm6328, %v6320, %v6325
  %v6330 = vrsqrt.pop %v5863
  %v6331 = vmul.f32 %v6330, %v5863
  %v6332 = vmul.f32 %v6331, %v6330
  %v6333 = vmul.f32 0.5, %v6332
  %v6334 = vsub.f32 1.5, %v6333
  %v6335 = vmul.f32 %v6330, %v6334
  %vm6336 = vweird.f32 %v5863
  %vm6337 = vweird.f32 %v6330
  %vm6338 = vmor %vm6336, %vm6337
  %v6339 = vsel %vm6338, %v6330, %v6335
  %v6340 = vrsqrt.pop %v5864
  %v6341 = vmul.f32 %v6340, %v5864
  %v6342 = vmul.f32 %v6341, %v6340
  %v6343 = vmul.f32 0.5, %v6342
  %v6344 = vsub.f32 1.5, %v6343
  %v6345 = vmul.f32 %v6340, %v6344
  %vm6346 = vweird.f32 %v5864
  %vm6347 = vweird.f32 %v6340
  %vm6348 = vmor %vm6346, %vm6347
  %v6349 = vsel %vm6348, %v6340, %v6345
  %v6350 = vrsqrt.pop %v5865
  %v6351 = vmul.f32 %v6350, %v5865
  %v6352 = vmul.f32 %v6351, %v6350
  %v6353 = vmul.f32 0.5, %v6352
  %v6354 = vsub.f32 1.5, %v6353
  %v6355 = vmul.f32 %v6350, %v6354
  %vm6356 = vweird.f32 %v5865
  %vm6357 = vweird.f32 %v6350
  %vm6358 = vmor %vm6356, %vm6357
  %v6359 = vsel %vm6358, %v6350, %v6355
  %v6360 = vrsqrt.pop %v5866
  %v6361 = vmul.f32 %v6360, %v5866
  %v6362 = vmul.f32 %v6361, %v6360
  %v6363 = vmul.f32 0.5, %v6362
  %v6364 = vsub.f32 1.5, %v6363
  %v6365 = vmul.f32 %v6360, %v6364
  %vm6366 = vweird.f32 %v5866
  %vm6367 = vweird.f32 %v6360
  %vm6368 = vmor %vm6366, %vm6367
  %v6369 = vsel %vm6368, %v6360, %v6365
  %v6370 = vrsqrt.pop %v5867
  %v6371 = vmul.f32 %v6370, %v5867
  %v6372 = vmul.f32 %v6371, %v6370
  %v6373 = vmul.f32 0.5, %v6372
  %v6374 = vsub.f32 1.5, %v6373
  %v6375 = vmul.f32 %v6370, %v6374
  %vm6376 = vweird.f32 %v5867
  %vm6377 = vweird.f32 %v6370
  %vm6378 = vmor %vm6376, %vm6377
  %v6379 = vsel %vm6378, %v6370, %v6375
  %v6380 = vrsqrt.pop %v5868
  %v6381 = vmul.f32 %v6380, %v5868
  %v6382 = vmul.f32 %v6381, %v6380
  %v6383 = vmul.f32 0.5, %v6382
  %v6384 = vsub.f32 1.5, %v6383
  %v6385 = vmul.f32 %v6380, %v6384
  %vm6386 = vweird.f32 %v5868
  %vm6387 = vweird.f32 %v6380
  %vm6388 = vmor %vm6386, %vm6387
  %v6389 = vsel %vm6388, %v6380, %v6385
  %v6390 = vrsqrt.pop %v5869
  %v6391 = vmul.f32 %v6390, %v5869
  %v6392 = vmul.f32 %v6391, %v6390
  %v6393 = vmul.f32 0.5, %v6392
  %v6394 = vsub.f32 1.5, %v6393
  %v6395 = vmul.f32 %v6390, %v6394
  %vm6396 = vweird.f32 %v5869
  %vm6397 = vweird.f32 %v6390
  %vm6398 = vmor %vm6396, %vm6397
  %v6399 = vsel %vm6398, %v6390, %v6395
  %v6400 = vrsqrt.pop %v5870
  %v6401 = vmul.f32 %v6400, %v5870
  %v6402 = vmul.f32 %v6401, %v6400
  %v6403 = vmul.f32 0.5, %v6402
  %v6404 = vsub.f32 1.5, %v6403
  %v6405 = vmul.f32 %v6400, %v6404
  %vm6406 = vweird.f32 %v5870
  %vm6407 = vweird.f32 %v6400
  %vm6408 = vmor %vm6406, %vm6407
  %v6409 = vsel %vm6408, %v6400, %v6405
  %v6410 = vrsqrt.pop %v5871
  %v6411 = vmul.f32 %v6410, %v5871
  %v6412 = vmul.f32 %v6411, %v6410
  %v6413 = vmul.f32 0.5, %v6412
  %v6414 = vsub.f32 1.5, %v6413
  %v6415 = vmul.f32 %v6410, %v6414
  %vm6416 = vweird.f32 %v5871
  %vm6417 = vweird.f32 %v6410
  %vm6418 = vmor %vm6416, %vm6417
  %v6419 = vsel %vm6418, %v6410, %v6415
  %v6420 = vrsqrt.pop %v5872
  %v6421 = vmul.f32 %v6420, %v5872
  %v6422 = vmul.f32 %v6421, %v6420
  %v6423 = vmul.f32 0.5, %v6422
  %v6424 = vsub.f32 1.5, %v6423
  %v6425 = vmul.f32 %v6420, %v6424
  %vm6426 = vweird.f32 %v5872
  %vm6427 = vweird.f32 %v6420
  %vm6428 = vmor %vm6426, %vm6427
  %v6429 = vsel %vm6428, %v6420, %v6425
  %v6430 = vrsqrt.pop %v5873
  %v6431 = vmul.f32 %v6430, %v5873
  %v6432 = vmul.f32 %v6431, %v6430
  %v6433 = vmul.f32 0.5, %v6432
  %v6434 = vsub.f32 1.5, %v6433
  %v6435 = vmul.f32 %v6430, %v6434
  %vm6436 = vweird.f32 %v5873
  %vm6437 = vweird.f32 %v6430
  %vm6438 = vmor %vm6436, %vm6437
  %v6439 = vsel %vm6438, %v6430, %v6435
  %v6440 = vrsqrt.pop %v5874
  %v6441 = vmul.f32 %v6440, %v5874
  %v6442 = vmul.f32 %v6441, %v6440
  %v6443 = vmul.f32 0.5, %v6442
  %v6444 = vsub.f32 1.5, %v6443
  %v6445 = vmul.f32 %v6440, %v6444
  %vm6446 = vweird.f32 %v5874
  %vm6447 = vweird.f32 %v6440
  %vm6448 = vmor %vm6446, %vm6447
  %v6449 = vsel %vm6448, %v6440, %v6445
  %v6450 = vrsqrt.pop %v5875
  %v6451 = vmul.f32 %v6450, %v5875
  %v6452 = vmul.f32 %v6451, %v6450
  %v6453 = vmul.f32 0.5, %v6452
  %v6454 = vsub.f32 1.5, %v6453
  %v6455 = vmul.f32 %v6450, %v6454
  %vm6456 = vweird.f32 %v5875
  %vm6457 = vweird.f32 %v6450
  %vm6458 = vmor %vm6456, %vm6457
  %v6459 = vsel %vm6458, %v6450, %v6455
  %v6460 = vrsqrt.pop %v5876
  %v6461 = vmul.f32 %v6460, %v5876
  %v6462 = vmul.f32 %v6461, %v6460
  %v6463 = vmul.f32 0.5, %v6462
  %v6464 = vsub.f32 1.5, %v6463
  %v6465 = vmul.f32 %v6460, %v6464
  %vm6466 = vweird.f32 %v5876
  %vm6467 = vweird.f32 %v6460
  %vm6468 = vmor %vm6466, %vm6467
  %v6469 = vsel %vm6468, %v6460, %v6465
  %v6470 = vrsqrt.pop %v5877
  %v6471 = vmul.f32 %v6470, %v5877
  %v6472 = vmul.f32 %v6471, %v6470
  %v6473 = vmul.f32 0.5, %v6472
  %v6474 = vsub.f32 1.5, %v6473
  %v6475 = vmul.f32 %v6470, %v6474
  %vm6476 = vweird.f32 %v5877
  %vm6477 = vweird.f32 %v6470
  %vm6478 = vmor %vm6476, %vm6477
  %v6479 = vsel %vm6478, %v6470, %v6475
  %v6480 = vrsqrt.pop %v5878
  %v6481 = vmul.f32 %v6480, %v5878
  %v6482 = vmul.f32 %v6481, %v6480
  %v6483 = vmul.f32 0.5, %v6482
  %v6484 = vsub.f32 1.5, %v6483
  %v6485 = vmul.f32 %v6480, %v6484
  %vm6486 = vweird.f32 %v5878
  %vm6487 = vweird.f32 %v6480
  %vm6488 = vmor %vm6486, %vm6487
  %v6489 = vsel %vm6488, %v6480, %v6485
  %v6490 = vrsqrt.pop %v5879
  %v6491 = vmul.f32 %v6490, %v5879
  %v6492 = vmul.f32 %v6491, %v6490
  %v6493 = vmul.f32 0.5, %v6492
  %v6494 = vsub.f32 1.5, %v6493
  %v6495 = vmul.f32 %v6490, %v6494
  %vm6496 = vweird.f32 %v5879
  %vm6497 = vweird.f32 %v6490
  %vm6498 = vmor %vm6496, %vm6497
  %v6499 = vsel %vm6498, %v6490, %v6495
  %v6500 = vrsqrt.pop %v5880
  %v6501 = vmul.f32 %v6500, %v5880
  %v6502 = vmul.f32 %v6501, %v6500
  %v6503 = vmul.f32 0.5, %v6502
  %v6504 = vsub.f32 1.5, %v6503
  %v6505 = vmul.f32 %v6500, %v6504
  %vm6506 = vweird.f32 %v5880
  %vm6507 = vweird.f32 %v6500
  %vm6508 = vmor %vm6506, %vm6507
  %v6509 = vsel %vm6508, %v6500, %v6505
  %v6510 = vrsqrt.pop %v5881
  %v6511 = vmul.f32 %v6510, %v5881
  %v6512 = vmul.f32 %v6511, %v6510
  %v6513 = vmul.f32 0.5, %v6512
  %v6514 = vsub.f32 1.5, %v6513
  %v6515 = vmul.f32 %v6510, %v6514
  %vm6516 = vweird.f32 %v5881
  %vm6517 = vweird.f32 %v6510
  %vm6518 = vmor %vm6516, %vm6517
  %v6519 = vsel %vm6518, %v6510, %v6515
  %v6520 = vrsqrt.pop %v5882
  %v6521 = vmul.f32 %v6520, %v5882
  %v6522 = vmul.f32 %v6521, %v6520
  %v6523 = vmul.f32 0.5, %v6522
  %v6524 = vsub.f32 1.5, %v6523
  %v6525 = vmul.f32 %v6520, %v6524
  %vm6526 = vweird.f32 %v5882
  %vm6527 = vweird.f32 %v6520
  %vm6528 = vmor %vm6526, %vm6527
  %v6529 = vsel %vm6528, %v6520, %v6525
  %v6530 = vrsqrt.pop %v5883
  %v6531 = vmul.f32 %v6530, %v5883
  %v6532 = vmul.f32 %v6531, %v6530
  %v6533 = vmul.f32 0.5, %v6532
  %v6534 = vsub.f32 1.5, %v6533
  %v6535 = vmul.f32 %v6530, %v6534
  %vm6536 = vweird.f32 %v5883
  %vm6537 = vweird.f32 %v6530
  %vm6538 = vmor %vm6536, %vm6537
  %v6539 = vsel %vm6538, %v6530, %v6535
  %v6540 = vrsqrt.pop %v5884
  %v6541 = vmul.f32 %v6540, %v5884
  %v6542 = vmul.f32 %v6541, %v6540
  %v6543 = vmul.f32 0.5, %v6542
  %v6544 = vsub.f32 1.5, %v6543
  %v6545 = vmul.f32 %v6540, %v6544
  %vm6546 = vweird.f32 %v5884
  %vm6547 = vweird.f32 %v6540
  %vm6548 = vmor %vm6546, %vm6547
  %v6549 = vsel %vm6548, %v6540, %v6545
  %v6550 = vrsqrt.pop %v5885
  %v6551 = vmul.f32 %v6550, %v5885
  %v6552 = vmul.f32 %v6551, %v6550
  %v6553 = vmul.f32 0.5, %v6552
  %v6554 = vsub.f32 1.5, %v6553
  %v6555 = vmul.f32 %v6550, %v6554
  %vm6556 = vweird.f32 %v5885
  %vm6557 = vweird.f32 %v6550
  %vm6558 = vmor %vm6556, %vm6557
  %v6559 = vsel %vm6558, %v6550, %v6555
  %v6560 = vrsqrt.pop %v5886
  %v6561 = vmul.f32 %v6560, %v5886
  %v6562 = vmul.f32 %v6561, %v6560
  %v6563 = vmul.f32 0.5, %v6562
  %v6564 = vsub.f32 1.5, %v6563
  %v6565 = vmul.f32 %v6560, %v6564
  %vm6566 = vweird.f32 %v5886
  %vm6567 = vweird.f32 %v6560
  %vm6568 = vmor %vm6566, %vm6567
  %v6569 = vsel %vm6568, %v6560, %v6565
  %v6570 = vrsqrt.pop %v5887
  %v6571 = vmul.f32 %v6570, %v5887
  %v6572 = vmul.f32 %v6571, %v6570
  %v6573 = vmul.f32 0.5, %v6572
  %v6574 = vsub.f32 1.5, %v6573
  %v6575 = vmul.f32 %v6570, %v6574
  %vm6576 = vweird.f32 %v5887
  %vm6577 = vweird.f32 %v6570
  %vm6578 = vmor %vm6576, %vm6577
  %v6579 = vsel %vm6578, %v6570, %v6575
  %v6580 = vrsqrt.pop %v5888
  %v6581 = vmul.f32 %v6580, %v5888
  %v6582 = vmul.f32 %v6581, %v6580
  %v6583 = vmul.f32 0.5, %v6582
  %v6584 = vsub.f32 1.5, %v6583
  %v6585 = vmul.f32 %v6580, %v6584
  %vm6586 = vweird.f32 %v5888
  %vm6587 = vweird.f32 %v6580
  %vm6588 = vmor %vm6586, %vm6587
  %v6589 = vsel %vm6588, %v6580, %v6585
  %v6590 = vrsqrt.pop %v5889
  %v6591 = vmul.f32 %v6590, %v5889
  %v6592 = vmul.f32 %v6591, %v6590
  %v6593 = vmul.f32 0.5, %v6592
  %v6594 = vsub.f32 1.5, %v6593
  %v6595 = vmul.f32 %v6590, %v6594
  %vm6596 = vweird.f32 %v5889
  %vm6597 = vweird.f32 %v6590
  %vm6598 = vmor %vm6596, %vm6597
  %v6599 = vsel %vm6598, %v6590, %v6595
  %v6600 = vrsqrt.pop %v5890
  %v6601 = vmul.f32 %v6600, %v5890
  %v6602 = vmul.f32 %v6601, %v6600
  %v6603 = vmul.f32 0.5, %v6602
  %v6604 = vsub.f32 1.5, %v6603
  %v6605 = vmul.f32 %v6600, %v6604
  %vm6606 = vweird.f32 %v5890
  %vm6607 = vweird.f32 %v6600
  %vm6608 = vmor %vm6606, %vm6607
  %v6609 = vsel %vm6608, %v6600, %v6605
  %v6610 = vrsqrt.pop %v5891
  %v6611 = vmul.f32 %v6610, %v5891
  %v6612 = vmul.f32 %v6611, %v6610
  %v6613 = vmul.f32 0.5, %v6612
  %v6614 = vsub.f32 1.5, %v6613
  %v6615 = vmul.f32 %v6610, %v6614
  %vm6616 = vweird.f32 %v5891
  %vm6617 = vweird.f32 %v6610
  %vm6618 = vmor %vm6616, %vm6617
  %v6619 = vsel %vm6618, %v6610, %v6615
  %v6620 = vrsqrt.pop %v5892
  %v6621 = vmul.f32 %v6620, %v5892
  %v6622 = vmul.f32 %v6621, %v6620
  %v6623 = vmul.f32 0.5, %v6622
  %v6624 = vsub.f32 1.5, %v6623
  %v6625 = vmul.f32 %v6620, %v6624
  %vm6626 = vweird.f32 %v5892
  %vm6627 = vweird.f32 %v6620
  %vm6628 = vmor %vm6626, %vm6627
  %v6629 = vsel %vm6628, %v6620, %v6625
  %v6630 = vrsqrt.pop %v5893
  %v6631 = vmul.f32 %v6630, %v5893
  %v6632 = vmul.f32 %v6631, %v6630
  %v6633 = vmul.f32 0.5, %v6632
  %v6634 = vsub.f32 1.5, %v6633
  %v6635 = vmul.f32 %v6630, %v6634
  %vm6636 = vweird.f32 %v5893
  %vm6637 = vweird.f32 %v6630
  %vm6638 = vmor %vm6636, %vm6637
  %v6639 = vsel %vm6638, %v6630, %v6635
  %v6640 = vrsqrt.pop %v5894
  %v6641 = vmul.f32 %v6640, %v5894
  %v6642 = vmul.f32 %v6641, %v6640
  %v6643 = vmul.f32 0.5, %v6642
  %v6644 = vsub.f32 1.5, %v6643
  %v6645 = vmul.f32 %v6640, %v6644
  %vm6646 = vweird.f32 %v5894
  %vm6647 = vweird.f32 %v6640
  %vm6648 = vmor %vm6646, %vm6647
  %v6649 = vsel %vm6648, %v6640, %v6645
  %v6650 = vrsqrt.pop %v5895
  %v6651 = vmul.f32 %v6650, %v5895
  %v6652 = vmul.f32 %v6651, %v6650
  %v6653 = vmul.f32 0.5, %v6652
  %v6654 = vsub.f32 1.5, %v6653
  %v6655 = vmul.f32 %v6650, %v6654
  %vm6656 = vweird.f32 %v5895
  %vm6657 = vweird.f32 %v6650
  %vm6658 = vmor %vm6656, %vm6657
  %v6659 = vsel %vm6658, %v6650, %v6655
  %v6660 = vrsqrt.pop %v5896
  %v6661 = vmul.f32 %v6660, %v5896
  %v6662 = vmul.f32 %v6661, %v6660
  %v6663 = vmul.f32 0.5, %v6662
  %v6664 = vsub.f32 1.5, %v6663
  %v6665 = vmul.f32 %v6660, %v6664
  %vm6666 = vweird.f32 %v5896
  %vm6667 = vweird.f32 %v6660
  %vm6668 = vmor %vm6666, %vm6667
  %v6669 = vsel %vm6668, %v6660, %v6665
  %v6670 = vrsqrt.pop %v5897
  %v6671 = vmul.f32 %v6670, %v5897
  %v6672 = vmul.f32 %v6671, %v6670
  %v6673 = vmul.f32 0.5, %v6672
  %v6674 = vsub.f32 1.5, %v6673
  %v6675 = vmul.f32 %v6670, %v6674
  %vm6676 = vweird.f32 %v5897
  %vm6677 = vweird.f32 %v6670
  %vm6678 = vmor %vm6676, %vm6677
  %v6679 = vsel %vm6678, %v6670, %v6675
  %v6680 = vrsqrt.pop %v5898
  %v6681 = vmul.f32 %v6680, %v5898
  %v6682 = vmul.f32 %v6681, %v6680
  %v6683 = vmul.f32 0.5, %v6682
  %v6684 = vsub.f32 1.5, %v6683
  %v6685 = vmul.f32 %v6680, %v6684
  %vm6686 = vweird.f32 %v5898
  %vm6687 = vweird.f32 %v6680
  %vm6688 = vmor %vm6686, %vm6687
  %v6689 = vsel %vm6688, %v6680, %v6685
  %v6690 = vrsqrt.pop %v5899
  %v6691 = vmul.f32 %v6690, %v5899
  %v6692 = vmul.f32 %v6691, %v6690
  %v6693 = vmul.f32 0.5, %v6692
  %v6694 = vsub.f32 1.5, %v6693
  %v6695 = vmul.f32 %v6690, %v6694
  %vm6696 = vweird.f32 %v5899
  %vm6697 = vweird.f32 %v6690
  %vm6698 = vmor %vm6696, %vm6697
  %v6699 = vsel %vm6698, %v6690, %v6695
  %v6700 = vrsqrt.pop %v5900
  %v6701 = vmul.f32 %v6700, %v5900
  %v6702 = vmul.f32 %v6701, %v6700
  %v6703 = vmul.f32 0.5, %v6702
  %v6704 = vsub.f32 1.5, %v6703
  %v6705 = vmul.f32 %v6700, %v6704
  %vm6706 = vweird.f32 %v5900
  %vm6707 = vweird.f32 %v6700
  %vm6708 = vmor %vm6706, %vm6707
  %v6709 = vsel %vm6708, %v6700, %v6705
  %v6710 = vrsqrt.pop %v5901
  %v6711 = vmul.f32 %v6710, %v5901
  %v6712 = vmul.f32 %v6711, %v6710
  %v6713 = vmul.f32 0.5, %v6712
  %v6714 = vsub.f32 1.5, %v6713
  %v6715 = vmul.f32 %v6710, %v6714
  %vm6716 = vweird.f32 %v5901
  %vm6717 = vweird.f32 %v6710
  %vm6718 = vmor %vm6716, %vm6717
  %v6719 = vsel %vm6718, %v6710, %v6715
  %v6720 = vrsqrt.pop %v5902
  %v6721 = vmul.f32 %v6720, %v5902
  %v6722 = vmul.f32 %v6721, %v6720
  %v6723 = vmul.f32 0.5, %v6722
  %v6724 = vsub.f32 1.5, %v6723
  %v6725 = vmul.f32 %v6720, %v6724
  %vm6726 = vweird.f32 %v5902
  %vm6727 = vweird.f32 %v6720
  %vm6728 = vmor %vm6726, %vm6727
  %v6729 = vsel %vm6728, %v6720, %v6725
  %v6730 = vrsqrt.pop %v5903
  %v6731 = vmul.f32 %v6730, %v5903
  %v6732 = vmul.f32 %v6731, %v6730
  %v6733 = vmul.f32 0.5, %v6732
  %v6734 = vsub.f32 1.5, %v6733
  %v6735 = vmul.f32 %v6730, %v6734
  %vm6736 = vweird.f32 %v5903
  %vm6737 = vweird.f32 %v6730
  %vm6738 = vmor %vm6736, %vm6737
  %v6739 = vsel %vm6738, %v6730, %v6735
  %v6740 = vrsqrt.pop %v5904
  %v6741 = vmul.f32 %v6740, %v5904
  %v6742 = vmul.f32 %v6741, %v6740
  %v6743 = vmul.f32 0.5, %v6742
  %v6744 = vsub.f32 1.5, %v6743
  %v6745 = vmul.f32 %v6740, %v6744
  %vm6746 = vweird.f32 %v5904
  %vm6747 = vweird.f32 %v6740
  %vm6748 = vmor %vm6746, %vm6747
  %v6749 = vsel %vm6748, %v6740, %v6745
  %v6750 = vrsqrt.pop %v5905
  %v6751 = vmul.f32 %v6750, %v5905
  %v6752 = vmul.f32 %v6751, %v6750
  %v6753 = vmul.f32 0.5, %v6752
  %v6754 = vsub.f32 1.5, %v6753
  %v6755 = vmul.f32 %v6750, %v6754
  %vm6756 = vweird.f32 %v5905
  %vm6757 = vweird.f32 %v6750
  %vm6758 = vmor %vm6756, %vm6757
  %v6759 = vsel %vm6758, %v6750, %v6755
  %v6760 = vrsqrt.pop %v5906
  %v6761 = vmul.f32 %v6760, %v5906
  %v6762 = vmul.f32 %v6761, %v6760
  %v6763 = vmul.f32 0.5, %v6762
  %v6764 = vsub.f32 1.5, %v6763
  %v6765 = vmul.f32 %v6760, %v6764
  %vm6766 = vweird.f32 %v5906
  %vm6767 = vweird.f32 %v6760
  %vm6768 = vmor %vm6766, %vm6767
  %v6769 = vsel %vm6768, %v6760, %v6765
  %v6770 = vrsqrt.pop %v5907
  %v6771 = vmul.f32 %v6770, %v5907
  %v6772 = vmul.f32 %v6771, %v6770
  %v6773 = vmul.f32 0.5, %v6772
  %v6774 = vsub.f32 1.5, %v6773
  %v6775 = vmul.f32 %v6770, %v6774
  %vm6776 = vweird.f32 %v5907
  %vm6777 = vweird.f32 %v6770
  %vm6778 = vmor %vm6776, %vm6777
  %v6779 = vsel %vm6778, %v6770, %v6775
  %v6780 = vrsqrt.pop %v5908
  %v6781 = vmul.f32 %v6780, %v5908
  %v6782 = vmul.f32 %v6781, %v6780
  %v6783 = vmul.f32 0.5, %v6782
  %v6784 = vsub.f32 1.5, %v6783
  %v6785 = vmul.f32 %v6780, %v6784
  %vm6786 = vweird.f32 %v5908
  %vm6787 = vweird.f32 %v6780
  %vm6788 = vmor %vm6786, %vm6787
  %v6789 = vsel %vm6788, %v6780, %v6785
  %v6790 = vrsqrt.pop %v5909
  %v6791 = vmul.f32 %v6790, %v5909
  %v6792 = vmul.f32 %v6791, %v6790
  %v6793 = vmul.f32 0.5, %v6792
  %v6794 = vsub.f32 1.5, %v6793
  %v6795 = vmul.f32 %v6790, %v6794
  %vm6796 = vweird.f32 %v5909
  %vm6797 = vweird.f32 %v6790
  %vm6798 = vmor %vm6796, %vm6797
  %v6799 = vsel %vm6798, %v6790, %v6795
  %v6800 = vrsqrt.pop %v5910
  %v6801 = vmul.f32 %v6800, %v5910
  %v6802 = vmul.f32 %v6801, %v6800
  %v6803 = vmul.f32 0.5, %v6802
  %v6804 = vsub.f32 1.5, %v6803
  %v6805 = vmul.f32 %v6800, %v6804
  %vm6806 = vweird.f32 %v5910
  %vm6807 = vweird.f32 %v6800
  %vm6808 = vmor %vm6806, %vm6807
  %v6809 = vsel %vm6808, %v6800, %v6805
  %v6810 = vrsqrt.pop %v5911
  %v6811 = vmul.f32 %v6810, %v5911
  %v6812 = vmul.f32 %v6811, %v6810
  %v6813 = vmul.f32 0.5, %v6812
  %v6814 = vsub.f32 1.5, %v6813
  %v6815 = vmul.f32 %v6810, %v6814
  %vm6816 = vweird.f32 %v5911
  %vm6817 = vweird.f32 %v6810
  %vm6818 = vmor %vm6816, %vm6817
  %v6819 = vsel %vm6818, %v6810, %v6815
  %v6820 = vrsqrt.pop %v5912
  %v6821 = vmul.f32 %v6820, %v5912
  %v6822 = vmul.f32 %v6821, %v6820
  %v6823 = vmul.f32 0.5, %v6822
  %v6824 = vsub.f32 1.5, %v6823
  %v6825 = vmul.f32 %v6820, %v6824
  %vm6826 = vweird.f32 %v5912
  %vm6827 = vweird.f32 %v6820
  %vm6828 = vmor %vm6826, %vm6827
  %v6829 = vsel %vm6828, %v6820, %v6825
  %v6830 = vrsqrt.pop %v5913
  %v6831 = vmul.f32 %v6830, %v5913
  %v6832 = vmul.f32 %v6831, %v6830
  %v6833 = vmul.f32 0.5, %v6832
  %v6834 = vsub.f32 1.5, %v6833
  %v6835 = vmul.f32 %v6830, %v6834
  %vm6836 = vweird.f32 %v5913
  %vm6837 = vweird.f32 %v6830
  %vm6838 = vmor %vm6836, %vm6837
  %v6839 = vsel %vm6838, %v6830, %v6835
  %v6840 = vrsqrt.pop %v5914
  %v6841 = vmul.f32 %v6840, %v5914
  %v6842 = vmul.f32 %v6841, %v6840
  %v6843 = vmul.f32 0.5, %v6842
  %v6844 = vsub.f32 1.5, %v6843
  %v6845 = vmul.f32 %v6840, %v6844
  %vm6846 = vweird.f32 %v5914
  %vm6847 = vweird.f32 %v6840
  %vm6848 = vmor %vm6846, %vm6847
  %v6849 = vsel %vm6848, %v6840, %v6845
  %v6850 = vrsqrt.pop %v5915
  %v6851 = vmul.f32 %v6850, %v5915
  %v6852 = vmul.f32 %v6851, %v6850
  %v6853 = vmul.f32 0.5, %v6852
  %v6854 = vsub.f32 1.5, %v6853
  %v6855 = vmul.f32 %v6850, %v6854
  %vm6856 = vweird.f32 %v5915
  %vm6857 = vweird.f32 %v6850
  %vm6858 = vmor %vm6856, %vm6857
  %v6859 = vsel %vm6858, %v6850, %v6855
  %v6860 = vrsqrt.pop %v5916
  %v6861 = vmul.f32 %v6860, %v5916
  %v6862 = vmul.f32 %v6861, %v6860
  %v6863 = vmul.f32 0.5, %v6862
  %v6864 = vsub.f32 1.5, %v6863
  %v6865 = vmul.f32 %v6860, %v6864
  %vm6866 = vweird.f32 %v5916
  %vm6867 = vweird.f32 %v6860
  %vm6868 = vmor %vm6866, %vm6867
  %v6869 = vsel %vm6868, %v6860, %v6865
  %v6870 = vrsqrt.pop %v5917
  %v6871 = vmul.f32 %v6870, %v5917
  %v6872 = vmul.f32 %v6871, %v6870
  %v6873 = vmul.f32 0.5, %v6872
  %v6874 = vsub.f32 1.5, %v6873
  %v6875 = vmul.f32 %v6870, %v6874
  %vm6876 = vweird.f32 %v5917
  %vm6877 = vweird.f32 %v6870
  %vm6878 = vmor %vm6876, %vm6877
  %v6879 = vsel %vm6878, %v6870, %v6875
  %v6880 = vrsqrt.pop %v5918
  %v6881 = vmul.f32 %v6880, %v5918
  %v6882 = vmul.f32 %v6881, %v6880
  %v6883 = vmul.f32 0.5, %v6882
  %v6884 = vsub.f32 1.5, %v6883
  %v6885 = vmul.f32 %v6880, %v6884
  %vm6886 = vweird.f32 %v5918
  %vm6887 = vweird.f32 %v6880
  %vm6888 = vmor %vm6886, %vm6887
  %v6889 = vsel %vm6888, %v6880, %v6885
  %v6890 = vrsqrt.pop %v5919
  %v6891 = vmul.f32 %v6890, %v5919
  %v6892 = vmul.f32 %v6891, %v6890
  %v6893 = vmul.f32 0.5, %v6892
  %v6894 = vsub.f32 1.5, %v6893
  %v6895 = vmul.f32 %v6890, %v6894
  %vm6896 = vweird.f32 %v5919
  %vm6897 = vweird.f32 %v6890
  %vm6898 = vmor %vm6896, %vm6897
  %v6899 = vsel %vm6898, %v6890, %v6895
  %v6900 = vrsqrt.pop %v5920
  %v6901 = vmul.f32 %v6900, %v5920
  %v6902 = vmul.f32 %v6901, %v6900
  %v6903 = vmul.f32 0.5, %v6902
  %v6904 = vsub.f32 1.5, %v6903
  %v6905 = vmul.f32 %v6900, %v6904
  %vm6906 = vweird.f32 %v5920
  %vm6907 = vweird.f32 %v6900
  %vm6908 = vmor %vm6906, %vm6907
  %v6909 = vsel %vm6908, %v6900, %v6905
  %v6910 = vrsqrt.pop %v5921
  %v6911 = vmul.f32 %v6910, %v5921
  %v6912 = vmul.f32 %v6911, %v6910
  %v6913 = vmul.f32 0.5, %v6912
  %v6914 = vsub.f32 1.5, %v6913
  %v6915 = vmul.f32 %v6910, %v6914
  %vm6916 = vweird.f32 %v5921
  %vm6917 = vweird.f32 %v6910
  %vm6918 = vmor %vm6916, %vm6917
  %v6919 = vsel %vm6918, %v6910, %v6915
  %v6920 = vrsqrt.pop %v5922
  %v6921 = vmul.f32 %v6920, %v5922
  %v6922 = vmul.f32 %v6921, %v6920
  %v6923 = vmul.f32 0.5, %v6922
  %v6924 = vsub.f32 1.5, %v6923
  %v6925 = vmul.f32 %v6920, %v6924
  %vm6926 = vweird.f32 %v5922
  %vm6927 = vweird.f32 %v6920
  %vm6928 = vmor %vm6926, %vm6927
  %v6929 = vsel %vm6928, %v6920, %v6925
  %v6930 = vrsqrt.pop %v5923
  %v6931 = vmul.f32 %v6930, %v5923
  %v6932 = vmul.f32 %v6931, %v6930
  %v6933 = vmul.f32 0.5, %v6932
  %v6934 = vsub.f32 1.5, %v6933
  %v6935 = vmul.f32 %v6930, %v6934
  %vm6936 = vweird.f32 %v5923
  %vm6937 = vweird.f32 %v6930
  %vm6938 = vmor %vm6936, %vm6937
  %v6939 = vsel %vm6938, %v6930, %v6935
  %v6940 = vrsqrt.pop %v5924
  %v6941 = vmul.f32 %v6940, %v5924
  %v6942 = vmul.f32 %v6941, %v6940
  %v6943 = vmul.f32 0.5, %v6942
  %v6944 = vsub.f32 1.5, %v6943
  %v6945 = vmul.f32 %v6940, %v6944
  %vm6946 = vweird.f32 %v5924
  %vm6947 = vweird.f32 %v6940
  %vm6948 = vmor %vm6946, %vm6947
  %v6949 = vsel %vm6948, %v6940, %v6945
  %v6950 = vrsqrt.pop %v5925
  %v6951 = vmul.f32 %v6950, %v5925
  %v6952 = vmul.f32 %v6951, %v6950
  %v6953 = vmul.f32 0.5, %v6952
  %v6954 = vsub.f32 1.5, %v6953
  %v6955 = vmul.f32 %v6950, %v6954
  %vm6956 = vweird.f32 %v5925
  %vm6957 = vweird.f32 %v6950
  %vm6958 = vmor %vm6956, %vm6957
  %v6959 = vsel %vm6958, %v6950, %v6955
  %v6960 = vrsqrt.pop %v5926
  %v6961 = vmul.f32 %v6960, %v5926
  %v6962 = vmul.f32 %v6961, %v6960
  %v6963 = vmul.f32 0.5, %v6962
  %v6964 = vsub.f32 1.5, %v6963
  %v6965 = vmul.f32 %v6960, %v6964
  %vm6966 = vweird.f32 %v5926
  %vm6967 = vweird.f32 %v6960
  %vm6968 = vmor %vm6966, %vm6967
  %v6969 = vsel %vm6968, %v6960, %v6965
  %v6970 = vrsqrt.pop %v5927
  %v6971 = vmul.f32 %v6970, %v5927
  %v6972 = vmul.f32 %v6971, %v6970
  %v6973 = vmul.f32 0.5, %v6972
  %v6974 = vsub.f32 1.5, %v6973
  %v6975 = vmul.f32 %v6970, %v6974
  %vm6976 = vweird.f32 %v5927
  %vm6977 = vweird.f32 %v6970
  %vm6978 = vmor %vm6976, %vm6977
  %v6979 = vsel %vm6978, %v6970, %v6975
  %v6980 = vrsqrt.pop %v5928
  %v6981 = vmul.f32 %v6980, %v5928
  %v6982 = vmul.f32 %v6981, %v6980
  %v6983 = vmul.f32 0.5, %v6982
  %v6984 = vsub.f32 1.5, %v6983
  %v6985 = vmul.f32 %v6980, %v6984
  %vm6986 = vweird.f32 %v5928
  %vm6987 = vweird.f32 %v6980
  %vm6988 = vmor %vm6986, %vm6987
  %v6989 = vsel %vm6988, %v6980, %v6985
  %v6990 = vrsqrt.pop %v5929
  %v6991 = vmul.f32 %v6990, %v5929
  %v6992 = vmul.f32 %v6991, %v6990
  %v6993 = vmul.f32 0.5, %v6992
  %v6994 = vsub.f32 1.5, %v6993
  %v6995 = vmul.f32 %v6990, %v6994
  %vm6996 = vweird.f32 %v5929
  %vm6997 = vweird.f32 %v6990
  %vm6998 = vmor %vm6996, %vm6997
  %v6999 = vsel %vm6998, %v6990, %v6995
  %v7000 = vrsqrt.pop %v5930
  %v7001 = vmul.f32 %v7000, %v5930
  %v7002 = vmul.f32 %v7001, %v7000
  %v7003 = vmul.f32 0.5, %v7002
  %v7004 = vsub.f32 1.5, %v7003
  %v7005 = vmul.f32 %v7000, %v7004
  %vm7006 = vweird.f32 %v5930
  %vm7007 = vweird.f32 %v7000
  %vm7008 = vmor %vm7006, %vm7007
  %v7009 = vsel %vm7008, %v7000, %v7005
  %v7010 = vrsqrt.pop %v5931
  %v7011 = vmul.f32 %v7010, %v5931
  %v7012 = vmul.f32 %v7011, %v7010
  %v7013 = vmul.f32 0.5, %v7012
  %v7014 = vsub.f32 1.5, %v7013
  %v7015 = vmul.f32 %v7010, %v7014
  %vm7016 = vweird.f32 %v5931
  %vm7017 = vweird.f32 %v7010
  %vm7018 = vmor %vm7016, %vm7017
  %v7019 = vsel %vm7018, %v7010, %v7015
  %v7020 = vrsqrt.pop %v5932
  %v7021 = vmul.f32 %v7020, %v5932
  %v7022 = vmul.f32 %v7021, %v7020
  %v7023 = vmul.f32 0.5, %v7022
  %v7024 = vsub.f32 1.5, %v7023
  %v7025 = vmul.f32 %v7020, %v7024
  %vm7026 = vweird.f32 %v5932
  %vm7027 = vweird.f32 %v7020
  %vm7028 = vmor %vm7026, %vm7027
  %v7029 = vsel %vm7028, %v7020, %v7025
  %v7030 = vrsqrt.pop %v5933
  %v7031 = vmul.f32 %v7030, %v5933
  %v7032 = vmul.f32 %v7031, %v7030
  %v7033 = vmul.f32 0.5, %v7032
  %v7034 = vsub.f32 1.5, %v7033
  %v7035 = vmul.f32 %v7030, %v7034
  %vm7036 = vweird.f32 %v5933
  %vm7037 = vweird.f32 %v7030
  %vm7038 = vmor %vm7036, %vm7037
  %v7039 = vsel %vm7038, %v7030, %v7035
  %v7040 = vrsqrt.pop %v5934
  %v7041 = vmul.f32 %v7040, %v5934
  %v7042 = vmul.f32 %v7041, %v7040
  %v7043 = vmul.f32 0.5, %v7042
  %v7044 = vsub.f32 1.5, %v7043
  %v7045 = vmul.f32 %v7040, %v7044
  %vm7046 = vweird.f32 %v5934
  %vm7047 = vweird.f32 %v7040
  %vm7048 = vmor %vm7046, %vm7047
  %v7049 = vsel %vm7048, %v7040, %v7045
  %v7050 = vrsqrt.pop %v5935
  %v7051 = vmul.f32 %v7050, %v5935
  %v7052 = vmul.f32 %v7051, %v7050
  %v7053 = vmul.f32 0.5, %v7052
  %v7054 = vsub.f32 1.5, %v7053
  %v7055 = vmul.f32 %v7050, %v7054
  %vm7056 = vweird.f32 %v5935
  %vm7057 = vweird.f32 %v7050
  %vm7058 = vmor %vm7056, %vm7057
  %v7059 = vsel %vm7058, %v7050, %v7055
  %v7060 = vrsqrt.pop %v5936
  %v7061 = vmul.f32 %v7060, %v5936
  %v7062 = vmul.f32 %v7061, %v7060
  %v7063 = vmul.f32 0.5, %v7062
  %v7064 = vsub.f32 1.5, %v7063
  %v7065 = vmul.f32 %v7060, %v7064
  %vm7066 = vweird.f32 %v5936
  %vm7067 = vweird.f32 %v7060
  %vm7068 = vmor %vm7066, %vm7067
  %v7069 = vsel %vm7068, %v7060, %v7065
  %v7070 = vrsqrt.pop %v5937
  %v7071 = vmul.f32 %v7070, %v5937
  %v7072 = vmul.f32 %v7071, %v7070
  %v7073 = vmul.f32 0.5, %v7072
  %v7074 = vsub.f32 1.5, %v7073
  %v7075 = vmul.f32 %v7070, %v7074
  %vm7076 = vweird.f32 %v5937
  %vm7077 = vweird.f32 %v7070
  %vm7078 = vmor %vm7076, %vm7077
  %v7079 = vsel %vm7078, %v7070, %v7075
  %v7080 = vrsqrt.pop %v5938
  %v7081 = vmul.f32 %v7080, %v5938
  %v7082 = vmul.f32 %v7081, %v7080
  %v7083 = vmul.f32 0.5, %v7082
  %v7084 = vsub.f32 1.5, %v7083
  %v7085 = vmul.f32 %v7080, %v7084
  %vm7086 = vweird.f32 %v5938
  %vm7087 = vweird.f32 %v7080
  %vm7088 = vmor %vm7086, %vm7087
  %v7089 = vsel %vm7088, %v7080, %v7085
  %v7090 = vrsqrt.pop %v5939
  %v7091 = vmul.f32 %v7090, %v5939
  %v7092 = vmul.f32 %v7091, %v7090
  %v7093 = vmul.f32 0.5, %v7092
  %v7094 = vsub.f32 1.5, %v7093
  %v7095 = vmul.f32 %v7090, %v7094
  %vm7096 = vweird.f32 %v5939
  %vm7097 = vweird.f32 %v7090
  %vm7098 = vmor %vm7096, %vm7097
  %v7099 = vsel %vm7098, %v7090, %v7095
  %v7100 = vrsqrt.pop %v5940
  %v7101 = vmul.f32 %v7100, %v5940
  %v7102 = vmul.f32 %v7101, %v7100
  %v7103 = vmul.f32 0.5, %v7102
  %v7104 = vsub.f32 1.5, %v7103
  %v7105 = vmul.f32 %v7100, %v7104
  %vm7106 = vweird.f32 %v5940
  %vm7107 = vweird.f32 %v7100
  %vm7108 = vmor %vm7106, %vm7107
  %v7109 = vsel %vm7108, %v7100, %v7105
  %v7110 = vrsqrt.pop %v5941
  %v7111 = vmul.f32 %v7110, %v5941
  %v7112 = vmul.f32 %v7111, %v7110
  %v7113 = vmul.f32 0.5, %v7112
  %v7114 = vsub.f32 1.5, %v7113
  %v7115 = vmul.f32 %v7110, %v7114
  %vm7116 = vweird.f32 %v5941
  %vm7117 = vweird.f32 %v7110
  %vm7118 = vmor %vm7116, %vm7117
  %v7119 = vsel %vm7118, %v7110, %v7115
  %v7120 = vrsqrt.pop %v5942
  %v7121 = vmul.f32 %v7120, %v5942
  %v7122 = vmul.f32 %v7121, %v7120
  %v7123 = vmul.f32 0.5, %v7122
  %v7124 = vsub.f32 1.5, %v7123
  %v7125 = vmul.f32 %v7120, %v7124
  %vm7126 = vweird.f32 %v5942
  %vm7127 = vweird.f32 %v7120
  %vm7128 = vmor %vm7126, %vm7127
  %v7129 = vsel %vm7128, %v7120, %v7125
  %v7130 = vrsqrt.pop %v5943
  %v7131 = vmul.f32 %v7130, %v5943
  %v7132 = vmul.f32 %v7131, %v7130
  %v7133 = vmul.f32 0.5, %v7132
  %v7134 = vsub.f32 1.5, %v7133
  %v7135 = vmul.f32 %v7130, %v7134
  %vm7136 = vweird.f32 %v5943
  %vm7137 = vweird.f32 %v7130
  %vm7138 = vmor %vm7136, %vm7137
  %v7139 = vsel %vm7138, %v7130, %v7135
  %v7140 = vrsqrt.pop %v5944
  %v7141 = vmul.f32 %v7140, %v5944
  %v7142 = vmul.f32 %v7141, %v7140
  %v7143 = vmul.f32 0.5, %v7142
  %v7144 = vsub.f32 1.5, %v7143
  %v7145 = vmul.f32 %v7140, %v7144
  %vm7146 = vweird.f32 %v5944
  %vm7147 = vweird.f32 %v7140
  %vm7148 = vmor %vm7146, %vm7147
  %v7149 = vsel %vm7148, %v7140, %v7145
  %v7150 = vrsqrt.pop %v5945
  %v7151 = vmul.f32 %v7150, %v5945
  %v7152 = vmul.f32 %v7151, %v7150
  %v7153 = vmul.f32 0.5, %v7152
  %v7154 = vsub.f32 1.5, %v7153
  %v7155 = vmul.f32 %v7150, %v7154
  %vm7156 = vweird.f32 %v5945
  %vm7157 = vweird.f32 %v7150
  %vm7158 = vmor %vm7156, %vm7157
  %v7159 = vsel %vm7158, %v7150, %v7155
  %v7160 = vrsqrt.pop %v5946
  %v7161 = vmul.f32 %v7160, %v5946
  %v7162 = vmul.f32 %v7161, %v7160
  %v7163 = vmul.f32 0.5, %v7162
  %v7164 = vsub.f32 1.5, %v7163
  %v7165 = vmul.f32 %v7160, %v7164
  %vm7166 = vweird.f32 %v5946
  %vm7167 = vweird.f32 %v7160
  %vm7168 = vmor %vm7166, %vm7167
  %v7169 = vsel %vm7168, %v7160, %v7165
  %v7170 = vrsqrt.pop %v5947
  %v7171 = vmul.f32 %v7170, %v5947
  %v7172 = vmul.f32 %v7171, %v7170
  %v7173 = vmul.f32 0.5, %v7172
  %v7174 = vsub.f32 1.5, %v7173
  %v7175 = vmul.f32 %v7170, %v7174
  %vm7176 = vweird.f32 %v5947
  %vm7177 = vweird.f32 %v7170
  %vm7178 = vmor %vm7176, %vm7177
  %v7179 = vsel %vm7178, %v7170, %v7175
  %v7180 = vrsqrt.pop %v5948
  %v7181 = vmul.f32 %v7180, %v5948
  %v7182 = vmul.f32 %v7181, %v7180
  %v7183 = vmul.f32 0.5, %v7182
  %v7184 = vsub.f32 1.5, %v7183
  %v7185 = vmul.f32 %v7180, %v7184
  %vm7186 = vweird.f32 %v5948
  %vm7187 = vweird.f32 %v7180
  %vm7188 = vmor %vm7186, %vm7187
  %v7189 = vsel %vm7188, %v7180, %v7185
  %v7190 = vrsqrt.pop %v5949
  %v7191 = vmul.f32 %v7190, %v5949
  %v7192 = vmul.f32 %v7191, %v7190
  %v7193 = vmul.f32 0.5, %v7192
  %v7194 = vsub.f32 1.5, %v7193
  %v7195 = vmul.f32 %v7190, %v7194
  %vm7196 = vweird.f32 %v5949
  %vm7197 = vweird.f32 %v7190
  %vm7198 = vmor %vm7196, %vm7197
  %v7199 = vsel %vm7198, %v7190, %v7195
  %v7200 = vmul.f32 %v5700, %v5959
  %v7201 = vmul.f32 %v5701, %v5969
  %v7202 = vmul.f32 %v5702, %v5979
  %v7203 = vmul.f32 %v5703, %v5989
  %v7204 = vmul.f32 %v5704, %v5999
  %v7205 = vmul.f32 %v5705, %v6009
  %v7206 = vmul.f32 %v5706, %v6019
  %v7207 = vmul.f32 %v5707, %v6029
  %v7208 = vmul.f32 %v5708, %v6039
  %v7209 = vmul.f32 %v5709, %v6049
  %v7210 = vmul.f32 %v5710, %v6059
  %v7211 = vmul.f32 %v5711, %v6069
  %v7212 = vmul.f32 %v5712, %v6079
  %v7213 = vmul.f32 %v5713, %v6089
  %v7214 = vmul.f32 %v5714, %v6099
  %v7215 = vmul.f32 %v5715, %v6109
  %v7216 = vmul.f32 %v5716, %v6119
  %v7217 = vmul.f32 %v5717, %v6129
  %v7218 = vmul.f32 %v5718, %v6139
  %v7219 = vmul.f32 %v5719, %v6149
  %v7220 = vmul.f32 %v5720, %v6159
  %v7221 = vmul.f32 %v5721, %v6169
  %v7222 = vmul.f32 %v5722, %v6179
  %v7223 = vmul.f32 %v5723, %v6189
  %v7224 = vmul.f32 %v5724, %v6199
  %v7225 = vmul.f32 %v5725, %v6209
  %v7226 = vmul.f32 %v5726, %v6219
  %v7227 = vmul.f32 %v5727, %v6229
  %v7228 = vmul.f32 %v5728, %v6239
  %v7229 = vmul.f32 %v5729, %v6249
  %v7230 = vmul.f32 %v5730, %v6259
  %v7231 = vmul.f32 %v5731, %v6269
  %v7232 = vmul.f32 %v5732, %v6279
  %v7233 = vmul.f32 %v5733, %v6289
  %v7234 = vmul.f32 %v5734, %v6299
  %v7235 = vmul.f32 %v5735, %v6309
  %v7236 = vmul.f32 %v5736, %v6319
  %v7237 = vmul.f32 %v5737, %v6329
  %v7238 = vmul.f32 %v5738, %v6339
  %v7239 = vmul.f32 %v5739, %v6349
  %v7240 = vmul.f32 %v5740, %v6359
  %v7241 = vmul.f32 %v5741, %v6369
  %v7242 = vmul.f32 %v5742, %v6379
  %v7243 = vmul.f32 %v5743, %v6389
  %v7244 = vmul.f32 %v5744, %v6399
  %v7245 = vmul.f32 %v5745, %v6409
  %v7246 = vmul.f32 %v5746, %v6419
  %v7247 = vmul.f32 %v5747, %v6429
  %v7248 = vmul.f32 %v5748, %v6439
  %v7249 = vmul.f32 %v5749, %v6449
  %v7250 = vmul.f32 %v5750, %v6459
  %v7251 = vmul.f32 %v5751, %v6469
  %v7252 = vmul.f32 %v5752, %v6479
  %v7253 = vmul.f32 %v5753, %v6489
  %v7254 = vmul.f32 %v5754, %v6499
  %v7255 = vmul.f32 %v5755, %v6509
  %v7256 = vmul.f32 %v5756, %v6519
  %v7257 = vmul.f32 %v5757, %v6529
  %v7258 = vmul.f32 %v5758, %v6539
  %v7259 = vmul.f32 %v5759, %v6549
  %v7260 = vmul.f32 %v5760, %v6559
  %v7261 = vmul.f32 %v5761, %v6569
  %v7262 = vmul.f32 %v5762, %v6579
  %v7263 = vmul.f32 %v5763, %v6589
  %v7264 = vmul.f32 %v5764, %v6599
  %v7265 = vmul.f32 %v5765, %v6609
  %v7266 = vmul.f32 %v5766, %v6619
  %v7267 = vmul.f32 %v5767, %v6629
  %v7268 = vmul.f32 %v5768, %v6639
  %v7269 = vmul.f32 %v5769, %v6649
  %v7270 = vmul.f32 %v5770, %v6659
  %v7271 = vmul.f32 %v5771, %v6669
  %v7272 = vmul.f32 %v5772, %v6679
  %v7273 = vmul.f32 %v5773, %v6689
  %v7274 = vmul.f32 %v5774, %v6699
  %v7275 = vmul.f32 %v5775, %v6709
  %v7276 = vmul.f32 %v5776, %v6719
  %v7277 = vmul.f32 %v5777, %v6729
  %v7278 = vmul.f32 %v5778, %v6739
  %v7279 = vmul.f32 %v5779, %v6749
  %v7280 = vmul.f32 %v5780, %v6759
  %v7281 = vmul.f32 %v5781, %v6769
  %v7282 = vmul.f32 %v5782, %v6779
  %v7283 = vmul.f32 %v5783, %v6789
  %v7284 = vmul.f32 %v5784, %v6799
  %v7285 = vmul.f32 %v5785, %v6809
  %v7286 = vmul.f32 %v5786, %v6819
  %v7287 = vmul.f32 %v5787, %v6829
  %v7288 = vmul.f32 %v5788, %v6839
  %v7289 = vmul.f32 %v5789, %v6849
  %v7290 = vmul.f32 %v5790, %v6859
  %v7291 = vmul.f32 %v5791, %v6869
  %v7292 = vmul.f32 %v5792, %v6879
  %v7293 = vmul.f32 %v5793, %v6889
  %v7294 = vmul.f32 %v5794, %v6899
  %v7295 = vmul.f32 %v5795, %v6909
  %v7296 = vmul.f32 %v5796, %v6919
  %v7297 = vmul.f32 %v5797, %v6929
  %v7298 = vmul.f32 %v5798, %v6939
  %v7299 = vmul.f32 %v5799, %v6949
  %v7300 = vmul.f32 %v5800, %v6959
  %v7301 = vmul.f32 %v5801, %v6969
  %v7302 = vmul.f32 %v5802, %v6979
  %v7303 = vmul.f32 %v5803, %v6989
  %v7304 = vmul.f32 %v5804, %v6999
  %v7305 = vmul.f32 %v5805, %v7009
  %v7306 = vmul.f32 %v5806, %v7019
  %v7307 = vmul.f32 %v5807, %v7029
  %v7308 = vmul.f32 %v5808, %v7039
  %v7309 = vmul.f32 %v5809, %v7049
  %v7310 = vmul.f32 %v5810, %v7059
  %v7311 = vmul.f32 %v5811, %v7069
  %v7312 = vmul.f32 %v5812, %v7079
  %v7313 = vmul.f32 %v5813, %v7089
  %v7314 = vmul.f32 %v5814, %v7099
  %v7315 = vmul.f32 %v5815, %v7109
  %v7316 = vmul.f32 %v5816, %v7119
  %v7317 = vmul.f32 %v5817, %v7129
  %v7318 = vmul.f32 %v5818, %v7139
  %v7319 = vmul.f32 %v5819, %v7149
  %v7320 = vmul.f32 %v5820, %v7159
  %v7321 = vmul.f32 %v5821, %v7169
  %v7322 = vmul.f32 %v5822, %v7179
  %v7323 = vmul.f32 %v5823, %v7189
  %v7324 = vmul.f32 %v5824, %v7199
  %v7325 = vperm.slane %v4573, 0
  %v7326 = vmul.f32 %v7200, %v7325
  %v7327 = vmul.f32 %v7201, %v7325
  %v7328 = vmul.f32 %v7202, %v7325
  %v7329 = vmul.f32 %v7203, %v7325
  %v7330 = vmul.f32 %v7204, %v7325
  %v7331 = vmul.f32 %v7205, %v7325
  %v7332 = vmul.f32 %v7206, %v7325
  %v7333 = vmul.f32 %v7207, %v7325
  %v7334 = vmul.f32 %v7208, %v7325
  %v7335 = vmul.f32 %v7209, %v7325
  %v7336 = vmul.f32 %v7210, %v7325
  %v7337 = vmul.f32 %v7211, %v7325
  %v7338 = vmul.f32 %v7212, %v7325
  %v7339 = vmul.f32 %v7213, %v7325
  %v7340 = vmul.f32 %v7214, %v7325
  %v7341 = vmul.f32 %v7215, %v7325
  %v7342 = vmul.f32 %v7216, %v7325
  %v7343 = vmul.f32 %v7217, %v7325
  %v7344 = vmul.f32 %v7218, %v7325
  %v7345 = vmul.f32 %v7219, %v7325
  %v7346 = vmul.f32 %v7220, %v7325
  %v7347 = vmul.f32 %v7221, %v7325
  %v7348 = vmul.f32 %v7222, %v7325
  %v7349 = vmul.f32 %v7223, %v7325
  %v7350 = vmul.f32 %v7224, %v7325
  %v7351 = vmul.f32 %v7225, %v7325
  %v7352 = vmul.f32 %v7226, %v7325
  %v7353 = vmul.f32 %v7227, %v7325
  %v7354 = vmul.f32 %v7228, %v7325
  %v7355 = vmul.f32 %v7229, %v7325
  %v7356 = vmul.f32 %v7230, %v7325
  %v7357 = vmul.f32 %v7231, %v7325
  %v7358 = vmul.f32 %v7232, %v7325
  %v7359 = vmul.f32 %v7233, %v7325
  %v7360 = vmul.f32 %v7234, %v7325
  %v7361 = vmul.f32 %v7235, %v7325
  %v7362 = vmul.f32 %v7236, %v7325
  %v7363 = vmul.f32 %v7237, %v7325
  %v7364 = vmul.f32 %v7238, %v7325
  %v7365 = vmul.f32 %v7239, %v7325
  %v7366 = vmul.f32 %v7240, %v7325
  %v7367 = vmul.f32 %v7241, %v7325
  %v7368 = vmul.f32 %v7242, %v7325
  %v7369 = vmul.f32 %v7243, %v7325
  %v7370 = vmul.f32 %v7244, %v7325
  %v7371 = vmul.f32 %v7245, %v7325
  %v7372 = vmul.f32 %v7246, %v7325
  %v7373 = vmul.f32 %v7247, %v7325
  %v7374 = vmul.f32 %v7248, %v7325
  %v7375 = vmul.f32 %v7249, %v7325
  %v7376 = vmul.f32 %v7250, %v7325
  %v7377 = vmul.f32 %v7251, %v7325
  %v7378 = vmul.f32 %v7252, %v7325
  %v7379 = vmul.f32 %v7253, %v7325
  %v7380 = vmul.f32 %v7254, %v7325
  %v7381 = vmul.f32 %v7255, %v7325
  %v7382 = vmul.f32 %v7256, %v7325
  %v7383 = vmul.f32 %v7257, %v7325
  %v7384 = vmul.f32 %v7258, %v7325
  %v7385 = vmul.f32 %v7259, %v7325
  %v7386 = vmul.f32 %v7260, %v7325
  %v7387 = vmul.f32 %v7261, %v7325
  %v7388 = vmul.f32 %v7262, %v7325
  %v7389 = vmul.f32 %v7263, %v7325
  %v7390 = vmul.f32 %v7264, %v7325
  %v7391 = vmul.f32 %v7265, %v7325
  %v7392 = vmul.f32 %v7266, %v7325
  %v7393 = vmul.f32 %v7267, %v7325
  %v7394 = vmul.f32 %v7268, %v7325
  %v7395 = vmul.f32 %v7269, %v7325
  %v7396 = vmul.f32 %v7270, %v7325
  %v7397 = vmul.f32 %v7271, %v7325
  %v7398 = vmul.f32 %v7272, %v7325
  %v7399 = vmul.f32 %v7273, %v7325
  %v7400 = vmul.f32 %v7274, %v7325
  %v7401 = vmul.f32 %v7275, %v7325
  %v7402 = vmul.f32 %v7276, %v7325
  %v7403 = vmul.f32 %v7277, %v7325
  %v7404 = vmul.f32 %v7278, %v7325
  %v7405 = vmul.f32 %v7279, %v7325
  %v7406 = vmul.f32 %v7280, %v7325
  %v7407 = vmul.f32 %v7281, %v7325
  %v7408 = vmul.f32 %v7282, %v7325
  %v7409 = vmul.f32 %v7283, %v7325
  %v7410 = vmul.f32 %v7284, %v7325
  %v7411 = vmul.f32 %v7285, %v7325
  %v7412 = vmul.f32 %v7286, %v7325
  %v7413 = vmul.f32 %v7287, %v7325
  %v7414 = vmul.f32 %v7288, %v7325
  %v7415 = vmul.f32 %v7289, %v7325
  %v7416 = vmul.f32 %v7290, %v7325
  %v7417 = vmul.f32 %v7291, %v7325
  %v7418 = vmul.f32 %v7292, %v7325
  %v7419 = vmul.f32 %v7293, %v7325
  %v7420 = vmul.f32 %v7294, %v7325
  %v7421 = vmul.f32 %v7295, %v7325
  %v7422 = vmul.f32 %v7296, %v7325
  %v7423 = vmul.f32 %v7297, %v7325
  %v7424 = vmul.f32 %v7298, %v7325
  %v7425 = vmul.f32 %v7299, %v7325
  %v7426 = vmul.f32 %v7300, %v7325
  %v7427 = vmul.f32 %v7301, %v7325
  %v7428 = vmul.f32 %v7302, %v7325
  %v7429 = vmul.f32 %v7303, %v7325
  %v7430 = vmul.f32 %v7304, %v7325
  %v7431 = vmul.f32 %v7305, %v7325
  %v7432 = vmul.f32 %v7306, %v7325
  %v7433 = vmul.f32 %v7307, %v7325
  %v7434 = vmul.f32 %v7308, %v7325
  %v7435 = vmul.f32 %v7309, %v7325
  %v7436 = vmul.f32 %v7310, %v7325
  %v7437 = vmul.f32 %v7311, %v7325
  %v7438 = vmul.f32 %v7312, %v7325
  %v7439 = vmul.f32 %v7313, %v7325
  %v7440 = vmul.f32 %v7314, %v7325
  %v7441 = vmul.f32 %v7315, %v7325
  %v7442 = vmul.f32 %v7316, %v7325
  %v7443 = vmul.f32 %v7317, %v7325
  %v7444 = vmul.f32 %v7318, %v7325
  %v7445 = vmul.f32 %v7319, %v7325
  %v7446 = vmul.f32 %v7320, %v7325
  %v7447 = vmul.f32 %v7321, %v7325
  %v7448 = vmul.f32 %v7322, %v7325
  %v7449 = vmul.f32 %v7323, %v7325
  %v7450 = vmul.f32 %v7324, %v7325
  %v7451 = vperm.slane %v4574, 0
  %v7452 = vadd.f32 %v7326, %v7451
  %v7453 = vadd.f32 %v7327, %v7451
  %v7454 = vadd.f32 %v7328, %v7451
  %v7455 = vadd.f32 %v7329, %v7451
  %v7456 = vadd.f32 %v7330, %v7451
  %v7457 = vadd.f32 %v7331, %v7451
  %v7458 = vadd.f32 %v7332, %v7451
  %v7459 = vadd.f32 %v7333, %v7451
  %v7460 = vadd.f32 %v7334, %v7451
  %v7461 = vadd.f32 %v7335, %v7451
  %v7462 = vadd.f32 %v7336, %v7451
  %v7463 = vadd.f32 %v7337, %v7451
  %v7464 = vadd.f32 %v7338, %v7451
  %v7465 = vadd.f32 %v7339, %v7451
  %v7466 = vadd.f32 %v7340, %v7451
  %v7467 = vadd.f32 %v7341, %v7451
  %v7468 = vadd.f32 %v7342, %v7451
  %v7469 = vadd.f32 %v7343, %v7451
  %v7470 = vadd.f32 %v7344, %v7451
  %v7471 = vadd.f32 %v7345, %v7451
  %v7472 = vadd.f32 %v7346, %v7451
  %v7473 = vadd.f32 %v7347, %v7451
  %v7474 = vadd.f32 %v7348, %v7451
  %v7475 = vadd.f32 %v7349, %v7451
  %v7476 = vadd.f32 %v7350, %v7451
  %v7477 = vadd.f32 %v7351, %v7451
  %v7478 = vadd.f32 %v7352, %v7451
  %v7479 = vadd.f32 %v7353, %v7451
  %v7480 = vadd.f32 %v7354, %v7451
  %v7481 = vadd.f32 %v7355, %v7451
  %v7482 = vadd.f32 %v7356, %v7451
  %v7483 = vadd.f32 %v7357, %v7451
  %v7484 = vadd.f32 %v7358, %v7451
  %v7485 = vadd.f32 %v7359, %v7451
  %v7486 = vadd.f32 %v7360, %v7451
  %v7487 = vadd.f32 %v7361, %v7451
  %v7488 = vadd.f32 %v7362, %v7451
  %v7489 = vadd.f32 %v7363, %v7451
  %v7490 = vadd.f32 %v7364, %v7451
  %v7491 = vadd.f32 %v7365, %v7451
  %v7492 = vadd.f32 %v7366, %v7451
  %v7493 = vadd.f32 %v7367, %v7451
  %v7494 = vadd.f32 %v7368, %v7451
  %v7495 = vadd.f32 %v7369, %v7451
  %v7496 = vadd.f32 %v7370, %v7451
  %v7497 = vadd.f32 %v7371, %v7451
  %v7498 = vadd.f32 %v7372, %v7451
  %v7499 = vadd.f32 %v7373, %v7451
  %v7500 = vadd.f32 %v7374, %v7451
  %v7501 = vadd.f32 %v7375, %v7451
  %v7502 = vadd.f32 %v7376, %v7451
  %v7503 = vadd.f32 %v7377, %v7451
  %v7504 = vadd.f32 %v7378, %v7451
  %v7505 = vadd.f32 %v7379, %v7451
  %v7506 = vadd.f32 %v7380, %v7451
  %v7507 = vadd.f32 %v7381, %v7451
  %v7508 = vadd.f32 %v7382, %v7451
  %v7509 = vadd.f32 %v7383, %v7451
  %v7510 = vadd.f32 %v7384, %v7451
  %v7511 = vadd.f32 %v7385, %v7451
  %v7512 = vadd.f32 %v7386, %v7451
  %v7513 = vadd.f32 %v7387, %v7451
  %v7514 = vadd.f32 %v7388, %v7451
  %v7515 = vadd.f32 %v7389, %v7451
  %v7516 = vadd.f32 %v7390, %v7451
  %v7517 = vadd.f32 %v7391, %v7451
  %v7518 = vadd.f32 %v7392, %v7451
  %v7519 = vadd.f32 %v7393, %v7451
  %v7520 = vadd.f32 %v7394, %v7451
  %v7521 = vadd.f32 %v7395, %v7451
  %v7522 = vadd.f32 %v7396, %v7451
  %v7523 = vadd.f32 %v7397, %v7451
  %v7524 = vadd.f32 %v7398, %v7451
  %v7525 = vadd.f32 %v7399, %v7451
  %v7526 = vadd.f32 %v7400, %v7451
  %v7527 = vadd.f32 %v7401, %v7451
  %v7528 = vadd.f32 %v7402, %v7451
  %v7529 = vadd.f32 %v7403, %v7451
  %v7530 = vadd.f32 %v7404, %v7451
  %v7531 = vadd.f32 %v7405, %v7451
  %v7532 = vadd.f32 %v7406, %v7451
  %v7533 = vadd.f32 %v7407, %v7451
  %v7534 = vadd.f32 %v7408, %v7451
  %v7535 = vadd.f32 %v7409, %v7451
  %v7536 = vadd.f32 %v7410, %v7451
  %v7537 = vadd.f32 %v7411, %v7451
  %v7538 = vadd.f32 %v7412, %v7451
  %v7539 = vadd.f32 %v7413, %v7451
  %v7540 = vadd.f32 %v7414, %v7451
  %v7541 = vadd.f32 %v7415, %v7451
  %v7542 = vadd.f32 %v7416, %v7451
  %v7543 = vadd.f32 %v7417, %v7451
  %v7544 = vadd.f32 %v7418, %v7451
  %v7545 = vadd.f32 %v7419, %v7451
  %v7546 = vadd.f32 %v7420, %v7451
  %v7547 = vadd.f32 %v7421, %v7451
  %v7548 = vadd.f32 %v7422, %v7451
  %v7549 = vadd.f32 %v7423, %v7451
  %v7550 = vadd.f32 %v7424, %v7451
  %v7551 = vadd.f32 %v7425, %v7451
  %v7552 = vadd.f32 %v7426, %v7451
  %v7553 = vadd.f32 %v7427, %v7451
  %v7554 = vadd.f32 %v7428, %v7451
  %v7555 = vadd.f32 %v7429, %v7451
  %v7556 = vadd.f32 %v7430, %v7451
  %v7557 = vadd.f32 %v7431, %v7451
  %v7558 = vadd.f32 %v7432, %v7451
  %v7559 = vadd.f32 %v7433, %v7451
  %v7560 = vadd.f32 %v7434, %v7451
  %v7561 = vadd.f32 %v7435, %v7451
  %v7562 = vadd.f32 %v7436, %v7451
  %v7563 = vadd.f32 %v7437, %v7451
  %v7564 = vadd.f32 %v7438, %v7451
  %v7565 = vadd.f32 %v7439, %v7451
  %v7566 = vadd.f32 %v7440, %v7451
  %v7567 = vadd.f32 %v7441, %v7451
  %v7568 = vadd.f32 %v7442, %v7451
  %v7569 = vadd.f32 %v7443, %v7451
  %v7570 = vadd.f32 %v7444, %v7451
  %v7571 = vadd.f32 %v7445, %v7451
  %v7572 = vadd.f32 %v7446, %v7451
  %v7573 = vadd.f32 %v7447, %v7451
  %v7574 = vadd.f32 %v7448, %v7451
  %v7575 = vadd.f32 %v7449, %v7451
  %v7576 = vadd.f32 %v7450, %v7451
  %v7577 = vmax.f32 %v7452, 0.0
  %v7578 = vmax.f32 %v7453, 0.0
  %v7579 = vmax.f32 %v7454, 0.0
  %v7580 = vmax.f32 %v7455, 0.0
  %v7581 = vmax.f32 %v7456, 0.0
  %v7582 = vmax.f32 %v7457, 0.0
  %v7583 = vmax.f32 %v7458, 0.0
  %v7584 = vmax.f32 %v7459, 0.0
  %v7585 = vmax.f32 %v7460, 0.0
  %v7586 = vmax.f32 %v7461, 0.0
  %v7587 = vmax.f32 %v7462, 0.0
  %v7588 = vmax.f32 %v7463, 0.0
  %v7589 = vmax.f32 %v7464, 0.0
  %v7590 = vmax.f32 %v7465, 0.0
  %v7591 = vmax.f32 %v7466, 0.0
  %v7592 = vmax.f32 %v7467, 0.0
  %v7593 = vmax.f32 %v7468, 0.0
  %v7594 = vmax.f32 %v7469, 0.0
  %v7595 = vmax.f32 %v7470, 0.0
  %v7596 = vmax.f32 %v7471, 0.0
  %v7597 = vmax.f32 %v7472, 0.0
  %v7598 = vmax.f32 %v7473, 0.0
  %v7599 = vmax.f32 %v7474, 0.0
  %v7600 = vmax.f32 %v7475, 0.0
  %v7601 = vmax.f32 %v7476, 0.0
  %v7602 = vmax.f32 %v7477, 0.0
  %v7603 = vmax.f32 %v7478, 0.0
  %v7604 = vmax.f32 %v7479, 0.0
  %v7605 = vmax.f32 %v7480, 0.0
  %v7606 = vmax.f32 %v7481, 0.0
  %v7607 = vmax.f32 %v7482, 0.0
  %v7608 = vmax.f32 %v7483, 0.0
  %v7609 = vmax.f32 %v7484, 0.0
  %v7610 = vmax.f32 %v7485, 0.0
  %v7611 = vmax.f32 %v7486, 0.0
  %v7612 = vmax.f32 %v7487, 0.0
  %v7613 = vmax.f32 %v7488, 0.0
  %v7614 = vmax.f32 %v7489, 0.0
  %v7615 = vmax.f32 %v7490, 0.0
  %v7616 = vmax.f32 %v7491, 0.0
  %v7617 = vmax.f32 %v7492, 0.0
  %v7618 = vmax.f32 %v7493, 0.0
  %v7619 = vmax.f32 %v7494, 0.0
  %v7620 = vmax.f32 %v7495, 0.0
  %v7621 = vmax.f32 %v7496, 0.0
  %v7622 = vmax.f32 %v7497, 0.0
  %v7623 = vmax.f32 %v7498, 0.0
  %v7624 = vmax.f32 %v7499, 0.0
  %v7625 = vmax.f32 %v7500, 0.0
  %v7626 = vmax.f32 %v7501, 0.0
  %v7627 = vmax.f32 %v7502, 0.0
  %v7628 = vmax.f32 %v7503, 0.0
  %v7629 = vmax.f32 %v7504, 0.0
  %v7630 = vmax.f32 %v7505, 0.0
  %v7631 = vmax.f32 %v7506, 0.0
  %v7632 = vmax.f32 %v7507, 0.0
  %v7633 = vmax.f32 %v7508, 0.0
  %v7634 = vmax.f32 %v7509, 0.0
  %v7635 = vmax.f32 %v7510, 0.0
  %v7636 = vmax.f32 %v7511, 0.0
  %v7637 = vmax.f32 %v7512, 0.0
  %v7638 = vmax.f32 %v7513, 0.0
  %v7639 = vmax.f32 %v7514, 0.0
  %v7640 = vmax.f32 %v7515, 0.0
  %v7641 = vmax.f32 %v7516, 0.0
  %v7642 = vmax.f32 %v7517, 0.0
  %v7643 = vmax.f32 %v7518, 0.0
  %v7644 = vmax.f32 %v7519, 0.0
  %v7645 = vmax.f32 %v7520, 0.0
  %v7646 = vmax.f32 %v7521, 0.0
  %v7647 = vmax.f32 %v7522, 0.0
  %v7648 = vmax.f32 %v7523, 0.0
  %v7649 = vmax.f32 %v7524, 0.0
  %v7650 = vmax.f32 %v7525, 0.0
  %v7651 = vmax.f32 %v7526, 0.0
  %v7652 = vmax.f32 %v7527, 0.0
  %v7653 = vmax.f32 %v7528, 0.0
  %v7654 = vmax.f32 %v7529, 0.0
  %v7655 = vmax.f32 %v7530, 0.0
  %v7656 = vmax.f32 %v7531, 0.0
  %v7657 = vmax.f32 %v7532, 0.0
  %v7658 = vmax.f32 %v7533, 0.0
  %v7659 = vmax.f32 %v7534, 0.0
  %v7660 = vmax.f32 %v7535, 0.0
  %v7661 = vmax.f32 %v7536, 0.0
  %v7662 = vmax.f32 %v7537, 0.0
  %v7663 = vmax.f32 %v7538, 0.0
  %v7664 = vmax.f32 %v7539, 0.0
  %v7665 = vmax.f32 %v7540, 0.0
  %v7666 = vmax.f32 %v7541, 0.0
  %v7667 = vmax.f32 %v7542, 0.0
  %v7668 = vmax.f32 %v7543, 0.0
  %v7669 = vmax.f32 %v7544, 0.0
  %v7670 = vmax.f32 %v7545, 0.0
  %v7671 = vmax.f32 %v7546, 0.0
  %v7672 = vmax.f32 %v7547, 0.0
  %v7673 = vmax.f32 %v7548, 0.0
  %v7674 = vmax.f32 %v7549, 0.0
  %v7675 = vmax.f32 %v7550, 0.0
  %v7676 = vmax.f32 %v7551, 0.0
  %v7677 = vmax.f32 %v7552, 0.0
  %v7678 = vmax.f32 %v7553, 0.0
  %v7679 = vmax.f32 %v7554, 0.0
  %v7680 = vmax.f32 %v7555, 0.0
  %v7681 = vmax.f32 %v7556, 0.0
  %v7682 = vmax.f32 %v7557, 0.0
  %v7683 = vmax.f32 %v7558, 0.0
  %v7684 = vmax.f32 %v7559, 0.0
  %v7685 = vmax.f32 %v7560, 0.0
  %v7686 = vmax.f32 %v7561, 0.0
  %v7687 = vmax.f32 %v7562, 0.0
  %v7688 = vmax.f32 %v7563, 0.0
  %v7689 = vmax.f32 %v7564, 0.0
  %v7690 = vmax.f32 %v7565, 0.0
  %v7691 = vmax.f32 %v7566, 0.0
  %v7692 = vmax.f32 %v7567, 0.0
  %v7693 = vmax.f32 %v7568, 0.0
  %v7694 = vmax.f32 %v7569, 0.0
  %v7695 = vmax.f32 %v7570, 0.0
  %v7696 = vmax.f32 %v7571, 0.0
  %v7697 = vmax.f32 %v7572, 0.0
  %v7698 = vmax.f32 %v7573, 0.0
  %v7699 = vmax.f32 %v7574, 0.0
  %v7700 = vmax.f32 %v7575, 0.0
  %v7701 = vmax.f32 %v7576, 0.0
  %v7702 = vpack.c.bf16 %v7578, %v7577
  %v7703 = vpack.c.bf16 %v7580, %v7579
  %v7704 = vpack.c.bf16 %v7582, %v7581
  %v7705 = vpack.c.bf16 %v7584, %v7583
  %v7706 = vpack.c.bf16 %v7586, %v7585
  %v7707 = vpack.c.bf16 %v7588, %v7587
  %v7708 = vpack.c.bf16 %v7590, %v7589
  %v7709 = vpack.c.bf16 %v7592, %v7591
  %v7710 = vpack.c.bf16 %v7594, %v7593
  %v7711 = vpack.c.bf16 %v7596, %v7595
  %v7712 = vpack.c.bf16 %v7598, %v7597
  %v7713 = vpack.c.bf16 %v7600, %v7599
  %v7714 = vpack.c.bf16 %v7602, %v7601
  %v7715 = vpack.c.bf16 %v7604, %v7603
  %v7716 = vpack.c.bf16 %v7606, %v7605
  %v7717 = vpack.c.bf16 %v7608, %v7607
  %v7718 = vpack.c.bf16 %v7610, %v7609
  %v7719 = vpack.c.bf16 %v7612, %v7611
  %v7720 = vpack.c.bf16 %v7614, %v7613
  %v7721 = vpack.c.bf16 %v7616, %v7615
  %v7722 = vpack.c.bf16 %v7618, %v7617
  %v7723 = vpack.c.bf16 %v7620, %v7619
  %v7724 = vpack.c.bf16 %v7622, %v7621
  %v7725 = vpack.c.bf16 %v7624, %v7623
  %v7726 = vpack.c.bf16 %v7626, %v7625
  %v7727 = vpack.c.bf16 %v7628, %v7627
  %v7728 = vpack.c.bf16 %v7630, %v7629
  %v7729 = vpack.c.bf16 %v7632, %v7631
  %v7730 = vpack.c.bf16 %v7634, %v7633
  %v7731 = vpack.c.bf16 %v7636, %v7635
  %v7732 = vpack.c.bf16 %v7638, %v7637
  %v7733 = vpack.c.bf16 %v7640, %v7639
  %v7734 = vpack.c.bf16 %v7642, %v7641
  %v7735 = vpack.c.bf16 %v7644, %v7643
  %v7736 = vpack.c.bf16 %v7646, %v7645
  %v7737 = vpack.c.bf16 %v7648, %v7647
  %v7738 = vpack.c.bf16 %v7650, %v7649
  %v7739 = vpack.c.bf16 %v7652, %v7651
  %v7740 = vpack.c.bf16 %v7654, %v7653
  %v7741 = vpack.c.bf16 %v7656, %v7655
  %v7742 = vpack.c.bf16 %v7658, %v7657
  %v7743 = vpack.c.bf16 %v7660, %v7659
  %v7744 = vpack.c.bf16 %v7662, %v7661
  %v7745 = vpack.c.bf16 %v7664, %v7663
  %v7746 = vpack.c.bf16 %v7666, %v7665
  %v7747 = vpack.c.bf16 %v7668, %v7667
  %v7748 = vpack.c.bf16 %v7670, %v7669
  %v7749 = vpack.c.bf16 %v7672, %v7671
  %v7750 = vpack.c.bf16 %v7674, %v7673
  %v7751 = vpack.c.bf16 %v7676, %v7675
  %v7752 = vpack.c.bf16 %v7678, %v7677
  %v7753 = vpack.c.bf16 %v7680, %v7679
  %v7754 = vpack.c.bf16 %v7682, %v7681
  %v7755 = vpack.c.bf16 %v7684, %v7683
  %v7756 = vpack.c.bf16 %v7686, %v7685
  %v7757 = vpack.c.bf16 %v7688, %v7687
  %v7758 = vpack.c.bf16 %v7690, %v7689
  %v7759 = vpack.c.bf16 %v7692, %v7691
  %v7760 = vpack.c.bf16 %v7694, %v7693
  %v7761 = vpack.c.bf16 %v7696, %v7695
  %v7762 = vpack.c.bf16 %v7698, %v7697
  %v7763 = vpack.c.bf16 %v7700, %v7699
  %v7764 = vpack.c.bf16 %v7701, %v7701
  %v7765 = vld [vmem:[%s2 + $0x6] sm:$0x1]
  %v7766 = vperm.slane %v7765, 0
  %v7783 = vunpack.c.l.b16 %v33
  %v7784 = vunpack.c.l.b16 %v34
  %v7785 = vunpack.c.l.b16 %v35
  %v7786 = vunpack.c.l.b16 %v36
  %v7787 = vunpack.c.l.b16 %v37
  %v7788 = vunpack.c.l.b16 %v38
  %v7789 = vunpack.c.l.b16 %v39
  %v7790 = vunpack.c.l.b16 %v40
  %v7791 = vunpack.c.l.b16 %v41
  %v7792 = vunpack.c.l.b16 %v42
  %v7793 = vunpack.c.l.b16 %v43
  %v7794 = vunpack.c.l.b16 %v44
  %v7795 = vunpack.c.l.b16 %v45
  %v7796 = vunpack.c.l.b16 %v46
  %v7797 = vunpack.c.l.b16 %v47
  %v7798 = vunpack.c.l.b16 %v48
  %v7799 = vpack.c.b16 %v7784, %v7783
  %v7800 = vpack.c.b16 %v7786, %v7785
  %v7801 = vpack.c.b16 %v7788, %v7787
  %v7802 = vpack.c.b16 %v7790, %v7789
  %v7803 = vpack.c.b16 %v7792, %v7791
  %v7804 = vpack.c.b16 %v7794, %v7793
  %v7805 = vpack.c.b16 %v7796, %v7795
  %v7806 = vpack.c.b16 %v7798, %v7797
  %7815 = vmatpush.bf16.msra.mxu0 %v7806
  %7816 = vmatpush.bf16.msra.mxu0 %v7805
  %7817 = vmatpush.bf16.msra.mxu0 %v7804
  %7818 = vmatpush.bf16.msra.mxu0 %v7803
  %7819 = vmatpush.bf16.msra.mxu0 %v7802
  %7820 = vmatpush.bf16.msra.mxu0 %v7801
  %7821 = vmatpush.bf16.msra.mxu0 %v7800
  %7822 = vmatpush.bf16.msra.mxu0 %v7799
  %7823 = vmatmul.bf16.gmra.mxu0 %v7702
  %v7824 = vpop.f32.mrf.mxu0
  %v7825 = vadd.f32 %v7766, %v7824
  %v7826 = vpop.f32.mrf.mxu0
  %v7827 = vadd.f32 %v7766, %v7826
  %7828 = vmatmul.bf16.gmra.mxu0 %v7703
  %v7829 = vpop.f32.mrf.mxu0
  %v7830 = vadd.f32 %v7766, %v7829
  %v7831 = vpop.f32.mrf.mxu0
  %v7832 = vadd.f32 %v7766, %v7831
  %7833 = vmatmul.bf16.gmra.mxu0 %v7704
  %v7834 = vpop.f32.mrf.mxu0
  %v7835 = vadd.f32 %v7766, %v7834
  %v7836 = vpop.f32.mrf.mxu0
  %v7837 = vadd.f32 %v7766, %v7836
  %7838 = vmatmul.bf16.gmra.mxu0 %v7705
  %v7839 = vpop.f32.mrf.mxu0
  %v7840 = vadd.f32 %v7766, %v7839
  %v7841 = vpop.f32.mrf.mxu0
  %v7842 = vadd.f32 %v7766, %v7841
  %7843 = vmatmul.bf16.gmra.mxu0 %v7706
  %v7844 = vpop.f32.mrf.mxu0
  %v7845 = vadd.f32 %v7766, %v7844
  %v7846 = vpop.f32.mrf.mxu0
  %v7847 = vadd.f32 %v7766, %v7846
  %7848 = vmatmul.bf16.gmra.mxu0 %v7707
  %v7849 = vpop.f32.mrf.mxu0
  %v7850 = vadd.f32 %v7766, %v7849
  %v7851 = vpop.f32.mrf.mxu0
  %v7852 = vadd.f32 %v7766, %v7851
  %7853 = vmatmul.bf16.gmra.mxu0 %v7708
  %v7854 = vpop.f32.mrf.mxu0
  %v7855 = vadd.f32 %v7766, %v7854
  %v7856 = vpop.f32.mrf.mxu0
  %v7857 = vadd.f32 %v7766, %v7856
  %7858 = vmatmul.bf16.gmra.mxu0 %v7709
  %v7859 = vpop.f32.mrf.mxu0
  %v7860 = vadd.f32 %v7766, %v7859
  %v7861 = vpop.f32.mrf.mxu0
  %v7862 = vadd.f32 %v7766, %v7861
  %7863 = vmatmul.bf16.gmra.mxu0 %v7710
  %v7864 = vpop.f32.mrf.mxu0
  %v7865 = vadd.f32 %v7766, %v7864
  %v7866 = vpop.f32.mrf.mxu0
  %v7867 = vadd.f32 %v7766, %v7866
  %7868 = vmatmul.bf16.gmra.mxu0 %v7711
  %v7869 = vpop.f32.mrf.mxu0
  %v7870 = vadd.f32 %v7766, %v7869
  %v7871 = vpop.f32.mrf.mxu0
  %v7872 = vadd.f32 %v7766, %v7871
  %7873 = vmatmul.bf16.gmra.mxu0 %v7712
  %v7874 = vpop.f32.mrf.mxu0
  %v7875 = vadd.f32 %v7766, %v7874
  %v7876 = vpop.f32.mrf.mxu0
  %v7877 = vadd.f32 %v7766, %v7876
  %7878 = vmatmul.bf16.gmra.mxu0 %v7713
  %v7879 = vpop.f32.mrf.mxu0
  %v7880 = vadd.f32 %v7766, %v7879
  %v7881 = vpop.f32.mrf.mxu0
  %v7882 = vadd.f32 %v7766, %v7881
  %7883 = vmatmul.bf16.gmra.mxu0 %v7714
  %v7884 = vpop.f32.mrf.mxu0
  %v7885 = vadd.f32 %v7766, %v7884
  %v7886 = vpop.f32.mrf.mxu0
  %v7887 = vadd.f32 %v7766, %v7886
  %7888 = vmatmul.bf16.gmra.mxu0 %v7715
  %v7889 = vpop.f32.mrf.mxu0
  %v7890 = vadd.f32 %v7766, %v7889
  %v7891 = vpop.f32.mrf.mxu0
  %v7892 = vadd.f32 %v7766, %v7891
  %7893 = vmatmul.bf16.gmra.mxu0 %v7716
  %v7894 = vpop.f32.mrf.mxu0
  %v7895 = vadd.f32 %v7766, %v7894
  %v7896 = vpop.f32.mrf.mxu0
  %v7897 = vadd.f32 %v7766, %v7896
  %7898 = vmatmul.bf16.gmra.mxu0 %v7717
  %v7899 = vpop.f32.mrf.mxu0
  %v7900 = vadd.f32 %v7766, %v7899
  %v7901 = vpop.f32.mrf.mxu0
  %v7902 = vadd.f32 %v7766, %v7901
  %7903 = vmatmul.bf16.gmra.mxu0 %v7718
  %v7904 = vpop.f32.mrf.mxu0
  %v7905 = vadd.f32 %v7766, %v7904
  %v7906 = vpop.f32.mrf.mxu0
  %v7907 = vadd.f32 %v7766, %v7906
  %7908 = vmatmul.bf16.gmra.mxu0 %v7719
  %v7909 = vpop.f32.mrf.mxu0
  %v7910 = vadd.f32 %v7766, %v7909
  %v7911 = vpop.f32.mrf.mxu0
  %v7912 = vadd.f32 %v7766, %v7911
  %7913 = vmatmul.bf16.gmra.mxu0 %v7720
  %v7914 = vpop.f32.mrf.mxu0
  %v7915 = vadd.f32 %v7766, %v7914
  %v7916 = vpop.f32.mrf.mxu0
  %v7917 = vadd.f32 %v7766, %v7916
  %7918 = vmatmul.bf16.gmra.mxu0 %v7721
  %v7919 = vpop.f32.mrf.mxu0
  %v7920 = vadd.f32 %v7766, %v7919
  %v7921 = vpop.f32.mrf.mxu0
  %v7922 = vadd.f32 %v7766, %v7921
  %7923 = vmatmul.bf16.gmra.mxu0 %v7722
  %v7924 = vpop.f32.mrf.mxu0
  %v7925 = vadd.f32 %v7766, %v7924
  %v7926 = vpop.f32.mrf.mxu0
  %v7927 = vadd.f32 %v7766, %v7926
  %7928 = vmatmul.bf16.gmra.mxu0 %v7723
  %v7929 = vpop.f32.mrf.mxu0
  %v7930 = vadd.f32 %v7766, %v7929
  %v7931 = vpop.f32.mrf.mxu0
  %v7932 = vadd.f32 %v7766, %v7931
  %7933 = vmatmul.bf16.gmra.mxu0 %v7724
  %v7934 = vpop.f32.mrf.mxu0
  %v7935 = vadd.f32 %v7766, %v7934
  %v7936 = vpop.f32.mrf.mxu0
  %v7937 = vadd.f32 %v7766, %v7936
  %7938 = vmatmul.bf16.gmra.mxu0 %v7725
  %v7939 = vpop.f32.mrf.mxu0
  %v7940 = vadd.f32 %v7766, %v7939
  %v7941 = vpop.f32.mrf.mxu0
  %v7942 = vadd.f32 %v7766, %v7941
  %7943 = vmatmul.bf16.gmra.mxu0 %v7726
  %v7944 = vpop.f32.mrf.mxu0
  %v7945 = vadd.f32 %v7766, %v7944
  %v7946 = vpop.f32.mrf.mxu0
  %v7947 = vadd.f32 %v7766, %v7946
  %7948 = vmatmul.bf16.gmra.mxu0 %v7727
  %v7949 = vpop.f32.mrf.mxu0
  %v7950 = vadd.f32 %v7766, %v7949
  %v7951 = vpop.f32.mrf.mxu0
  %v7952 = vadd.f32 %v7766, %v7951
  %7953 = vmatmul.bf16.gmra.mxu0 %v7728
  %v7954 = vpop.f32.mrf.mxu0
  %v7955 = vadd.f32 %v7766, %v7954
  %v7956 = vpop.f32.mrf.mxu0
  %v7957 = vadd.f32 %v7766, %v7956
  %7958 = vmatmul.bf16.gmra.mxu0 %v7729
  %v7959 = vpop.f32.mrf.mxu0
  %v7960 = vadd.f32 %v7766, %v7959
  %v7961 = vpop.f32.mrf.mxu0
  %v7962 = vadd.f32 %v7766, %v7961
  %7963 = vmatmul.bf16.gmra.mxu0 %v7730
  %v7964 = vpop.f32.mrf.mxu0
  %v7965 = vadd.f32 %v7766, %v7964
  %v7966 = vpop.f32.mrf.mxu0
  %v7967 = vadd.f32 %v7766, %v7966
  %7968 = vmatmul.bf16.gmra.mxu0 %v7731
  %v7969 = vpop.f32.mrf.mxu0
  %v7970 = vadd.f32 %v7766, %v7969
  %v7971 = vpop.f32.mrf.mxu0
  %v7972 = vadd.f32 %v7766, %v7971
  %7973 = vmatmul.bf16.gmra.mxu0 %v7732
  %v7974 = vpop.f32.mrf.mxu0
  %v7975 = vadd.f32 %v7766, %v7974
  %v7976 = vpop.f32.mrf.mxu0
  %v7977 = vadd.f32 %v7766, %v7976
  %7978 = vmatmul.bf16.gmra.mxu0 %v7733
  %v7979 = vpop.f32.mrf.mxu0
  %v7980 = vadd.f32 %v7766, %v7979
  %v7981 = vpop.f32.mrf.mxu0
  %v7982 = vadd.f32 %v7766, %v7981
  %7983 = vmatmul.bf16.gmra.mxu0 %v7734
  %v7984 = vpop.f32.mrf.mxu0
  %v7985 = vadd.f32 %v7766, %v7984
  %v7986 = vpop.f32.mrf.mxu0
  %v7987 = vadd.f32 %v7766, %v7986
  %7988 = vmatmul.bf16.gmra.mxu0 %v7735
  %v7989 = vpop.f32.mrf.mxu0
  %v7990 = vadd.f32 %v7766, %v7989
  %v7991 = vpop.f32.mrf.mxu0
  %v7992 = vadd.f32 %v7766, %v7991
  %7993 = vmatmul.bf16.gmra.mxu0 %v7736
  %v7994 = vpop.f32.mrf.mxu0
  %v7995 = vadd.f32 %v7766, %v7994
  %v7996 = vpop.f32.mrf.mxu0
  %v7997 = vadd.f32 %v7766, %v7996
  %7998 = vmatmul.bf16.gmra.mxu0 %v7737
  %v7999 = vpop.f32.mrf.mxu0
  %v8000 = vadd.f32 %v7766, %v7999
  %v8001 = vpop.f32.mrf.mxu0
  %v8002 = vadd.f32 %v7766, %v8001
  %8003 = vmatmul.bf16.gmra.mxu0 %v7738
  %v8004 = vpop.f32.mrf.mxu0
  %v8005 = vadd.f32 %v7766, %v8004
  %v8006 = vpop.f32.mrf.mxu0
  %v8007 = vadd.f32 %v7766, %v8006
  %8008 = vmatmul.bf16.gmra.mxu0 %v7739
  %v8009 = vpop.f32.mrf.mxu0
  %v8010 = vadd.f32 %v7766, %v8009
  %v8011 = vpop.f32.mrf.mxu0
  %v8012 = vadd.f32 %v7766, %v8011
  %8013 = vmatmul.bf16.gmra.mxu0 %v7740
  %v8014 = vpop.f32.mrf.mxu0
  %v8015 = vadd.f32 %v7766, %v8014
  %v8016 = vpop.f32.mrf.mxu0
  %v8017 = vadd.f32 %v7766, %v8016
  %8018 = vmatmul.bf16.gmra.mxu0 %v7741
  %v8019 = vpop.f32.mrf.mxu0
  %v8020 = vadd.f32 %v7766, %v8019
  %v8021 = vpop.f32.mrf.mxu0
  %v8022 = vadd.f32 %v7766, %v8021
  %8023 = vmatmul.bf16.gmra.mxu0 %v7742
  %v8024 = vpop.f32.mrf.mxu0
  %v8025 = vadd.f32 %v7766, %v8024
  %v8026 = vpop.f32.mrf.mxu0
  %v8027 = vadd.f32 %v7766, %v8026
  %8028 = vmatmul.bf16.gmra.mxu0 %v7743
  %v8029 = vpop.f32.mrf.mxu0
  %v8030 = vadd.f32 %v7766, %v8029
  %v8031 = vpop.f32.mrf.mxu0
  %v8032 = vadd.f32 %v7766, %v8031
  %8033 = vmatmul.bf16.gmra.mxu0 %v7744
  %v8034 = vpop.f32.mrf.mxu0
  %v8035 = vadd.f32 %v7766, %v8034
  %v8036 = vpop.f32.mrf.mxu0
  %v8037 = vadd.f32 %v7766, %v8036
  %8038 = vmatmul.bf16.gmra.mxu0 %v7745
  %v8039 = vpop.f32.mrf.mxu0
  %v8040 = vadd.f32 %v7766, %v8039
  %v8041 = vpop.f32.mrf.mxu0
  %v8042 = vadd.f32 %v7766, %v8041
  %8043 = vmatmul.bf16.gmra.mxu0 %v7746
  %v8044 = vpop.f32.mrf.mxu0
  %v8045 = vadd.f32 %v7766, %v8044
  %v8046 = vpop.f32.mrf.mxu0
  %v8047 = vadd.f32 %v7766, %v8046
  %8048 = vmatmul.bf16.gmra.mxu0 %v7747
  %v8049 = vpop.f32.mrf.mxu0
  %v8050 = vadd.f32 %v7766, %v8049
  %v8051 = vpop.f32.mrf.mxu0
  %v8052 = vadd.f32 %v7766, %v8051
  %8053 = vmatmul.bf16.gmra.mxu0 %v7748
  %v8054 = vpop.f32.mrf.mxu0
  %v8055 = vadd.f32 %v7766, %v8054
  %v8056 = vpop.f32.mrf.mxu0
  %v8057 = vadd.f32 %v7766, %v8056
  %8058 = vmatmul.bf16.gmra.mxu0 %v7749
  %v8059 = vpop.f32.mrf.mxu0
  %v8060 = vadd.f32 %v7766, %v8059
  %v8061 = vpop.f32.mrf.mxu0
  %v8062 = vadd.f32 %v7766, %v8061
  %8063 = vmatmul.bf16.gmra.mxu0 %v7750
  %v8064 = vpop.f32.mrf.mxu0
  %v8065 = vadd.f32 %v7766, %v8064
  %v8066 = vpop.f32.mrf.mxu0
  %v8067 = vadd.f32 %v7766, %v8066
  %8068 = vmatmul.bf16.gmra.mxu0 %v7751
  %v8069 = vpop.f32.mrf.mxu0
  %v8070 = vadd.f32 %v7766, %v8069
  %v8071 = vpop.f32.mrf.mxu0
  %v8072 = vadd.f32 %v7766, %v8071
  %8073 = vmatmul.bf16.gmra.mxu0 %v7752
  %v8074 = vpop.f32.mrf.mxu0
  %v8075 = vadd.f32 %v7766, %v8074
  %v8076 = vpop.f32.mrf.mxu0
  %v8077 = vadd.f32 %v7766, %v8076
  %8078 = vmatmul.bf16.gmra.mxu0 %v7753
  %v8079 = vpop.f32.mrf.mxu0
  %v8080 = vadd.f32 %v7766, %v8079
  %v8081 = vpop.f32.mrf.mxu0
  %v8082 = vadd.f32 %v7766, %v8081
  %8083 = vmatmul.bf16.gmra.mxu0 %v7754
  %v8084 = vpop.f32.mrf.mxu0
  %v8085 = vadd.f32 %v7766, %v8084
  %v8086 = vpop.f32.mrf.mxu0
  %v8087 = vadd.f32 %v7766, %v8086
  %8088 = vmatmul.bf16.gmra.mxu0 %v7755
  %v8089 = vpop.f32.mrf.mxu0
  %v8090 = vadd.f32 %v7766, %v8089
  %v8091 = vpop.f32.mrf.mxu0
  %v8092 = vadd.f32 %v7766, %v8091
  %8093 = vmatmul.bf16.gmra.mxu0 %v7756
  %v8094 = vpop.f32.mrf.mxu0
  %v8095 = vadd.f32 %v7766, %v8094
  %v8096 = vpop.f32.mrf.mxu0
  %v8097 = vadd.f32 %v7766, %v8096
  %8098 = vmatmul.bf16.gmra.mxu0 %v7757
  %v8099 = vpop.f32.mrf.mxu0
  %v8100 = vadd.f32 %v7766, %v8099
  %v8101 = vpop.f32.mrf.mxu0
  %v8102 = vadd.f32 %v7766, %v8101
  %8103 = vmatmul.bf16.gmra.mxu0 %v7758
  %v8104 = vpop.f32.mrf.mxu0
  %v8105 = vadd.f32 %v7766, %v8104
  %v8106 = vpop.f32.mrf.mxu0
  %v8107 = vadd.f32 %v7766, %v8106
  %8108 = vmatmul.bf16.gmra.mxu0 %v7759
  %v8109 = vpop.f32.mrf.mxu0
  %v8110 = vadd.f32 %v7766, %v8109
  %v8111 = vpop.f32.mrf.mxu0
  %v8112 = vadd.f32 %v7766, %v8111
  %8113 = vmatmul.bf16.gmra.mxu0 %v7760
  %v8114 = vpop.f32.mrf.mxu0
  %v8115 = vadd.f32 %v7766, %v8114
  %v8116 = vpop.f32.mrf.mxu0
  %v8117 = vadd.f32 %v7766, %v8116
  %8118 = vmatmul.bf16.gmra.mxu0 %v7761
  %v8119 = vpop.f32.mrf.mxu0
  %v8120 = vadd.f32 %v7766, %v8119
  %v8121 = vpop.f32.mrf.mxu0
  %v8122 = vadd.f32 %v7766, %v8121
  %8123 = vmatmul.bf16.gmra.mxu0 %v7762
  %v8124 = vpop.f32.mrf.mxu0
  %v8125 = vadd.f32 %v7766, %v8124
  %v8126 = vpop.f32.mrf.mxu0
  %v8127 = vadd.f32 %v7766, %v8126
  %8128 = vmatmul.bf16.gmra.mxu0 %v7763
  %v8129 = vpop.f32.mrf.mxu0
  %v8130 = vadd.f32 %v7766, %v8129
  %v8131 = vpop.f32.mrf.mxu0
  %v8132 = vadd.f32 %v7766, %v8131
  %8133 = vmatmul.bf16.gmra.mxu0 %v7764
  %v8134 = vpop.f32.mrf.mxu0
  %v8135 = vadd.f32 %v7766, %v8134
  %v8136 = vpop.f32.mrf.mxu0
  %8137 = vdwg.mxu0
  %vm8138 = vcmask 64512
  %v8139 = vsel %vm8138, %v7825, -inf
  %8140 = vmax.xlane.f32.xlu0 %v8139
  %v8141 = vpop.xlane.xlu0 %8140
  %v8142 = vsel %vm8138, %v7827, -inf
  %8143 = vmax.xlane.f32.xlu0 %v8142
  %v8144 = vpop.xlane.xlu0 %8143
  %v8145 = vsel %vm8138, %v7830, -inf
  %8146 = vmax.xlane.f32.xlu0 %v8145
  %v8147 = vpop.xlane.xlu0 %8146
  %v8148 = vsel %vm8138, %v7832, -inf
  %8149 = vmax.xlane.f32.xlu0 %v8148
  %v8150 = vpop.xlane.xlu0 %8149
  %v8151 = vsel %vm8138, %v7835, -inf
  %8152 = vmax.xlane.f32.xlu0 %v8151
  %v8153 = vpop.xlane.xlu0 %8152
  %v8154 = vsel %vm8138, %v7837, -inf
  %8155 = vmax.xlane.f32.xlu0 %v8154
  %v8156 = vpop.xlane.xlu0 %8155
  %v8157 = vsel %vm8138, %v7840, -inf
  %8158 = vmax.xlane.f32.xlu0 %v8157
  %v8159 = vpop.xlane.xlu0 %8158
  %v8160 = vsel %vm8138, %v7842, -inf
  %8161 = vmax.xlane.f32.xlu0 %v8160
  %v8162 = vpop.xlane.xlu0 %8161
  %v8163 = vsel %vm8138, %v7845, -inf
  %8164 = vmax.xlane.f32.xlu0 %v8163
  %v8165 = vpop.xlane.xlu0 %8164
  %v8166 = vsel %vm8138, %v7847, -inf
  %8167 = vmax.xlane.f32.xlu0 %v8166
  %v8168 = vpop.xlane.xlu0 %8167
  %v8169 = vsel %vm8138, %v7850, -inf
  %8170 = vmax.xlane.f32.xlu0 %v8169
  %v8171 = vpop.xlane.xlu0 %8170
  %v8172 = vsel %vm8138, %v7852, -inf
  %8173 = vmax.xlane.f32.xlu0 %v8172
  %v8174 = vpop.xlane.xlu0 %8173
  %v8175 = vsel %vm8138, %v7855, -inf
  %8176 = vmax.xlane.f32.xlu0 %v8175
  %v8177 = vpop.xlane.xlu0 %8176
  %v8178 = vsel %vm8138, %v7857, -inf
  %8179 = vmax.xlane.f32.xlu0 %v8178
  %v8180 = vpop.xlane.xlu0 %8179
  %v8181 = vsel %vm8138, %v7860, -inf
  %8182 = vmax.xlane.f32.xlu0 %v8181
  %v8183 = vpop.xlane.xlu0 %8182
  %v8184 = vsel %vm8138, %v7862, -inf
  %8185 = vmax.xlane.f32.xlu0 %v8184
  %v8186 = vpop.xlane.xlu0 %8185
  %v8187 = vsel %vm8138, %v7865, -inf
  %8188 = vmax.xlane.f32.xlu0 %v8187
  %v8189 = vpop.xlane.xlu0 %8188
  %v8190 = vsel %vm8138, %v7867, -inf
  %8191 = vmax.xlane.f32.xlu0 %v8190
  %v8192 = vpop.xlane.xlu0 %8191
  %v8193 = vsel %vm8138, %v7870, -inf
  %8194 = vmax.xlane.f32.xlu0 %v8193
  %v8195 = vpop.xlane.xlu0 %8194
  %v8196 = vsel %vm8138, %v7872, -inf
  %8197 = vmax.xlane.f32.xlu0 %v8196
  %v8198 = vpop.xlane.xlu0 %8197
  %v8199 = vsel %vm8138, %v7875, -inf
  %8200 = vmax.xlane.f32.xlu0 %v8199
  %v8201 = vpop.xlane.xlu0 %8200
  %v8202 = vsel %vm8138, %v7877, -inf
  %8203 = vmax.xlane.f32.xlu0 %v8202
  %v8204 = vpop.xlane.xlu0 %8203
  %v8205 = vsel %vm8138, %v7880, -inf
  %8206 = vmax.xlane.f32.xlu0 %v8205
  %v8207 = vpop.xlane.xlu0 %8206
  %v8208 = vsel %vm8138, %v7882, -inf
  %8209 = vmax.xlane.f32.xlu0 %v8208
  %v8210 = vpop.xlane.xlu0 %8209
  %v8211 = vsel %vm8138, %v7885, -inf
  %8212 = vmax.xlane.f32.xlu0 %v8211
  %v8213 = vpop.xlane.xlu0 %8212
  %v8214 = vsel %vm8138, %v7887, -inf
  %8215 = vmax.xlane.f32.xlu0 %v8214
  %v8216 = vpop.xlane.xlu0 %8215
  %v8217 = vsel %vm8138, %v7890, -inf
  %8218 = vmax.xlane.f32.xlu0 %v8217
  %v8219 = vpop.xlane.xlu0 %8218
  %v8220 = vsel %vm8138, %v7892, -inf
  %8221 = vmax.xlane.f32.xlu0 %v8220
  %v8222 = vpop.xlane.xlu0 %8221
  %v8223 = vsel %vm8138, %v7895, -inf
  %8224 = vmax.xlane.f32.xlu0 %v8223
  %v8225 = vpop.xlane.xlu0 %8224
  %v8226 = vsel %vm8138, %v7897, -inf
  %8227 = vmax.xlane.f32.xlu0 %v8226
  %v8228 = vpop.xlane.xlu0 %8227
  %v8229 = vsel %vm8138, %v7900, -inf
  %8230 = vmax.xlane.f32.xlu0 %v8229
  %v8231 = vpop.xlane.xlu0 %8230
  %v8232 = vsel %vm8138, %v7902, -inf
  %8233 = vmax.xlane.f32.xlu0 %v8232
  %v8234 = vpop.xlane.xlu0 %8233
  %v8235 = vsel %vm8138, %v7905, -inf
  %8236 = vmax.xlane.f32.xlu0 %v8235
  %v8237 = vpop.xlane.xlu0 %8236
  %v8238 = vsel %vm8138, %v7907, -inf
  %8239 = vmax.xlane.f32.xlu0 %v8238
  %v8240 = vpop.xlane.xlu0 %8239
  %v8241 = vsel %vm8138, %v7910, -inf
  %8242 = vmax.xlane.f32.xlu0 %v8241
  %v8243 = vpop.xlane.xlu0 %8242
  %v8244 = vsel %vm8138, %v7912, -inf
  %8245 = vmax.xlane.f32.xlu0 %v8244
  %v8246 = vpop.xlane.xlu0 %8245
  %v8247 = vsel %vm8138, %v7915, -inf
  %8248 = vmax.xlane.f32.xlu0 %v8247
  %v8249 = vpop.xlane.xlu0 %8248
  %v8250 = vsel %vm8138, %v7917, -inf
  %8251 = vmax.xlane.f32.xlu0 %v8250
  %v8252 = vpop.xlane.xlu0 %8251
  %v8253 = vsel %vm8138, %v7920, -inf
  %8254 = vmax.xlane.f32.xlu0 %v8253
  %v8255 = vpop.xlane.xlu0 %8254
  %v8256 = vsel %vm8138, %v7922, -inf
  %8257 = vmax.xlane.f32.xlu0 %v8256
  %v8258 = vpop.xlane.xlu0 %8257
  %v8259 = vsel %vm8138, %v7925, -inf
  %8260 = vmax.xlane.f32.xlu0 %v8259
  %v8261 = vpop.xlane.xlu0 %8260
  %v8262 = vsel %vm8138, %v7927, -inf
  %8263 = vmax.xlane.f32.xlu0 %v8262
  %v8264 = vpop.xlane.xlu0 %8263
  %v8265 = vsel %vm8138, %v7930, -inf
  %8266 = vmax.xlane.f32.xlu0 %v8265
  %v8267 = vpop.xlane.xlu0 %8266
  %v8268 = vsel %vm8138, %v7932, -inf
  %8269 = vmax.xlane.f32.xlu0 %v8268
  %v8270 = vpop.xlane.xlu0 %8269
  %v8271 = vsel %vm8138, %v7935, -inf
  %8272 = vmax.xlane.f32.xlu0 %v8271
  %v8273 = vpop.xlane.xlu0 %8272
  %v8274 = vsel %vm8138, %v7937, -inf
  %8275 = vmax.xlane.f32.xlu0 %v8274
  %v8276 = vpop.xlane.xlu0 %8275
  %v8277 = vsel %vm8138, %v7940, -inf
  %8278 = vmax.xlane.f32.xlu0 %v8277
  %v8279 = vpop.xlane.xlu0 %8278
  %v8280 = vsel %vm8138, %v7942, -inf
  %8281 = vmax.xlane.f32.xlu0 %v8280
  %v8282 = vpop.xlane.xlu0 %8281
  %v8283 = vsel %vm8138, %v7945, -inf
  %8284 = vmax.xlane.f32.xlu0 %v8283
  %v8285 = vpop.xlane.xlu0 %8284
  %v8286 = vsel %vm8138, %v7947, -inf
  %8287 = vmax.xlane.f32.xlu0 %v8286
  %v8288 = vpop.xlane.xlu0 %8287
  %v8289 = vsel %vm8138, %v7950, -inf
  %8290 = vmax.xlane.f32.xlu0 %v8289
  %v8291 = vpop.xlane.xlu0 %8290
  %v8292 = vsel %vm8138, %v7952, -inf
  %8293 = vmax.xlane.f32.xlu0 %v8292
  %v8294 = vpop.xlane.xlu0 %8293
  %v8295 = vsel %vm8138, %v7955, -inf
  %8296 = vmax.xlane.f32.xlu0 %v8295
  %v8297 = vpop.xlane.xlu0 %8296
  %v8298 = vsel %vm8138, %v7957, -inf
  %8299 = vmax.xlane.f32.xlu0 %v8298
  %v8300 = vpop.xlane.xlu0 %8299
  %v8301 = vsel %vm8138, %v7960, -inf
  %8302 = vmax.xlane.f32.xlu0 %v8301
  %v8303 = vpop.xlane.xlu0 %8302
  %v8304 = vsel %vm8138, %v7962, -inf
  %8305 = vmax.xlane.f32.xlu0 %v8304
  %v8306 = vpop.xlane.xlu0 %8305
  %v8307 = vsel %vm8138, %v7965, -inf
  %8308 = vmax.xlane.f32.xlu0 %v8307
  %v8309 = vpop.xlane.xlu0 %8308
  %v8310 = vsel %vm8138, %v7967, -inf
  %8311 = vmax.xlane.f32.xlu0 %v8310
  %v8312 = vpop.xlane.xlu0 %8311
  %v8313 = vsel %vm8138, %v7970, -inf
  %8314 = vmax.xlane.f32.xlu0 %v8313
  %v8315 = vpop.xlane.xlu0 %8314
  %v8316 = vsel %vm8138, %v7972, -inf
  %8317 = vmax.xlane.f32.xlu0 %v8316
  %v8318 = vpop.xlane.xlu0 %8317
  %v8319 = vsel %vm8138, %v7975, -inf
  %8320 = vmax.xlane.f32.xlu0 %v8319
  %v8321 = vpop.xlane.xlu0 %8320
  %v8322 = vsel %vm8138, %v7977, -inf
  %8323 = vmax.xlane.f32.xlu0 %v8322
  %v8324 = vpop.xlane.xlu0 %8323
  %v8325 = vsel %vm8138, %v7980, -inf
  %8326 = vmax.xlane.f32.xlu0 %v8325
  %v8327 = vpop.xlane.xlu0 %8326
  %v8328 = vsel %vm8138, %v7982, -inf
  %8329 = vmax.xlane.f32.xlu0 %v8328
  %v8330 = vpop.xlane.xlu0 %8329
  %v8331 = vsel %vm8138, %v7985, -inf
  %8332 = vmax.xlane.f32.xlu0 %v8331
  %v8333 = vpop.xlane.xlu0 %8332
  %v8334 = vsel %vm8138, %v7987, -inf
  %8335 = vmax.xlane.f32.xlu0 %v8334
  %v8336 = vpop.xlane.xlu0 %8335
  %v8337 = vsel %vm8138, %v7990, -inf
  %8338 = vmax.xlane.f32.xlu0 %v8337
  %v8339 = vpop.xlane.xlu0 %8338
  %v8340 = vsel %vm8138, %v7992, -inf
  %8341 = vmax.xlane.f32.xlu0 %v8340
  %v8342 = vpop.xlane.xlu0 %8341
  %v8343 = vsel %vm8138, %v7995, -inf
  %8344 = vmax.xlane.f32.xlu0 %v8343
  %v8345 = vpop.xlane.xlu0 %8344
  %v8346 = vsel %vm8138, %v7997, -inf
  %8347 = vmax.xlane.f32.xlu0 %v8346
  %v8348 = vpop.xlane.xlu0 %8347
  %v8349 = vsel %vm8138, %v8000, -inf
  %8350 = vmax.xlane.f32.xlu0 %v8349
  %v8351 = vpop.xlane.xlu0 %8350
  %v8352 = vsel %vm8138, %v8002, -inf
  %8353 = vmax.xlane.f32.xlu0 %v8352
  %v8354 = vpop.xlane.xlu0 %8353
  %v8355 = vsel %vm8138, %v8005, -inf
  %8356 = vmax.xlane.f32.xlu0 %v8355
  %v8357 = vpop.xlane.xlu0 %8356
  %v8358 = vsel %vm8138, %v8007, -inf
  %8359 = vmax.xlane.f32.xlu0 %v8358
  %v8360 = vpop.xlane.xlu0 %8359
  %v8361 = vsel %vm8138, %v8010, -inf
  %8362 = vmax.xlane.f32.xlu0 %v8361
  %v8363 = vpop.xlane.xlu0 %8362
  %v8364 = vsel %vm8138, %v8012, -inf
  %8365 = vmax.xlane.f32.xlu0 %v8364
  %v8366 = vpop.xlane.xlu0 %8365
  %v8367 = vsel %vm8138, %v8015, -inf
  %8368 = vmax.xlane.f32.xlu0 %v8367
  %v8369 = vpop.xlane.xlu0 %8368
  %v8370 = vsel %vm8138, %v8017, -inf
  %8371 = vmax.xlane.f32.xlu0 %v8370
  %v8372 = vpop.xlane.xlu0 %8371
  %v8373 = vsel %vm8138, %v8020, -inf
  %8374 = vmax.xlane.f32.xlu0 %v8373
  %v8375 = vpop.xlane.xlu0 %8374
  %v8376 = vsel %vm8138, %v8022, -inf
  %8377 = vmax.xlane.f32.xlu0 %v8376
  %v8378 = vpop.xlane.xlu0 %8377
  %v8379 = vsel %vm8138, %v8025, -inf
  %8380 = vmax.xlane.f32.xlu0 %v8379
  %v8381 = vpop.xlane.xlu0 %8380
  %v8382 = vsel %vm8138, %v8027, -inf
  %8383 = vmax.xlane.f32.xlu0 %v8382
  %v8384 = vpop.xlane.xlu0 %8383
  %v8385 = vsel %vm8138, %v8030, -inf
  %8386 = vmax.xlane.f32.xlu0 %v8385
  %v8387 = vpop.xlane.xlu0 %8386
  %v8388 = vsel %vm8138, %v8032, -inf
  %8389 = vmax.xlane.f32.xlu0 %v8388
  %v8390 = vpop.xlane.xlu0 %8389
  %v8391 = vsel %vm8138, %v8035, -inf
  %8392 = vmax.xlane.f32.xlu0 %v8391
  %v8393 = vpop.xlane.xlu0 %8392
  %v8394 = vsel %vm8138, %v8037, -inf
  %8395 = vmax.xlane.f32.xlu0 %v8394
  %v8396 = vpop.xlane.xlu0 %8395
  %v8397 = vsel %vm8138, %v8040, -inf
  %8398 = vmax.xlane.f32.xlu0 %v8397
  %v8399 = vpop.xlane.xlu0 %8398
  %v8400 = vsel %vm8138, %v8042, -inf
  %8401 = vmax.xlane.f32.xlu0 %v8400
  %v8402 = vpop.xlane.xlu0 %8401
  %v8403 = vsel %vm8138, %v8045, -inf
  %8404 = vmax.xlane.f32.xlu0 %v8403
  %v8405 = vpop.xlane.xlu0 %8404
  %v8406 = vsel %vm8138, %v8047, -inf
  %8407 = vmax.xlane.f32.xlu0 %v8406
  %v8408 = vpop.xlane.xlu0 %8407
  %v8409 = vsel %vm8138, %v8050, -inf
  %8410 = vmax.xlane.f32.xlu0 %v8409
  %v8411 = vpop.xlane.xlu0 %8410
  %v8412 = vsel %vm8138, %v8052, -inf
  %8413 = vmax.xlane.f32.xlu0 %v8412
  %v8414 = vpop.xlane.xlu0 %8413
  %v8415 = vsel %vm8138, %v8055, -inf
  %8416 = vmax.xlane.f32.xlu0 %v8415
  %v8417 = vpop.xlane.xlu0 %8416
  %v8418 = vsel %vm8138, %v8057, -inf
  %8419 = vmax.xlane.f32.xlu0 %v8418
  %v8420 = vpop.xlane.xlu0 %8419
  %v8421 = vsel %vm8138, %v8060, -inf
  %8422 = vmax.xlane.f32.xlu0 %v8421
  %v8423 = vpop.xlane.xlu0 %8422
  %v8424 = vsel %vm8138, %v8062, -inf
  %8425 = vmax.xlane.f32.xlu0 %v8424
  %v8426 = vpop.xlane.xlu0 %8425
  %v8427 = vsel %vm8138, %v8065, -inf
  %8428 = vmax.xlane.f32.xlu0 %v8427
  %v8429 = vpop.xlane.xlu0 %8428
  %v8430 = vsel %vm8138, %v8067, -inf
  %8431 = vmax.xlane.f32.xlu0 %v8430
  %v8432 = vpop.xlane.xlu0 %8431
  %v8433 = vsel %vm8138, %v8070, -inf
  %8434 = vmax.xlane.f32.xlu0 %v8433
  %v8435 = vpop.xlane.xlu0 %8434
  %v8436 = vsel %vm8138, %v8072, -inf
  %8437 = vmax.xlane.f32.xlu0 %v8436
  %v8438 = vpop.xlane.xlu0 %8437
  %v8439 = vsel %vm8138, %v8075, -inf
  %8440 = vmax.xlane.f32.xlu0 %v8439
  %v8441 = vpop.xlane.xlu0 %8440
  %v8442 = vsel %vm8138, %v8077, -inf
  %8443 = vmax.xlane.f32.xlu0 %v8442
  %v8444 = vpop.xlane.xlu0 %8443
  %v8445 = vsel %vm8138, %v8080, -inf
  %8446 = vmax.xlane.f32.xlu0 %v8445
  %v8447 = vpop.xlane.xlu0 %8446
  %v8448 = vsel %vm8138, %v8082, -inf
  %8449 = vmax.xlane.f32.xlu0 %v8448
  %v8450 = vpop.xlane.xlu0 %8449
  %v8451 = vsel %vm8138, %v8085, -inf
  %8452 = vmax.xlane.f32.xlu0 %v8451
  %v8453 = vpop.xlane.xlu0 %8452
  %v8454 = vsel %vm8138, %v8087, -inf
  %8455 = vmax.xlane.f32.xlu0 %v8454
  %v8456 = vpop.xlane.xlu0 %8455
  %v8457 = vsel %vm8138, %v8090, -inf
  %8458 = vmax.xlane.f32.xlu0 %v8457
  %v8459 = vpop.xlane.xlu0 %8458
  %v8460 = vsel %vm8138, %v8092, -inf
  %8461 = vmax.xlane.f32.xlu0 %v8460
  %v8462 = vpop.xlane.xlu0 %8461
  %v8463 = vsel %vm8138, %v8095, -inf
  %8464 = vmax.xlane.f32.xlu0 %v8463
  %v8465 = vpop.xlane.xlu0 %8464
  %v8466 = vsel %vm8138, %v8097, -inf
  %8467 = vmax.xlane.f32.xlu0 %v8466
  %v8468 = vpop.xlane.xlu0 %8467
  %v8469 = vsel %vm8138, %v8100, -inf
  %8470 = vmax.xlane.f32.xlu0 %v8469
  %v8471 = vpop.xlane.xlu0 %8470
  %v8472 = vsel %vm8138, %v8102, -inf
  %8473 = vmax.xlane.f32.xlu0 %v8472
  %v8474 = vpop.xlane.xlu0 %8473
  %v8475 = vsel %vm8138, %v8105, -inf
  %8476 = vmax.xlane.f32.xlu0 %v8475
  %v8477 = vpop.xlane.xlu0 %8476
  %v8478 = vsel %vm8138, %v8107, -inf
  %8479 = vmax.xlane.f32.xlu0 %v8478
  %v8480 = vpop.xlane.xlu0 %8479
  %v8481 = vsel %vm8138, %v8110, -inf
  %8482 = vmax.xlane.f32.xlu0 %v8481
  %v8483 = vpop.xlane.xlu0 %8482
  %v8484 = vsel %vm8138, %v8112, -inf
  %8485 = vmax.xlane.f32.xlu0 %v8484
  %v8486 = vpop.xlane.xlu0 %8485
  %v8487 = vsel %vm8138, %v8115, -inf
  %8488 = vmax.xlane.f32.xlu0 %v8487
  %v8489 = vpop.xlane.xlu0 %8488
  %v8490 = vsel %vm8138, %v8117, -inf
  %8491 = vmax.xlane.f32.xlu0 %v8490
  %v8492 = vpop.xlane.xlu0 %8491
  %v8493 = vsel %vm8138, %v8120, -inf
  %8494 = vmax.xlane.f32.xlu0 %v8493
  %v8495 = vpop.xlane.xlu0 %8494
  %v8496 = vsel %vm8138, %v8122, -inf
  %8497 = vmax.xlane.f32.xlu0 %v8496
  %v8498 = vpop.xlane.xlu0 %8497
  %v8499 = vsel %vm8138, %v8125, -inf
  %8500 = vmax.xlane.f32.xlu0 %v8499
  %v8501 = vpop.xlane.xlu0 %8500
  %v8502 = vsel %vm8138, %v8127, -inf
  %8503 = vmax.xlane.f32.xlu0 %v8502
  %v8504 = vpop.xlane.xlu0 %8503
  %v8505 = vsel %vm8138, %v8130, -inf
  %8506 = vmax.xlane.f32.xlu0 %v8505
  %v8507 = vpop.xlane.xlu0 %8506
  %v8508 = vsel %vm8138, %v8132, -inf
  %8509 = vmax.xlane.f32.xlu0 %v8508
  %v8510 = vpop.xlane.xlu0 %8509
  %v8511 = vsel %vm8138, %v8135, -inf
  %8512 = vmax.xlane.f32.xlu0 %v8511
  %v8513 = vpop.xlane.xlu0 %8512
  %v8514 = vsub.f32 %v7825, %v8141
  %v8515 = vsub.f32 %v7827, %v8144
  %v8516 = vsub.f32 %v7830, %v8147
  %v8517 = vsub.f32 %v7832, %v8150
  %v8518 = vsub.f32 %v7835, %v8153
  %v8519 = vsub.f32 %v7837, %v8156
  %v8520 = vsub.f32 %v7840, %v8159
  %v8521 = vsub.f32 %v7842, %v8162
  %v8522 = vsub.f32 %v7845, %v8165
  %v8523 = vsub.f32 %v7847, %v8168
  %v8524 = vsub.f32 %v7850, %v8171
  %v8525 = vsub.f32 %v7852, %v8174
  %v8526 = vsub.f32 %v7855, %v8177
  %v8527 = vsub.f32 %v7857, %v8180
  %v8528 = vsub.f32 %v7860, %v8183
  %v8529 = vsub.f32 %v7862, %v8186
  %v8530 = vsub.f32 %v7865, %v8189
  %v8531 = vsub.f32 %v7867, %v8192
  %v8532 = vsub.f32 %v7870, %v8195
  %v8533 = vsub.f32 %v7872, %v8198
  %v8534 = vsub.f32 %v7875, %v8201
  %v8535 = vsub.f32 %v7877, %v8204
  %v8536 = vsub.f32 %v7880, %v8207
  %v8537 = vsub.f32 %v7882, %v8210
  %v8538 = vsub.f32 %v7885, %v8213
  %v8539 = vsub.f32 %v7887, %v8216
  %v8540 = vsub.f32 %v7890, %v8219
  %v8541 = vsub.f32 %v7892, %v8222
  %v8542 = vsub.f32 %v7895, %v8225
  %v8543 = vsub.f32 %v7897, %v8228
  %v8544 = vsub.f32 %v7900, %v8231
  %v8545 = vsub.f32 %v7902, %v8234
  %v8546 = vsub.f32 %v7905, %v8237
  %v8547 = vsub.f32 %v7907, %v8240
  %v8548 = vsub.f32 %v7910, %v8243
  %v8549 = vsub.f32 %v7912, %v8246
  %v8550 = vsub.f32 %v7915, %v8249
  %v8551 = vsub.f32 %v7917, %v8252
  %v8552 = vsub.f32 %v7920, %v8255
  %v8553 = vsub.f32 %v7922, %v8258
  %v8554 = vsub.f32 %v7925, %v8261
  %v8555 = vsub.f32 %v7927, %v8264
  %v8556 = vsub.f32 %v7930, %v8267
  %v8557 = vsub.f32 %v7932, %v8270
  %v8558 = vsub.f32 %v7935, %v8273
  %v8559 = vsub.f32 %v7937, %v8276
  %v8560 = vsub.f32 %v7940, %v8279
  %v8561 = vsub.f32 %v7942, %v8282
  %v8562 = vsub.f32 %v7945, %v8285
  %v8563 = vsub.f32 %v7947, %v8288
  %v8564 = vsub.f32 %v7950, %v8291
  %v8565 = vsub.f32 %v7952, %v8294
  %v8566 = vsub.f32 %v7955, %v8297
  %v8567 = vsub.f32 %v7957, %v8300
  %v8568 = vsub.f32 %v7960, %v8303
  %v8569 = vsub.f32 %v7962, %v8306
  %v8570 = vsub.f32 %v7965, %v8309
  %v8571 = vsub.f32 %v7967, %v8312
  %v8572 = vsub.f32 %v7970, %v8315
  %v8573 = vsub.f32 %v7972, %v8318
  %v8574 = vsub.f32 %v7975, %v8321
  %v8575 = vsub.f32 %v7977, %v8324
  %v8576 = vsub.f32 %v7980, %v8327
  %v8577 = vsub.f32 %v7982, %v8330
  %v8578 = vsub.f32 %v7985, %v8333
  %v8579 = vsub.f32 %v7987, %v8336
  %v8580 = vsub.f32 %v7990, %v8339
  %v8581 = vsub.f32 %v7992, %v8342
  %v8582 = vsub.f32 %v7995, %v8345
  %v8583 = vsub.f32 %v7997, %v8348
  %v8584 = vsub.f32 %v8000, %v8351
  %v8585 = vsub.f32 %v8002, %v8354
  %v8586 = vsub.f32 %v8005, %v8357
  %v8587 = vsub.f32 %v8007, %v8360
  %v8588 = vsub.f32 %v8010, %v8363
  %v8589 = vsub.f32 %v8012, %v8366
  %v8590 = vsub.f32 %v8015, %v8369
  %v8591 = vsub.f32 %v8017, %v8372
  %v8592 = vsub.f32 %v8020, %v8375
  %v8593 = vsub.f32 %v8022, %v8378
  %v8594 = vsub.f32 %v8025, %v8381
  %v8595 = vsub.f32 %v8027, %v8384
  %v8596 = vsub.f32 %v8030, %v8387
  %v8597 = vsub.f32 %v8032, %v8390
  %v8598 = vsub.f32 %v8035, %v8393
  %v8599 = vsub.f32 %v8037, %v8396
  %v8600 = vsub.f32 %v8040, %v8399
  %v8601 = vsub.f32 %v8042, %v8402
  %v8602 = vsub.f32 %v8045, %v8405
  %v8603 = vsub.f32 %v8047, %v8408
  %v8604 = vsub.f32 %v8050, %v8411
  %v8605 = vsub.f32 %v8052, %v8414
  %v8606 = vsub.f32 %v8055, %v8417
  %v8607 = vsub.f32 %v8057, %v8420
  %v8608 = vsub.f32 %v8060, %v8423
  %v8609 = vsub.f32 %v8062, %v8426
  %v8610 = vsub.f32 %v8065, %v8429
  %v8611 = vsub.f32 %v8067, %v8432
  %v8612 = vsub.f32 %v8070, %v8435
  %v8613 = vsub.f32 %v8072, %v8438
  %v8614 = vsub.f32 %v8075, %v8441
  %v8615 = vsub.f32 %v8077, %v8444
  %v8616 = vsub.f32 %v8080, %v8447
  %v8617 = vsub.f32 %v8082, %v8450
  %v8618 = vsub.f32 %v8085, %v8453
  %v8619 = vsub.f32 %v8087, %v8456
  %v8620 = vsub.f32 %v8090, %v8459
  %v8621 = vsub.f32 %v8092, %v8462
  %v8622 = vsub.f32 %v8095, %v8465
  %v8623 = vsub.f32 %v8097, %v8468
  %v8624 = vsub.f32 %v8100, %v8471
  %v8625 = vsub.f32 %v8102, %v8474
  %v8626 = vsub.f32 %v8105, %v8477
  %v8627 = vsub.f32 %v8107, %v8480
  %v8628 = vsub.f32 %v8110, %v8483
  %v8629 = vsub.f32 %v8112, %v8486
  %v8630 = vsub.f32 %v8115, %v8489
  %v8631 = vsub.f32 %v8117, %v8492
  %v8632 = vsub.f32 %v8120, %v8495
  %v8633 = vsub.f32 %v8122, %v8498
  %v8634 = vsub.f32 %v8125, %v8501
  %v8635 = vsub.f32 %v8127, %v8504
  %v8636 = vsub.f32 %v8130, %v8507
  %v8637 = vsub.f32 %v8132, %v8510
  %v8638 = vsub.f32 %v8135, %v8513
  %v8639 = vmul.f32 %v8514, 1.442695
  %v8640 = vpow.pop %v8639
  %v8641 = vmul.f32 %v8515, 1.442695
  %v8642 = vpow.pop %v8641
  %v8643 = vmul.f32 %v8516, 1.442695
  %v8644 = vpow.pop %v8643
  %v8645 = vmul.f32 %v8517, 1.442695
  %v8646 = vpow.pop %v8645
  %v8647 = vmul.f32 %v8518, 1.442695
  %v8648 = vpow.pop %v8647
  %v8649 = vmul.f32 %v8519, 1.442695
  %v8650 = vpow.pop %v8649
  %v8651 = vmul.f32 %v8520, 1.442695
  %v8652 = vpow.pop %v8651
  %v8653 = vmul.f32 %v8521, 1.442695
  %v8654 = vpow.pop %v8653
  %v8655 = vmul.f32 %v8522, 1.442695
  %v8656 = vpow.pop %v8655
  %v8657 = vmul.f32 %v8523, 1.442695
  %v8658 = vpow.pop %v8657
  %v8659 = vmul.f32 %v8524, 1.442695
  %v8660 = vpow.pop %v8659
  %v8661 = vmul.f32 %v8525, 1.442695
  %v8662 = vpow.pop %v8661
  %v8663 = vmul.f32 %v8526, 1.442695
  %v8664 = vpow.pop %v8663
  %v8665 = vmul.f32 %v8527, 1.442695
  %v8666 = vpow.pop %v8665
  %v8667 = vmul.f32 %v8528, 1.442695
  %v8668 = vpow.pop %v8667
  %v8669 = vmul.f32 %v8529, 1.442695
  %v8670 = vpow.pop %v8669
  %v8671 = vmul.f32 %v8530, 1.442695
  %v8672 = vpow.pop %v8671
  %v8673 = vmul.f32 %v8531, 1.442695
  %v8674 = vpow.pop %v8673
  %v8675 = vmul.f32 %v8532, 1.442695
  %v8676 = vpow.pop %v8675
  %v8677 = vmul.f32 %v8533, 1.442695
  %v8678 = vpow.pop %v8677
  %v8679 = vmul.f32 %v8534, 1.442695
  %v8680 = vpow.pop %v8679
  %v8681 = vmul.f32 %v8535, 1.442695
  %v8682 = vpow.pop %v8681
  %v8683 = vmul.f32 %v8536, 1.442695
  %v8684 = vpow.pop %v8683
  %v8685 = vmul.f32 %v8537, 1.442695
  %v8686 = vpow.pop %v8685
  %v8687 = vmul.f32 %v8538, 1.442695
  %v8688 = vpow.pop %v8687
  %v8689 = vmul.f32 %v8539, 1.442695
  %v8690 = vpow.pop %v8689
  %v8691 = vmul.f32 %v8540, 1.442695
  %v8692 = vpow.pop %v8691
  %v8693 = vmul.f32 %v8541, 1.442695
  %v8694 = vpow.pop %v8693
  %v8695 = vmul.f32 %v8542, 1.442695
  %v8696 = vpow.pop %v8695
  %v8697 = vmul.f32 %v8543, 1.442695
  %v8698 = vpow.pop %v8697
  %v8699 = vmul.f32 %v8544, 1.442695
  %v8700 = vpow.pop %v8699
  %v8701 = vmul.f32 %v8545, 1.442695
  %v8702 = vpow.pop %v8701
  %v8703 = vmul.f32 %v8546, 1.442695
  %v8704 = vpow.pop %v8703
  %v8705 = vmul.f32 %v8547, 1.442695
  %v8706 = vpow.pop %v8705
  %v8707 = vmul.f32 %v8548, 1.442695
  %v8708 = vpow.pop %v8707
  %v8709 = vmul.f32 %v8549, 1.442695
  %v8710 = vpow.pop %v8709
  %v8711 = vmul.f32 %v8550, 1.442695
  %v8712 = vpow.pop %v8711
  %v8713 = vmul.f32 %v8551, 1.442695
  %v8714 = vpow.pop %v8713
  %v8715 = vmul.f32 %v8552, 1.442695
  %v8716 = vpow.pop %v8715
  %v8717 = vmul.f32 %v8553, 1.442695
  %v8718 = vpow.pop %v8717
  %v8719 = vmul.f32 %v8554, 1.442695
  %v8720 = vpow.pop %v8719
  %v8721 = vmul.f32 %v8555, 1.442695
  %v8722 = vpow.pop %v8721
  %v8723 = vmul.f32 %v8556, 1.442695
  %v8724 = vpow.pop %v8723
  %v8725 = vmul.f32 %v8557, 1.442695
  %v8726 = vpow.pop %v8725
  %v8727 = vmul.f32 %v8558, 1.442695
  %v8728 = vpow.pop %v8727
  %v8729 = vmul.f32 %v8559, 1.442695
  %v8730 = vpow.pop %v8729
  %v8731 = vmul.f32 %v8560, 1.442695
  %v8732 = vpow.pop %v8731
  %v8733 = vmul.f32 %v8561, 1.442695
  %v8734 = vpow.pop %v8733
  %v8735 = vmul.f32 %v8562, 1.442695
  %v8736 = vpow.pop %v8735
  %v8737 = vmul.f32 %v8563, 1.442695
  %v8738 = vpow.pop %v8737
  %v8739 = vmul.f32 %v8564, 1.442695
  %v8740 = vpow.pop %v8739
  %v8741 = vmul.f32 %v8565, 1.442695
  %v8742 = vpow.pop %v8741
  %v8743 = vmul.f32 %v8566, 1.442695
  %v8744 = vpow.pop %v8743
  %v8745 = vmul.f32 %v8567, 1.442695
  %v8746 = vpow.pop %v8745
  %v8747 = vmul.f32 %v8568, 1.442695
  %v8748 = vpow.pop %v8747
  %v8749 = vmul.f32 %v8569, 1.442695
  %v8750 = vpow.pop %v8749
  %v8751 = vmul.f32 %v8570, 1.442695
  %v8752 = vpow.pop %v8751
  %v8753 = vmul.f32 %v8571, 1.442695
  %v8754 = vpow.pop %v8753
  %v8755 = vmul.f32 %v8572, 1.442695
  %v8756 = vpow.pop %v8755
  %v8757 = vmul.f32 %v8573, 1.442695
  %v8758 = vpow.pop %v8757
  %v8759 = vmul.f32 %v8574, 1.442695
  %v8760 = vpow.pop %v8759
  %v8761 = vmul.f32 %v8575, 1.442695
  %v8762 = vpow.pop %v8761
  %v8763 = vmul.f32 %v8576, 1.442695
  %v8764 = vpow.pop %v8763
  %v8765 = vmul.f32 %v8577, 1.442695
  %v8766 = vpow.pop %v8765
  %v8767 = vmul.f32 %v8578, 1.442695
  %v8768 = vpow.pop %v8767
  %v8769 = vmul.f32 %v8579, 1.442695
  %v8770 = vpow.pop %v8769
  %v8771 = vmul.f32 %v8580, 1.442695
  %v8772 = vpow.pop %v8771
  %v8773 = vmul.f32 %v8581, 1.442695
  %v8774 = vpow.pop %v8773
  %v8775 = vmul.f32 %v8582, 1.442695
  %v8776 = vpow.pop %v8775
  %v8777 = vmul.f32 %v8583, 1.442695
  %v8778 = vpow.pop %v8777
  %v8779 = vmul.f32 %v8584, 1.442695
  %v8780 = vpow.pop %v8779
  %v8781 = vmul.f32 %v8585, 1.442695
  %v8782 = vpow.pop %v8781
  %v8783 = vmul.f32 %v8586, 1.442695
  %v8784 = vpow.pop %v8783
  %v8785 = vmul.f32 %v8587, 1.442695
  %v8786 = vpow.pop %v8785
  %v8787 = vmul.f32 %v8588, 1.442695
  %v8788 = vpow.pop %v8787
  %v8789 = vmul.f32 %v8589, 1.442695
  %v8790 = vpow.pop %v8789
  %v8791 = vmul.f32 %v8590, 1.442695
  %v8792 = vpow.pop %v8791
  %v8793 = vmul.f32 %v8591, 1.442695
  %v8794 = vpow.pop %v8793
  %v8795 = vmul.f32 %v8592, 1.442695
  %v8796 = vpow.pop %v8795
  %v8797 = vmul.f32 %v8593, 1.442695
  %v8798 = vpow.pop %v8797
  %v8799 = vmul.f32 %v8594, 1.442695
  %v8800 = vpow.pop %v8799
  %v8801 = vmul.f32 %v8595, 1.442695
  %v8802 = vpow.pop %v8801
  %v8803 = vmul.f32 %v8596, 1.442695
  %v8804 = vpow.pop %v8803
  %v8805 = vmul.f32 %v8597, 1.442695
  %v8806 = vpow.pop %v8805
  %v8807 = vmul.f32 %v8598, 1.442695
  %v8808 = vpow.pop %v8807
  %v8809 = vmul.f32 %v8599, 1.442695
  %v8810 = vpow.pop %v8809
  %v8811 = vmul.f32 %v8600, 1.442695
  %v8812 = vpow.pop %v8811
  %v8813 = vmul.f32 %v8601, 1.442695
  %v8814 = vpow.pop %v8813
  %v8815 = vmul.f32 %v8602, 1.442695
  %v8816 = vpow.pop %v8815
  %v8817 = vmul.f32 %v8603, 1.442695
  %v8818 = vpow.pop %v8817
  %v8819 = vmul.f32 %v8604, 1.442695
  %v8820 = vpow.pop %v8819
  %v8821 = vmul.f32 %v8605, 1.442695
  %v8822 = vpow.pop %v8821
  %v8823 = vmul.f32 %v8606, 1.442695
  %v8824 = vpow.pop %v8823
  %v8825 = vmul.f32 %v8607, 1.442695
  %v8826 = vpow.pop %v8825
  %v8827 = vmul.f32 %v8608, 1.442695
  %v8828 = vpow.pop %v8827
  %v8829 = vmul.f32 %v8609, 1.442695
  %v8830 = vpow.pop %v8829
  %v8831 = vmul.f32 %v8610, 1.442695
  %v8832 = vpow.pop %v8831
  %v8833 = vmul.f32 %v8611, 1.442695
  %v8834 = vpow.pop %v8833
  %v8835 = vmul.f32 %v8612, 1.442695
  %v8836 = vpow.pop %v8835
  %v8837 = vmul.f32 %v8613, 1.442695
  %v8838 = vpow.pop %v8837
  %v8839 = vmul.f32 %v8614, 1.442695
  %v8840 = vpow.pop %v8839
  %v8841 = vmul.f32 %v8615, 1.442695
  %v8842 = vpow.pop %v8841
  %v8843 = vmul.f32 %v8616, 1.442695
  %v8844 = vpow.pop %v8843
  %v8845 = vmul.f32 %v8617, 1.442695
  %v8846 = vpow.pop %v8845
  %v8847 = vmul.f32 %v8618, 1.442695
  %v8848 = vpow.pop %v8847
  %v8849 = vmul.f32 %v8619, 1.442695
  %v8850 = vpow.pop %v8849
  %v8851 = vmul.f32 %v8620, 1.442695
  %v8852 = vpow.pop %v8851
  %v8853 = vmul.f32 %v8621, 1.442695
  %v8854 = vpow.pop %v8853
  %v8855 = vmul.f32 %v8622, 1.442695
  %v8856 = vpow.pop %v8855
  %v8857 = vmul.f32 %v8623, 1.442695
  %v8858 = vpow.pop %v8857
  %v8859 = vmul.f32 %v8624, 1.442695
  %v8860 = vpow.pop %v8859
  %v8861 = vmul.f32 %v8625, 1.442695
  %v8862 = vpow.pop %v8861
  %v8863 = vmul.f32 %v8626, 1.442695
  %v8864 = vpow.pop %v8863
  %v8865 = vmul.f32 %v8627, 1.442695
  %v8866 = vpow.pop %v8865
  %v8867 = vmul.f32 %v8628, 1.442695
  %v8868 = vpow.pop %v8867
  %v8869 = vmul.f32 %v8629, 1.442695
  %v8870 = vpow.pop %v8869
  %v8871 = vmul.f32 %v8630, 1.442695
  %v8872 = vpow.pop %v8871
  %v8873 = vmul.f32 %v8631, 1.442695
  %v8874 = vpow.pop %v8873
  %v8875 = vmul.f32 %v8632, 1.442695
  %v8876 = vpow.pop %v8875
  %v8877 = vmul.f32 %v8633, 1.442695
  %v8878 = vpow.pop %v8877
  %v8879 = vmul.f32 %v8634, 1.442695
  %v8880 = vpow.pop %v8879
  %v8881 = vmul.f32 %v8635, 1.442695
  %v8882 = vpow.pop %v8881
  %v8883 = vmul.f32 %v8636, 1.442695
  %v8884 = vpow.pop %v8883
  %v8885 = vmul.f32 %v8637, 1.442695
  %v8886 = vpow.pop %v8885
  %v8887 = vmul.f32 %v8638, 1.442695
  %v8888 = vpow.pop %v8887
  %v8889 = vsel %vm8138, %v8640, 0.0
  %8890 = vadd.xlane.f32.xlu0 %v8889
  %v8891 = vpop.xlane.xlu0 %8890
  %v8892 = vsel %vm8138, %v8642, 0.0
  %8893 = vadd.xlane.f32.xlu0 %v8892
  %v8894 = vpop.xlane.xlu0 %8893
  %v8895 = vsel %vm8138, %v8644, 0.0
  %8896 = vadd.xlane.f32.xlu0 %v8895
  %v8897 = vpop.xlane.xlu0 %8896
  %v8898 = vsel %vm8138, %v8646, 0.0
  %8899 = vadd.xlane.f32.xlu0 %v8898
  %v8900 = vpop.xlane.xlu0 %8899
  %v8901 = vsel %vm8138, %v8648, 0.0
  %8902 = vadd.xlane.f32.xlu0 %v8901
  %v8903 = vpop.xlane.xlu0 %8902
  %v8904 = vsel %vm8138, %v8650, 0.0
  %8905 = vadd.xlane.f32.xlu0 %v8904
  %v8906 = vpop.xlane.xlu0 %8905
  %v8907 = vsel %vm8138, %v8652, 0.0
  %8908 = vadd.xlane.f32.xlu0 %v8907
  %v8909 = vpop.xlane.xlu0 %8908
  %v8910 = vsel %vm8138, %v8654, 0.0
  %8911 = vadd.xlane.f32.xlu0 %v8910
  %v8912 = vpop.xlane.xlu0 %8911
  %v8913 = vsel %vm8138, %v8656, 0.0
  %8914 = vadd.xlane.f32.xlu0 %v8913
  %v8915 = vpop.xlane.xlu0 %8914
  %v8916 = vsel %vm8138, %v8658, 0.0
  %8917 = vadd.xlane.f32.xlu0 %v8916
  %v8918 = vpop.xlane.xlu0 %8917
  %v8919 = vsel %vm8138, %v8660, 0.0
  %8920 = vadd.xlane.f32.xlu0 %v8919
  %v8921 = vpop.xlane.xlu0 %8920
  %v8922 = vsel %vm8138, %v8662, 0.0
  %8923 = vadd.xlane.f32.xlu0 %v8922
  %v8924 = vpop.xlane.xlu0 %8923
  %v8925 = vsel %vm8138, %v8664, 0.0
  %8926 = vadd.xlane.f32.xlu0 %v8925
  %v8927 = vpop.xlane.xlu0 %8926
  %v8928 = vsel %vm8138, %v8666, 0.0
  %8929 = vadd.xlane.f32.xlu0 %v8928
  %v8930 = vpop.xlane.xlu0 %8929
  %v8931 = vsel %vm8138, %v8668, 0.0
  %8932 = vadd.xlane.f32.xlu0 %v8931
  %v8933 = vpop.xlane.xlu0 %8932
  %v8934 = vsel %vm8138, %v8670, 0.0
  %8935 = vadd.xlane.f32.xlu0 %v8934
  %v8936 = vpop.xlane.xlu0 %8935
  %v8937 = vsel %vm8138, %v8672, 0.0
  %8938 = vadd.xlane.f32.xlu0 %v8937
  %v8939 = vpop.xlane.xlu0 %8938
  %v8940 = vsel %vm8138, %v8674, 0.0
  %8941 = vadd.xlane.f32.xlu0 %v8940
  %v8942 = vpop.xlane.xlu0 %8941
  %v8943 = vsel %vm8138, %v8676, 0.0
  %8944 = vadd.xlane.f32.xlu0 %v8943
  %v8945 = vpop.xlane.xlu0 %8944
  %v8946 = vsel %vm8138, %v8678, 0.0
  %8947 = vadd.xlane.f32.xlu0 %v8946
  %v8948 = vpop.xlane.xlu0 %8947
  %v8949 = vsel %vm8138, %v8680, 0.0
  %8950 = vadd.xlane.f32.xlu0 %v8949
  %v8951 = vpop.xlane.xlu0 %8950
  %v8952 = vsel %vm8138, %v8682, 0.0
  %8953 = vadd.xlane.f32.xlu0 %v8952
  %v8954 = vpop.xlane.xlu0 %8953
  %v8955 = vsel %vm8138, %v8684, 0.0
  %8956 = vadd.xlane.f32.xlu0 %v8955
  %v8957 = vpop.xlane.xlu0 %8956
  %v8958 = vsel %vm8138, %v8686, 0.0
  %8959 = vadd.xlane.f32.xlu0 %v8958
  %v8960 = vpop.xlane.xlu0 %8959
  %v8961 = vsel %vm8138, %v8688, 0.0
  %8962 = vadd.xlane.f32.xlu0 %v8961
  %v8963 = vpop.xlane.xlu0 %8962
  %v8964 = vsel %vm8138, %v8690, 0.0
  %8965 = vadd.xlane.f32.xlu0 %v8964
  %v8966 = vpop.xlane.xlu0 %8965
  %v8967 = vsel %vm8138, %v8692, 0.0
  %8968 = vadd.xlane.f32.xlu0 %v8967
  %v8969 = vpop.xlane.xlu0 %8968
  %v8970 = vsel %vm8138, %v8694, 0.0
  %8971 = vadd.xlane.f32.xlu0 %v8970
  %v8972 = vpop.xlane.xlu0 %8971
  %v8973 = vsel %vm8138, %v8696, 0.0
  %8974 = vadd.xlane.f32.xlu0 %v8973
  %v8975 = vpop.xlane.xlu0 %8974
  %v8976 = vsel %vm8138, %v8698, 0.0
  %8977 = vadd.xlane.f32.xlu0 %v8976
  %v8978 = vpop.xlane.xlu0 %8977
  %v8979 = vsel %vm8138, %v8700, 0.0
  %8980 = vadd.xlane.f32.xlu0 %v8979
  %v8981 = vpop.xlane.xlu0 %8980
  %v8982 = vsel %vm8138, %v8702, 0.0
  %8983 = vadd.xlane.f32.xlu0 %v8982
  %v8984 = vpop.xlane.xlu0 %8983
  %v8985 = vsel %vm8138, %v8704, 0.0
  %8986 = vadd.xlane.f32.xlu0 %v8985
  %v8987 = vpop.xlane.xlu0 %8986
  %v8988 = vsel %vm8138, %v8706, 0.0
  %8989 = vadd.xlane.f32.xlu0 %v8988
  %v8990 = vpop.xlane.xlu0 %8989
  %v8991 = vsel %vm8138, %v8708, 0.0
  %8992 = vadd.xlane.f32.xlu0 %v8991
  %v8993 = vpop.xlane.xlu0 %8992
  %v8994 = vsel %vm8138, %v8710, 0.0
  %8995 = vadd.xlane.f32.xlu0 %v8994
  %v8996 = vpop.xlane.xlu0 %8995
  %v8997 = vsel %vm8138, %v8712, 0.0
  %8998 = vadd.xlane.f32.xlu0 %v8997
  %v8999 = vpop.xlane.xlu0 %8998
  %v9000 = vsel %vm8138, %v8714, 0.0
  %9001 = vadd.xlane.f32.xlu0 %v9000
  %v9002 = vpop.xlane.xlu0 %9001
  %v9003 = vsel %vm8138, %v8716, 0.0
  %9004 = vadd.xlane.f32.xlu0 %v9003
  %v9005 = vpop.xlane.xlu0 %9004
  %v9006 = vsel %vm8138, %v8718, 0.0
  %9007 = vadd.xlane.f32.xlu0 %v9006
  %v9008 = vpop.xlane.xlu0 %9007
  %v9009 = vsel %vm8138, %v8720, 0.0
  %9010 = vadd.xlane.f32.xlu0 %v9009
  %v9011 = vpop.xlane.xlu0 %9010
  %v9012 = vsel %vm8138, %v8722, 0.0
  %9013 = vadd.xlane.f32.xlu0 %v9012
  %v9014 = vpop.xlane.xlu0 %9013
  %v9015 = vsel %vm8138, %v8724, 0.0
  %9016 = vadd.xlane.f32.xlu0 %v9015
  %v9017 = vpop.xlane.xlu0 %9016
  %v9018 = vsel %vm8138, %v8726, 0.0
  %9019 = vadd.xlane.f32.xlu0 %v9018
  %v9020 = vpop.xlane.xlu0 %9019
  %v9021 = vsel %vm8138, %v8728, 0.0
  %9022 = vadd.xlane.f32.xlu0 %v9021
  %v9023 = vpop.xlane.xlu0 %9022
  %v9024 = vsel %vm8138, %v8730, 0.0
  %9025 = vadd.xlane.f32.xlu0 %v9024
  %v9026 = vpop.xlane.xlu0 %9025
  %v9027 = vsel %vm8138, %v8732, 0.0
  %9028 = vadd.xlane.f32.xlu0 %v9027
  %v9029 = vpop.xlane.xlu0 %9028
  %v9030 = vsel %vm8138, %v8734, 0.0
  %9031 = vadd.xlane.f32.xlu0 %v9030
  %v9032 = vpop.xlane.xlu0 %9031
  %v9033 = vsel %vm8138, %v8736, 0.0
  %9034 = vadd.xlane.f32.xlu0 %v9033
  %v9035 = vpop.xlane.xlu0 %9034
  %v9036 = vsel %vm8138, %v8738, 0.0
  %9037 = vadd.xlane.f32.xlu0 %v9036
  %v9038 = vpop.xlane.xlu0 %9037
  %v9039 = vsel %vm8138, %v8740, 0.0
  %9040 = vadd.xlane.f32.xlu0 %v9039
  %v9041 = vpop.xlane.xlu0 %9040
  %v9042 = vsel %vm8138, %v8742, 0.0
  %9043 = vadd.xlane.f32.xlu0 %v9042
  %v9044 = vpop.xlane.xlu0 %9043
  %v9045 = vsel %vm8138, %v8744, 0.0
  %9046 = vadd.xlane.f32.xlu0 %v9045
  %v9047 = vpop.xlane.xlu0 %9046
  %v9048 = vsel %vm8138, %v8746, 0.0
  %9049 = vadd.xlane.f32.xlu0 %v9048
  %v9050 = vpop.xlane.xlu0 %9049
  %v9051 = vsel %vm8138, %v8748, 0.0
  %9052 = vadd.xlane.f32.xlu0 %v9051
  %v9053 = vpop.xlane.xlu0 %9052
  %v9054 = vsel %vm8138, %v8750, 0.0
  %9055 = vadd.xlane.f32.xlu0 %v9054
  %v9056 = vpop.xlane.xlu0 %9055
  %v9057 = vsel %vm8138, %v8752, 0.0
  %9058 = vadd.xlane.f32.xlu0 %v9057
  %v9059 = vpop.xlane.xlu0 %9058
  %v9060 = vsel %vm8138, %v8754, 0.0
  %9061 = vadd.xlane.f32.xlu0 %v9060
  %v9062 = vpop.xlane.xlu0 %9061
  %v9063 = vsel %vm8138, %v8756, 0.0
  %9064 = vadd.xlane.f32.xlu0 %v9063
  %v9065 = vpop.xlane.xlu0 %9064
  %v9066 = vsel %vm8138, %v8758, 0.0
  %9067 = vadd.xlane.f32.xlu0 %v9066
  %v9068 = vpop.xlane.xlu0 %9067
  %v9069 = vsel %vm8138, %v8760, 0.0
  %9070 = vadd.xlane.f32.xlu0 %v9069
  %v9071 = vpop.xlane.xlu0 %9070
  %v9072 = vsel %vm8138, %v8762, 0.0
  %9073 = vadd.xlane.f32.xlu0 %v9072
  %v9074 = vpop.xlane.xlu0 %9073
  %v9075 = vsel %vm8138, %v8764, 0.0
  %9076 = vadd.xlane.f32.xlu0 %v9075
  %v9077 = vpop.xlane.xlu0 %9076
  %v9078 = vsel %vm8138, %v8766, 0.0
  %9079 = vadd.xlane.f32.xlu0 %v9078
  %v9080 = vpop.xlane.xlu0 %9079
  %v9081 = vsel %vm8138, %v8768, 0.0
  %9082 = vadd.xlane.f32.xlu0 %v9081
  %v9083 = vpop.xlane.xlu0 %9082
  %v9084 = vsel %vm8138, %v8770, 0.0
  %9085 = vadd.xlane.f32.xlu0 %v9084
  %v9086 = vpop.xlane.xlu0 %9085
  %v9087 = vsel %vm8138, %v8772, 0.0
  %9088 = vadd.xlane.f32.xlu0 %v9087
  %v9089 = vpop.xlane.xlu0 %9088
  %v9090 = vsel %vm8138, %v8774, 0.0
  %9091 = vadd.xlane.f32.xlu0 %v9090
  %v9092 = vpop.xlane.xlu0 %9091
  %v9093 = vsel %vm8138, %v8776, 0.0
  %9094 = vadd.xlane.f32.xlu0 %v9093
  %v9095 = vpop.xlane.xlu0 %9094
  %v9096 = vsel %vm8138, %v8778, 0.0
  %9097 = vadd.xlane.f32.xlu0 %v9096
  %v9098 = vpop.xlane.xlu0 %9097
  %v9099 = vsel %vm8138, %v8780, 0.0
  %9100 = vadd.xlane.f32.xlu0 %v9099
  %v9101 = vpop.xlane.xlu0 %9100
  %v9102 = vsel %vm8138, %v8782, 0.0
  %9103 = vadd.xlane.f32.xlu0 %v9102
  %v9104 = vpop.xlane.xlu0 %9103
  %v9105 = vsel %vm8138, %v8784, 0.0
  %9106 = vadd.xlane.f32.xlu0 %v9105
  %v9107 = vpop.xlane.xlu0 %9106
  %v9108 = vsel %vm8138, %v8786, 0.0
  %9109 = vadd.xlane.f32.xlu0 %v9108
  %v9110 = vpop.xlane.xlu0 %9109
  %v9111 = vsel %vm8138, %v8788, 0.0
  %9112 = vadd.xlane.f32.xlu0 %v9111
  %v9113 = vpop.xlane.xlu0 %9112
  %v9114 = vsel %vm8138, %v8790, 0.0
  %9115 = vadd.xlane.f32.xlu0 %v9114
  %v9116 = vpop.xlane.xlu0 %9115
  %v9117 = vsel %vm8138, %v8792, 0.0
  %9118 = vadd.xlane.f32.xlu0 %v9117
  %v9119 = vpop.xlane.xlu0 %9118
  %v9120 = vsel %vm8138, %v8794, 0.0
  %9121 = vadd.xlane.f32.xlu0 %v9120
  %v9122 = vpop.xlane.xlu0 %9121
  %v9123 = vsel %vm8138, %v8796, 0.0
  %9124 = vadd.xlane.f32.xlu0 %v9123
  %v9125 = vpop.xlane.xlu0 %9124
  %v9126 = vsel %vm8138, %v8798, 0.0
  %9127 = vadd.xlane.f32.xlu0 %v9126
  %v9128 = vpop.xlane.xlu0 %9127
  %v9129 = vsel %vm8138, %v8800, 0.0
  %9130 = vadd.xlane.f32.xlu0 %v9129
  %v9131 = vpop.xlane.xlu0 %9130
  %v9132 = vsel %vm8138, %v8802, 0.0
  %9133 = vadd.xlane.f32.xlu0 %v9132
  %v9134 = vpop.xlane.xlu0 %9133
  %v9135 = vsel %vm8138, %v8804, 0.0
  %9136 = vadd.xlane.f32.xlu0 %v9135
  %v9137 = vpop.xlane.xlu0 %9136
  %v9138 = vsel %vm8138, %v8806, 0.0
  %9139 = vadd.xlane.f32.xlu0 %v9138
  %v9140 = vpop.xlane.xlu0 %9139
  %v9141 = vsel %vm8138, %v8808, 0.0
  %9142 = vadd.xlane.f32.xlu0 %v9141
  %v9143 = vpop.xlane.xlu0 %9142
  %v9144 = vsel %vm8138, %v8810, 0.0
  %9145 = vadd.xlane.f32.xlu0 %v9144
  %v9146 = vpop.xlane.xlu0 %9145
  %v9147 = vsel %vm8138, %v8812, 0.0
  %9148 = vadd.xlane.f32.xlu0 %v9147
  %v9149 = vpop.xlane.xlu0 %9148
  %v9150 = vsel %vm8138, %v8814, 0.0
  %9151 = vadd.xlane.f32.xlu0 %v9150
  %v9152 = vpop.xlane.xlu0 %9151
  %v9153 = vsel %vm8138, %v8816, 0.0
  %9154 = vadd.xlane.f32.xlu0 %v9153
  %v9155 = vpop.xlane.xlu0 %9154
  %v9156 = vsel %vm8138, %v8818, 0.0
  %9157 = vadd.xlane.f32.xlu0 %v9156
  %v9158 = vpop.xlane.xlu0 %9157
  %v9159 = vsel %vm8138, %v8820, 0.0
  %9160 = vadd.xlane.f32.xlu0 %v9159
  %v9161 = vpop.xlane.xlu0 %9160
  %v9162 = vsel %vm8138, %v8822, 0.0
  %9163 = vadd.xlane.f32.xlu0 %v9162
  %v9164 = vpop.xlane.xlu0 %9163
  %v9165 = vsel %vm8138, %v8824, 0.0
  %9166 = vadd.xlane.f32.xlu0 %v9165
  %v9167 = vpop.xlane.xlu0 %9166
  %v9168 = vsel %vm8138, %v8826, 0.0
  %9169 = vadd.xlane.f32.xlu0 %v9168
  %v9170 = vpop.xlane.xlu0 %9169
  %v9171 = vsel %vm8138, %v8828, 0.0
  %9172 = vadd.xlane.f32.xlu0 %v9171
  %v9173 = vpop.xlane.xlu0 %9172
  %v9174 = vsel %vm8138, %v8830, 0.0
  %9175 = vadd.xlane.f32.xlu0 %v9174
  %v9176 = vpop.xlane.xlu0 %9175
  %v9177 = vsel %vm8138, %v8832, 0.0
  %9178 = vadd.xlane.f32.xlu0 %v9177
  %v9179 = vpop.xlane.xlu0 %9178
  %v9180 = vsel %vm8138, %v8834, 0.0
  %9181 = vadd.xlane.f32.xlu0 %v9180
  %v9182 = vpop.xlane.xlu0 %9181
  %v9183 = vsel %vm8138, %v8836, 0.0
  %9184 = vadd.xlane.f32.xlu0 %v9183
  %v9185 = vpop.xlane.xlu0 %9184
  %v9186 = vsel %vm8138, %v8838, 0.0
  %9187 = vadd.xlane.f32.xlu0 %v9186
  %v9188 = vpop.xlane.xlu0 %9187
  %v9189 = vsel %vm8138, %v8840, 0.0
  %9190 = vadd.xlane.f32.xlu0 %v9189
  %v9191 = vpop.xlane.xlu0 %9190
  %v9192 = vsel %vm8138, %v8842, 0.0
  %9193 = vadd.xlane.f32.xlu0 %v9192
  %v9194 = vpop.xlane.xlu0 %9193
  %v9195 = vsel %vm8138, %v8844, 0.0
  %9196 = vadd.xlane.f32.xlu0 %v9195
  %v9197 = vpop.xlane.xlu0 %9196
  %v9198 = vsel %vm8138, %v8846, 0.0
  %9199 = vadd.xlane.f32.xlu0 %v9198
  %v9200 = vpop.xlane.xlu0 %9199
  %v9201 = vsel %vm8138, %v8848, 0.0
  %9202 = vadd.xlane.f32.xlu0 %v9201
  %v9203 = vpop.xlane.xlu0 %9202
  %v9204 = vsel %vm8138, %v8850, 0.0
  %9205 = vadd.xlane.f32.xlu0 %v9204
  %v9206 = vpop.xlane.xlu0 %9205
  %v9207 = vsel %vm8138, %v8852, 0.0
  %9208 = vadd.xlane.f32.xlu0 %v9207
  %v9209 = vpop.xlane.xlu0 %9208
  %v9210 = vsel %vm8138, %v8854, 0.0
  %9211 = vadd.xlane.f32.xlu0 %v9210
  %v9212 = vpop.xlane.xlu0 %9211
  %v9213 = vsel %vm8138, %v8856, 0.0
  %9214 = vadd.xlane.f32.xlu0 %v9213
  %v9215 = vpop.xlane.xlu0 %9214
  %v9216 = vsel %vm8138, %v8858, 0.0
  %9217 = vadd.xlane.f32.xlu0 %v9216
  %v9218 = vpop.xlane.xlu0 %9217
  %v9219 = vsel %vm8138, %v8860, 0.0
  %9220 = vadd.xlane.f32.xlu0 %v9219
  %v9221 = vpop.xlane.xlu0 %9220
  %v9222 = vsel %vm8138, %v8862, 0.0
  %9223 = vadd.xlane.f32.xlu0 %v9222
  %v9224 = vpop.xlane.xlu0 %9223
  %v9225 = vsel %vm8138, %v8864, 0.0
  %9226 = vadd.xlane.f32.xlu0 %v9225
  %v9227 = vpop.xlane.xlu0 %9226
  %v9228 = vsel %vm8138, %v8866, 0.0
  %9229 = vadd.xlane.f32.xlu0 %v9228
  %v9230 = vpop.xlane.xlu0 %9229
  %v9231 = vsel %vm8138, %v8868, 0.0
  %9232 = vadd.xlane.f32.xlu0 %v9231
  %v9233 = vpop.xlane.xlu0 %9232
  %v9234 = vsel %vm8138, %v8870, 0.0
  %9235 = vadd.xlane.f32.xlu0 %v9234
  %v9236 = vpop.xlane.xlu0 %9235
  %v9237 = vsel %vm8138, %v8872, 0.0
  %9238 = vadd.xlane.f32.xlu0 %v9237
  %v9239 = vpop.xlane.xlu0 %9238
  %v9240 = vsel %vm8138, %v8874, 0.0
  %9241 = vadd.xlane.f32.xlu0 %v9240
  %v9242 = vpop.xlane.xlu0 %9241
  %v9243 = vsel %vm8138, %v8876, 0.0
  %9244 = vadd.xlane.f32.xlu0 %v9243
  %v9245 = vpop.xlane.xlu0 %9244
  %v9246 = vsel %vm8138, %v8878, 0.0
  %9247 = vadd.xlane.f32.xlu0 %v9246
  %v9248 = vpop.xlane.xlu0 %9247
  %v9249 = vsel %vm8138, %v8880, 0.0
  %9250 = vadd.xlane.f32.xlu0 %v9249
  %v9251 = vpop.xlane.xlu0 %9250
  %v9252 = vsel %vm8138, %v8882, 0.0
  %9253 = vadd.xlane.f32.xlu0 %v9252
  %v9254 = vpop.xlane.xlu0 %9253
  %v9255 = vsel %vm8138, %v8884, 0.0
  %9256 = vadd.xlane.f32.xlu0 %v9255
  %v9257 = vpop.xlane.xlu0 %9256
  %v9258 = vsel %vm8138, %v8886, 0.0
  %9259 = vadd.xlane.f32.xlu0 %v9258
  %v9260 = vpop.xlane.xlu0 %9259
  %v9261 = vsel %vm8138, %v8888, 0.0
  %9262 = vadd.xlane.f32.xlu0 %v9261
  %v9263 = vpop.xlane.xlu0 %9262
  %v9264 = vrcp.pop %v8891
  %v9265 = vmul.f32 %v8891, %v9264
  %v9266 = vsub.f32 1.0, %v9265
  %v9267 = vmul.f32 %v9264, %v9266
  %v9268 = vadd.f32 %v9264, %v9267
  %vm9269 = vweird.f32 %v8891
  %vm9270 = vweird.f32 %v9264
  %vm9271 = vmor %vm9269, %vm9270
  %v9272 = vsel %vm9271, %v9264, %v9268
  %v9273 = vand.u32 2147483647, %v8891
  %vm9274 = vcmp.eq.f32.partialorder %v9273, 8.507059e+37
  %v9275 = vand.u32 %v8891, 2147483648
  %v9276 = vor.u32 1.1754944e-38, %v9275
  %v9277 = vsel %vm9274, %v9276, %v9272
  %v9278 = vmul.f32 %v8640, %v9277
  %v9279 = vrcp.pop %v8894
  %v9280 = vmul.f32 %v8894, %v9279
  %v9281 = vsub.f32 1.0, %v9280
  %v9282 = vmul.f32 %v9279, %v9281
  %v9283 = vadd.f32 %v9279, %v9282
  %vm9284 = vweird.f32 %v8894
  %vm9285 = vweird.f32 %v9279
  %vm9286 = vmor %vm9284, %vm9285
  %v9287 = vsel %vm9286, %v9279, %v9283
  %v9288 = vand.u32 2147483647, %v8894
  %vm9289 = vcmp.eq.f32.partialorder %v9288, 8.507059e+37
  %v9290 = vand.u32 %v8894, 2147483648
  %v9291 = vor.u32 1.1754944e-38, %v9290
  %v9292 = vsel %vm9289, %v9291, %v9287
  %v9293 = vmul.f32 %v8642, %v9292
  %v9294 = vrcp.pop %v8897
  %v9295 = vmul.f32 %v8897, %v9294
  %v9296 = vsub.f32 1.0, %v9295
  %v9297 = vmul.f32 %v9294, %v9296
  %v9298 = vadd.f32 %v9294, %v9297
  %vm9299 = vweird.f32 %v8897
  %vm9300 = vweird.f32 %v9294
  %vm9301 = vmor %vm9299, %vm9300
  %v9302 = vsel %vm9301, %v9294, %v9298
  %v9303 = vand.u32 2147483647, %v8897
  %vm9304 = vcmp.eq.f32.partialorder %v9303, 8.507059e+37
  %v9305 = vand.u32 %v8897, 2147483648
  %v9306 = vor.u32 1.1754944e-38, %v9305
  %v9307 = vsel %vm9304, %v9306, %v9302
  %v9308 = vmul.f32 %v8644, %v9307
  %v9309 = vrcp.pop %v8900
  %v9310 = vmul.f32 %v8900, %v9309
  %v9311 = vsub.f32 1.0, %v9310
  %v9312 = vmul.f32 %v9309, %v9311
  %v9313 = vadd.f32 %v9309, %v9312
  %vm9314 = vweird.f32 %v8900
  %vm9315 = vweird.f32 %v9309
  %vm9316 = vmor %vm9314, %vm9315
  %v9317 = vsel %vm9316, %v9309, %v9313
  %v9318 = vand.u32 2147483647, %v8900
  %vm9319 = vcmp.eq.f32.partialorder %v9318, 8.507059e+37
  %v9320 = vand.u32 %v8900, 2147483648
  %v9321 = vor.u32 1.1754944e-38, %v9320
  %v9322 = vsel %vm9319, %v9321, %v9317
  %v9323 = vmul.f32 %v8646, %v9322
  %v9324 = vrcp.pop %v8903
  %v9325 = vmul.f32 %v8903, %v9324
  %v9326 = vsub.f32 1.0, %v9325
  %v9327 = vmul.f32 %v9324, %v9326
  %v9328 = vadd.f32 %v9324, %v9327
  %vm9329 = vweird.f32 %v8903
  %vm9330 = vweird.f32 %v9324
  %vm9331 = vmor %vm9329, %vm9330
  %v9332 = vsel %vm9331, %v9324, %v9328
  %v9333 = vand.u32 2147483647, %v8903
  %vm9334 = vcmp.eq.f32.partialorder %v9333, 8.507059e+37
  %v9335 = vand.u32 %v8903, 2147483648
  %v9336 = vor.u32 1.1754944e-38, %v9335
  %v9337 = vsel %vm9334, %v9336, %v9332
  %v9338 = vmul.f32 %v8648, %v9337
  %v9339 = vrcp.pop %v8906
  %v9340 = vmul.f32 %v8906, %v9339
  %v9341 = vsub.f32 1.0, %v9340
  %v9342 = vmul.f32 %v9339, %v9341
  %v9343 = vadd.f32 %v9339, %v9342
  %vm9344 = vweird.f32 %v8906
  %vm9345 = vweird.f32 %v9339
  %vm9346 = vmor %vm9344, %vm9345
  %v9347 = vsel %vm9346, %v9339, %v9343
  %v9348 = vand.u32 2147483647, %v8906
  %vm9349 = vcmp.eq.f32.partialorder %v9348, 8.507059e+37
  %v9350 = vand.u32 %v8906, 2147483648
  %v9351 = vor.u32 1.1754944e-38, %v9350
  %v9352 = vsel %vm9349, %v9351, %v9347
  %v9353 = vmul.f32 %v8650, %v9352
  %v9354 = vrcp.pop %v8909
  %v9355 = vmul.f32 %v8909, %v9354
  %v9356 = vsub.f32 1.0, %v9355
  %v9357 = vmul.f32 %v9354, %v9356
  %v9358 = vadd.f32 %v9354, %v9357
  %vm9359 = vweird.f32 %v8909
  %vm9360 = vweird.f32 %v9354
  %vm9361 = vmor %vm9359, %vm9360
  %v9362 = vsel %vm9361, %v9354, %v9358
  %v9363 = vand.u32 2147483647, %v8909
  %vm9364 = vcmp.eq.f32.partialorder %v9363, 8.507059e+37
  %v9365 = vand.u32 %v8909, 2147483648
  %v9366 = vor.u32 1.1754944e-38, %v9365
  %v9367 = vsel %vm9364, %v9366, %v9362
  %v9368 = vmul.f32 %v8652, %v9367
  %v9369 = vrcp.pop %v8912
  %v9370 = vmul.f32 %v8912, %v9369
  %v9371 = vsub.f32 1.0, %v9370
  %v9372 = vmul.f32 %v9369, %v9371
  %v9373 = vadd.f32 %v9369, %v9372
  %vm9374 = vweird.f32 %v8912
  %vm9375 = vweird.f32 %v9369
  %vm9376 = vmor %vm9374, %vm9375
  %v9377 = vsel %vm9376, %v9369, %v9373
  %v9378 = vand.u32 2147483647, %v8912
  %vm9379 = vcmp.eq.f32.partialorder %v9378, 8.507059e+37
  %v9380 = vand.u32 %v8912, 2147483648
  %v9381 = vor.u32 1.1754944e-38, %v9380
  %v9382 = vsel %vm9379, %v9381, %v9377
  %v9383 = vmul.f32 %v8654, %v9382
  %v9384 = vrcp.pop %v8915
  %v9385 = vmul.f32 %v8915, %v9384
  %v9386 = vsub.f32 1.0, %v9385
  %v9387 = vmul.f32 %v9384, %v9386
  %v9388 = vadd.f32 %v9384, %v9387
  %vm9389 = vweird.f32 %v8915
  %vm9390 = vweird.f32 %v9384
  %vm9391 = vmor %vm9389, %vm9390
  %v9392 = vsel %vm9391, %v9384, %v9388
  %v9393 = vand.u32 2147483647, %v8915
  %vm9394 = vcmp.eq.f32.partialorder %v9393, 8.507059e+37
  %v9395 = vand.u32 %v8915, 2147483648
  %v9396 = vor.u32 1.1754944e-38, %v9395
  %v9397 = vsel %vm9394, %v9396, %v9392
  %v9398 = vmul.f32 %v8656, %v9397
  %v9399 = vrcp.pop %v8918
  %v9400 = vmul.f32 %v8918, %v9399
  %v9401 = vsub.f32 1.0, %v9400
  %v9402 = vmul.f32 %v9399, %v9401
  %v9403 = vadd.f32 %v9399, %v9402
  %vm9404 = vweird.f32 %v8918
  %vm9405 = vweird.f32 %v9399
  %vm9406 = vmor %vm9404, %vm9405
  %v9407 = vsel %vm9406, %v9399, %v9403
  %v9408 = vand.u32 2147483647, %v8918
  %vm9409 = vcmp.eq.f32.partialorder %v9408, 8.507059e+37
  %v9410 = vand.u32 %v8918, 2147483648
  %v9411 = vor.u32 1.1754944e-38, %v9410
  %v9412 = vsel %vm9409, %v9411, %v9407
  %v9413 = vmul.f32 %v8658, %v9412
  %v9414 = vrcp.pop %v8921
  %v9415 = vmul.f32 %v8921, %v9414
  %v9416 = vsub.f32 1.0, %v9415
  %v9417 = vmul.f32 %v9414, %v9416
  %v9418 = vadd.f32 %v9414, %v9417
  %vm9419 = vweird.f32 %v8921
  %vm9420 = vweird.f32 %v9414
  %vm9421 = vmor %vm9419, %vm9420
  %v9422 = vsel %vm9421, %v9414, %v9418
  %v9423 = vand.u32 2147483647, %v8921
  %vm9424 = vcmp.eq.f32.partialorder %v9423, 8.507059e+37
  %v9425 = vand.u32 %v8921, 2147483648
  %v9426 = vor.u32 1.1754944e-38, %v9425
  %v9427 = vsel %vm9424, %v9426, %v9422
  %v9428 = vmul.f32 %v8660, %v9427
  %v9429 = vrcp.pop %v8924
  %v9430 = vmul.f32 %v8924, %v9429
  %v9431 = vsub.f32 1.0, %v9430
  %v9432 = vmul.f32 %v9429, %v9431
  %v9433 = vadd.f32 %v9429, %v9432
  %vm9434 = vweird.f32 %v8924
  %vm9435 = vweird.f32 %v9429
  %vm9436 = vmor %vm9434, %vm9435
  %v9437 = vsel %vm9436, %v9429, %v9433
  %v9438 = vand.u32 2147483647, %v8924
  %vm9439 = vcmp.eq.f32.partialorder %v9438, 8.507059e+37
  %v9440 = vand.u32 %v8924, 2147483648
  %v9441 = vor.u32 1.1754944e-38, %v9440
  %v9442 = vsel %vm9439, %v9441, %v9437
  %v9443 = vmul.f32 %v8662, %v9442
  %v9444 = vrcp.pop %v8927
  %v9445 = vmul.f32 %v8927, %v9444
  %v9446 = vsub.f32 1.0, %v9445
  %v9447 = vmul.f32 %v9444, %v9446
  %v9448 = vadd.f32 %v9444, %v9447
  %vm9449 = vweird.f32 %v8927
  %vm9450 = vweird.f32 %v9444
  %vm9451 = vmor %vm9449, %vm9450
  %v9452 = vsel %vm9451, %v9444, %v9448
  %v9453 = vand.u32 2147483647, %v8927
  %vm9454 = vcmp.eq.f32.partialorder %v9453, 8.507059e+37
  %v9455 = vand.u32 %v8927, 2147483648
  %v9456 = vor.u32 1.1754944e-38, %v9455
  %v9457 = vsel %vm9454, %v9456, %v9452
  %v9458 = vmul.f32 %v8664, %v9457
  %v9459 = vrcp.pop %v8930
  %v9460 = vmul.f32 %v8930, %v9459
  %v9461 = vsub.f32 1.0, %v9460
  %v9462 = vmul.f32 %v9459, %v9461
  %v9463 = vadd.f32 %v9459, %v9462
  %vm9464 = vweird.f32 %v8930
  %vm9465 = vweird.f32 %v9459
  %vm9466 = vmor %vm9464, %vm9465
  %v9467 = vsel %vm9466, %v9459, %v9463
  %v9468 = vand.u32 2147483647, %v8930
  %vm9469 = vcmp.eq.f32.partialorder %v9468, 8.507059e+37
  %v9470 = vand.u32 %v8930, 2147483648
  %v9471 = vor.u32 1.1754944e-38, %v9470
  %v9472 = vsel %vm9469, %v9471, %v9467
  %v9473 = vmul.f32 %v8666, %v9472
  %v9474 = vrcp.pop %v8933
  %v9475 = vmul.f32 %v8933, %v9474
  %v9476 = vsub.f32 1.0, %v9475
  %v9477 = vmul.f32 %v9474, %v9476
  %v9478 = vadd.f32 %v9474, %v9477
  %vm9479 = vweird.f32 %v8933
  %vm9480 = vweird.f32 %v9474
  %vm9481 = vmor %vm9479, %vm9480
  %v9482 = vsel %vm9481, %v9474, %v9478
  %v9483 = vand.u32 2147483647, %v8933
  %vm9484 = vcmp.eq.f32.partialorder %v9483, 8.507059e+37
  %v9485 = vand.u32 %v8933, 2147483648
  %v9486 = vor.u32 1.1754944e-38, %v9485
  %v9487 = vsel %vm9484, %v9486, %v9482
  %v9488 = vmul.f32 %v8668, %v9487
  %v9489 = vrcp.pop %v8936
  %v9490 = vmul.f32 %v8936, %v9489
  %v9491 = vsub.f32 1.0, %v9490
  %v9492 = vmul.f32 %v9489, %v9491
  %v9493 = vadd.f32 %v9489, %v9492
  %vm9494 = vweird.f32 %v8936
  %vm9495 = vweird.f32 %v9489
  %vm9496 = vmor %vm9494, %vm9495
  %v9497 = vsel %vm9496, %v9489, %v9493
  %v9498 = vand.u32 2147483647, %v8936
  %vm9499 = vcmp.eq.f32.partialorder %v9498, 8.507059e+37
  %v9500 = vand.u32 %v8936, 2147483648
  %v9501 = vor.u32 1.1754944e-38, %v9500
  %v9502 = vsel %vm9499, %v9501, %v9497
  %v9503 = vmul.f32 %v8670, %v9502
  %v9504 = vrcp.pop %v8939
  %v9505 = vmul.f32 %v8939, %v9504
  %v9506 = vsub.f32 1.0, %v9505
  %v9507 = vmul.f32 %v9504, %v9506
  %v9508 = vadd.f32 %v9504, %v9507
  %vm9509 = vweird.f32 %v8939
  %vm9510 = vweird.f32 %v9504
  %vm9511 = vmor %vm9509, %vm9510
  %v9512 = vsel %vm9511, %v9504, %v9508
  %v9513 = vand.u32 2147483647, %v8939
  %vm9514 = vcmp.eq.f32.partialorder %v9513, 8.507059e+37
  %v9515 = vand.u32 %v8939, 2147483648
  %v9516 = vor.u32 1.1754944e-38, %v9515
  %v9517 = vsel %vm9514, %v9516, %v9512
  %v9518 = vmul.f32 %v8672, %v9517
  %v9519 = vrcp.pop %v8942
  %v9520 = vmul.f32 %v8942, %v9519
  %v9521 = vsub.f32 1.0, %v9520
  %v9522 = vmul.f32 %v9519, %v9521
  %v9523 = vadd.f32 %v9519, %v9522
  %vm9524 = vweird.f32 %v8942
  %vm9525 = vweird.f32 %v9519
  %vm9526 = vmor %vm9524, %vm9525
  %v9527 = vsel %vm9526, %v9519, %v9523
  %v9528 = vand.u32 2147483647, %v8942
  %vm9529 = vcmp.eq.f32.partialorder %v9528, 8.507059e+37
  %v9530 = vand.u32 %v8942, 2147483648
  %v9531 = vor.u32 1.1754944e-38, %v9530
  %v9532 = vsel %vm9529, %v9531, %v9527
  %v9533 = vmul.f32 %v8674, %v9532
  %v9534 = vrcp.pop %v8945
  %v9535 = vmul.f32 %v8945, %v9534
  %v9536 = vsub.f32 1.0, %v9535
  %v9537 = vmul.f32 %v9534, %v9536
  %v9538 = vadd.f32 %v9534, %v9537
  %vm9539 = vweird.f32 %v8945
  %vm9540 = vweird.f32 %v9534
  %vm9541 = vmor %vm9539, %vm9540
  %v9542 = vsel %vm9541, %v9534, %v9538
  %v9543 = vand.u32 2147483647, %v8945
  %vm9544 = vcmp.eq.f32.partialorder %v9543, 8.507059e+37
  %v9545 = vand.u32 %v8945, 2147483648
  %v9546 = vor.u32 1.1754944e-38, %v9545
  %v9547 = vsel %vm9544, %v9546, %v9542
  %v9548 = vmul.f32 %v8676, %v9547
  %v9549 = vrcp.pop %v8948
  %v9550 = vmul.f32 %v8948, %v9549
  %v9551 = vsub.f32 1.0, %v9550
  %v9552 = vmul.f32 %v9549, %v9551
  %v9553 = vadd.f32 %v9549, %v9552
  %vm9554 = vweird.f32 %v8948
  %vm9555 = vweird.f32 %v9549
  %vm9556 = vmor %vm9554, %vm9555
  %v9557 = vsel %vm9556, %v9549, %v9553
  %v9558 = vand.u32 2147483647, %v8948
  %vm9559 = vcmp.eq.f32.partialorder %v9558, 8.507059e+37
  %v9560 = vand.u32 %v8948, 2147483648
  %v9561 = vor.u32 1.1754944e-38, %v9560
  %v9562 = vsel %vm9559, %v9561, %v9557
  %v9563 = vmul.f32 %v8678, %v9562
  %v9564 = vrcp.pop %v8951
  %v9565 = vmul.f32 %v8951, %v9564
  %v9566 = vsub.f32 1.0, %v9565
  %v9567 = vmul.f32 %v9564, %v9566
  %v9568 = vadd.f32 %v9564, %v9567
  %vm9569 = vweird.f32 %v8951
  %vm9570 = vweird.f32 %v9564
  %vm9571 = vmor %vm9569, %vm9570
  %v9572 = vsel %vm9571, %v9564, %v9568
  %v9573 = vand.u32 2147483647, %v8951
  %vm9574 = vcmp.eq.f32.partialorder %v9573, 8.507059e+37
  %v9575 = vand.u32 %v8951, 2147483648
  %v9576 = vor.u32 1.1754944e-38, %v9575
  %v9577 = vsel %vm9574, %v9576, %v9572
  %v9578 = vmul.f32 %v8680, %v9577
  %v9579 = vrcp.pop %v8954
  %v9580 = vmul.f32 %v8954, %v9579
  %v9581 = vsub.f32 1.0, %v9580
  %v9582 = vmul.f32 %v9579, %v9581
  %v9583 = vadd.f32 %v9579, %v9582
  %vm9584 = vweird.f32 %v8954
  %vm9585 = vweird.f32 %v9579
  %vm9586 = vmor %vm9584, %vm9585
  %v9587 = vsel %vm9586, %v9579, %v9583
  %v9588 = vand.u32 2147483647, %v8954
  %vm9589 = vcmp.eq.f32.partialorder %v9588, 8.507059e+37
  %v9590 = vand.u32 %v8954, 2147483648
  %v9591 = vor.u32 1.1754944e-38, %v9590
  %v9592 = vsel %vm9589, %v9591, %v9587
  %v9593 = vmul.f32 %v8682, %v9592
  %v9594 = vrcp.pop %v8957
  %v9595 = vmul.f32 %v8957, %v9594
  %v9596 = vsub.f32 1.0, %v9595
  %v9597 = vmul.f32 %v9594, %v9596
  %v9598 = vadd.f32 %v9594, %v9597
  %vm9599 = vweird.f32 %v8957
  %vm9600 = vweird.f32 %v9594
  %vm9601 = vmor %vm9599, %vm9600
  %v9602 = vsel %vm9601, %v9594, %v9598
  %v9603 = vand.u32 2147483647, %v8957
  %vm9604 = vcmp.eq.f32.partialorder %v9603, 8.507059e+37
  %v9605 = vand.u32 %v8957, 2147483648
  %v9606 = vor.u32 1.1754944e-38, %v9605
  %v9607 = vsel %vm9604, %v9606, %v9602
  %v9608 = vmul.f32 %v8684, %v9607
  %v9609 = vrcp.pop %v8960
  %v9610 = vmul.f32 %v8960, %v9609
  %v9611 = vsub.f32 1.0, %v9610
  %v9612 = vmul.f32 %v9609, %v9611
  %v9613 = vadd.f32 %v9609, %v9612
  %vm9614 = vweird.f32 %v8960
  %vm9615 = vweird.f32 %v9609
  %vm9616 = vmor %vm9614, %vm9615
  %v9617 = vsel %vm9616, %v9609, %v9613
  %v9618 = vand.u32 2147483647, %v8960
  %vm9619 = vcmp.eq.f32.partialorder %v9618, 8.507059e+37
  %v9620 = vand.u32 %v8960, 2147483648
  %v9621 = vor.u32 1.1754944e-38, %v9620
  %v9622 = vsel %vm9619, %v9621, %v9617
  %v9623 = vmul.f32 %v8686, %v9622
  %v9624 = vrcp.pop %v8963
  %v9625 = vmul.f32 %v8963, %v9624
  %v9626 = vsub.f32 1.0, %v9625
  %v9627 = vmul.f32 %v9624, %v9626
  %v9628 = vadd.f32 %v9624, %v9627
  %vm9629 = vweird.f32 %v8963
  %vm9630 = vweird.f32 %v9624
  %vm9631 = vmor %vm9629, %vm9630
  %v9632 = vsel %vm9631, %v9624, %v9628
  %v9633 = vand.u32 2147483647, %v8963
  %vm9634 = vcmp.eq.f32.partialorder %v9633, 8.507059e+37
  %v9635 = vand.u32 %v8963, 2147483648
  %v9636 = vor.u32 1.1754944e-38, %v9635
  %v9637 = vsel %vm9634, %v9636, %v9632
  %v9638 = vmul.f32 %v8688, %v9637
  %v9639 = vrcp.pop %v8966
  %v9640 = vmul.f32 %v8966, %v9639
  %v9641 = vsub.f32 1.0, %v9640
  %v9642 = vmul.f32 %v9639, %v9641
  %v9643 = vadd.f32 %v9639, %v9642
  %vm9644 = vweird.f32 %v8966
  %vm9645 = vweird.f32 %v9639
  %vm9646 = vmor %vm9644, %vm9645
  %v9647 = vsel %vm9646, %v9639, %v9643
  %v9648 = vand.u32 2147483647, %v8966
  %vm9649 = vcmp.eq.f32.partialorder %v9648, 8.507059e+37
  %v9650 = vand.u32 %v8966, 2147483648
  %v9651 = vor.u32 1.1754944e-38, %v9650
  %v9652 = vsel %vm9649, %v9651, %v9647
  %v9653 = vmul.f32 %v8690, %v9652
  %v9654 = vrcp.pop %v8969
  %v9655 = vmul.f32 %v8969, %v9654
  %v9656 = vsub.f32 1.0, %v9655
  %v9657 = vmul.f32 %v9654, %v9656
  %v9658 = vadd.f32 %v9654, %v9657
  %vm9659 = vweird.f32 %v8969
  %vm9660 = vweird.f32 %v9654
  %vm9661 = vmor %vm9659, %vm9660
  %v9662 = vsel %vm9661, %v9654, %v9658
  %v9663 = vand.u32 2147483647, %v8969
  %vm9664 = vcmp.eq.f32.partialorder %v9663, 8.507059e+37
  %v9665 = vand.u32 %v8969, 2147483648
  %v9666 = vor.u32 1.1754944e-38, %v9665
  %v9667 = vsel %vm9664, %v9666, %v9662
  %v9668 = vmul.f32 %v8692, %v9667
  %v9669 = vrcp.pop %v8972
  %v9670 = vmul.f32 %v8972, %v9669
  %v9671 = vsub.f32 1.0, %v9670
  %v9672 = vmul.f32 %v9669, %v9671
  %v9673 = vadd.f32 %v9669, %v9672
  %vm9674 = vweird.f32 %v8972
  %vm9675 = vweird.f32 %v9669
  %vm9676 = vmor %vm9674, %vm9675
  %v9677 = vsel %vm9676, %v9669, %v9673
  %v9678 = vand.u32 2147483647, %v8972
  %vm9679 = vcmp.eq.f32.partialorder %v9678, 8.507059e+37
  %v9680 = vand.u32 %v8972, 2147483648
  %v9681 = vor.u32 1.1754944e-38, %v9680
  %v9682 = vsel %vm9679, %v9681, %v9677
  %v9683 = vmul.f32 %v8694, %v9682
  %v9684 = vrcp.pop %v8975
  %v9685 = vmul.f32 %v8975, %v9684
  %v9686 = vsub.f32 1.0, %v9685
  %v9687 = vmul.f32 %v9684, %v9686
  %v9688 = vadd.f32 %v9684, %v9687
  %vm9689 = vweird.f32 %v8975
  %vm9690 = vweird.f32 %v9684
  %vm9691 = vmor %vm9689, %vm9690
  %v9692 = vsel %vm9691, %v9684, %v9688
  %v9693 = vand.u32 2147483647, %v8975
  %vm9694 = vcmp.eq.f32.partialorder %v9693, 8.507059e+37
  %v9695 = vand.u32 %v8975, 2147483648
  %v9696 = vor.u32 1.1754944e-38, %v9695
  %v9697 = vsel %vm9694, %v9696, %v9692
  %v9698 = vmul.f32 %v8696, %v9697
  %v9699 = vrcp.pop %v8978
  %v9700 = vmul.f32 %v8978, %v9699
  %v9701 = vsub.f32 1.0, %v9700
  %v9702 = vmul.f32 %v9699, %v9701
  %v9703 = vadd.f32 %v9699, %v9702
  %vm9704 = vweird.f32 %v8978
  %vm9705 = vweird.f32 %v9699
  %vm9706 = vmor %vm9704, %vm9705
  %v9707 = vsel %vm9706, %v9699, %v9703
  %v9708 = vand.u32 2147483647, %v8978
  %vm9709 = vcmp.eq.f32.partialorder %v9708, 8.507059e+37
  %v9710 = vand.u32 %v8978, 2147483648
  %v9711 = vor.u32 1.1754944e-38, %v9710
  %v9712 = vsel %vm9709, %v9711, %v9707
  %v9713 = vmul.f32 %v8698, %v9712
  %v9714 = vrcp.pop %v8981
  %v9715 = vmul.f32 %v8981, %v9714
  %v9716 = vsub.f32 1.0, %v9715
  %v9717 = vmul.f32 %v9714, %v9716
  %v9718 = vadd.f32 %v9714, %v9717
  %vm9719 = vweird.f32 %v8981
  %vm9720 = vweird.f32 %v9714
  %vm9721 = vmor %vm9719, %vm9720
  %v9722 = vsel %vm9721, %v9714, %v9718
  %v9723 = vand.u32 2147483647, %v8981
  %vm9724 = vcmp.eq.f32.partialorder %v9723, 8.507059e+37
  %v9725 = vand.u32 %v8981, 2147483648
  %v9726 = vor.u32 1.1754944e-38, %v9725
  %v9727 = vsel %vm9724, %v9726, %v9722
  %v9728 = vmul.f32 %v8700, %v9727
  %v9729 = vrcp.pop %v8984
  %v9730 = vmul.f32 %v8984, %v9729
  %v9731 = vsub.f32 1.0, %v9730
  %v9732 = vmul.f32 %v9729, %v9731
  %v9733 = vadd.f32 %v9729, %v9732
  %vm9734 = vweird.f32 %v8984
  %vm9735 = vweird.f32 %v9729
  %vm9736 = vmor %vm9734, %vm9735
  %v9737 = vsel %vm9736, %v9729, %v9733
  %v9738 = vand.u32 2147483647, %v8984
  %vm9739 = vcmp.eq.f32.partialorder %v9738, 8.507059e+37
  %v9740 = vand.u32 %v8984, 2147483648
  %v9741 = vor.u32 1.1754944e-38, %v9740
  %v9742 = vsel %vm9739, %v9741, %v9737
  %v9743 = vmul.f32 %v8702, %v9742
  %v9744 = vrcp.pop %v8987
  %v9745 = vmul.f32 %v8987, %v9744
  %v9746 = vsub.f32 1.0, %v9745
  %v9747 = vmul.f32 %v9744, %v9746
  %v9748 = vadd.f32 %v9744, %v9747
  %vm9749 = vweird.f32 %v8987
  %vm9750 = vweird.f32 %v9744
  %vm9751 = vmor %vm9749, %vm9750
  %v9752 = vsel %vm9751, %v9744, %v9748
  %v9753 = vand.u32 2147483647, %v8987
  %vm9754 = vcmp.eq.f32.partialorder %v9753, 8.507059e+37
  %v9755 = vand.u32 %v8987, 2147483648
  %v9756 = vor.u32 1.1754944e-38, %v9755
  %v9757 = vsel %vm9754, %v9756, %v9752
  %v9758 = vmul.f32 %v8704, %v9757
  %v9759 = vrcp.pop %v8990
  %v9760 = vmul.f32 %v8990, %v9759
  %v9761 = vsub.f32 1.0, %v9760
  %v9762 = vmul.f32 %v9759, %v9761
  %v9763 = vadd.f32 %v9759, %v9762
  %vm9764 = vweird.f32 %v8990
  %vm9765 = vweird.f32 %v9759
  %vm9766 = vmor %vm9764, %vm9765
  %v9767 = vsel %vm9766, %v9759, %v9763
  %v9768 = vand.u32 2147483647, %v8990
  %vm9769 = vcmp.eq.f32.partialorder %v9768, 8.507059e+37
  %v9770 = vand.u32 %v8990, 2147483648
  %v9771 = vor.u32 1.1754944e-38, %v9770
  %v9772 = vsel %vm9769, %v9771, %v9767
  %v9773 = vmul.f32 %v8706, %v9772
  %v9774 = vrcp.pop %v8993
  %v9775 = vmul.f32 %v8993, %v9774
  %v9776 = vsub.f32 1.0, %v9775
  %v9777 = vmul.f32 %v9774, %v9776
  %v9778 = vadd.f32 %v9774, %v9777
  %vm9779 = vweird.f32 %v8993
  %vm9780 = vweird.f32 %v9774
  %vm9781 = vmor %vm9779, %vm9780
  %v9782 = vsel %vm9781, %v9774, %v9778
  %v9783 = vand.u32 2147483647, %v8993
  %vm9784 = vcmp.eq.f32.partialorder %v9783, 8.507059e+37
  %v9785 = vand.u32 %v8993, 2147483648
  %v9786 = vor.u32 1.1754944e-38, %v9785
  %v9787 = vsel %vm9784, %v9786, %v9782
  %v9788 = vmul.f32 %v8708, %v9787
  %v9789 = vrcp.pop %v8996
  %v9790 = vmul.f32 %v8996, %v9789
  %v9791 = vsub.f32 1.0, %v9790
  %v9792 = vmul.f32 %v9789, %v9791
  %v9793 = vadd.f32 %v9789, %v9792
  %vm9794 = vweird.f32 %v8996
  %vm9795 = vweird.f32 %v9789
  %vm9796 = vmor %vm9794, %vm9795
  %v9797 = vsel %vm9796, %v9789, %v9793
  %v9798 = vand.u32 2147483647, %v8996
  %vm9799 = vcmp.eq.f32.partialorder %v9798, 8.507059e+37
  %v9800 = vand.u32 %v8996, 2147483648
  %v9801 = vor.u32 1.1754944e-38, %v9800
  %v9802 = vsel %vm9799, %v9801, %v9797
  %v9803 = vmul.f32 %v8710, %v9802
  %v9804 = vrcp.pop %v8999
  %v9805 = vmul.f32 %v8999, %v9804
  %v9806 = vsub.f32 1.0, %v9805
  %v9807 = vmul.f32 %v9804, %v9806
  %v9808 = vadd.f32 %v9804, %v9807
  %vm9809 = vweird.f32 %v8999
  %vm9810 = vweird.f32 %v9804
  %vm9811 = vmor %vm9809, %vm9810
  %v9812 = vsel %vm9811, %v9804, %v9808
  %v9813 = vand.u32 2147483647, %v8999
  %vm9814 = vcmp.eq.f32.partialorder %v9813, 8.507059e+37
  %v9815 = vand.u32 %v8999, 2147483648
  %v9816 = vor.u32 1.1754944e-38, %v9815
  %v9817 = vsel %vm9814, %v9816, %v9812
  %v9818 = vmul.f32 %v8712, %v9817
  %v9819 = vrcp.pop %v9002
  %v9820 = vmul.f32 %v9002, %v9819
  %v9821 = vsub.f32 1.0, %v9820
  %v9822 = vmul.f32 %v9819, %v9821
  %v9823 = vadd.f32 %v9819, %v9822
  %vm9824 = vweird.f32 %v9002
  %vm9825 = vweird.f32 %v9819
  %vm9826 = vmor %vm9824, %vm9825
  %v9827 = vsel %vm9826, %v9819, %v9823
  %v9828 = vand.u32 2147483647, %v9002
  %vm9829 = vcmp.eq.f32.partialorder %v9828, 8.507059e+37
  %v9830 = vand.u32 %v9002, 2147483648
  %v9831 = vor.u32 1.1754944e-38, %v9830
  %v9832 = vsel %vm9829, %v9831, %v9827
  %v9833 = vmul.f32 %v8714, %v9832
  %v9834 = vrcp.pop %v9005
  %v9835 = vmul.f32 %v9005, %v9834
  %v9836 = vsub.f32 1.0, %v9835
  %v9837 = vmul.f32 %v9834, %v9836
  %v9838 = vadd.f32 %v9834, %v9837
  %vm9839 = vweird.f32 %v9005
  %vm9840 = vweird.f32 %v9834
  %vm9841 = vmor %vm9839, %vm9840
  %v9842 = vsel %vm9841, %v9834, %v9838
  %v9843 = vand.u32 2147483647, %v9005
  %vm9844 = vcmp.eq.f32.partialorder %v9843, 8.507059e+37
  %v9845 = vand.u32 %v9005, 2147483648
  %v9846 = vor.u32 1.1754944e-38, %v9845
  %v9847 = vsel %vm9844, %v9846, %v9842
  %v9848 = vmul.f32 %v8716, %v9847
  %v9849 = vrcp.pop %v9008
  %v9850 = vmul.f32 %v9008, %v9849
  %v9851 = vsub.f32 1.0, %v9850
  %v9852 = vmul.f32 %v9849, %v9851
  %v9853 = vadd.f32 %v9849, %v9852
  %vm9854 = vweird.f32 %v9008
  %vm9855 = vweird.f32 %v9849
  %vm9856 = vmor %vm9854, %vm9855
  %v9857 = vsel %vm9856, %v9849, %v9853
  %v9858 = vand.u32 2147483647, %v9008
  %vm9859 = vcmp.eq.f32.partialorder %v9858, 8.507059e+37
  %v9860 = vand.u32 %v9008, 2147483648
  %v9861 = vor.u32 1.1754944e-38, %v9860
  %v9862 = vsel %vm9859, %v9861, %v9857
  %v9863 = vmul.f32 %v8718, %v9862
  %v9864 = vrcp.pop %v9011
  %v9865 = vmul.f32 %v9011, %v9864
  %v9866 = vsub.f32 1.0, %v9865
  %v9867 = vmul.f32 %v9864, %v9866
  %v9868 = vadd.f32 %v9864, %v9867
  %vm9869 = vweird.f32 %v9011
  %vm9870 = vweird.f32 %v9864
  %vm9871 = vmor %vm9869, %vm9870
  %v9872 = vsel %vm9871, %v9864, %v9868
  %v9873 = vand.u32 2147483647, %v9011
  %vm9874 = vcmp.eq.f32.partialorder %v9873, 8.507059e+37
  %v9875 = vand.u32 %v9011, 2147483648
  %v9876 = vor.u32 1.1754944e-38, %v9875
  %v9877 = vsel %vm9874, %v9876, %v9872
  %v9878 = vmul.f32 %v8720, %v9877
  %v9879 = vrcp.pop %v9014
  %v9880 = vmul.f32 %v9014, %v9879
  %v9881 = vsub.f32 1.0, %v9880
  %v9882 = vmul.f32 %v9879, %v9881
  %v9883 = vadd.f32 %v9879, %v9882
  %vm9884 = vweird.f32 %v9014
  %vm9885 = vweird.f32 %v9879
  %vm9886 = vmor %vm9884, %vm9885
  %v9887 = vsel %vm9886, %v9879, %v9883
  %v9888 = vand.u32 2147483647, %v9014
  %vm9889 = vcmp.eq.f32.partialorder %v9888, 8.507059e+37
  %v9890 = vand.u32 %v9014, 2147483648
  %v9891 = vor.u32 1.1754944e-38, %v9890
  %v9892 = vsel %vm9889, %v9891, %v9887
  %v9893 = vmul.f32 %v8722, %v9892
  %v9894 = vrcp.pop %v9017
  %v9895 = vmul.f32 %v9017, %v9894
  %v9896 = vsub.f32 1.0, %v9895
  %v9897 = vmul.f32 %v9894, %v9896
  %v9898 = vadd.f32 %v9894, %v9897
  %vm9899 = vweird.f32 %v9017
  %vm9900 = vweird.f32 %v9894
  %vm9901 = vmor %vm9899, %vm9900
  %v9902 = vsel %vm9901, %v9894, %v9898
  %v9903 = vand.u32 2147483647, %v9017
  %vm9904 = vcmp.eq.f32.partialorder %v9903, 8.507059e+37
  %v9905 = vand.u32 %v9017, 2147483648
  %v9906 = vor.u32 1.1754944e-38, %v9905
  %v9907 = vsel %vm9904, %v9906, %v9902
  %v9908 = vmul.f32 %v8724, %v9907
  %v9909 = vrcp.pop %v9020
  %v9910 = vmul.f32 %v9020, %v9909
  %v9911 = vsub.f32 1.0, %v9910
  %v9912 = vmul.f32 %v9909, %v9911
  %v9913 = vadd.f32 %v9909, %v9912
  %vm9914 = vweird.f32 %v9020
  %vm9915 = vweird.f32 %v9909
  %vm9916 = vmor %vm9914, %vm9915
  %v9917 = vsel %vm9916, %v9909, %v9913
  %v9918 = vand.u32 2147483647, %v9020
  %vm9919 = vcmp.eq.f32.partialorder %v9918, 8.507059e+37
  %v9920 = vand.u32 %v9020, 2147483648
  %v9921 = vor.u32 1.1754944e-38, %v9920
  %v9922 = vsel %vm9919, %v9921, %v9917
  %v9923 = vmul.f32 %v8726, %v9922
  %v9924 = vrcp.pop %v9023
  %v9925 = vmul.f32 %v9023, %v9924
  %v9926 = vsub.f32 1.0, %v9925
  %v9927 = vmul.f32 %v9924, %v9926
  %v9928 = vadd.f32 %v9924, %v9927
  %vm9929 = vweird.f32 %v9023
  %vm9930 = vweird.f32 %v9924
  %vm9931 = vmor %vm9929, %vm9930
  %v9932 = vsel %vm9931, %v9924, %v9928
  %v9933 = vand.u32 2147483647, %v9023
  %vm9934 = vcmp.eq.f32.partialorder %v9933, 8.507059e+37
  %v9935 = vand.u32 %v9023, 2147483648
  %v9936 = vor.u32 1.1754944e-38, %v9935
  %v9937 = vsel %vm9934, %v9936, %v9932
  %v9938 = vmul.f32 %v8728, %v9937
  %v9939 = vrcp.pop %v9026
  %v9940 = vmul.f32 %v9026, %v9939
  %v9941 = vsub.f32 1.0, %v9940
  %v9942 = vmul.f32 %v9939, %v9941
  %v9943 = vadd.f32 %v9939, %v9942
  %vm9944 = vweird.f32 %v9026
  %vm9945 = vweird.f32 %v9939
  %vm9946 = vmor %vm9944, %vm9945
  %v9947 = vsel %vm9946, %v9939, %v9943
  %v9948 = vand.u32 2147483647, %v9026
  %vm9949 = vcmp.eq.f32.partialorder %v9948, 8.507059e+37
  %v9950 = vand.u32 %v9026, 2147483648
  %v9951 = vor.u32 1.1754944e-38, %v9950
  %v9952 = vsel %vm9949, %v9951, %v9947
  %v9953 = vmul.f32 %v8730, %v9952
  %v9954 = vrcp.pop %v9029
  %v9955 = vmul.f32 %v9029, %v9954
  %v9956 = vsub.f32 1.0, %v9955
  %v9957 = vmul.f32 %v9954, %v9956
  %v9958 = vadd.f32 %v9954, %v9957
  %vm9959 = vweird.f32 %v9029
  %vm9960 = vweird.f32 %v9954
  %vm9961 = vmor %vm9959, %vm9960
  %v9962 = vsel %vm9961, %v9954, %v9958
  %v9963 = vand.u32 2147483647, %v9029
  %vm9964 = vcmp.eq.f32.partialorder %v9963, 8.507059e+37
  %v9965 = vand.u32 %v9029, 2147483648
  %v9966 = vor.u32 1.1754944e-38, %v9965
  %v9967 = vsel %vm9964, %v9966, %v9962
  %v9968 = vmul.f32 %v8732, %v9967
  %v9969 = vrcp.pop %v9032
  %v9970 = vmul.f32 %v9032, %v9969
  %v9971 = vsub.f32 1.0, %v9970
  %v9972 = vmul.f32 %v9969, %v9971
  %v9973 = vadd.f32 %v9969, %v9972
  %vm9974 = vweird.f32 %v9032
  %vm9975 = vweird.f32 %v9969
  %vm9976 = vmor %vm9974, %vm9975
  %v9977 = vsel %vm9976, %v9969, %v9973
  %v9978 = vand.u32 2147483647, %v9032
  %vm9979 = vcmp.eq.f32.partialorder %v9978, 8.507059e+37
  %v9980 = vand.u32 %v9032, 2147483648
  %v9981 = vor.u32 1.1754944e-38, %v9980
  %v9982 = vsel %vm9979, %v9981, %v9977
  %v9983 = vmul.f32 %v8734, %v9982
  %v9984 = vrcp.pop %v9035
  %v9985 = vmul.f32 %v9035, %v9984
  %v9986 = vsub.f32 1.0, %v9985
  %v9987 = vmul.f32 %v9984, %v9986
  %v9988 = vadd.f32 %v9984, %v9987
  %vm9989 = vweird.f32 %v9035
  %vm9990 = vweird.f32 %v9984
  %vm9991 = vmor %vm9989, %vm9990
  %v9992 = vsel %vm9991, %v9984, %v9988
  %v9993 = vand.u32 2147483647, %v9035
  %vm9994 = vcmp.eq.f32.partialorder %v9993, 8.507059e+37
  %v9995 = vand.u32 %v9035, 2147483648
  %v9996 = vor.u32 1.1754944e-38, %v9995
  %v9997 = vsel %vm9994, %v9996, %v9992
  %v9998 = vmul.f32 %v8736, %v9997
  %v9999 = vrcp.pop %v9038
  %v10000 = vmul.f32 %v9038, %v9999
  %v10001 = vsub.f32 1.0, %v10000
  %v10002 = vmul.f32 %v9999, %v10001
  %v10003 = vadd.f32 %v9999, %v10002
  %vm10004 = vweird.f32 %v9038
  %vm10005 = vweird.f32 %v9999
  %vm10006 = vmor %vm10004, %vm10005
  %v10007 = vsel %vm10006, %v9999, %v10003
  %v10008 = vand.u32 2147483647, %v9038
  %vm10009 = vcmp.eq.f32.partialorder %v10008, 8.507059e+37
  %v10010 = vand.u32 %v9038, 2147483648
  %v10011 = vor.u32 1.1754944e-38, %v10010
  %v10012 = vsel %vm10009, %v10011, %v10007
  %v10013 = vmul.f32 %v8738, %v10012
  %v10014 = vrcp.pop %v9041
  %v10015 = vmul.f32 %v9041, %v10014
  %v10016 = vsub.f32 1.0, %v10015
  %v10017 = vmul.f32 %v10014, %v10016
  %v10018 = vadd.f32 %v10014, %v10017
  %vm10019 = vweird.f32 %v9041
  %vm10020 = vweird.f32 %v10014
  %vm10021 = vmor %vm10019, %vm10020
  %v10022 = vsel %vm10021, %v10014, %v10018
  %v10023 = vand.u32 2147483647, %v9041
  %vm10024 = vcmp.eq.f32.partialorder %v10023, 8.507059e+37
  %v10025 = vand.u32 %v9041, 2147483648
  %v10026 = vor.u32 1.1754944e-38, %v10025
  %v10027 = vsel %vm10024, %v10026, %v10022
  %v10028 = vmul.f32 %v8740, %v10027
  %v10029 = vrcp.pop %v9044
  %v10030 = vmul.f32 %v9044, %v10029
  %v10031 = vsub.f32 1.0, %v10030
  %v10032 = vmul.f32 %v10029, %v10031
  %v10033 = vadd.f32 %v10029, %v10032
  %vm10034 = vweird.f32 %v9044
  %vm10035 = vweird.f32 %v10029
  %vm10036 = vmor %vm10034, %vm10035
  %v10037 = vsel %vm10036, %v10029, %v10033
  %v10038 = vand.u32 2147483647, %v9044
  %vm10039 = vcmp.eq.f32.partialorder %v10038, 8.507059e+37
  %v10040 = vand.u32 %v9044, 2147483648
  %v10041 = vor.u32 1.1754944e-38, %v10040
  %v10042 = vsel %vm10039, %v10041, %v10037
  %v10043 = vmul.f32 %v8742, %v10042
  %v10044 = vrcp.pop %v9047
  %v10045 = vmul.f32 %v9047, %v10044
  %v10046 = vsub.f32 1.0, %v10045
  %v10047 = vmul.f32 %v10044, %v10046
  %v10048 = vadd.f32 %v10044, %v10047
  %vm10049 = vweird.f32 %v9047
  %vm10050 = vweird.f32 %v10044
  %vm10051 = vmor %vm10049, %vm10050
  %v10052 = vsel %vm10051, %v10044, %v10048
  %v10053 = vand.u32 2147483647, %v9047
  %vm10054 = vcmp.eq.f32.partialorder %v10053, 8.507059e+37
  %v10055 = vand.u32 %v9047, 2147483648
  %v10056 = vor.u32 1.1754944e-38, %v10055
  %v10057 = vsel %vm10054, %v10056, %v10052
  %v10058 = vmul.f32 %v8744, %v10057
  %v10059 = vrcp.pop %v9050
  %v10060 = vmul.f32 %v9050, %v10059
  %v10061 = vsub.f32 1.0, %v10060
  %v10062 = vmul.f32 %v10059, %v10061
  %v10063 = vadd.f32 %v10059, %v10062
  %vm10064 = vweird.f32 %v9050
  %vm10065 = vweird.f32 %v10059
  %vm10066 = vmor %vm10064, %vm10065
  %v10067 = vsel %vm10066, %v10059, %v10063
  %v10068 = vand.u32 2147483647, %v9050
  %vm10069 = vcmp.eq.f32.partialorder %v10068, 8.507059e+37
  %v10070 = vand.u32 %v9050, 2147483648
  %v10071 = vor.u32 1.1754944e-38, %v10070
  %v10072 = vsel %vm10069, %v10071, %v10067
  %v10073 = vmul.f32 %v8746, %v10072
  %v10074 = vrcp.pop %v9053
  %v10075 = vmul.f32 %v9053, %v10074
  %v10076 = vsub.f32 1.0, %v10075
  %v10077 = vmul.f32 %v10074, %v10076
  %v10078 = vadd.f32 %v10074, %v10077
  %vm10079 = vweird.f32 %v9053
  %vm10080 = vweird.f32 %v10074
  %vm10081 = vmor %vm10079, %vm10080
  %v10082 = vsel %vm10081, %v10074, %v10078
  %v10083 = vand.u32 2147483647, %v9053
  %vm10084 = vcmp.eq.f32.partialorder %v10083, 8.507059e+37
  %v10085 = vand.u32 %v9053, 2147483648
  %v10086 = vor.u32 1.1754944e-38, %v10085
  %v10087 = vsel %vm10084, %v10086, %v10082
  %v10088 = vmul.f32 %v8748, %v10087
  %v10089 = vrcp.pop %v9056
  %v10090 = vmul.f32 %v9056, %v10089
  %v10091 = vsub.f32 1.0, %v10090
  %v10092 = vmul.f32 %v10089, %v10091
  %v10093 = vadd.f32 %v10089, %v10092
  %vm10094 = vweird.f32 %v9056
  %vm10095 = vweird.f32 %v10089
  %vm10096 = vmor %vm10094, %vm10095
  %v10097 = vsel %vm10096, %v10089, %v10093
  %v10098 = vand.u32 2147483647, %v9056
  %vm10099 = vcmp.eq.f32.partialorder %v10098, 8.507059e+37
  %v10100 = vand.u32 %v9056, 2147483648
  %v10101 = vor.u32 1.1754944e-38, %v10100
  %v10102 = vsel %vm10099, %v10101, %v10097
  %v10103 = vmul.f32 %v8750, %v10102
  %v10104 = vrcp.pop %v9059
  %v10105 = vmul.f32 %v9059, %v10104
  %v10106 = vsub.f32 1.0, %v10105
  %v10107 = vmul.f32 %v10104, %v10106
  %v10108 = vadd.f32 %v10104, %v10107
  %vm10109 = vweird.f32 %v9059
  %vm10110 = vweird.f32 %v10104
  %vm10111 = vmor %vm10109, %vm10110
  %v10112 = vsel %vm10111, %v10104, %v10108
  %v10113 = vand.u32 2147483647, %v9059
  %vm10114 = vcmp.eq.f32.partialorder %v10113, 8.507059e+37
  %v10115 = vand.u32 %v9059, 2147483648
  %v10116 = vor.u32 1.1754944e-38, %v10115
  %v10117 = vsel %vm10114, %v10116, %v10112
  %v10118 = vmul.f32 %v8752, %v10117
  %v10119 = vrcp.pop %v9062
  %v10120 = vmul.f32 %v9062, %v10119
  %v10121 = vsub.f32 1.0, %v10120
  %v10122 = vmul.f32 %v10119, %v10121
  %v10123 = vadd.f32 %v10119, %v10122
  %vm10124 = vweird.f32 %v9062
  %vm10125 = vweird.f32 %v10119
  %vm10126 = vmor %vm10124, %vm10125
  %v10127 = vsel %vm10126, %v10119, %v10123
  %v10128 = vand.u32 2147483647, %v9062
  %vm10129 = vcmp.eq.f32.partialorder %v10128, 8.507059e+37
  %v10130 = vand.u32 %v9062, 2147483648
  %v10131 = vor.u32 1.1754944e-38, %v10130
  %v10132 = vsel %vm10129, %v10131, %v10127
  %v10133 = vmul.f32 %v8754, %v10132
  %v10134 = vrcp.pop %v9065
  %v10135 = vmul.f32 %v9065, %v10134
  %v10136 = vsub.f32 1.0, %v10135
  %v10137 = vmul.f32 %v10134, %v10136
  %v10138 = vadd.f32 %v10134, %v10137
  %vm10139 = vweird.f32 %v9065
  %vm10140 = vweird.f32 %v10134
  %vm10141 = vmor %vm10139, %vm10140
  %v10142 = vsel %vm10141, %v10134, %v10138
  %v10143 = vand.u32 2147483647, %v9065
  %vm10144 = vcmp.eq.f32.partialorder %v10143, 8.507059e+37
  %v10145 = vand.u32 %v9065, 2147483648
  %v10146 = vor.u32 1.1754944e-38, %v10145
  %v10147 = vsel %vm10144, %v10146, %v10142
  %v10148 = vmul.f32 %v8756, %v10147
  %v10149 = vrcp.pop %v9068
  %v10150 = vmul.f32 %v9068, %v10149
  %v10151 = vsub.f32 1.0, %v10150
  %v10152 = vmul.f32 %v10149, %v10151
  %v10153 = vadd.f32 %v10149, %v10152
  %vm10154 = vweird.f32 %v9068
  %vm10155 = vweird.f32 %v10149
  %vm10156 = vmor %vm10154, %vm10155
  %v10157 = vsel %vm10156, %v10149, %v10153
  %v10158 = vand.u32 2147483647, %v9068
  %vm10159 = vcmp.eq.f32.partialorder %v10158, 8.507059e+37
  %v10160 = vand.u32 %v9068, 2147483648
  %v10161 = vor.u32 1.1754944e-38, %v10160
  %v10162 = vsel %vm10159, %v10161, %v10157
  %v10163 = vmul.f32 %v8758, %v10162
  %v10164 = vrcp.pop %v9071
  %v10165 = vmul.f32 %v9071, %v10164
  %v10166 = vsub.f32 1.0, %v10165
  %v10167 = vmul.f32 %v10164, %v10166
  %v10168 = vadd.f32 %v10164, %v10167
  %vm10169 = vweird.f32 %v9071
  %vm10170 = vweird.f32 %v10164
  %vm10171 = vmor %vm10169, %vm10170
  %v10172 = vsel %vm10171, %v10164, %v10168
  %v10173 = vand.u32 2147483647, %v9071
  %vm10174 = vcmp.eq.f32.partialorder %v10173, 8.507059e+37
  %v10175 = vand.u32 %v9071, 2147483648
  %v10176 = vor.u32 1.1754944e-38, %v10175
  %v10177 = vsel %vm10174, %v10176, %v10172
  %v10178 = vmul.f32 %v8760, %v10177
  %v10179 = vrcp.pop %v9074
  %v10180 = vmul.f32 %v9074, %v10179
  %v10181 = vsub.f32 1.0, %v10180
  %v10182 = vmul.f32 %v10179, %v10181
  %v10183 = vadd.f32 %v10179, %v10182
  %vm10184 = vweird.f32 %v9074
  %vm10185 = vweird.f32 %v10179
  %vm10186 = vmor %vm10184, %vm10185
  %v10187 = vsel %vm10186, %v10179, %v10183
  %v10188 = vand.u32 2147483647, %v9074
  %vm10189 = vcmp.eq.f32.partialorder %v10188, 8.507059e+37
  %v10190 = vand.u32 %v9074, 2147483648
  %v10191 = vor.u32 1.1754944e-38, %v10190
  %v10192 = vsel %vm10189, %v10191, %v10187
  %v10193 = vmul.f32 %v8762, %v10192
  %v10194 = vrcp.pop %v9077
  %v10195 = vmul.f32 %v9077, %v10194
  %v10196 = vsub.f32 1.0, %v10195
  %v10197 = vmul.f32 %v10194, %v10196
  %v10198 = vadd.f32 %v10194, %v10197
  %vm10199 = vweird.f32 %v9077
  %vm10200 = vweird.f32 %v10194
  %vm10201 = vmor %vm10199, %vm10200
  %v10202 = vsel %vm10201, %v10194, %v10198
  %v10203 = vand.u32 2147483647, %v9077
  %vm10204 = vcmp.eq.f32.partialorder %v10203, 8.507059e+37
  %v10205 = vand.u32 %v9077, 2147483648
  %v10206 = vor.u32 1.1754944e-38, %v10205
  %v10207 = vsel %vm10204, %v10206, %v10202
  %v10208 = vmul.f32 %v8764, %v10207
  %v10209 = vrcp.pop %v9080
  %v10210 = vmul.f32 %v9080, %v10209
  %v10211 = vsub.f32 1.0, %v10210
  %v10212 = vmul.f32 %v10209, %v10211
  %v10213 = vadd.f32 %v10209, %v10212
  %vm10214 = vweird.f32 %v9080
  %vm10215 = vweird.f32 %v10209
  %vm10216 = vmor %vm10214, %vm10215
  %v10217 = vsel %vm10216, %v10209, %v10213
  %v10218 = vand.u32 2147483647, %v9080
  %vm10219 = vcmp.eq.f32.partialorder %v10218, 8.507059e+37
  %v10220 = vand.u32 %v9080, 2147483648
  %v10221 = vor.u32 1.1754944e-38, %v10220
  %v10222 = vsel %vm10219, %v10221, %v10217
  %v10223 = vmul.f32 %v8766, %v10222
  %v10224 = vrcp.pop %v9083
  %v10225 = vmul.f32 %v9083, %v10224
  %v10226 = vsub.f32 1.0, %v10225
  %v10227 = vmul.f32 %v10224, %v10226
  %v10228 = vadd.f32 %v10224, %v10227
  %vm10229 = vweird.f32 %v9083
  %vm10230 = vweird.f32 %v10224
  %vm10231 = vmor %vm10229, %vm10230
  %v10232 = vsel %vm10231, %v10224, %v10228
  %v10233 = vand.u32 2147483647, %v9083
  %vm10234 = vcmp.eq.f32.partialorder %v10233, 8.507059e+37
  %v10235 = vand.u32 %v9083, 2147483648
  %v10236 = vor.u32 1.1754944e-38, %v10235
  %v10237 = vsel %vm10234, %v10236, %v10232
  %v10238 = vmul.f32 %v8768, %v10237
  %v10239 = vrcp.pop %v9086
  %v10240 = vmul.f32 %v9086, %v10239
  %v10241 = vsub.f32 1.0, %v10240
  %v10242 = vmul.f32 %v10239, %v10241
  %v10243 = vadd.f32 %v10239, %v10242
  %vm10244 = vweird.f32 %v9086
  %vm10245 = vweird.f32 %v10239
  %vm10246 = vmor %vm10244, %vm10245
  %v10247 = vsel %vm10246, %v10239, %v10243
  %v10248 = vand.u32 2147483647, %v9086
  %vm10249 = vcmp.eq.f32.partialorder %v10248, 8.507059e+37
  %v10250 = vand.u32 %v9086, 2147483648
  %v10251 = vor.u32 1.1754944e-38, %v10250
  %v10252 = vsel %vm10249, %v10251, %v10247
  %v10253 = vmul.f32 %v8770, %v10252
  %v10254 = vrcp.pop %v9089
  %v10255 = vmul.f32 %v9089, %v10254
  %v10256 = vsub.f32 1.0, %v10255
  %v10257 = vmul.f32 %v10254, %v10256
  %v10258 = vadd.f32 %v10254, %v10257
  %vm10259 = vweird.f32 %v9089
  %vm10260 = vweird.f32 %v10254
  %vm10261 = vmor %vm10259, %vm10260
  %v10262 = vsel %vm10261, %v10254, %v10258
  %v10263 = vand.u32 2147483647, %v9089
  %vm10264 = vcmp.eq.f32.partialorder %v10263, 8.507059e+37
  %v10265 = vand.u32 %v9089, 2147483648
  %v10266 = vor.u32 1.1754944e-38, %v10265
  %v10267 = vsel %vm10264, %v10266, %v10262
  %v10268 = vmul.f32 %v8772, %v10267
  %v10269 = vrcp.pop %v9092
  %v10270 = vmul.f32 %v9092, %v10269
  %v10271 = vsub.f32 1.0, %v10270
  %v10272 = vmul.f32 %v10269, %v10271
  %v10273 = vadd.f32 %v10269, %v10272
  %vm10274 = vweird.f32 %v9092
  %vm10275 = vweird.f32 %v10269
  %vm10276 = vmor %vm10274, %vm10275
  %v10277 = vsel %vm10276, %v10269, %v10273
  %v10278 = vand.u32 2147483647, %v9092
  %vm10279 = vcmp.eq.f32.partialorder %v10278, 8.507059e+37
  %v10280 = vand.u32 %v9092, 2147483648
  %v10281 = vor.u32 1.1754944e-38, %v10280
  %v10282 = vsel %vm10279, %v10281, %v10277
  %v10283 = vmul.f32 %v8774, %v10282
  %v10284 = vrcp.pop %v9095
  %v10285 = vmul.f32 %v9095, %v10284
  %v10286 = vsub.f32 1.0, %v10285
  %v10287 = vmul.f32 %v10284, %v10286
  %v10288 = vadd.f32 %v10284, %v10287
  %vm10289 = vweird.f32 %v9095
  %vm10290 = vweird.f32 %v10284
  %vm10291 = vmor %vm10289, %vm10290
  %v10292 = vsel %vm10291, %v10284, %v10288
  %v10293 = vand.u32 2147483647, %v9095
  %vm10294 = vcmp.eq.f32.partialorder %v10293, 8.507059e+37
  %v10295 = vand.u32 %v9095, 2147483648
  %v10296 = vor.u32 1.1754944e-38, %v10295
  %v10297 = vsel %vm10294, %v10296, %v10292
  %v10298 = vmul.f32 %v8776, %v10297
  %v10299 = vrcp.pop %v9098
  %v10300 = vmul.f32 %v9098, %v10299
  %v10301 = vsub.f32 1.0, %v10300
  %v10302 = vmul.f32 %v10299, %v10301
  %v10303 = vadd.f32 %v10299, %v10302
  %vm10304 = vweird.f32 %v9098
  %vm10305 = vweird.f32 %v10299
  %vm10306 = vmor %vm10304, %vm10305
  %v10307 = vsel %vm10306, %v10299, %v10303
  %v10308 = vand.u32 2147483647, %v9098
  %vm10309 = vcmp.eq.f32.partialorder %v10308, 8.507059e+37
  %v10310 = vand.u32 %v9098, 2147483648
  %v10311 = vor.u32 1.1754944e-38, %v10310
  %v10312 = vsel %vm10309, %v10311, %v10307
  %v10313 = vmul.f32 %v8778, %v10312
  %v10314 = vrcp.pop %v9101
  %v10315 = vmul.f32 %v9101, %v10314
  %v10316 = vsub.f32 1.0, %v10315
  %v10317 = vmul.f32 %v10314, %v10316
  %v10318 = vadd.f32 %v10314, %v10317
  %vm10319 = vweird.f32 %v9101
  %vm10320 = vweird.f32 %v10314
  %vm10321 = vmor %vm10319, %vm10320
  %v10322 = vsel %vm10321, %v10314, %v10318
  %v10323 = vand.u32 2147483647, %v9101
  %vm10324 = vcmp.eq.f32.partialorder %v10323, 8.507059e+37
  %v10325 = vand.u32 %v9101, 2147483648
  %v10326 = vor.u32 1.1754944e-38, %v10325
  %v10327 = vsel %vm10324, %v10326, %v10322
  %v10328 = vmul.f32 %v8780, %v10327
  %v10329 = vrcp.pop %v9104
  %v10330 = vmul.f32 %v9104, %v10329
  %v10331 = vsub.f32 1.0, %v10330
  %v10332 = vmul.f32 %v10329, %v10331
  %v10333 = vadd.f32 %v10329, %v10332
  %vm10334 = vweird.f32 %v9104
  %vm10335 = vweird.f32 %v10329
  %vm10336 = vmor %vm10334, %vm10335
  %v10337 = vsel %vm10336, %v10329, %v10333
  %v10338 = vand.u32 2147483647, %v9104
  %vm10339 = vcmp.eq.f32.partialorder %v10338, 8.507059e+37
  %v10340 = vand.u32 %v9104, 2147483648
  %v10341 = vor.u32 1.1754944e-38, %v10340
  %v10342 = vsel %vm10339, %v10341, %v10337
  %v10343 = vmul.f32 %v8782, %v10342
  %v10344 = vrcp.pop %v9107
  %v10345 = vmul.f32 %v9107, %v10344
  %v10346 = vsub.f32 1.0, %v10345
  %v10347 = vmul.f32 %v10344, %v10346
  %v10348 = vadd.f32 %v10344, %v10347
  %vm10349 = vweird.f32 %v9107
  %vm10350 = vweird.f32 %v10344
  %vm10351 = vmor %vm10349, %vm10350
  %v10352 = vsel %vm10351, %v10344, %v10348
  %v10353 = vand.u32 2147483647, %v9107
  %vm10354 = vcmp.eq.f32.partialorder %v10353, 8.507059e+37
  %v10355 = vand.u32 %v9107, 2147483648
  %v10356 = vor.u32 1.1754944e-38, %v10355
  %v10357 = vsel %vm10354, %v10356, %v10352
  %v10358 = vmul.f32 %v8784, %v10357
  %v10359 = vrcp.pop %v9110
  %v10360 = vmul.f32 %v9110, %v10359
  %v10361 = vsub.f32 1.0, %v10360
  %v10362 = vmul.f32 %v10359, %v10361
  %v10363 = vadd.f32 %v10359, %v10362
  %vm10364 = vweird.f32 %v9110
  %vm10365 = vweird.f32 %v10359
  %vm10366 = vmor %vm10364, %vm10365
  %v10367 = vsel %vm10366, %v10359, %v10363
  %v10368 = vand.u32 2147483647, %v9110
  %vm10369 = vcmp.eq.f32.partialorder %v10368, 8.507059e+37
  %v10370 = vand.u32 %v9110, 2147483648
  %v10371 = vor.u32 1.1754944e-38, %v10370
  %v10372 = vsel %vm10369, %v10371, %v10367
  %v10373 = vmul.f32 %v8786, %v10372
  %v10374 = vrcp.pop %v9113
  %v10375 = vmul.f32 %v9113, %v10374
  %v10376 = vsub.f32 1.0, %v10375
  %v10377 = vmul.f32 %v10374, %v10376
  %v10378 = vadd.f32 %v10374, %v10377
  %vm10379 = vweird.f32 %v9113
  %vm10380 = vweird.f32 %v10374
  %vm10381 = vmor %vm10379, %vm10380
  %v10382 = vsel %vm10381, %v10374, %v10378
  %v10383 = vand.u32 2147483647, %v9113
  %vm10384 = vcmp.eq.f32.partialorder %v10383, 8.507059e+37
  %v10385 = vand.u32 %v9113, 2147483648
  %v10386 = vor.u32 1.1754944e-38, %v10385
  %v10387 = vsel %vm10384, %v10386, %v10382
  %v10388 = vmul.f32 %v8788, %v10387
  %v10389 = vrcp.pop %v9116
  %v10390 = vmul.f32 %v9116, %v10389
  %v10391 = vsub.f32 1.0, %v10390
  %v10392 = vmul.f32 %v10389, %v10391
  %v10393 = vadd.f32 %v10389, %v10392
  %vm10394 = vweird.f32 %v9116
  %vm10395 = vweird.f32 %v10389
  %vm10396 = vmor %vm10394, %vm10395
  %v10397 = vsel %vm10396, %v10389, %v10393
  %v10398 = vand.u32 2147483647, %v9116
  %vm10399 = vcmp.eq.f32.partialorder %v10398, 8.507059e+37
  %v10400 = vand.u32 %v9116, 2147483648
  %v10401 = vor.u32 1.1754944e-38, %v10400
  %v10402 = vsel %vm10399, %v10401, %v10397
  %v10403 = vmul.f32 %v8790, %v10402
  %v10404 = vrcp.pop %v9119
  %v10405 = vmul.f32 %v9119, %v10404
  %v10406 = vsub.f32 1.0, %v10405
  %v10407 = vmul.f32 %v10404, %v10406
  %v10408 = vadd.f32 %v10404, %v10407
  %vm10409 = vweird.f32 %v9119
  %vm10410 = vweird.f32 %v10404
  %vm10411 = vmor %vm10409, %vm10410
  %v10412 = vsel %vm10411, %v10404, %v10408
  %v10413 = vand.u32 2147483647, %v9119
  %vm10414 = vcmp.eq.f32.partialorder %v10413, 8.507059e+37
  %v10415 = vand.u32 %v9119, 2147483648
  %v10416 = vor.u32 1.1754944e-38, %v10415
  %v10417 = vsel %vm10414, %v10416, %v10412
  %v10418 = vmul.f32 %v8792, %v10417
  %v10419 = vrcp.pop %v9122
  %v10420 = vmul.f32 %v9122, %v10419
  %v10421 = vsub.f32 1.0, %v10420
  %v10422 = vmul.f32 %v10419, %v10421
  %v10423 = vadd.f32 %v10419, %v10422
  %vm10424 = vweird.f32 %v9122
  %vm10425 = vweird.f32 %v10419
  %vm10426 = vmor %vm10424, %vm10425
  %v10427 = vsel %vm10426, %v10419, %v10423
  %v10428 = vand.u32 2147483647, %v9122
  %vm10429 = vcmp.eq.f32.partialorder %v10428, 8.507059e+37
  %v10430 = vand.u32 %v9122, 2147483648
  %v10431 = vor.u32 1.1754944e-38, %v10430
  %v10432 = vsel %vm10429, %v10431, %v10427
  %v10433 = vmul.f32 %v8794, %v10432
  %v10434 = vrcp.pop %v9125
  %v10435 = vmul.f32 %v9125, %v10434
  %v10436 = vsub.f32 1.0, %v10435
  %v10437 = vmul.f32 %v10434, %v10436
  %v10438 = vadd.f32 %v10434, %v10437
  %vm10439 = vweird.f32 %v9125
  %vm10440 = vweird.f32 %v10434
  %vm10441 = vmor %vm10439, %vm10440
  %v10442 = vsel %vm10441, %v10434, %v10438
  %v10443 = vand.u32 2147483647, %v9125
  %vm10444 = vcmp.eq.f32.partialorder %v10443, 8.507059e+37
  %v10445 = vand.u32 %v9125, 2147483648
  %v10446 = vor.u32 1.1754944e-38, %v10445
  %v10447 = vsel %vm10444, %v10446, %v10442
  %v10448 = vmul.f32 %v8796, %v10447
  %v10449 = vrcp.pop %v9128
  %v10450 = vmul.f32 %v9128, %v10449
  %v10451 = vsub.f32 1.0, %v10450
  %v10452 = vmul.f32 %v10449, %v10451
  %v10453 = vadd.f32 %v10449, %v10452
  %vm10454 = vweird.f32 %v9128
  %vm10455 = vweird.f32 %v10449
  %vm10456 = vmor %vm10454, %vm10455
  %v10457 = vsel %vm10456, %v10449, %v10453
  %v10458 = vand.u32 2147483647, %v9128
  %vm10459 = vcmp.eq.f32.partialorder %v10458, 8.507059e+37
  %v10460 = vand.u32 %v9128, 2147483648
  %v10461 = vor.u32 1.1754944e-38, %v10460
  %v10462 = vsel %vm10459, %v10461, %v10457
  %v10463 = vmul.f32 %v8798, %v10462
  %v10464 = vrcp.pop %v9131
  %v10465 = vmul.f32 %v9131, %v10464
  %v10466 = vsub.f32 1.0, %v10465
  %v10467 = vmul.f32 %v10464, %v10466
  %v10468 = vadd.f32 %v10464, %v10467
  %vm10469 = vweird.f32 %v9131
  %vm10470 = vweird.f32 %v10464
  %vm10471 = vmor %vm10469, %vm10470
  %v10472 = vsel %vm10471, %v10464, %v10468
  %v10473 = vand.u32 2147483647, %v9131
  %vm10474 = vcmp.eq.f32.partialorder %v10473, 8.507059e+37
  %v10475 = vand.u32 %v9131, 2147483648
  %v10476 = vor.u32 1.1754944e-38, %v10475
  %v10477 = vsel %vm10474, %v10476, %v10472
  %v10478 = vmul.f32 %v8800, %v10477
  %v10479 = vrcp.pop %v9134
  %v10480 = vmul.f32 %v9134, %v10479
  %v10481 = vsub.f32 1.0, %v10480
  %v10482 = vmul.f32 %v10479, %v10481
  %v10483 = vadd.f32 %v10479, %v10482
  %vm10484 = vweird.f32 %v9134
  %vm10485 = vweird.f32 %v10479
  %vm10486 = vmor %vm10484, %vm10485
  %v10487 = vsel %vm10486, %v10479, %v10483
  %v10488 = vand.u32 2147483647, %v9134
  %vm10489 = vcmp.eq.f32.partialorder %v10488, 8.507059e+37
  %v10490 = vand.u32 %v9134, 2147483648
  %v10491 = vor.u32 1.1754944e-38, %v10490
  %v10492 = vsel %vm10489, %v10491, %v10487
  %v10493 = vmul.f32 %v8802, %v10492
  %v10494 = vrcp.pop %v9137
  %v10495 = vmul.f32 %v9137, %v10494
  %v10496 = vsub.f32 1.0, %v10495
  %v10497 = vmul.f32 %v10494, %v10496
  %v10498 = vadd.f32 %v10494, %v10497
  %vm10499 = vweird.f32 %v9137
  %vm10500 = vweird.f32 %v10494
  %vm10501 = vmor %vm10499, %vm10500
  %v10502 = vsel %vm10501, %v10494, %v10498
  %v10503 = vand.u32 2147483647, %v9137
  %vm10504 = vcmp.eq.f32.partialorder %v10503, 8.507059e+37
  %v10505 = vand.u32 %v9137, 2147483648
  %v10506 = vor.u32 1.1754944e-38, %v10505
  %v10507 = vsel %vm10504, %v10506, %v10502
  %v10508 = vmul.f32 %v8804, %v10507
  %v10509 = vrcp.pop %v9140
  %v10510 = vmul.f32 %v9140, %v10509
  %v10511 = vsub.f32 1.0, %v10510
  %v10512 = vmul.f32 %v10509, %v10511
  %v10513 = vadd.f32 %v10509, %v10512
  %vm10514 = vweird.f32 %v9140
  %vm10515 = vweird.f32 %v10509
  %vm10516 = vmor %vm10514, %vm10515
  %v10517 = vsel %vm10516, %v10509, %v10513
  %v10518 = vand.u32 2147483647, %v9140
  %vm10519 = vcmp.eq.f32.partialorder %v10518, 8.507059e+37
  %v10520 = vand.u32 %v9140, 2147483648
  %v10521 = vor.u32 1.1754944e-38, %v10520
  %v10522 = vsel %vm10519, %v10521, %v10517
  %v10523 = vmul.f32 %v8806, %v10522
  %v10524 = vrcp.pop %v9143
  %v10525 = vmul.f32 %v9143, %v10524
  %v10526 = vsub.f32 1.0, %v10525
  %v10527 = vmul.f32 %v10524, %v10526
  %v10528 = vadd.f32 %v10524, %v10527
  %vm10529 = vweird.f32 %v9143
  %vm10530 = vweird.f32 %v10524
  %vm10531 = vmor %vm10529, %vm10530
  %v10532 = vsel %vm10531, %v10524, %v10528
  %v10533 = vand.u32 2147483647, %v9143
  %vm10534 = vcmp.eq.f32.partialorder %v10533, 8.507059e+37
  %v10535 = vand.u32 %v9143, 2147483648
  %v10536 = vor.u32 1.1754944e-38, %v10535
  %v10537 = vsel %vm10534, %v10536, %v10532
  %v10538 = vmul.f32 %v8808, %v10537
  %v10539 = vrcp.pop %v9146
  %v10540 = vmul.f32 %v9146, %v10539
  %v10541 = vsub.f32 1.0, %v10540
  %v10542 = vmul.f32 %v10539, %v10541
  %v10543 = vadd.f32 %v10539, %v10542
  %vm10544 = vweird.f32 %v9146
  %vm10545 = vweird.f32 %v10539
  %vm10546 = vmor %vm10544, %vm10545
  %v10547 = vsel %vm10546, %v10539, %v10543
  %v10548 = vand.u32 2147483647, %v9146
  %vm10549 = vcmp.eq.f32.partialorder %v10548, 8.507059e+37
  %v10550 = vand.u32 %v9146, 2147483648
  %v10551 = vor.u32 1.1754944e-38, %v10550
  %v10552 = vsel %vm10549, %v10551, %v10547
  %v10553 = vmul.f32 %v8810, %v10552
  %v10554 = vrcp.pop %v9149
  %v10555 = vmul.f32 %v9149, %v10554
  %v10556 = vsub.f32 1.0, %v10555
  %v10557 = vmul.f32 %v10554, %v10556
  %v10558 = vadd.f32 %v10554, %v10557
  %vm10559 = vweird.f32 %v9149
  %vm10560 = vweird.f32 %v10554
  %vm10561 = vmor %vm10559, %vm10560
  %v10562 = vsel %vm10561, %v10554, %v10558
  %v10563 = vand.u32 2147483647, %v9149
  %vm10564 = vcmp.eq.f32.partialorder %v10563, 8.507059e+37
  %v10565 = vand.u32 %v9149, 2147483648
  %v10566 = vor.u32 1.1754944e-38, %v10565
  %v10567 = vsel %vm10564, %v10566, %v10562
  %v10568 = vmul.f32 %v8812, %v10567
  %v10569 = vrcp.pop %v9152
  %v10570 = vmul.f32 %v9152, %v10569
  %v10571 = vsub.f32 1.0, %v10570
  %v10572 = vmul.f32 %v10569, %v10571
  %v10573 = vadd.f32 %v10569, %v10572
  %vm10574 = vweird.f32 %v9152
  %vm10575 = vweird.f32 %v10569
  %vm10576 = vmor %vm10574, %vm10575
  %v10577 = vsel %vm10576, %v10569, %v10573
  %v10578 = vand.u32 2147483647, %v9152
  %vm10579 = vcmp.eq.f32.partialorder %v10578, 8.507059e+37
  %v10580 = vand.u32 %v9152, 2147483648
  %v10581 = vor.u32 1.1754944e-38, %v10580
  %v10582 = vsel %vm10579, %v10581, %v10577
  %v10583 = vmul.f32 %v8814, %v10582
  %v10584 = vrcp.pop %v9155
  %v10585 = vmul.f32 %v9155, %v10584
  %v10586 = vsub.f32 1.0, %v10585
  %v10587 = vmul.f32 %v10584, %v10586
  %v10588 = vadd.f32 %v10584, %v10587
  %vm10589 = vweird.f32 %v9155
  %vm10590 = vweird.f32 %v10584
  %vm10591 = vmor %vm10589, %vm10590
  %v10592 = vsel %vm10591, %v10584, %v10588
  %v10593 = vand.u32 2147483647, %v9155
  %vm10594 = vcmp.eq.f32.partialorder %v10593, 8.507059e+37
  %v10595 = vand.u32 %v9155, 2147483648
  %v10596 = vor.u32 1.1754944e-38, %v10595
  %v10597 = vsel %vm10594, %v10596, %v10592
  %v10598 = vmul.f32 %v8816, %v10597
  %v10599 = vrcp.pop %v9158
  %v10600 = vmul.f32 %v9158, %v10599
  %v10601 = vsub.f32 1.0, %v10600
  %v10602 = vmul.f32 %v10599, %v10601
  %v10603 = vadd.f32 %v10599, %v10602
  %vm10604 = vweird.f32 %v9158
  %vm10605 = vweird.f32 %v10599
  %vm10606 = vmor %vm10604, %vm10605
  %v10607 = vsel %vm10606, %v10599, %v10603
  %v10608 = vand.u32 2147483647, %v9158
  %vm10609 = vcmp.eq.f32.partialorder %v10608, 8.507059e+37
  %v10610 = vand.u32 %v9158, 2147483648
  %v10611 = vor.u32 1.1754944e-38, %v10610
  %v10612 = vsel %vm10609, %v10611, %v10607
  %v10613 = vmul.f32 %v8818, %v10612
  %v10614 = vrcp.pop %v9161
  %v10615 = vmul.f32 %v9161, %v10614
  %v10616 = vsub.f32 1.0, %v10615
  %v10617 = vmul.f32 %v10614, %v10616
  %v10618 = vadd.f32 %v10614, %v10617
  %vm10619 = vweird.f32 %v9161
  %vm10620 = vweird.f32 %v10614
  %vm10621 = vmor %vm10619, %vm10620
  %v10622 = vsel %vm10621, %v10614, %v10618
  %v10623 = vand.u32 2147483647, %v9161
  %vm10624 = vcmp.eq.f32.partialorder %v10623, 8.507059e+37
  %v10625 = vand.u32 %v9161, 2147483648
  %v10626 = vor.u32 1.1754944e-38, %v10625
  %v10627 = vsel %vm10624, %v10626, %v10622
  %v10628 = vmul.f32 %v8820, %v10627
  %v10629 = vrcp.pop %v9164
  %v10630 = vmul.f32 %v9164, %v10629
  %v10631 = vsub.f32 1.0, %v10630
  %v10632 = vmul.f32 %v10629, %v10631
  %v10633 = vadd.f32 %v10629, %v10632
  %vm10634 = vweird.f32 %v9164
  %vm10635 = vweird.f32 %v10629
  %vm10636 = vmor %vm10634, %vm10635
  %v10637 = vsel %vm10636, %v10629, %v10633
  %v10638 = vand.u32 2147483647, %v9164
  %vm10639 = vcmp.eq.f32.partialorder %v10638, 8.507059e+37
  %v10640 = vand.u32 %v9164, 2147483648
  %v10641 = vor.u32 1.1754944e-38, %v10640
  %v10642 = vsel %vm10639, %v10641, %v10637
  %v10643 = vmul.f32 %v8822, %v10642
  %v10644 = vrcp.pop %v9167
  %v10645 = vmul.f32 %v9167, %v10644
  %v10646 = vsub.f32 1.0, %v10645
  %v10647 = vmul.f32 %v10644, %v10646
  %v10648 = vadd.f32 %v10644, %v10647
  %vm10649 = vweird.f32 %v9167
  %vm10650 = vweird.f32 %v10644
  %vm10651 = vmor %vm10649, %vm10650
  %v10652 = vsel %vm10651, %v10644, %v10648
  %v10653 = vand.u32 2147483647, %v9167
  %vm10654 = vcmp.eq.f32.partialorder %v10653, 8.507059e+37
  %v10655 = vand.u32 %v9167, 2147483648
  %v10656 = vor.u32 1.1754944e-38, %v10655
  %v10657 = vsel %vm10654, %v10656, %v10652
  %v10658 = vmul.f32 %v8824, %v10657
  %v10659 = vrcp.pop %v9170
  %v10660 = vmul.f32 %v9170, %v10659
  %v10661 = vsub.f32 1.0, %v10660
  %v10662 = vmul.f32 %v10659, %v10661
  %v10663 = vadd.f32 %v10659, %v10662
  %vm10664 = vweird.f32 %v9170
  %vm10665 = vweird.f32 %v10659
  %vm10666 = vmor %vm10664, %vm10665
  %v10667 = vsel %vm10666, %v10659, %v10663
  %v10668 = vand.u32 2147483647, %v9170
  %vm10669 = vcmp.eq.f32.partialorder %v10668, 8.507059e+37
  %v10670 = vand.u32 %v9170, 2147483648
  %v10671 = vor.u32 1.1754944e-38, %v10670
  %v10672 = vsel %vm10669, %v10671, %v10667
  %v10673 = vmul.f32 %v8826, %v10672
  %v10674 = vrcp.pop %v9173
  %v10675 = vmul.f32 %v9173, %v10674
  %v10676 = vsub.f32 1.0, %v10675
  %v10677 = vmul.f32 %v10674, %v10676
  %v10678 = vadd.f32 %v10674, %v10677
  %vm10679 = vweird.f32 %v9173
  %vm10680 = vweird.f32 %v10674
  %vm10681 = vmor %vm10679, %vm10680
  %v10682 = vsel %vm10681, %v10674, %v10678
  %v10683 = vand.u32 2147483647, %v9173
  %vm10684 = vcmp.eq.f32.partialorder %v10683, 8.507059e+37
  %v10685 = vand.u32 %v9173, 2147483648
  %v10686 = vor.u32 1.1754944e-38, %v10685
  %v10687 = vsel %vm10684, %v10686, %v10682
  %v10688 = vmul.f32 %v8828, %v10687
  %v10689 = vrcp.pop %v9176
  %v10690 = vmul.f32 %v9176, %v10689
  %v10691 = vsub.f32 1.0, %v10690
  %v10692 = vmul.f32 %v10689, %v10691
  %v10693 = vadd.f32 %v10689, %v10692
  %vm10694 = vweird.f32 %v9176
  %vm10695 = vweird.f32 %v10689
  %vm10696 = vmor %vm10694, %vm10695
  %v10697 = vsel %vm10696, %v10689, %v10693
  %v10698 = vand.u32 2147483647, %v9176
  %vm10699 = vcmp.eq.f32.partialorder %v10698, 8.507059e+37
  %v10700 = vand.u32 %v9176, 2147483648
  %v10701 = vor.u32 1.1754944e-38, %v10700
  %v10702 = vsel %vm10699, %v10701, %v10697
  %v10703 = vmul.f32 %v8830, %v10702
  %v10704 = vrcp.pop %v9179
  %v10705 = vmul.f32 %v9179, %v10704
  %v10706 = vsub.f32 1.0, %v10705
  %v10707 = vmul.f32 %v10704, %v10706
  %v10708 = vadd.f32 %v10704, %v10707
  %vm10709 = vweird.f32 %v9179
  %vm10710 = vweird.f32 %v10704
  %vm10711 = vmor %vm10709, %vm10710
  %v10712 = vsel %vm10711, %v10704, %v10708
  %v10713 = vand.u32 2147483647, %v9179
  %vm10714 = vcmp.eq.f32.partialorder %v10713, 8.507059e+37
  %v10715 = vand.u32 %v9179, 2147483648
  %v10716 = vor.u32 1.1754944e-38, %v10715
  %v10717 = vsel %vm10714, %v10716, %v10712
  %v10718 = vmul.f32 %v8832, %v10717
  %v10719 = vrcp.pop %v9182
  %v10720 = vmul.f32 %v9182, %v10719
  %v10721 = vsub.f32 1.0, %v10720
  %v10722 = vmul.f32 %v10719, %v10721
  %v10723 = vadd.f32 %v10719, %v10722
  %vm10724 = vweird.f32 %v9182
  %vm10725 = vweird.f32 %v10719
  %vm10726 = vmor %vm10724, %vm10725
  %v10727 = vsel %vm10726, %v10719, %v10723
  %v10728 = vand.u32 2147483647, %v9182
  %vm10729 = vcmp.eq.f32.partialorder %v10728, 8.507059e+37
  %v10730 = vand.u32 %v9182, 2147483648
  %v10731 = vor.u32 1.1754944e-38, %v10730
  %v10732 = vsel %vm10729, %v10731, %v10727
  %v10733 = vmul.f32 %v8834, %v10732
  %v10734 = vrcp.pop %v9185
  %v10735 = vmul.f32 %v9185, %v10734
  %v10736 = vsub.f32 1.0, %v10735
  %v10737 = vmul.f32 %v10734, %v10736
  %v10738 = vadd.f32 %v10734, %v10737
  %vm10739 = vweird.f32 %v9185
  %vm10740 = vweird.f32 %v10734
  %vm10741 = vmor %vm10739, %vm10740
  %v10742 = vsel %vm10741, %v10734, %v10738
  %v10743 = vand.u32 2147483647, %v9185
  %vm10744 = vcmp.eq.f32.partialorder %v10743, 8.507059e+37
  %v10745 = vand.u32 %v9185, 2147483648
  %v10746 = vor.u32 1.1754944e-38, %v10745
  %v10747 = vsel %vm10744, %v10746, %v10742
  %v10748 = vmul.f32 %v8836, %v10747
  %v10749 = vrcp.pop %v9188
  %v10750 = vmul.f32 %v9188, %v10749
  %v10751 = vsub.f32 1.0, %v10750
  %v10752 = vmul.f32 %v10749, %v10751
  %v10753 = vadd.f32 %v10749, %v10752
  %vm10754 = vweird.f32 %v9188
  %vm10755 = vweird.f32 %v10749
  %vm10756 = vmor %vm10754, %vm10755
  %v10757 = vsel %vm10756, %v10749, %v10753
  %v10758 = vand.u32 2147483647, %v9188
  %vm10759 = vcmp.eq.f32.partialorder %v10758, 8.507059e+37
  %v10760 = vand.u32 %v9188, 2147483648
  %v10761 = vor.u32 1.1754944e-38, %v10760
  %v10762 = vsel %vm10759, %v10761, %v10757
  %v10763 = vmul.f32 %v8838, %v10762
  %v10764 = vrcp.pop %v9191
  %v10765 = vmul.f32 %v9191, %v10764
  %v10766 = vsub.f32 1.0, %v10765
  %v10767 = vmul.f32 %v10764, %v10766
  %v10768 = vadd.f32 %v10764, %v10767
  %vm10769 = vweird.f32 %v9191
  %vm10770 = vweird.f32 %v10764
  %vm10771 = vmor %vm10769, %vm10770
  %v10772 = vsel %vm10771, %v10764, %v10768
  %v10773 = vand.u32 2147483647, %v9191
  %vm10774 = vcmp.eq.f32.partialorder %v10773, 8.507059e+37
  %v10775 = vand.u32 %v9191, 2147483648
  %v10776 = vor.u32 1.1754944e-38, %v10775
  %v10777 = vsel %vm10774, %v10776, %v10772
  %v10778 = vmul.f32 %v8840, %v10777
  %v10779 = vrcp.pop %v9194
  %v10780 = vmul.f32 %v9194, %v10779
  %v10781 = vsub.f32 1.0, %v10780
  %v10782 = vmul.f32 %v10779, %v10781
  %v10783 = vadd.f32 %v10779, %v10782
  %vm10784 = vweird.f32 %v9194
  %vm10785 = vweird.f32 %v10779
  %vm10786 = vmor %vm10784, %vm10785
  %v10787 = vsel %vm10786, %v10779, %v10783
  %v10788 = vand.u32 2147483647, %v9194
  %vm10789 = vcmp.eq.f32.partialorder %v10788, 8.507059e+37
  %v10790 = vand.u32 %v9194, 2147483648
  %v10791 = vor.u32 1.1754944e-38, %v10790
  %v10792 = vsel %vm10789, %v10791, %v10787
  %v10793 = vmul.f32 %v8842, %v10792
  %v10794 = vrcp.pop %v9197
  %v10795 = vmul.f32 %v9197, %v10794
  %v10796 = vsub.f32 1.0, %v10795
  %v10797 = vmul.f32 %v10794, %v10796
  %v10798 = vadd.f32 %v10794, %v10797
  %vm10799 = vweird.f32 %v9197
  %vm10800 = vweird.f32 %v10794
  %vm10801 = vmor %vm10799, %vm10800
  %v10802 = vsel %vm10801, %v10794, %v10798
  %v10803 = vand.u32 2147483647, %v9197
  %vm10804 = vcmp.eq.f32.partialorder %v10803, 8.507059e+37
  %v10805 = vand.u32 %v9197, 2147483648
  %v10806 = vor.u32 1.1754944e-38, %v10805
  %v10807 = vsel %vm10804, %v10806, %v10802
  %v10808 = vmul.f32 %v8844, %v10807
  %v10809 = vrcp.pop %v9200
  %v10810 = vmul.f32 %v9200, %v10809
  %v10811 = vsub.f32 1.0, %v10810
  %v10812 = vmul.f32 %v10809, %v10811
  %v10813 = vadd.f32 %v10809, %v10812
  %vm10814 = vweird.f32 %v9200
  %vm10815 = vweird.f32 %v10809
  %vm10816 = vmor %vm10814, %vm10815
  %v10817 = vsel %vm10816, %v10809, %v10813
  %v10818 = vand.u32 2147483647, %v9200
  %vm10819 = vcmp.eq.f32.partialorder %v10818, 8.507059e+37
  %v10820 = vand.u32 %v9200, 2147483648
  %v10821 = vor.u32 1.1754944e-38, %v10820
  %v10822 = vsel %vm10819, %v10821, %v10817
  %v10823 = vmul.f32 %v8846, %v10822
  %v10824 = vrcp.pop %v9203
  %v10825 = vmul.f32 %v9203, %v10824
  %v10826 = vsub.f32 1.0, %v10825
  %v10827 = vmul.f32 %v10824, %v10826
  %v10828 = vadd.f32 %v10824, %v10827
  %vm10829 = vweird.f32 %v9203
  %vm10830 = vweird.f32 %v10824
  %vm10831 = vmor %vm10829, %vm10830
  %v10832 = vsel %vm10831, %v10824, %v10828
  %v10833 = vand.u32 2147483647, %v9203
  %vm10834 = vcmp.eq.f32.partialorder %v10833, 8.507059e+37
  %v10835 = vand.u32 %v9203, 2147483648
  %v10836 = vor.u32 1.1754944e-38, %v10835
  %v10837 = vsel %vm10834, %v10836, %v10832
  %v10838 = vmul.f32 %v8848, %v10837
  %v10839 = vrcp.pop %v9206
  %v10840 = vmul.f32 %v9206, %v10839
  %v10841 = vsub.f32 1.0, %v10840
  %v10842 = vmul.f32 %v10839, %v10841
  %v10843 = vadd.f32 %v10839, %v10842
  %vm10844 = vweird.f32 %v9206
  %vm10845 = vweird.f32 %v10839
  %vm10846 = vmor %vm10844, %vm10845
  %v10847 = vsel %vm10846, %v10839, %v10843
  %v10848 = vand.u32 2147483647, %v9206
  %vm10849 = vcmp.eq.f32.partialorder %v10848, 8.507059e+37
  %v10850 = vand.u32 %v9206, 2147483648
  %v10851 = vor.u32 1.1754944e-38, %v10850
  %v10852 = vsel %vm10849, %v10851, %v10847
  %v10853 = vmul.f32 %v8850, %v10852
  %v10854 = vrcp.pop %v9209
  %v10855 = vmul.f32 %v9209, %v10854
  %v10856 = vsub.f32 1.0, %v10855
  %v10857 = vmul.f32 %v10854, %v10856
  %v10858 = vadd.f32 %v10854, %v10857
  %vm10859 = vweird.f32 %v9209
  %vm10860 = vweird.f32 %v10854
  %vm10861 = vmor %vm10859, %vm10860
  %v10862 = vsel %vm10861, %v10854, %v10858
  %v10863 = vand.u32 2147483647, %v9209
  %vm10864 = vcmp.eq.f32.partialorder %v10863, 8.507059e+37
  %v10865 = vand.u32 %v9209, 2147483648
  %v10866 = vor.u32 1.1754944e-38, %v10865
  %v10867 = vsel %vm10864, %v10866, %v10862
  %v10868 = vmul.f32 %v8852, %v10867
  %v10869 = vrcp.pop %v9212
  %v10870 = vmul.f32 %v9212, %v10869
  %v10871 = vsub.f32 1.0, %v10870
  %v10872 = vmul.f32 %v10869, %v10871
  %v10873 = vadd.f32 %v10869, %v10872
  %vm10874 = vweird.f32 %v9212
  %vm10875 = vweird.f32 %v10869
  %vm10876 = vmor %vm10874, %vm10875
  %v10877 = vsel %vm10876, %v10869, %v10873
  %v10878 = vand.u32 2147483647, %v9212
  %vm10879 = vcmp.eq.f32.partialorder %v10878, 8.507059e+37
  %v10880 = vand.u32 %v9212, 2147483648
  %v10881 = vor.u32 1.1754944e-38, %v10880
  %v10882 = vsel %vm10879, %v10881, %v10877
  %v10883 = vmul.f32 %v8854, %v10882
  %v10884 = vrcp.pop %v9215
  %v10885 = vmul.f32 %v9215, %v10884
  %v10886 = vsub.f32 1.0, %v10885
  %v10887 = vmul.f32 %v10884, %v10886
  %v10888 = vadd.f32 %v10884, %v10887
  %vm10889 = vweird.f32 %v9215
  %vm10890 = vweird.f32 %v10884
  %vm10891 = vmor %vm10889, %vm10890
  %v10892 = vsel %vm10891, %v10884, %v10888
  %v10893 = vand.u32 2147483647, %v9215
  %vm10894 = vcmp.eq.f32.partialorder %v10893, 8.507059e+37
  %v10895 = vand.u32 %v9215, 2147483648
  %v10896 = vor.u32 1.1754944e-38, %v10895
  %v10897 = vsel %vm10894, %v10896, %v10892
  %v10898 = vmul.f32 %v8856, %v10897
  %v10899 = vrcp.pop %v9218
  %v10900 = vmul.f32 %v9218, %v10899
  %v10901 = vsub.f32 1.0, %v10900
  %v10902 = vmul.f32 %v10899, %v10901
  %v10903 = vadd.f32 %v10899, %v10902
  %vm10904 = vweird.f32 %v9218
  %vm10905 = vweird.f32 %v10899
  %vm10906 = vmor %vm10904, %vm10905
  %v10907 = vsel %vm10906, %v10899, %v10903
  %v10908 = vand.u32 2147483647, %v9218
  %vm10909 = vcmp.eq.f32.partialorder %v10908, 8.507059e+37
  %v10910 = vand.u32 %v9218, 2147483648
  %v10911 = vor.u32 1.1754944e-38, %v10910
  %v10912 = vsel %vm10909, %v10911, %v10907
  %v10913 = vmul.f32 %v8858, %v10912
  %v10914 = vrcp.pop %v9221
  %v10915 = vmul.f32 %v9221, %v10914
  %v10916 = vsub.f32 1.0, %v10915
  %v10917 = vmul.f32 %v10914, %v10916
  %v10918 = vadd.f32 %v10914, %v10917
  %vm10919 = vweird.f32 %v9221
  %vm10920 = vweird.f32 %v10914
  %vm10921 = vmor %vm10919, %vm10920
  %v10922 = vsel %vm10921, %v10914, %v10918
  %v10923 = vand.u32 2147483647, %v9221
  %vm10924 = vcmp.eq.f32.partialorder %v10923, 8.507059e+37
  %v10925 = vand.u32 %v9221, 2147483648
  %v10926 = vor.u32 1.1754944e-38, %v10925
  %v10927 = vsel %vm10924, %v10926, %v10922
  %v10928 = vmul.f32 %v8860, %v10927
  %v10929 = vrcp.pop %v9224
  %v10930 = vmul.f32 %v9224, %v10929
  %v10931 = vsub.f32 1.0, %v10930
  %v10932 = vmul.f32 %v10929, %v10931
  %v10933 = vadd.f32 %v10929, %v10932
  %vm10934 = vweird.f32 %v9224
  %vm10935 = vweird.f32 %v10929
  %vm10936 = vmor %vm10934, %vm10935
  %v10937 = vsel %vm10936, %v10929, %v10933
  %v10938 = vand.u32 2147483647, %v9224
  %vm10939 = vcmp.eq.f32.partialorder %v10938, 8.507059e+37
  %v10940 = vand.u32 %v9224, 2147483648
  %v10941 = vor.u32 1.1754944e-38, %v10940
  %v10942 = vsel %vm10939, %v10941, %v10937
  %v10943 = vmul.f32 %v8862, %v10942
  %v10944 = vrcp.pop %v9227
  %v10945 = vmul.f32 %v9227, %v10944
  %v10946 = vsub.f32 1.0, %v10945
  %v10947 = vmul.f32 %v10944, %v10946
  %v10948 = vadd.f32 %v10944, %v10947
  %vm10949 = vweird.f32 %v9227
  %vm10950 = vweird.f32 %v10944
  %vm10951 = vmor %vm10949, %vm10950
  %v10952 = vsel %vm10951, %v10944, %v10948
  %v10953 = vand.u32 2147483647, %v9227
  %vm10954 = vcmp.eq.f32.partialorder %v10953, 8.507059e+37
  %v10955 = vand.u32 %v9227, 2147483648
  %v10956 = vor.u32 1.1754944e-38, %v10955
  %v10957 = vsel %vm10954, %v10956, %v10952
  %v10958 = vmul.f32 %v8864, %v10957
  %v10959 = vrcp.pop %v9230
  %v10960 = vmul.f32 %v9230, %v10959
  %v10961 = vsub.f32 1.0, %v10960
  %v10962 = vmul.f32 %v10959, %v10961
  %v10963 = vadd.f32 %v10959, %v10962
  %vm10964 = vweird.f32 %v9230
  %vm10965 = vweird.f32 %v10959
  %vm10966 = vmor %vm10964, %vm10965
  %v10967 = vsel %vm10966, %v10959, %v10963
  %v10968 = vand.u32 2147483647, %v9230
  %vm10969 = vcmp.eq.f32.partialorder %v10968, 8.507059e+37
  %v10970 = vand.u32 %v9230, 2147483648
  %v10971 = vor.u32 1.1754944e-38, %v10970
  %v10972 = vsel %vm10969, %v10971, %v10967
  %v10973 = vmul.f32 %v8866, %v10972
  %v10974 = vrcp.pop %v9233
  %v10975 = vmul.f32 %v9233, %v10974
  %v10976 = vsub.f32 1.0, %v10975
  %v10977 = vmul.f32 %v10974, %v10976
  %v10978 = vadd.f32 %v10974, %v10977
  %vm10979 = vweird.f32 %v9233
  %vm10980 = vweird.f32 %v10974
  %vm10981 = vmor %vm10979, %vm10980
  %v10982 = vsel %vm10981, %v10974, %v10978
  %v10983 = vand.u32 2147483647, %v9233
  %vm10984 = vcmp.eq.f32.partialorder %v10983, 8.507059e+37
  %v10985 = vand.u32 %v9233, 2147483648
  %v10986 = vor.u32 1.1754944e-38, %v10985
  %v10987 = vsel %vm10984, %v10986, %v10982
  %v10988 = vmul.f32 %v8868, %v10987
  %v10989 = vrcp.pop %v9236
  %v10990 = vmul.f32 %v9236, %v10989
  %v10991 = vsub.f32 1.0, %v10990
  %v10992 = vmul.f32 %v10989, %v10991
  %v10993 = vadd.f32 %v10989, %v10992
  %vm10994 = vweird.f32 %v9236
  %vm10995 = vweird.f32 %v10989
  %vm10996 = vmor %vm10994, %vm10995
  %v10997 = vsel %vm10996, %v10989, %v10993
  %v10998 = vand.u32 2147483647, %v9236
  %vm10999 = vcmp.eq.f32.partialorder %v10998, 8.507059e+37
  %v11000 = vand.u32 %v9236, 2147483648
  %v11001 = vor.u32 1.1754944e-38, %v11000
  %v11002 = vsel %vm10999, %v11001, %v10997
  %v11003 = vmul.f32 %v8870, %v11002
  %v11004 = vrcp.pop %v9239
  %v11005 = vmul.f32 %v9239, %v11004
  %v11006 = vsub.f32 1.0, %v11005
  %v11007 = vmul.f32 %v11004, %v11006
  %v11008 = vadd.f32 %v11004, %v11007
  %vm11009 = vweird.f32 %v9239
  %vm11010 = vweird.f32 %v11004
  %vm11011 = vmor %vm11009, %vm11010
  %v11012 = vsel %vm11011, %v11004, %v11008
  %v11013 = vand.u32 2147483647, %v9239
  %vm11014 = vcmp.eq.f32.partialorder %v11013, 8.507059e+37
  %v11015 = vand.u32 %v9239, 2147483648
  %v11016 = vor.u32 1.1754944e-38, %v11015
  %v11017 = vsel %vm11014, %v11016, %v11012
  %v11018 = vmul.f32 %v8872, %v11017
  %v11019 = vrcp.pop %v9242
  %v11020 = vmul.f32 %v9242, %v11019
  %v11021 = vsub.f32 1.0, %v11020
  %v11022 = vmul.f32 %v11019, %v11021
  %v11023 = vadd.f32 %v11019, %v11022
  %vm11024 = vweird.f32 %v9242
  %vm11025 = vweird.f32 %v11019
  %vm11026 = vmor %vm11024, %vm11025
  %v11027 = vsel %vm11026, %v11019, %v11023
  %v11028 = vand.u32 2147483647, %v9242
  %vm11029 = vcmp.eq.f32.partialorder %v11028, 8.507059e+37
  %v11030 = vand.u32 %v9242, 2147483648
  %v11031 = vor.u32 1.1754944e-38, %v11030
  %v11032 = vsel %vm11029, %v11031, %v11027
  %v11033 = vmul.f32 %v8874, %v11032
  %v11034 = vrcp.pop %v9245
  %v11035 = vmul.f32 %v9245, %v11034
  %v11036 = vsub.f32 1.0, %v11035
  %v11037 = vmul.f32 %v11034, %v11036
  %v11038 = vadd.f32 %v11034, %v11037
  %vm11039 = vweird.f32 %v9245
  %vm11040 = vweird.f32 %v11034
  %vm11041 = vmor %vm11039, %vm11040
  %v11042 = vsel %vm11041, %v11034, %v11038
  %v11043 = vand.u32 2147483647, %v9245
  %vm11044 = vcmp.eq.f32.partialorder %v11043, 8.507059e+37
  %v11045 = vand.u32 %v9245, 2147483648
  %v11046 = vor.u32 1.1754944e-38, %v11045
  %v11047 = vsel %vm11044, %v11046, %v11042
  %v11048 = vmul.f32 %v8876, %v11047
  %v11049 = vrcp.pop %v9248
  %v11050 = vmul.f32 %v9248, %v11049
  %v11051 = vsub.f32 1.0, %v11050
  %v11052 = vmul.f32 %v11049, %v11051
  %v11053 = vadd.f32 %v11049, %v11052
  %vm11054 = vweird.f32 %v9248
  %vm11055 = vweird.f32 %v11049
  %vm11056 = vmor %vm11054, %vm11055
  %v11057 = vsel %vm11056, %v11049, %v11053
  %v11058 = vand.u32 2147483647, %v9248
  %vm11059 = vcmp.eq.f32.partialorder %v11058, 8.507059e+37
  %v11060 = vand.u32 %v9248, 2147483648
  %v11061 = vor.u32 1.1754944e-38, %v11060
  %v11062 = vsel %vm11059, %v11061, %v11057
  %v11063 = vmul.f32 %v8878, %v11062
  %v11064 = vrcp.pop %v9251
  %v11065 = vmul.f32 %v9251, %v11064
  %v11066 = vsub.f32 1.0, %v11065
  %v11067 = vmul.f32 %v11064, %v11066
  %v11068 = vadd.f32 %v11064, %v11067
  %vm11069 = vweird.f32 %v9251
  %vm11070 = vweird.f32 %v11064
  %vm11071 = vmor %vm11069, %vm11070
  %v11072 = vsel %vm11071, %v11064, %v11068
  %v11073 = vand.u32 2147483647, %v9251
  %vm11074 = vcmp.eq.f32.partialorder %v11073, 8.507059e+37
  %v11075 = vand.u32 %v9251, 2147483648
  %v11076 = vor.u32 1.1754944e-38, %v11075
  %v11077 = vsel %vm11074, %v11076, %v11072
  %v11078 = vmul.f32 %v8880, %v11077
  %v11079 = vrcp.pop %v9254
  %v11080 = vmul.f32 %v9254, %v11079
  %v11081 = vsub.f32 1.0, %v11080
  %v11082 = vmul.f32 %v11079, %v11081
  %v11083 = vadd.f32 %v11079, %v11082
  %vm11084 = vweird.f32 %v9254
  %vm11085 = vweird.f32 %v11079
  %vm11086 = vmor %vm11084, %vm11085
  %v11087 = vsel %vm11086, %v11079, %v11083
  %v11088 = vand.u32 2147483647, %v9254
  %vm11089 = vcmp.eq.f32.partialorder %v11088, 8.507059e+37
  %v11090 = vand.u32 %v9254, 2147483648
  %v11091 = vor.u32 1.1754944e-38, %v11090
  %v11092 = vsel %vm11089, %v11091, %v11087
  %v11093 = vmul.f32 %v8882, %v11092
  %v11094 = vrcp.pop %v9257
  %v11095 = vmul.f32 %v9257, %v11094
  %v11096 = vsub.f32 1.0, %v11095
  %v11097 = vmul.f32 %v11094, %v11096
  %v11098 = vadd.f32 %v11094, %v11097
  %vm11099 = vweird.f32 %v9257
  %vm11100 = vweird.f32 %v11094
  %vm11101 = vmor %vm11099, %vm11100
  %v11102 = vsel %vm11101, %v11094, %v11098
  %v11103 = vand.u32 2147483647, %v9257
  %vm11104 = vcmp.eq.f32.partialorder %v11103, 8.507059e+37
  %v11105 = vand.u32 %v9257, 2147483648
  %v11106 = vor.u32 1.1754944e-38, %v11105
  %v11107 = vsel %vm11104, %v11106, %v11102
  %v11108 = vmul.f32 %v8884, %v11107
  %v11109 = vrcp.pop %v9260
  %v11110 = vmul.f32 %v9260, %v11109
  %v11111 = vsub.f32 1.0, %v11110
  %v11112 = vmul.f32 %v11109, %v11111
  %v11113 = vadd.f32 %v11109, %v11112
  %vm11114 = vweird.f32 %v9260
  %vm11115 = vweird.f32 %v11109
  %vm11116 = vmor %vm11114, %vm11115
  %v11117 = vsel %vm11116, %v11109, %v11113
  %v11118 = vand.u32 2147483647, %v9260
  %vm11119 = vcmp.eq.f32.partialorder %v11118, 8.507059e+37
  %v11120 = vand.u32 %v9260, 2147483648
  %v11121 = vor.u32 1.1754944e-38, %v11120
  %v11122 = vsel %vm11119, %v11121, %v11117
  %v11123 = vmul.f32 %v8886, %v11122
  %v11124 = vrcp.pop %v9263
  %v11125 = vmul.f32 %v9263, %v11124
  %v11126 = vsub.f32 1.0, %v11125
  %v11127 = vmul.f32 %v11124, %v11126
  %v11128 = vadd.f32 %v11124, %v11127
  %vm11129 = vweird.f32 %v9263
  %vm11130 = vweird.f32 %v11124
  %vm11131 = vmor %vm11129, %vm11130
  %v11132 = vsel %vm11131, %v11124, %v11128
  %v11133 = vand.u32 2147483647, %v9263
  %vm11134 = vcmp.eq.f32.partialorder %v11133, 8.507059e+37
  %v11135 = vand.u32 %v9263, 2147483648
  %v11136 = vor.u32 1.1754944e-38, %v11135
  %v11137 = vsel %vm11134, %v11136, %v11132
  %v11138 = vmul.f32 %v8888, %v11137
  %11139 = vst.msk [vmem:[%s3] sm:$0xff] %vm8138, %v9278
  %11140 = vst.msk [vmem:[%s3 + $0x8] sm:$0xff] %vm8138, %v9293
  %11141 = vst.msk [vmem:[%s3 + $0x10] sm:$0xff] %vm8138, %v9308
  %11142 = vst.msk [vmem:[%s3 + $0x18] sm:$0xff] %vm8138, %v9323
  %11143 = vst.msk [vmem:[%s3 + $0x20] sm:$0xff] %vm8138, %v9338
  %11144 = vst.msk [vmem:[%s3 + $0x28] sm:$0xff] %vm8138, %v9353
  %11145 = vst.msk [vmem:[%s3 + $0x30] sm:$0xff] %vm8138, %v9368
  %11146 = vst.msk [vmem:[%s3 + $0x38] sm:$0xff] %vm8138, %v9383
  %11147 = vst.msk [vmem:[%s3 + $0x40] sm:$0xff] %vm8138, %v9398
  %11148 = vst.msk [vmem:[%s3 + $0x48] sm:$0xff] %vm8138, %v9413
  %11149 = vst.msk [vmem:[%s3 + $0x50] sm:$0xff] %vm8138, %v9428
  %11150 = vst.msk [vmem:[%s3 + $0x58] sm:$0xff] %vm8138, %v9443
  %11151 = vst.msk [vmem:[%s3 + $0x60] sm:$0xff] %vm8138, %v9458
  %11152 = vst.msk [vmem:[%s3 + $0x68] sm:$0xff] %vm8138, %v9473
  %11153 = vst.msk [vmem:[%s3 + $0x70] sm:$0xff] %vm8138, %v9488
  %11154 = vst.msk [vmem:[%s3 + $0x78] sm:$0xff] %vm8138, %v9503
  %11155 = vst.msk [vmem:[%s3 + $0x80] sm:$0xff] %vm8138, %v9518
  %11156 = vst.msk [vmem:[%s3 + $0x88] sm:$0xff] %vm8138, %v9533
  %11157 = vst.msk [vmem:[%s3 + $0x90] sm:$0xff] %vm8138, %v9548
  %11158 = vst.msk [vmem:[%s3 + $0x98] sm:$0xff] %vm8138, %v9563
  %11159 = vst.msk [vmem:[%s3 + $0xa0] sm:$0xff] %vm8138, %v9578
  %11160 = vst.msk [vmem:[%s3 + $0xa8] sm:$0xff] %vm8138, %v9593
  %11161 = vst.msk [vmem:[%s3 + $0xb0] sm:$0xff] %vm8138, %v9608
  %11162 = vst.msk [vmem:[%s3 + $0xb8] sm:$0xff] %vm8138, %v9623
  %11163 = vst.msk [vmem:[%s3 + $0xc0] sm:$0xff] %vm8138, %v9638
  %11164 = vst.msk [vmem:[%s3 + $0xc8] sm:$0xff] %vm8138, %v9653
  %11165 = vst.msk [vmem:[%s3 + $0xd0] sm:$0xff] %vm8138, %v9668
  %11166 = vst.msk [vmem:[%s3 + $0xd8] sm:$0xff] %vm8138, %v9683
  %11167 = vst.msk [vmem:[%s3 + $0xe0] sm:$0xff] %vm8138, %v9698
  %11168 = vst.msk [vmem:[%s3 + $0xe8] sm:$0xff] %vm8138, %v9713
  %11169 = vst.msk [vmem:[%s3 + $0xf0] sm:$0xff] %vm8138, %v9728
  %11170 = vst.msk [vmem:[%s3 + $0xf8] sm:$0xff] %vm8138, %v9743
  %11171 = vst.msk [vmem:[%s3 + $0x100] sm:$0xff] %vm8138, %v9758
  %11172 = vst.msk [vmem:[%s3 + $0x108] sm:$0xff] %vm8138, %v9773
  %11173 = vst.msk [vmem:[%s3 + $0x110] sm:$0xff] %vm8138, %v9788
  %11174 = vst.msk [vmem:[%s3 + $0x118] sm:$0xff] %vm8138, %v9803
  %11175 = vst.msk [vmem:[%s3 + $0x120] sm:$0xff] %vm8138, %v9818
  %11176 = vst.msk [vmem:[%s3 + $0x128] sm:$0xff] %vm8138, %v9833
  %11177 = vst.msk [vmem:[%s3 + $0x130] sm:$0xff] %vm8138, %v9848
  %11178 = vst.msk [vmem:[%s3 + $0x138] sm:$0xff] %vm8138, %v9863
  %11179 = vst.msk [vmem:[%s3 + $0x140] sm:$0xff] %vm8138, %v9878
  %11180 = vst.msk [vmem:[%s3 + $0x148] sm:$0xff] %vm8138, %v9893
  %11181 = vst.msk [vmem:[%s3 + $0x150] sm:$0xff] %vm8138, %v9908
  %11182 = vst.msk [vmem:[%s3 + $0x158] sm:$0xff] %vm8138, %v9923
  %11183 = vst.msk [vmem:[%s3 + $0x160] sm:$0xff] %vm8138, %v9938
  %11184 = vst.msk [vmem:[%s3 + $0x168] sm:$0xff] %vm8138, %v9953
  %11185 = vst.msk [vmem:[%s3 + $0x170] sm:$0xff] %vm8138, %v9968
  %11186 = vst.msk [vmem:[%s3 + $0x178] sm:$0xff] %vm8138, %v9983
  %11187 = vst.msk [vmem:[%s3 + $0x180] sm:$0xff] %vm8138, %v9998
  %11188 = vst.msk [vmem:[%s3 + $0x188] sm:$0xff] %vm8138, %v10013
  %11189 = vst.msk [vmem:[%s3 + $0x190] sm:$0xff] %vm8138, %v10028
  %11190 = vst.msk [vmem:[%s3 + $0x198] sm:$0xff] %vm8138, %v10043
  %11191 = vst.msk [vmem:[%s3 + $0x1a0] sm:$0xff] %vm8138, %v10058
  %11192 = vst.msk [vmem:[%s3 + $0x1a8] sm:$0xff] %vm8138, %v10073
  %11193 = vst.msk [vmem:[%s3 + $0x1b0] sm:$0xff] %vm8138, %v10088
  %11194 = vst.msk [vmem:[%s3 + $0x1b8] sm:$0xff] %vm8138, %v10103
  %11195 = vst.msk [vmem:[%s3 + $0x1c0] sm:$0xff] %vm8138, %v10118
  %11196 = vst.msk [vmem:[%s3 + $0x1c8] sm:$0xff] %vm8138, %v10133
  %11197 = vst.msk [vmem:[%s3 + $0x1d0] sm:$0xff] %vm8138, %v10148
  %11198 = vst.msk [vmem:[%s3 + $0x1d8] sm:$0xff] %vm8138, %v10163
  %11199 = vst.msk [vmem:[%s3 + $0x1e0] sm:$0xff] %vm8138, %v10178
  %11200 = vst.msk [vmem:[%s3 + $0x1e8] sm:$0xff] %vm8138, %v10193
  %11201 = vst.msk [vmem:[%s3 + $0x1f0] sm:$0xff] %vm8138, %v10208
  %11202 = vst.msk [vmem:[%s3 + $0x1f8] sm:$0xff] %vm8138, %v10223
  %11203 = vst.msk [vmem:[%s3 + $0x200] sm:$0xff] %vm8138, %v10238
  %11204 = vst.msk [vmem:[%s3 + $0x208] sm:$0xff] %vm8138, %v10253
  %11205 = vst.msk [vmem:[%s3 + $0x210] sm:$0xff] %vm8138, %v10268
  %11206 = vst.msk [vmem:[%s3 + $0x218] sm:$0xff] %vm8138, %v10283
  %11207 = vst.msk [vmem:[%s3 + $0x220] sm:$0xff] %vm8138, %v10298
  %11208 = vst.msk [vmem:[%s3 + $0x228] sm:$0xff] %vm8138, %v10313
  %11209 = vst.msk [vmem:[%s3 + $0x230] sm:$0xff] %vm8138, %v10328
  %11210 = vst.msk [vmem:[%s3 + $0x238] sm:$0xff] %vm8138, %v10343
  %11211 = vst.msk [vmem:[%s3 + $0x240] sm:$0xff] %vm8138, %v10358
  %11212 = vst.msk [vmem:[%s3 + $0x248] sm:$0xff] %vm8138, %v10373
  %11213 = vst.msk [vmem:[%s3 + $0x250] sm:$0xff] %vm8138, %v10388
  %11214 = vst.msk [vmem:[%s3 + $0x258] sm:$0xff] %vm8138, %v10403
  %11215 = vst.msk [vmem:[%s3 + $0x260] sm:$0xff] %vm8138, %v10418
  %11216 = vst.msk [vmem:[%s3 + $0x268] sm:$0xff] %vm8138, %v10433
  %11217 = vst.msk [vmem:[%s3 + $0x270] sm:$0xff] %vm8138, %v10448
  %11218 = vst.msk [vmem:[%s3 + $0x278] sm:$0xff] %vm8138, %v10463
  %11219 = vst.msk [vmem:[%s3 + $0x280] sm:$0xff] %vm8138, %v10478
  %11220 = vst.msk [vmem:[%s3 + $0x288] sm:$0xff] %vm8138, %v10493
  %11221 = vst.msk [vmem:[%s3 + $0x290] sm:$0xff] %vm8138, %v10508
  %11222 = vst.msk [vmem:[%s3 + $0x298] sm:$0xff] %vm8138, %v10523
  %11223 = vst.msk [vmem:[%s3 + $0x2a0] sm:$0xff] %vm8138, %v10538
  %11224 = vst.msk [vmem:[%s3 + $0x2a8] sm:$0xff] %vm8138, %v10553
  %11225 = vst.msk [vmem:[%s3 + $0x2b0] sm:$0xff] %vm8138, %v10568
  %11226 = vst.msk [vmem:[%s3 + $0x2b8] sm:$0xff] %vm8138, %v10583
  %11227 = vst.msk [vmem:[%s3 + $0x2c0] sm:$0xff] %vm8138, %v10598
  %11228 = vst.msk [vmem:[%s3 + $0x2c8] sm:$0xff] %vm8138, %v10613
  %11229 = vst.msk [vmem:[%s3 + $0x2d0] sm:$0xff] %vm8138, %v10628
  %11230 = vst.msk [vmem:[%s3 + $0x2d8] sm:$0xff] %vm8138, %v10643
  %11231 = vst.msk [vmem:[%s3 + $0x2e0] sm:$0xff] %vm8138, %v10658
  %11232 = vst.msk [vmem:[%s3 + $0x2e8] sm:$0xff] %vm8138, %v10673
  %11233 = vst.msk [vmem:[%s3 + $0x2f0] sm:$0xff] %vm8138, %v10688
  %11234 = vst.msk [vmem:[%s3 + $0x2f8] sm:$0xff] %vm8138, %v10703
  %11235 = vst.msk [vmem:[%s3 + $0x300] sm:$0xff] %vm8138, %v10718
  %11236 = vst.msk [vmem:[%s3 + $0x308] sm:$0xff] %vm8138, %v10733
  %11237 = vst.msk [vmem:[%s3 + $0x310] sm:$0xff] %vm8138, %v10748
  %11238 = vst.msk [vmem:[%s3 + $0x318] sm:$0xff] %vm8138, %v10763
  %11239 = vst.msk [vmem:[%s3 + $0x320] sm:$0xff] %vm8138, %v10778
  %11240 = vst.msk [vmem:[%s3 + $0x328] sm:$0xff] %vm8138, %v10793
  %11241 = vst.msk [vmem:[%s3 + $0x330] sm:$0xff] %vm8138, %v10808
  %11242 = vst.msk [vmem:[%s3 + $0x338] sm:$0xff] %vm8138, %v10823
  %11243 = vst.msk [vmem:[%s3 + $0x340] sm:$0xff] %vm8138, %v10838
  %11244 = vst.msk [vmem:[%s3 + $0x348] sm:$0xff] %vm8138, %v10853
  %11245 = vst.msk [vmem:[%s3 + $0x350] sm:$0xff] %vm8138, %v10868
  %11246 = vst.msk [vmem:[%s3 + $0x358] sm:$0xff] %vm8138, %v10883
  %11247 = vst.msk [vmem:[%s3 + $0x360] sm:$0xff] %vm8138, %v10898
  %11248 = vst.msk [vmem:[%s3 + $0x368] sm:$0xff] %vm8138, %v10913
  %11249 = vst.msk [vmem:[%s3 + $0x370] sm:$0xff] %vm8138, %v10928
  %11250 = vst.msk [vmem:[%s3 + $0x378] sm:$0xff] %vm8138, %v10943
  %11251 = vst.msk [vmem:[%s3 + $0x380] sm:$0xff] %vm8138, %v10958
  %11252 = vst.msk [vmem:[%s3 + $0x388] sm:$0xff] %vm8138, %v10973
  %11253 = vst.msk [vmem:[%s3 + $0x390] sm:$0xff] %vm8138, %v10988
  %11254 = vst.msk [vmem:[%s3 + $0x398] sm:$0xff] %vm8138, %v11003
  %11255 = vst.msk [vmem:[%s3 + $0x3a0] sm:$0xff] %vm8138, %v11018
  %11256 = vst.msk [vmem:[%s3 + $0x3a8] sm:$0xff] %vm8138, %v11033
  %11257 = vst.msk [vmem:[%s3 + $0x3b0] sm:$0xff] %vm8138, %v11048
  %11258 = vst.msk [vmem:[%s3 + $0x3b8] sm:$0xff] %vm8138, %v11063
  %11259 = vst.msk [vmem:[%s3 + $0x3c0] sm:$0xff] %vm8138, %v11078
  %11260 = vst.msk [vmem:[%s3 + $0x3c8] sm:$0xff] %vm8138, %v11093
  %11261 = vst.msk [vmem:[%s3 + $0x3d0] sm:$0xff] %vm8138, %v11108
  %11262 = vst.msk [vmem:[%s3 + $0x3d8] sm:$0xff] %vm8138, %v11123
  %11263 = vst.msk [vmem:[%s3 + $0x3e0] sm:$0xff] %vm8138, %v11138
  // Predicated region
  $region14: #{_mlp_pred_impl.1} parent=0 // pred_check
    _
  $region15: #{_mlp_pred_impl.1} parent=0 // pred_check_branch
    %11265 = sbr.rel (0) target = $region17
  $region16: #{_mlp_pred_impl.1} parent=0 // pred_region
    _
  $region17: #{_mlp_pred_impl.1} parent=0 // pred_fallthru
    _
  // Predicated region
  $region18: #{_mlp_pred_impl.1} parent=0 // pred_check
    _
  $region19: #{_mlp_pred_impl.1} parent=0 // pred_check_branch
    %11267 = sbr.rel (0) target = $region21
  $region20: #{_mlp_pred_impl.1} parent=0 // pred_region
    _
  $region21: #{_mlp_pred_impl.1} parent=0 // pred_fallthru
    _

</llo_original>
